<compile_context>
chip_gen: v6e
topology: v6e:2x2x1
jax: 0.10.0
libtpu: 0.0.40
codegen_flags: <defaults>
</compile_context>

<pallas_src>
import functools

import jax
import jax.numpy as jnp
import numpy as np
from jax import lax
from jax.experimental import pallas as pl
from jax.experimental.pallas import tpu as pltpu


# ---------------------------------------------------------------------------
# Fused kernel: whole network in one invocation (no grid)
# ---------------------------------------------------------------------------
def _fused_rnn_kernel(num_layers, hidden, seq_len, batch_p, *refs):
    H, T, Bp = hidden, seq_len, batch_p

    x_ref = refs[0]
    layer_refs = [refs[1 + 3 * l: 4 + 3 * l] for l in range(num_layers)]
    wout_ref = refs[1 + 3 * num_layers]
    bout_ref = refs[2 + 3 * num_layers]
    y_ref = refs[3 + 3 * num_layers]
    xproj_sc, hf_sc, hb_sc = refs[4 + 3 * num_layers:]

    h_last_bwd = None
    for l, (wih_ref, whh_ref, b_ref) in enumerate(layer_refs):
        # ---- hoisted input projection: one GEMM over all timesteps ----
        if l == 0:
            xflat = x_ref[...].reshape(T * Bp, x_ref.shape[-1])
            proj = jnp.dot(xflat, wih_ref[...], preferred_element_type=jnp.float32)
        else:
            w = wih_ref[...]                                   # (2H, 8H)
            hf = hf_sc[...].reshape(T * Bp, H)                 # previous layer fwd hiddens
            hb = hb_sc[...].reshape(T * Bp, H)                 # previous layer bwd hiddens
            proj = (jnp.dot(hf, w[:H], preferred_element_type=jnp.float32)
                    + jnp.dot(hb, w[H:], preferred_element_type=jnp.float32))
        proj = proj + b_ref[...]                               # bias folded in once
        xproj_sc[...] = proj.reshape(T, Bp, 8 * H)

        whh = whh_ref[...]                                     # (H, 8H) = [W_hh_fwd | W_hh_bwd]

        def step(t, carry, whh=whh):
            # carry: stacked states, rows [0:Bp]=forward dir, [Bp:2Bp]=backward dir
            hcat, ccat = carry                                 # (2Bp, H) each
            rec = jnp.dot(hcat, whh, preferred_element_type=jnp.float32)   # (2Bp, 8H)
            pre_f = xproj_sc[t][:, 0:4 * H]                    # fwd processes time t
            pre_b = xproj_sc[T - 1 - t][:, 4 * H:8 * H]        # bwd processes time T-1-t
            gates = jnp.concatenate(
                [pre_f + rec[:Bp, 0:4 * H],
                 pre_b + rec[Bp:, 4 * H:8 * H]], axis=0)       # (2Bp, 4H), order i,f,g,o
            i = jax.nn.sigmoid(gates[:, 0:H])
            f = jax.nn.sigmoid(gates[:, H:2 * H])
            g = jnp.tanh(gates[:, 2 * H:3 * H])
            o = jax.nn.sigmoid(gates[:, 3 * H:4 * H])
            c_new = f * ccat + i * g
            h_new = o * jnp.tanh(c_new)
            # hidden-sequence for the next layer stays in VMEM scratch
            hf_sc[t] = h_new[:Bp]
            hb_sc[T - 1 - t] = h_new[Bp:]
            return (h_new, c_new)

        init = (jnp.zeros((2 * Bp, H), jnp.float32),
                jnp.zeros((2 * Bp, H), jnp.float32))
        h_final, _ = lax.fori_loop(0, T, step, init, unroll=True)
        h_last_bwd = h_final[Bp:]      # backward-direction final hidden of this layer

    # h_n[-1] == last layer, backward direction final hidden -> fused Linear
    y_ref[...] = (jnp.dot(h_last_bwd, wout_ref[...],
                          preferred_element_type=jnp.float32) + bout_ref[...])


# ---------------------------------------------------------------------------
# Wrapper: pack weights, pad batch, single pallas_call
# ---------------------------------------------------------------------------
def rnn_forward(x, params):
    # x: (B, T, input_size), batch_first=True like the PyTorch module
    B, T, _ = x.shape
    H = params["layers"][0]["fwd"][1].shape[0]
    num_layers = len(params["layers"])
    O = params["w_out"].shape[1]

    Bp = int(-(-B // 8) * 8)                                  # pad batch to 8 sublanes
    x_tm = jnp.transpose(x, (1, 0, 2))                        # (T, B, F) time-major
    if Bp != B:
        x_tm = jnp.pad(x_tm, ((0, 0), (0, Bp - B), (0, 0)))

    # Pack per-layer weights [fwd | bwd] along the gate (N) axis -> N = 8H.
    flat = [x_tm]
    for layer in params["layers"]:
        wih = jnp.concatenate([layer["fwd"][0], layer["bwd"][0]], axis=1)   # (F_in, 8H)
        whh = jnp.concatenate([layer["fwd"][1], layer["bwd"][1]], axis=1)   # (H,   8H)
        b = jnp.concatenate([layer["fwd"][2], layer["bwd"][2]], axis=1)     # (1,   8H)
        flat += [wih, whh, b]
    flat += [params["w_out"], params["b_out"]]

    kernel = functools.partial(_fused_rnn_kernel, num_layers, H, T, Bp)
    vmem_spec = pl.BlockSpec(memory_space=pltpu.MemorySpace.VMEM)
    y = pl.pallas_call(
        kernel,
        out_shape=jax.ShapeDtypeStruct((Bp, O), jnp.float32),
        in_specs=[vmem_spec] * len(flat),
        out_specs=vmem_spec,
        scratch_shapes=[
            pltpu.VMEM((T, Bp, 8 * H), jnp.float32),   # hoisted input-projection buffer
            pltpu.VMEM((T, Bp, H), jnp.float32),       # fwd hidden sequence (this layer)
            pltpu.VMEM((T, Bp, H), jnp.float32),       # bwd hidden sequence (this layer)
        ],
    )(*flat)
    return y[:B]


# ---------------------------------------------------------------------------
# Deterministic parameter init (PyTorch-style U(-1/sqrt(H), 1/sqrt(H)))
# ---------------------------------------------------------------------------
def init_params(key, input_size, hidden_size, num_layers, out_features):
    scale = 1.0 / np.sqrt(hidden_size)

    def u(k, shape):
        return jax.random.uniform(k, shape, jnp.float32, -scale, scale)

    layers = []
    kidx = 0
    keys = jax.random.split(key, num_layers * 2 * 4 + 2)
    for l in range(num_layers):
        in_feat = input_size if l == 0 else 2 * hidden_size
        layer = {}
        for d in ("fwd", "bwd"):
            w_ih = u(keys[kidx], (in_feat, 4 * hidden_size)); kidx += 1
            w_hh = u(keys[kidx], (hidden_size, 4 * hidden_size)); kidx += 1
            b_ih = u(keys[kidx], (1, 4 * hidden_size)); kidx += 1
            b_hh = u(keys[kidx], (1, 4 * hidden_size)); kidx += 1
            layer[d] = (w_ih, w_hh, b_ih + b_hh)
        layers.append(layer)
    w_out = u(keys[kidx], (hidden_size, out_features)); kidx += 1
    b_out = u(keys[kidx], (1, out_features)); kidx += 1
    return {"layers": layers, "w_out": w_out, "b_out": b_out}


# ---------------------------------------------------------------------------
# Pure-JAX reference for correctness checking
# ---------------------------------------------------------------------------
def _dir_ref(x_tmajor, w_ih, w_hh, b):
    T, B, _ = x_tmajor.shape
    H = w_hh.shape[0]
    h = jnp.zeros((B, H), jnp.float32)
    c = jnp.zeros((B, H), jnp.float32)
    hs = []
    for t in range(T):
        gates = x_tmajor[t] @ w_ih + h @ w_hh + b[0]
        i = jax.nn.sigmoid(gates[:, :H])
        f = jax.nn.sigmoid(gates[:, H:2 * H])
        g = jnp.tanh(gates[:, 2 * H:3 * H])
        o = jax.nn.sigmoid(gates[:, 3 * H:])
        c = f * c + i * g
        h = o * jnp.tanh(c)
        hs.append(h)
    return jnp.stack(hs), h


def rnn_ref(x, params):
    inp = jnp.transpose(x, (1, 0, 2))
    h_bwd_final = None
    for layer in params["layers"]:
        h_f, _ = _dir_ref(inp, *layer["fwd"])
        h_b_rev, h_bwd_final = _dir_ref(inp[::-1], *layer["bwd"])
        inp = jnp.concatenate([h_f, h_b_rev[::-1]], axis=-1)
    return h_bwd_final @ params["w_out"] + params["b_out"][0]


# ---------------------------------------------------------------------------
if __name__ == "__main__":
    # Small shapes consistent with the module (input -> 3-layer bidir LSTM -> Linear->10)
    B, T = 4, 8
    input_size, hidden_size, num_layers, out_features = 16, 32, 3, 10

    key = jax.random.PRNGKey(0)
    kx, kp = jax.random.split(key)
    x = jax.random.normal(kx, (B, T, input_size), jnp.float32)
    params = init_params(kp, input_size, hidden_size, num_layers, out_features)

    fwd = jax.jit(rnn_forward)
    y = jax.block_until_ready(fwd(x, params))
    assert y.shape == (B, out_features)

    y_ref = jax.block_until_ready(rnn_ref(x, params))
    np.testing.assert_allclose(np.asarray(y), np.asarray(y_ref), atol=1e-4, rtol=1e-4)

    print("KERNEL_OK")
</pallas_src>

<mosaic_0001>
module attributes {stable_mosaic.version = 11 : i64} {
  func.func @_fused_rnn_kernel(%arg0: memref<8x8x16xf32, #tpu.memory_space<vmem>>, %arg1: memref<16x256xf32, #tpu.memory_space<vmem>>, %arg2: memref<32x256xf32, #tpu.memory_space<vmem>>, %arg3: memref<1x256xf32, #tpu.memory_space<vmem>>, %arg4: memref<64x256xf32, #tpu.memory_space<vmem>>, %arg5: memref<32x256xf32, #tpu.memory_space<vmem>>, %arg6: memref<1x256xf32, #tpu.memory_space<vmem>>, %arg7: memref<64x256xf32, #tpu.memory_space<vmem>>, %arg8: memref<32x256xf32, #tpu.memory_space<vmem>>, %arg9: memref<1x256xf32, #tpu.memory_space<vmem>>, %arg10: memref<32x10xf32, #tpu.memory_space<vmem>>, %arg11: memref<1x10xf32, #tpu.memory_space<vmem>>, %arg12: memref<8x10xf32, #tpu.memory_space<vmem>>, %arg13: memref<8x8x256xf32, #tpu.memory_space<vmem>>, %arg14: memref<8x8x32xf32, #tpu.memory_space<vmem>>, %arg15: memref<8x8x32xf32, #tpu.memory_space<vmem>>) attributes {dimension_semantics = [], scalar_prefetch = 0 : i64, scratch_operands = 3 : i64, tpu.core_type = #tpu.core_type<tc>} {
    %c0 = arith.constant 0 : index
    %c0_0 = arith.constant 0 : index
    %c0_1 = arith.constant 0 : index
    %0 = vector.load %arg0[%c0, %c0_0, %c0_1] : memref<8x8x16xf32, #tpu.memory_space<vmem>>, vector<8x8x16xf32>
    %1 = vector.shape_cast %0 : vector<8x8x16xf32> to vector<64x16xf32>
    %c0_2 = arith.constant 0 : index
    %c0_3 = arith.constant 0 : index
    %2 = vector.load %arg1[%c0_2, %c0_3] : memref<16x256xf32, #tpu.memory_space<vmem>>, vector<16x256xf32>
    %cst = arith.constant dense<0.000000e+00> : vector<64x256xf32>
    %3 = tpu.matmul %1, %2, %cst {dimension_numbers = #tpu.dot_dimension_numbers<[1], [0], [0], [1], [0, 0, 1, 1], [], []>} : vector<64x16xf32>, vector<16x256xf32>, vector<64x256xf32> -> vector<64x256xf32>
    %c0_4 = arith.constant 0 : index
    %c0_5 = arith.constant 0 : index
    %4 = vector.load %arg3[%c0_4, %c0_5] : memref<1x256xf32, #tpu.memory_space<vmem>>, vector<1x256xf32>
    %5 = vector.broadcast %4 : vector<1x256xf32> to vector<64x256xf32>
    %6 = arith.addf %3, %5 : vector<64x256xf32>
    %7 = vector.shape_cast %6 : vector<64x256xf32> to vector<8x8x256xf32>
    %c0_6 = arith.constant 0 : index
    %c0_7 = arith.constant 0 : index
    %c0_8 = arith.constant 0 : index
    %8 = vector.load %arg13[%c0_6, %c0_7, %c0_8] : memref<8x8x256xf32, #tpu.memory_space<vmem>>, vector<8x8x256xf32>
    tpu.vector_store %arg13[%c0_6, %c0_7, %c0_8], %7 {strides = array<i32>} : memref<8x8x256xf32, #tpu.memory_space<vmem>>, vector<8x8x256xf32>,
    %c0_9 = arith.constant 0 : index
    %c0_10 = arith.constant 0 : index
    %9 = vector.load %arg2[%c0_9, %c0_10] : memref<32x256xf32, #tpu.memory_space<vmem>>, vector<32x256xf32>
    %cst_11 = arith.constant 0.000000e+00 : f32
    %10 = vector.broadcast %cst_11 : f32 to vector<16x32xf32>
    %cst_12 = arith.constant 0.000000e+00 : f32
    %11 = vector.broadcast %cst_12 : f32 to vector<16x32xf32>
    %c0_i32 = arith.constant 0 : i32
    %cst_13 = arith.constant dense<0.000000e+00> : vector<16x256xf32>
    %12 = tpu.matmul %10, %9, %cst_13 {dimension_numbers = #tpu.dot_dimension_numbers<[1], [0], [0], [1], [0, 0, 1, 1], [], []>} : vector<16x32xf32>, vector<32x256xf32>, vector<16x256xf32> -> vector<16x256xf32>
    %13 = arith.index_cast %c0_i32 : i32 to index
    %c0_14 = arith.constant 0 : index
    %c0_15 = arith.constant 0 : index
    %14 = vector.load %arg13[%13, %c0_14, %c0_15] : memref<8x8x256xf32, #tpu.memory_space<vmem>>, vector<1x8x256xf32>
    %15 = vector.shape_cast %14 : vector<1x8x256xf32> to vector<8x256xf32>
    %16 = vector.extract_strided_slice %15 {offsets = [0, 0], sizes = [8, 128], strides = [1, 1]} : vector<8x256xf32> to vector<8x128xf32>
    %c7_i32 = arith.constant 7 : i32
    %17 = arith.subi %c7_i32, %c0_i32 : i32
    %18 = arith.index_cast %17 : i32 to index
    %c0_16 = arith.constant 0 : index
    %c0_17 = arith.constant 0 : index
    %19 = vector.load %arg13[%18, %c0_16, %c0_17] : memref<8x8x256xf32, #tpu.memory_space<vmem>>, vector<1x8x256xf32>
    %20 = vector.shape_cast %19 : vector<1x8x256xf32> to vector<8x256xf32>
    %21 = vector.extract_strided_slice %20 {offsets = [0, 128], sizes = [8, 128], strides = [1, 1]} : vector<8x256xf32> to vector<8x128xf32>
    %22 = vector.extract_strided_slice %12 {offsets = [0, 0], sizes = [8, 128], strides = [1, 1]} : vector<16x256xf32> to vector<8x128xf32>
    %23 = arith.addf %16, %22 : vector<8x128xf32>
    %24 = vector.extract_strided_slice %12 {offsets = [8, 128], sizes = [8, 128], strides = [1, 1]} : vector<16x256xf32> to vector<8x128xf32>
    %25 = arith.addf %21, %24 : vector<8x128xf32>
    %26 = tpu.concatenate %23, %25 in 0 : vector<8x128xf32>, vector<8x128xf32> -> vector<16x128xf32>
    %27 = vector.extract_strided_slice %26 {offsets = [0, 0], sizes = [16, 32], strides = [1, 1]} : vector<16x128xf32> to vector<16x32xf32>
    %28 = arith.negf %27 : vector<16x32xf32>
    %29 = math.exp %28 : vector<16x32xf32>
    %cst_18 = arith.constant 1.000000e+00 : f32
    %30 = vector.broadcast %cst_18 : f32 to vector<16x32xf32>
    %31 = arith.addf %30, %29 : vector<16x32xf32>
    %32 = arith.divf %30, %31 : vector<16x32xf32>
    %33 = vector.extract_strided_slice %26 {offsets = [0, 32], sizes = [16, 32], strides = [1, 1]} : vector<16x128xf32> to vector<16x32xf32>
    %34 = arith.negf %33 : vector<16x32xf32>
    %35 = math.exp %34 : vector<16x32xf32>
    %cst_19 = arith.constant 1.000000e+00 : f32
    %36 = vector.broadcast %cst_19 : f32 to vector<16x32xf32>
    %37 = arith.addf %36, %35 : vector<16x32xf32>
    %38 = arith.divf %36, %37 : vector<16x32xf32>
    %39 = vector.extract_strided_slice %26 {offsets = [0, 64], sizes = [16, 32], strides = [1, 1]} : vector<16x128xf32> to vector<16x32xf32>
    %40 = math.tanh %39 : vector<16x32xf32>
    %41 = vector.extract_strided_slice %26 {offsets = [0, 96], sizes = [16, 32], strides = [1, 1]} : vector<16x128xf32> to vector<16x32xf32>
    %42 = arith.negf %41 : vector<16x32xf32>
    %43 = math.exp %42 : vector<16x32xf32>
    %cst_20 = arith.constant 1.000000e+00 : f32
    %44 = vector.broadcast %cst_20 : f32 to vector<16x32xf32>
    %45 = arith.addf %44, %43 : vector<16x32xf32>
    %46 = arith.divf %44, %45 : vector<16x32xf32>
    %47 = arith.mulf %38, %11 : vector<16x32xf32>
    %48 = arith.mulf %32, %40 : vector<16x32xf32>
    %49 = arith.addf %47, %48 : vector<16x32xf32>
    %50 = math.tanh %49 : vector<16x32xf32>
    %51 = arith.mulf %46, %50 : vector<16x32xf32>
    %52 = vector.extract_strided_slice %51 {offsets = [0, 0], sizes = [8, 32], strides = [1, 1]} : vector<16x32xf32> to vector<8x32xf32>
    %53 = arith.index_cast %c0_i32 : i32 to index
    %c0_21 = arith.constant 0 : index
    %c0_22 = arith.constant 0 : index
    %54 = vector.load %arg14[%53, %c0_21, %c0_22] : memref<8x8x32xf32, #tpu.memory_space<vmem>>, vector<1x8x32xf32>
    %55 = vector.shape_cast %54 : vector<1x8x32xf32> to vector<8x32xf32>
    %56 = vector.shape_cast %52 : vector<8x32xf32> to vector<1x8x32xf32>
    tpu.vector_store %arg14[%53, %c0_21, %c0_22], %56 {strides = array<i32>} : memref<8x8x32xf32, #tpu.memory_space<vmem>>, vector<1x8x32xf32>,
    %57 = vector.extract_strided_slice %51 {offsets = [8, 0], sizes = [8, 32], strides = [1, 1]} : vector<16x32xf32> to vector<8x32xf32>
    %c7_i32_23 = arith.constant 7 : i32
    %58 = arith.subi %c7_i32_23, %c0_i32 : i32
    %59 = arith.index_cast %58 : i32 to index
    %c0_24 = arith.constant 0 : index
    %c0_25 = arith.constant 0 : index
    %60 = vector.load %arg15[%59, %c0_24, %c0_25] : memref<8x8x32xf32, #tpu.memory_space<vmem>>, vector<1x8x32xf32>
    %61 = vector.shape_cast %60 : vector<1x8x32xf32> to vector<8x32xf32>
    %62 = vector.shape_cast %57 : vector<8x32xf32> to vector<1x8x32xf32>
    tpu.vector_store %arg15[%59, %c0_24, %c0_25], %62 {strides = array<i32>} : memref<8x8x32xf32, #tpu.memory_space<vmem>>, vector<1x8x32xf32>,
    %c1_i32 = arith.constant 1 : i32
    %cst_26 = arith.constant dense<0.000000e+00> : vector<16x256xf32>
    %63 = tpu.matmul %51, %9, %cst_26 {dimension_numbers = #tpu.dot_dimension_numbers<[1], [0], [0], [1], [0, 0, 1, 1], [], []>} : vector<16x32xf32>, vector<32x256xf32>, vector<16x256xf32> -> vector<16x256xf32>
    %64 = arith.index_cast %c1_i32 : i32 to index
    %c0_27 = arith.constant 0 : index
    %c0_28 = arith.constant 0 : index
    %65 = vector.load %arg13[%64, %c0_27, %c0_28] : memref<8x8x256xf32, #tpu.memory_space<vmem>>, vector<1x8x256xf32>
    %66 = vector.shape_cast %65 : vector<1x8x256xf32> to vector<8x256xf32>
    %67 = vector.extract_strided_slice %66 {offsets = [0, 0], sizes = [8, 128], strides = [1, 1]} : vector<8x256xf32> to vector<8x128xf32>
    %c7_i32_29 = arith.constant 7 : i32
    %68 = arith.subi %c7_i32_29, %c1_i32 : i32
    %69 = arith.index_cast %68 : i32 to index
    %c0_30 = arith.constant 0 : index
    %c0_31 = arith.constant 0 : index
    %70 = vector.load %arg13[%69, %c0_30, %c0_31] : memref<8x8x256xf32, #tpu.memory_space<vmem>>, vector<1x8x256xf32>
    %71 = vector.shape_cast %70 : vector<1x8x256xf32> to vector<8x256xf32>
    %72 = vector.extract_strided_slice %71 {offsets = [0, 128], sizes = [8, 128], strides = [1, 1]} : vector<8x256xf32> to vector<8x128xf32>
    %73 = vector.extract_strided_slice %63 {offsets = [0, 0], sizes = [8, 128], strides = [1, 1]} : vector<16x256xf32> to vector<8x128xf32>
    %74 = arith.addf %67, %73 : vector<8x128xf32>
    %75 = vector.extract_strided_slice %63 {offsets = [8, 128], sizes = [8, 128], strides = [1, 1]} : vector<16x256xf32> to vector<8x128xf32>
    %76 = arith.addf %72, %75 : vector<8x128xf32>
    %77 = tpu.concatenate %74, %76 in 0 : vector<8x128xf32>, vector<8x128xf32> -> vector<16x128xf32>
    %78 = vector.extract_strided_slice %77 {offsets = [0, 0], sizes = [16, 32], strides = [1, 1]} : vector<16x128xf32> to vector<16x32xf32>
    %79 = arith.negf %78 : vector<16x32xf32>
    %80 = math.exp %79 : vector<16x32xf32>
    %cst_32 = arith.constant 1.000000e+00 : f32
    %81 = vector.broadcast %cst_32 : f32 to vector<16x32xf32>
    %82 = arith.addf %81, %80 : vector<16x32xf32>
    %83 = arith.divf %81, %82 : vector<16x32xf32>
    %84 = vector.extract_strided_slice %77 {offsets = [0, 32], sizes = [16, 32], strides = [1, 1]} : vector<16x128xf32> to vector<16x32xf32>
    %85 = arith.negf %84 : vector<16x32xf32>
    %86 = math.exp %85 : vector<16x32xf32>
    %cst_33 = arith.constant 1.000000e+00 : f32
    %87 = vector.broadcast %cst_33 : f32 to vector<16x32xf32>
    %88 = arith.addf %87, %86 : vector<16x32xf32>
    %89 = arith.divf %87, %88 : vector<16x32xf32>
    %90 = vector.extract_strided_slice %77 {offsets = [0, 64], sizes = [16, 32], strides = [1, 1]} : vector<16x128xf32> to vector<16x32xf32>
    %91 = math.tanh %90 : vector<16x32xf32>
    %92 = vector.extract_strided_slice %77 {offsets = [0, 96], sizes = [16, 32], strides = [1, 1]} : vector<16x128xf32> to vector<16x32xf32>
    %93 = arith.negf %92 : vector<16x32xf32>
    %94 = math.exp %93 : vector<16x32xf32>
    %cst_34 = arith.constant 1.000000e+00 : f32
    %95 = vector.broadcast %cst_34 : f32 to vector<16x32xf32>
    %96 = arith.addf %95, %94 : vector<16x32xf32>
    %97 = arith.divf %95, %96 : vector<16x32xf32>
    %98 = arith.mulf %89, %49 : vector<16x32xf32>
    %99 = arith.mulf %83, %91 : vector<16x32xf32>
    %100 = arith.addf %98, %99 : vector<16x32xf32>
    %101 = math.tanh %100 : vector<16x32xf32>
    %102 = arith.mulf %97, %101 : vector<16x32xf32>
    %103 = vector.extract_strided_slice %102 {offsets = [0, 0], sizes = [8, 32], strides = [1, 1]} : vector<16x32xf32> to vector<8x32xf32>
    %104 = arith.index_cast %c1_i32 : i32 to index
    %c0_35 = arith.constant 0 : index
    %c0_36 = arith.constant 0 : index
    %105 = vector.load %arg14[%104, %c0_35, %c0_36] : memref<8x8x32xf32, #tpu.memory_space<vmem>>, vector<1x8x32xf32>
    %106 = vector.shape_cast %105 : vector<1x8x32xf32> to vector<8x32xf32>
    %107 = vector.shape_cast %103 : vector<8x32xf32> to vector<1x8x32xf32>
    tpu.vector_store %arg14[%104, %c0_35, %c0_36], %107 {strides = array<i32>} : memref<8x8x32xf32, #tpu.memory_space<vmem>>, vector<1x8x32xf32>,
    %108 = vector.extract_strided_slice %102 {offsets = [8, 0], sizes = [8, 32], strides = [1, 1]} : vector<16x32xf32> to vector<8x32xf32>
    %c7_i32_37 = arith.constant 7 : i32
    %109 = arith.subi %c7_i32_37, %c1_i32 : i32
    %110 = arith.index_cast %109 : i32 to index
    %c0_38 = arith.constant 0 : index
    %c0_39 = arith.constant 0 : index
    %111 = vector.load %arg15[%110, %c0_38, %c0_39] : memref<8x8x32xf32, #tpu.memory_space<vmem>>, vector<1x8x32xf32>
    %112 = vector.shape_cast %111 : vector<1x8x32xf32> to vector<8x32xf32>
    %113 = vector.shape_cast %108 : vector<8x32xf32> to vector<1x8x32xf32>
    tpu.vector_store %arg15[%110, %c0_38, %c0_39], %113 {strides = array<i32>} : memref<8x8x32xf32, #tpu.memory_space<vmem>>, vector<1x8x32xf32>,
    %c2_i32 = arith.constant 2 : i32
    %cst_40 = arith.constant dense<0.000000e+00> : vector<16x256xf32>
    %114 = tpu.matmul %102, %9, %cst_40 {dimension_numbers = #tpu.dot_dimension_numbers<[1], [0], [0], [1], [0, 0, 1, 1], [], []>} : vector<16x32xf32>, vector<32x256xf32>, vector<16x256xf32> -> vector<16x256xf32>
    %115 = arith.index_cast %c2_i32 : i32 to index
    %c0_41 = arith.constant 0 : index
    %c0_42 = arith.constant 0 : index
    %116 = vector.load %arg13[%115, %c0_41, %c0_42] : memref<8x8x256xf32, #tpu.memory_space<vmem>>, vector<1x8x256xf32>
    %117 = vector.shape_cast %116 : vector<1x8x256xf32> to vector<8x256xf32>
    %118 = vector.extract_strided_slice %117 {offsets = [0, 0], sizes = [8, 128], strides = [1, 1]} : vector<8x256xf32> to vector<8x128xf32>
    %c7_i32_43 = arith.constant 7 : i32
    %119 = arith.subi %c7_i32_43, %c2_i32 : i32
    %120 = arith.index_cast %119 : i32 to index
    %c0_44 = arith.constant 0 : index
    %c0_45 = arith.constant 0 : index
    %121 = vector.load %arg13[%120, %c0_44, %c0_45] : memref<8x8x256xf32, #tpu.memory_space<vmem>>, vector<1x8x256xf32>
    %122 = vector.shape_cast %121 : vector<1x8x256xf32> to vector<8x256xf32>
    %123 = vector.extract_strided_slice %122 {offsets = [0, 128], sizes = [8, 128], strides = [1, 1]} : vector<8x256xf32> to vector<8x128xf32>
    %124 = vector.extract_strided_slice %114 {offsets = [0, 0], sizes = [8, 128], strides = [1, 1]} : vector<16x256xf32> to vector<8x128xf32>
    %125 = arith.addf %118, %124 : vector<8x128xf32>
    %126 = vector.extract_strided_slice %114 {offsets = [8, 128], sizes = [8, 128], strides = [1, 1]} : vector<16x256xf32> to vector<8x128xf32>
    %127 = arith.addf %123, %126 : vector<8x128xf32>
    %128 = tpu.concatenate %125, %127 in 0 : vector<8x128xf32>, vector<8x128xf32> -> vector<16x128xf32>
    %129 = vector.extract_strided_slice %128 {offsets = [0, 0], sizes = [16, 32], strides = [1, 1]} : vector<16x128xf32> to vector<16x32xf32>
    %130 = arith.negf %129 : vector<16x32xf32>
    %131 = math.exp %130 : vector<16x32xf32>
    %cst_46 = arith.constant 1.000000e+00 : f32
    %132 = vector.broadcast %cst_46 : f32 to vector<16x32xf32>
    %133 = arith.addf %132, %131 : vector<16x32xf32>
    %134 = arith.divf %132, %133 : vector<16x32xf32>
    %135 = vector.extract_strided_slice %128 {offsets = [0, 32], sizes = [16, 32], strides = [1, 1]} : vector<16x128xf32> to vector<16x32xf32>
    %136 = arith.negf %135 : vector<16x32xf32>
    %137 = math.exp %136 : vector<16x32xf32>
    %cst_47 = arith.constant 1.000000e+00 : f32
    %138 = vector.broadcast %cst_47 : f32 to vector<16x32xf32>
    %139 = arith.addf %138, %137 : vector<16x32xf32>
    %140 = arith.divf %138, %139 : vector<16x32xf32>
    %141 = vector.extract_strided_slice %128 {offsets = [0, 64], sizes = [16, 32], strides = [1, 1]} : vector<16x128xf32> to vector<16x32xf32>
    %142 = math.tanh %141 : vector<16x32xf32>
    %143 = vector.extract_strided_slice %128 {offsets = [0, 96], sizes = [16, 32], strides = [1, 1]} : vector<16x128xf32> to vector<16x32xf32>
    %144 = arith.negf %143 : vector<16x32xf32>
    %145 = math.exp %144 : vector<16x32xf32>
    %cst_48 = arith.constant 1.000000e+00 : f32
    %146 = vector.broadcast %cst_48 : f32 to vector<16x32xf32>
    %147 = arith.addf %146, %145 : vector<16x32xf32>
    %148 = arith.divf %146, %147 : vector<16x32xf32>
    %149 = arith.mulf %140, %100 : vector<16x32xf32>
    %150 = arith.mulf %134, %142 : vector<16x32xf32>
    %151 = arith.addf %149, %150 : vector<16x32xf32>
    %152 = math.tanh %151 : vector<16x32xf32>
    %153 = arith.mulf %148, %152 : vector<16x32xf32>
    %154 = vector.extract_strided_slice %153 {offsets = [0, 0], sizes = [8, 32], strides = [1, 1]} : vector<16x32xf32> to vector<8x32xf32>
    %155 = arith.index_cast %c2_i32 : i32 to index
    %c0_49 = arith.constant 0 : index
    %c0_50 = arith.constant 0 : index
    %156 = vector.load %arg14[%155, %c0_49, %c0_50] : memref<8x8x32xf32, #tpu.memory_space<vmem>>, vector<1x8x32xf32>
    %157 = vector.shape_cast %156 : vector<1x8x32xf32> to vector<8x32xf32>
    %158 = vector.shape_cast %154 : vector<8x32xf32> to vector<1x8x32xf32>
    tpu.vector_store %arg14[%155, %c0_49, %c0_50], %158 {strides = array<i32>} : memref<8x8x32xf32, #tpu.memory_space<vmem>>, vector<1x8x32xf32>,
    %159 = vector.extract_strided_slice %153 {offsets = [8, 0], sizes = [8, 32], strides = [1, 1]} : vector<16x32xf32> to vector<8x32xf32>
    %c7_i32_51 = arith.constant 7 : i32
    %160 = arith.subi %c7_i32_51, %c2_i32 : i32
    %161 = arith.index_cast %160 : i32 to index
    %c0_52 = arith.constant 0 : index
    %c0_53 = arith.constant 0 : index
    %162 = vector.load %arg15[%161, %c0_52, %c0_53] : memref<8x8x32xf32, #tpu.memory_space<vmem>>, vector<1x8x32xf32>
    %163 = vector.shape_cast %162 : vector<1x8x32xf32> to vector<8x32xf32>
    %164 = vector.shape_cast %159 : vector<8x32xf32> to vector<1x8x32xf32>
    tpu.vector_store %arg15[%161, %c0_52, %c0_53], %164 {strides = array<i32>} : memref<8x8x32xf32, #tpu.memory_space<vmem>>, vector<1x8x32xf32>,
    %c3_i32 = arith.constant 3 : i32
    %cst_54 = arith.constant dense<0.000000e+00> : vector<16x256xf32>
    %165 = tpu.matmul %153, %9, %cst_54 {dimension_numbers = #tpu.dot_dimension_numbers<[1], [0], [0], [1], [0, 0, 1, 1], [], []>} : vector<16x32xf32>, vector<32x256xf32>, vector<16x256xf32> -> vector<16x256xf32>
    %166 = arith.index_cast %c3_i32 : i32 to index
    %c0_55 = arith.constant 0 : index
    %c0_56 = arith.constant 0 : index
    %167 = vector.load %arg13[%166, %c0_55, %c0_56] : memref<8x8x256xf32, #tpu.memory_space<vmem>>, vector<1x8x256xf32>
    %168 = vector.shape_cast %167 : vector<1x8x256xf32> to vector<8x256xf32>
    %169 = vector.extract_strided_slice %168 {offsets = [0, 0], sizes = [8, 128], strides = [1, 1]} : vector<8x256xf32> to vector<8x128xf32>
    %c7_i32_57 = arith.constant 7 : i32
    %170 = arith.subi %c7_i32_57, %c3_i32 : i32
    %171 = arith.index_cast %170 : i32 to index
    %c0_58 = arith.constant 0 : index
    %c0_59 = arith.constant 0 : index
    %172 = vector.load %arg13[%171, %c0_58, %c0_59] : memref<8x8x256xf32, #tpu.memory_space<vmem>>, vector<1x8x256xf32>
    %173 = vector.shape_cast %172 : vector<1x8x256xf32> to vector<8x256xf32>
    %174 = vector.extract_strided_slice %173 {offsets = [0, 128], sizes = [8, 128], strides = [1, 1]} : vector<8x256xf32> to vector<8x128xf32>
    %175 = vector.extract_strided_slice %165 {offsets = [0, 0], sizes = [8, 128], strides = [1, 1]} : vector<16x256xf32> to vector<8x128xf32>
    %176 = arith.addf %169, %175 : vector<8x128xf32>
    %177 = vector.extract_strided_slice %165 {offsets = [8, 128], sizes = [8, 128], strides = [1, 1]} : vector<16x256xf32> to vector<8x128xf32>
    %178 = arith.addf %174, %177 : vector<8x128xf32>
    %179 = tpu.concatenate %176, %178 in 0 : vector<8x128xf32>, vector<8x128xf32> -> vector<16x128xf32>
    %180 = vector.extract_strided_slice %179 {offsets = [0, 0], sizes = [16, 32], strides = [1, 1]} : vector<16x128xf32> to vector<16x32xf32>
    %181 = arith.negf %180 : vector<16x32xf32>
    %182 = math.exp %181 : vector<16x32xf32>
    %cst_60 = arith.constant 1.000000e+00 : f32
    %183 = vector.broadcast %cst_60 : f32 to vector<16x32xf32>
    %184 = arith.addf %183, %182 : vector<16x32xf32>
    %185 = arith.divf %183, %184 : vector<16x32xf32>
    %186 = vector.extract_strided_slice %179 {offsets = [0, 32], sizes = [16, 32], strides = [1, 1]} : vector<16x128xf32> to vector<16x32xf32>
    %187 = arith.negf %186 : vector<16x32xf32>
    %188 = math.exp %187 : vector<16x32xf32>
    %cst_61 = arith.constant 1.000000e+00 : f32
    %189 = vector.broadcast %cst_61 : f32 to vector<16x32xf32>
    %190 = arith.addf %189, %188 : vector<16x32xf32>
    %191 = arith.divf %189, %190 : vector<16x32xf32>
    %192 = vector.extract_strided_slice %179 {offsets = [0, 64], sizes = [16, 32], strides = [1, 1]} : vector<16x128xf32> to vector<16x32xf32>
    %193 = math.tanh %192 : vector<16x32xf32>
    %194 = vector.extract_strided_slice %179 {offsets = [0, 96], sizes = [16, 32], strides = [1, 1]} : vector<16x128xf32> to vector<16x32xf32>
    %195 = arith.negf %194 : vector<16x32xf32>
    %196 = math.exp %195 : vector<16x32xf32>
    %cst_62 = arith.constant 1.000000e+00 : f32
    %197 = vector.broadcast %cst_62 : f32 to vector<16x32xf32>
    %198 = arith.addf %197, %196 : vector<16x32xf32>
    %199 = arith.divf %197, %198 : vector<16x32xf32>
    %200 = arith.mulf %191, %151 : vector<16x32xf32>
    %201 = arith.mulf %185, %193 : vector<16x32xf32>
    %202 = arith.addf %200, %201 : vector<16x32xf32>
    %203 = math.tanh %202 : vector<16x32xf32>
    %204 = arith.mulf %199, %203 : vector<16x32xf32>
    %205 = vector.extract_strided_slice %204 {offsets = [0, 0], sizes = [8, 32], strides = [1, 1]} : vector<16x32xf32> to vector<8x32xf32>
    %206 = arith.index_cast %c3_i32 : i32 to index
    %c0_63 = arith.constant 0 : index
    %c0_64 = arith.constant 0 : index
    %207 = vector.load %arg14[%206, %c0_63, %c0_64] : memref<8x8x32xf32, #tpu.memory_space<vmem>>, vector<1x8x32xf32>
    %208 = vector.shape_cast %207 : vector<1x8x32xf32> to vector<8x32xf32>
    %209 = vector.shape_cast %205 : vector<8x32xf32> to vector<1x8x32xf32>
    tpu.vector_store %arg14[%206, %c0_63, %c0_64], %209 {strides = array<i32>} : memref<8x8x32xf32, #tpu.memory_space<vmem>>, vector<1x8x32xf32>,
    %210 = vector.extract_strided_slice %204 {offsets = [8, 0], sizes = [8, 32], strides = [1, 1]} : vector<16x32xf32> to vector<8x32xf32>
    %c7_i32_65 = arith.constant 7 : i32
    %211 = arith.subi %c7_i32_65, %c3_i32 : i32
    %212 = arith.index_cast %211 : i32 to index
    %c0_66 = arith.constant 0 : index
    %c0_67 = arith.constant 0 : index
    %213 = vector.load %arg15[%212, %c0_66, %c0_67] : memref<8x8x32xf32, #tpu.memory_space<vmem>>, vector<1x8x32xf32>
    %214 = vector.shape_cast %213 : vector<1x8x32xf32> to vector<8x32xf32>
    %215 = vector.shape_cast %210 : vector<8x32xf32> to vector<1x8x32xf32>
    tpu.vector_store %arg15[%212, %c0_66, %c0_67], %215 {strides = array<i32>} : memref<8x8x32xf32, #tpu.memory_space<vmem>>, vector<1x8x32xf32>,
    %c4_i32 = arith.constant 4 : i32
    %cst_68 = arith.constant dense<0.000000e+00> : vector<16x256xf32>
    %216 = tpu.matmul %204, %9, %cst_68 {dimension_numbers = #tpu.dot_dimension_numbers<[1], [0], [0], [1], [0, 0, 1, 1], [], []>} : vector<16x32xf32>, vector<32x256xf32>, vector<16x256xf32> -> vector<16x256xf32>
    %217 = arith.index_cast %c4_i32 : i32 to index
    %c0_69 = arith.constant 0 : index
    %c0_70 = arith.constant 0 : index
    %218 = vector.load %arg13[%217, %c0_69, %c0_70] : memref<8x8x256xf32, #tpu.memory_space<vmem>>, vector<1x8x256xf32>
    %219 = vector.shape_cast %218 : vector<1x8x256xf32> to vector<8x256xf32>
    %220 = vector.extract_strided_slice %219 {offsets = [0, 0], sizes = [8, 128], strides = [1, 1]} : vector<8x256xf32> to vector<8x128xf32>
    %c7_i32_71 = arith.constant 7 : i32
    %221 = arith.subi %c7_i32_71, %c4_i32 : i32
    %222 = arith.index_cast %221 : i32 to index
    %c0_72 = arith.constant 0 : index
    %c0_73 = arith.constant 0 : index
    %223 = vector.load %arg13[%222, %c0_72, %c0_73] : memref<8x8x256xf32, #tpu.memory_space<vmem>>, vector<1x8x256xf32>
    %224 = vector.shape_cast %223 : vector<1x8x256xf32> to vector<8x256xf32>
    %225 = vector.extract_strided_slice %224 {offsets = [0, 128], sizes = [8, 128], strides = [1, 1]} : vector<8x256xf32> to vector<8x128xf32>
    %226 = vector.extract_strided_slice %216 {offsets = [0, 0], sizes = [8, 128], strides = [1, 1]} : vector<16x256xf32> to vector<8x128xf32>
    %227 = arith.addf %220, %226 : vector<8x128xf32>
    %228 = vector.extract_strided_slice %216 {offsets = [8, 128], sizes = [8, 128], strides = [1, 1]} : vector<16x256xf32> to vector<8x128xf32>
    %229 = arith.addf %225, %228 : vector<8x128xf32>
    %230 = tpu.concatenate %227, %229 in 0 : vector<8x128xf32>, vector<8x128xf32> -> vector<16x128xf32>
    %231 = vector.extract_strided_slice %230 {offsets = [0, 0], sizes = [16, 32], strides = [1, 1]} : vector<16x128xf32> to vector<16x32xf32>
    %232 = arith.negf %231 : vector<16x32xf32>
    %233 = math.exp %232 : vector<16x32xf32>
    %cst_74 = arith.constant 1.000000e+00 : f32
    %234 = vector.broadcast %cst_74 : f32 to vector<16x32xf32>
    %235 = arith.addf %234, %233 : vector<16x32xf32>
    %236 = arith.divf %234, %235 : vector<16x32xf32>
    %237 = vector.extract_strided_slice %230 {offsets = [0, 32], sizes = [16, 32], strides = [1, 1]} : vector<16x128xf32> to vector<16x32xf32>
    %238 = arith.negf %237 : vector<16x32xf32>
    %239 = math.exp %238 : vector<16x32xf32>
    %cst_75 = arith.constant 1.000000e+00 : f32
    %240 = vector.broadcast %cst_75 : f32 to vector<16x32xf32>
    %241 = arith.addf %240, %239 : vector<16x32xf32>
    %242 = arith.divf %240, %241 : vector<16x32xf32>
    %243 = vector.extract_strided_slice %230 {offsets = [0, 64], sizes = [16, 32], strides = [1, 1]} : vector<16x128xf32> to vector<16x32xf32>
    %244 = math.tanh %243 : vector<16x32xf32>
    %245 = vector.extract_strided_slice %230 {offsets = [0, 96], sizes = [16, 32], strides = [1, 1]} : vector<16x128xf32> to vector<16x32xf32>
    %246 = arith.negf %245 : vector<16x32xf32>
    %247 = math.exp %246 : vector<16x32xf32>
    %cst_76 = arith.constant 1.000000e+00 : f32
    %248 = vector.broadcast %cst_76 : f32 to vector<16x32xf32>
    %249 = arith.addf %248, %247 : vector<16x32xf32>
    %250 = arith.divf %248, %249 : vector<16x32xf32>
    %251 = arith.mulf %242, %202 : vector<16x32xf32>
    %252 = arith.mulf %236, %244 : vector<16x32xf32>
    %253 = arith.addf %251, %252 : vector<16x32xf32>
    %254 = math.tanh %253 : vector<16x32xf32>
    %255 = arith.mulf %250, %254 : vector<16x32xf32>
    %256 = vector.extract_strided_slice %255 {offsets = [0, 0], sizes = [8, 32], strides = [1, 1]} : vector<16x32xf32> to vector<8x32xf32>
    %257 = arith.index_cast %c4_i32 : i32 to index
    %c0_77 = arith.constant 0 : index
    %c0_78 = arith.constant 0 : index
    %258 = vector.load %arg14[%257, %c0_77, %c0_78] : memref<8x8x32xf32, #tpu.memory_space<vmem>>, vector<1x8x32xf32>
    %259 = vector.shape_cast %258 : vector<1x8x32xf32> to vector<8x32xf32>
    %260 = vector.shape_cast %256 : vector<8x32xf32> to vector<1x8x32xf32>
    tpu.vector_store %arg14[%257, %c0_77, %c0_78], %260 {strides = array<i32>} : memref<8x8x32xf32, #tpu.memory_space<vmem>>, vector<1x8x32xf32>,
    %261 = vector.extract_strided_slice %255 {offsets = [8, 0], sizes = [8, 32], strides = [1, 1]} : vector<16x32xf32> to vector<8x32xf32>
    %c7_i32_79 = arith.constant 7 : i32
    %262 = arith.subi %c7_i32_79, %c4_i32 : i32
    %263 = arith.index_cast %262 : i32 to index
    %c0_80 = arith.constant 0 : index
    %c0_81 = arith.constant 0 : index
    %264 = vector.load %arg15[%263, %c0_80, %c0_81] : memref<8x8x32xf32, #tpu.memory_space<vmem>>, vector<1x8x32xf32>
    %265 = vector.shape_cast %264 : vector<1x8x32xf32> to vector<8x32xf32>
    %266 = vector.shape_cast %261 : vector<8x32xf32> to vector<1x8x32xf32>
    tpu.vector_store %arg15[%263, %c0_80, %c0_81], %266 {strides = array<i32>} : memref<8x8x32xf32, #tpu.memory_space<vmem>>, vector<1x8x32xf32>,
    %c5_i32 = arith.constant 5 : i32
    %cst_82 = arith.constant dense<0.000000e+00> : vector<16x256xf32>
    %267 = tpu.matmul %255, %9, %cst_82 {dimension_numbers = #tpu.dot_dimension_numbers<[1], [0], [0], [1], [0, 0, 1, 1], [], []>} : vector<16x32xf32>, vector<32x256xf32>, vector<16x256xf32> -> vector<16x256xf32>
    %268 = arith.index_cast %c5_i32 : i32 to index
    %c0_83 = arith.constant 0 : index
    %c0_84 = arith.constant 0 : index
    %269 = vector.load %arg13[%268, %c0_83, %c0_84] : memref<8x8x256xf32, #tpu.memory_space<vmem>>, vector<1x8x256xf32>
    %270 = vector.shape_cast %269 : vector<1x8x256xf32> to vector<8x256xf32>
    %271 = vector.extract_strided_slice %270 {offsets = [0, 0], sizes = [8, 128], strides = [1, 1]} : vector<8x256xf32> to vector<8x128xf32>
    %c7_i32_85 = arith.constant 7 : i32
    %272 = arith.subi %c7_i32_85, %c5_i32 : i32
    %273 = arith.index_cast %272 : i32 to index
    %c0_86 = arith.constant 0 : index
    %c0_87 = arith.constant 0 : index
    %274 = vector.load %arg13[%273, %c0_86, %c0_87] : memref<8x8x256xf32, #tpu.memory_space<vmem>>, vector<1x8x256xf32>
    %275 = vector.shape_cast %274 : vector<1x8x256xf32> to vector<8x256xf32>
    %276 = vector.extract_strided_slice %275 {offsets = [0, 128], sizes = [8, 128], strides = [1, 1]} : vector<8x256xf32> to vector<8x128xf32>
    %277 = vector.extract_strided_slice %267 {offsets = [0, 0], sizes = [8, 128], strides = [1, 1]} : vector<16x256xf32> to vector<8x128xf32>
    %278 = arith.addf %271, %277 : vector<8x128xf32>
    %279 = vector.extract_strided_slice %267 {offsets = [8, 128], sizes = [8, 128], strides = [1, 1]} : vector<16x256xf32> to vector<8x128xf32>
    %280 = arith.addf %276, %279 : vector<8x128xf32>
    %281 = tpu.concatenate %278, %280 in 0 : vector<8x128xf32>, vector<8x128xf32> -> vector<16x128xf32>
    %282 = vector.extract_strided_slice %281 {offsets = [0, 0], sizes = [16, 32], strides = [1, 1]} : vector<16x128xf32> to vector<16x32xf32>
    %283 = arith.negf %282 : vector<16x32xf32>
    %284 = math.exp %283 : vector<16x32xf32>
    %cst_88 = arith.constant 1.000000e+00 : f32
    %285 = vector.broadcast %cst_88 : f32 to vector<16x32xf32>
    %286 = arith.addf %285, %284 : vector<16x32xf32>
    %287 = arith.divf %285, %286 : vector<16x32xf32>
    %288 = vector.extract_strided_slice %281 {offsets = [0, 32], sizes = [16, 32], strides = [1, 1]} : vector<16x128xf32> to vector<16x32xf32>
    %289 = arith.negf %288 : vector<16x32xf32>
    %290 = math.exp %289 : vector<16x32xf32>
    %cst_89 = arith.constant 1.000000e+00 : f32
    %291 = vector.broadcast %cst_89 : f32 to vector<16x32xf32>
    %292 = arith.addf %291, %290 : vector<16x32xf32>
    %293 = arith.divf %291, %292 : vector<16x32xf32>
    %294 = vector.extract_strided_slice %281 {offsets = [0, 64], sizes = [16, 32], strides = [1, 1]} : vector<16x128xf32> to vector<16x32xf32>
    %295 = math.tanh %294 : vector<16x32xf32>
    %296 = vector.extract_strided_slice %281 {offsets = [0, 96], sizes = [16, 32], strides = [1, 1]} : vector<16x128xf32> to vector<16x32xf32>
    %297 = arith.negf %296 : vector<16x32xf32>
    %298 = math.exp %297 : vector<16x32xf32>
    %cst_90 = arith.constant 1.000000e+00 : f32
    %299 = vector.broadcast %cst_90 : f32 to vector<16x32xf32>
    %300 = arith.addf %299, %298 : vector<16x32xf32>
    %301 = arith.divf %299, %300 : vector<16x32xf32>
    %302 = arith.mulf %293, %253 : vector<16x32xf32>
    %303 = arith.mulf %287, %295 : vector<16x32xf32>
    %304 = arith.addf %302, %303 : vector<16x32xf32>
    %305 = math.tanh %304 : vector<16x32xf32>
    %306 = arith.mulf %301, %305 : vector<16x32xf32>
    %307 = vector.extract_strided_slice %306 {offsets = [0, 0], sizes = [8, 32], strides = [1, 1]} : vector<16x32xf32> to vector<8x32xf32>
    %308 = arith.index_cast %c5_i32 : i32 to index
    %c0_91 = arith.constant 0 : index
    %c0_92 = arith.constant 0 : index
    %309 = vector.load %arg14[%308, %c0_91, %c0_92] : memref<8x8x32xf32, #tpu.memory_space<vmem>>, vector<1x8x32xf32>
    %310 = vector.shape_cast %309 : vector<1x8x32xf32> to vector<8x32xf32>
    %311 = vector.shape_cast %307 : vector<8x32xf32> to vector<1x8x32xf32>
    tpu.vector_store %arg14[%308, %c0_91, %c0_92], %311 {strides = array<i32>} : memref<8x8x32xf32, #tpu.memory_space<vmem>>, vector<1x8x32xf32>,
    %312 = vector.extract_strided_slice %306 {offsets = [8, 0], sizes = [8, 32], strides = [1, 1]} : vector<16x32xf32> to vector<8x32xf32>
    %c7_i32_93 = arith.constant 7 : i32
    %313 = arith.subi %c7_i32_93, %c5_i32 : i32
    %314 = arith.index_cast %313 : i32 to index
    %c0_94 = arith.constant 0 : index
    %c0_95 = arith.constant 0 : index
    %315 = vector.load %arg15[%314, %c0_94, %c0_95] : memref<8x8x32xf32, #tpu.memory_space<vmem>>, vector<1x8x32xf32>
    %316 = vector.shape_cast %315 : vector<1x8x32xf32> to vector<8x32xf32>
    %317 = vector.shape_cast %312 : vector<8x32xf32> to vector<1x8x32xf32>
    tpu.vector_store %arg15[%314, %c0_94, %c0_95], %317 {strides = array<i32>} : memref<8x8x32xf32, #tpu.memory_space<vmem>>, vector<1x8x32xf32>,
    %c6_i32 = arith.constant 6 : i32
    %cst_96 = arith.constant dense<0.000000e+00> : vector<16x256xf32>
    %318 = tpu.matmul %306, %9, %cst_96 {dimension_numbers = #tpu.dot_dimension_numbers<[1], [0], [0], [1], [0, 0, 1, 1], [], []>} : vector<16x32xf32>, vector<32x256xf32>, vector<16x256xf32> -> vector<16x256xf32>
    %319 = arith.index_cast %c6_i32 : i32 to index
    %c0_97 = arith.constant 0 : index
    %c0_98 = arith.constant 0 : index
    %320 = vector.load %arg13[%319, %c0_97, %c0_98] : memref<8x8x256xf32, #tpu.memory_space<vmem>>, vector<1x8x256xf32>
    %321 = vector.shape_cast %320 : vector<1x8x256xf32> to vector<8x256xf32>
    %322 = vector.extract_strided_slice %321 {offsets = [0, 0], sizes = [8, 128], strides = [1, 1]} : vector<8x256xf32> to vector<8x128xf32>
    %c7_i32_99 = arith.constant 7 : i32
    %323 = arith.subi %c7_i32_99, %c6_i32 : i32
    %324 = arith.index_cast %323 : i32 to index
    %c0_100 = arith.constant 0 : index
    %c0_101 = arith.constant 0 : index
    %325 = vector.load %arg13[%324, %c0_100, %c0_101] : memref<8x8x256xf32, #tpu.memory_space<vmem>>, vector<1x8x256xf32>
    %326 = vector.shape_cast %325 : vector<1x8x256xf32> to vector<8x256xf32>
    %327 = vector.extract_strided_slice %326 {offsets = [0, 128], sizes = [8, 128], strides = [1, 1]} : vector<8x256xf32> to vector<8x128xf32>
    %328 = vector.extract_strided_slice %318 {offsets = [0, 0], sizes = [8, 128], strides = [1, 1]} : vector<16x256xf32> to vector<8x128xf32>
    %329 = arith.addf %322, %328 : vector<8x128xf32>
    %330 = vector.extract_strided_slice %318 {offsets = [8, 128], sizes = [8, 128], strides = [1, 1]} : vector<16x256xf32> to vector<8x128xf32>
    %331 = arith.addf %327, %330 : vector<8x128xf32>
    %332 = tpu.concatenate %329, %331 in 0 : vector<8x128xf32>, vector<8x128xf32> -> vector<16x128xf32>
    %333 = vector.extract_strided_slice %332 {offsets = [0, 0], sizes = [16, 32], strides = [1, 1]} : vector<16x128xf32> to vector<16x32xf32>
    %334 = arith.negf %333 : vector<16x32xf32>
    %335 = math.exp %334 : vector<16x32xf32>
    %cst_102 = arith.constant 1.000000e+00 : f32
    %336 = vector.broadcast %cst_102 : f32 to vector<16x32xf32>
    %337 = arith.addf %336, %335 : vector<16x32xf32>
    %338 = arith.divf %336, %337 : vector<16x32xf32>
    %339 = vector.extract_strided_slice %332 {offsets = [0, 32], sizes = [16, 32], strides = [1, 1]} : vector<16x128xf32> to vector<16x32xf32>
    %340 = arith.negf %339 : vector<16x32xf32>
    %341 = math.exp %340 : vector<16x32xf32>
    %cst_103 = arith.constant 1.000000e+00 : f32
    %342 = vector.broadcast %cst_103 : f32 to vector<16x32xf32>
    %343 = arith.addf %342, %341 : vector<16x32xf32>
    %344 = arith.divf %342, %343 : vector<16x32xf32>
    %345 = vector.extract_strided_slice %332 {offsets = [0, 64], sizes = [16, 32], strides = [1, 1]} : vector<16x128xf32> to vector<16x32xf32>
    %346 = math.tanh %345 : vector<16x32xf32>
    %347 = vector.extract_strided_slice %332 {offsets = [0, 96], sizes = [16, 32], strides = [1, 1]} : vector<16x128xf32> to vector<16x32xf32>
    %348 = arith.negf %347 : vector<16x32xf32>
    %349 = math.exp %348 : vector<16x32xf32>
    %cst_104 = arith.constant 1.000000e+00 : f32
    %350 = vector.broadcast %cst_104 : f32 to vector<16x32xf32>
    %351 = arith.addf %350, %349 : vector<16x32xf32>
    %352 = arith.divf %350, %351 : vector<16x32xf32>
    %353 = arith.mulf %344, %304 : vector<16x32xf32>
    %354 = arith.mulf %338, %346 : vector<16x32xf32>
    %355 = arith.addf %353, %354 : vector<16x32xf32>
    %356 = math.tanh %355 : vector<16x32xf32>
    %357 = arith.mulf %352, %356 : vector<16x32xf32>
    %358 = vector.extract_strided_slice %357 {offsets = [0, 0], sizes = [8, 32], strides = [1, 1]} : vector<16x32xf32> to vector<8x32xf32>
    %359 = arith.index_cast %c6_i32 : i32 to index
    %c0_105 = arith.constant 0 : index
    %c0_106 = arith.constant 0 : index
    %360 = vector.load %arg14[%359, %c0_105, %c0_106] : memref<8x8x32xf32, #tpu.memory_space<vmem>>, vector<1x8x32xf32>
    %361 = vector.shape_cast %360 : vector<1x8x32xf32> to vector<8x32xf32>
    %362 = vector.shape_cast %358 : vector<8x32xf32> to vector<1x8x32xf32>
    tpu.vector_store %arg14[%359, %c0_105, %c0_106], %362 {strides = array<i32>} : memref<8x8x32xf32, #tpu.memory_space<vmem>>, vector<1x8x32xf32>,
    %363 = vector.extract_strided_slice %357 {offsets = [8, 0], sizes = [8, 32], strides = [1, 1]} : vector<16x32xf32> to vector<8x32xf32>
    %c7_i32_107 = arith.constant 7 : i32
    %364 = arith.subi %c7_i32_107, %c6_i32 : i32
    %365 = arith.index_cast %364 : i32 to index
    %c0_108 = arith.constant 0 : index
    %c0_109 = arith.constant 0 : index
    %366 = vector.load %arg15[%365, %c0_108, %c0_109] : memref<8x8x32xf32, #tpu.memory_space<vmem>>, vector<1x8x32xf32>
    %367 = vector.shape_cast %366 : vector<1x8x32xf32> to vector<8x32xf32>
    %368 = vector.shape_cast %363 : vector<8x32xf32> to vector<1x8x32xf32>
    tpu.vector_store %arg15[%365, %c0_108, %c0_109], %368 {strides = array<i32>} : memref<8x8x32xf32, #tpu.memory_space<vmem>>, vector<1x8x32xf32>,
    %c7_i32_110 = arith.constant 7 : i32
    %cst_111 = arith.constant dense<0.000000e+00> : vector<16x256xf32>
    %369 = tpu.matmul %357, %9, %cst_111 {dimension_numbers = #tpu.dot_dimension_numbers<[1], [0], [0], [1], [0, 0, 1, 1], [], []>} : vector<16x32xf32>, vector<32x256xf32>, vector<16x256xf32> -> vector<16x256xf32>
    %370 = arith.index_cast %c7_i32_110 : i32 to index
    %c0_112 = arith.constant 0 : index
    %c0_113 = arith.constant 0 : index
    %371 = vector.load %arg13[%370, %c0_112, %c0_113] : memref<8x8x256xf32, #tpu.memory_space<vmem>>, vector<1x8x256xf32>
    %372 = vector.shape_cast %371 : vector<1x8x256xf32> to vector<8x256xf32>
    %373 = vector.extract_strided_slice %372 {offsets = [0, 0], sizes = [8, 128], strides = [1, 1]} : vector<8x256xf32> to vector<8x128xf32>
    %c7_i32_114 = arith.constant 7 : i32
    %374 = arith.subi %c7_i32_114, %c7_i32_110 : i32
    %375 = arith.index_cast %374 : i32 to index
    %c0_115 = arith.constant 0 : index
    %c0_116 = arith.constant 0 : index
    %376 = vector.load %arg13[%375, %c0_115, %c0_116] : memref<8x8x256xf32, #tpu.memory_space<vmem>>, vector<1x8x256xf32>
    %377 = vector.shape_cast %376 : vector<1x8x256xf32> to vector<8x256xf32>
    %378 = vector.extract_strided_slice %377 {offsets = [0, 128], sizes = [8, 128], strides = [1, 1]} : vector<8x256xf32> to vector<8x128xf32>
    %379 = vector.extract_strided_slice %369 {offsets = [0, 0], sizes = [8, 128], strides = [1, 1]} : vector<16x256xf32> to vector<8x128xf32>
    %380 = arith.addf %373, %379 : vector<8x128xf32>
    %381 = vector.extract_strided_slice %369 {offsets = [8, 128], sizes = [8, 128], strides = [1, 1]} : vector<16x256xf32> to vector<8x128xf32>
    %382 = arith.addf %378, %381 : vector<8x128xf32>
    %383 = tpu.concatenate %380, %382 in 0 : vector<8x128xf32>, vector<8x128xf32> -> vector<16x128xf32>
    %384 = vector.extract_strided_slice %383 {offsets = [0, 0], sizes = [16, 32], strides = [1, 1]} : vector<16x128xf32> to vector<16x32xf32>
    %385 = arith.negf %384 : vector<16x32xf32>
    %386 = math.exp %385 : vector<16x32xf32>
    %cst_117 = arith.constant 1.000000e+00 : f32
    %387 = vector.broadcast %cst_117 : f32 to vector<16x32xf32>
    %388 = arith.addf %387, %386 : vector<16x32xf32>
    %389 = arith.divf %387, %388 : vector<16x32xf32>
    %390 = vector.extract_strided_slice %383 {offsets = [0, 32], sizes = [16, 32], strides = [1, 1]} : vector<16x128xf32> to vector<16x32xf32>
    %391 = arith.negf %390 : vector<16x32xf32>
    %392 = math.exp %391 : vector<16x32xf32>
    %cst_118 = arith.constant 1.000000e+00 : f32
    %393 = vector.broadcast %cst_118 : f32 to vector<16x32xf32>
    %394 = arith.addf %393, %392 : vector<16x32xf32>
    %395 = arith.divf %393, %394 : vector<16x32xf32>
    %396 = vector.extract_strided_slice %383 {offsets = [0, 64], sizes = [16, 32], strides = [1, 1]} : vector<16x128xf32> to vector<16x32xf32>
    %397 = math.tanh %396 : vector<16x32xf32>
    %398 = vector.extract_strided_slice %383 {offsets = [0, 96], sizes = [16, 32], strides = [1, 1]} : vector<16x128xf32> to vector<16x32xf32>
    %399 = arith.negf %398 : vector<16x32xf32>
    %400 = math.exp %399 : vector<16x32xf32>
    %cst_119 = arith.constant 1.000000e+00 : f32
    %401 = vector.broadcast %cst_119 : f32 to vector<16x32xf32>
    %402 = arith.addf %401, %400 : vector<16x32xf32>
    %403 = arith.divf %401, %402 : vector<16x32xf32>
    %404 = arith.mulf %395, %355 : vector<16x32xf32>
    %405 = arith.mulf %389, %397 : vector<16x32xf32>
    %406 = arith.addf %404, %405 : vector<16x32xf32>
    %407 = math.tanh %406 : vector<16x32xf32>
    %408 = arith.mulf %403, %407 : vector<16x32xf32>
    %409 = vector.extract_strided_slice %408 {offsets = [0, 0], sizes = [8, 32], strides = [1, 1]} : vector<16x32xf32> to vector<8x32xf32>
    %410 = arith.index_cast %c7_i32_110 : i32 to index
    %c0_120 = arith.constant 0 : index
    %c0_121 = arith.constant 0 : index
    %411 = vector.load %arg14[%410, %c0_120, %c0_121] : memref<8x8x32xf32, #tpu.memory_space<vmem>>, vector<1x8x32xf32>
    %412 = vector.shape_cast %411 : vector<1x8x32xf32> to vector<8x32xf32>
    %413 = vector.shape_cast %409 : vector<8x32xf32> to vector<1x8x32xf32>
    tpu.vector_store %arg14[%410, %c0_120, %c0_121], %413 {strides = array<i32>} : memref<8x8x32xf32, #tpu.memory_space<vmem>>, vector<1x8x32xf32>,
    %414 = vector.extract_strided_slice %408 {offsets = [8, 0], sizes = [8, 32], strides = [1, 1]} : vector<16x32xf32> to vector<8x32xf32>
    %c7_i32_122 = arith.constant 7 : i32
    %415 = arith.subi %c7_i32_122, %c7_i32_110 : i32
    %416 = arith.index_cast %415 : i32 to index
    %c0_123 = arith.constant 0 : index
    %c0_124 = arith.constant 0 : index
    %417 = vector.load %arg15[%416, %c0_123, %c0_124] : memref<8x8x32xf32, #tpu.memory_space<vmem>>, vector<1x8x32xf32>
    %418 = vector.shape_cast %417 : vector<1x8x32xf32> to vector<8x32xf32>
    %419 = vector.shape_cast %414 : vector<8x32xf32> to vector<1x8x32xf32>
    tpu.vector_store %arg15[%416, %c0_123, %c0_124], %419 {strides = array<i32>} : memref<8x8x32xf32, #tpu.memory_space<vmem>>, vector<1x8x32xf32>,
    %c8_i32 = arith.constant 8 : i32
    %c0_125 = arith.constant 0 : index
    %c0_126 = arith.constant 0 : index
    %420 = vector.load %arg4[%c0_125, %c0_126] : memref<64x256xf32, #tpu.memory_space<vmem>>, vector<64x256xf32>
    %c0_127 = arith.constant 0 : index
    %c0_128 = arith.constant 0 : index
    %c0_129 = arith.constant 0 : index
    %421 = vector.load %arg14[%c0_127, %c0_128, %c0_129] : memref<8x8x32xf32, #tpu.memory_space<vmem>>, vector<8x8x32xf32>
    %422 = vector.shape_cast %421 : vector<8x8x32xf32> to vector<64x32xf32>
    %c0_130 = arith.constant 0 : index
    %c0_131 = arith.constant 0 : index
    %c0_132 = arith.constant 0 : index
    %423 = vector.load %arg15[%c0_130, %c0_131, %c0_132] : memref<8x8x32xf32, #tpu.memory_space<vmem>>, vector<8x8x32xf32>
    %424 = vector.shape_cast %423 : vector<8x8x32xf32> to vector<64x32xf32>
    %425 = vector.extract_strided_slice %420 {offsets = [0, 0], sizes = [32, 256], strides = [1, 1]} : vector<64x256xf32> to vector<32x256xf32>
    %cst_133 = arith.constant dense<0.000000e+00> : vector<64x256xf32>
    %426 = tpu.matmul %422, %425, %cst_133 {dimension_numbers = #tpu.dot_dimension_numbers<[1], [0], [0], [1], [0, 0, 1, 1], [], []>} : vector<64x32xf32>, vector<32x256xf32>, vector<64x256xf32> -> vector<64x256xf32>
    %427 = vector.extract_strided_slice %420 {offsets = [32, 0], sizes = [32, 256], strides = [1, 1]} : vector<64x256xf32> to vector<32x256xf32>
    %cst_134 = arith.constant dense<0.000000e+00> : vector<64x256xf32>
    %428 = tpu.matmul %424, %427, %cst_134 {dimension_numbers = #tpu.dot_dimension_numbers<[1], [0], [0], [1], [0, 0, 1, 1], [], []>} : vector<64x32xf32>, vector<32x256xf32>, vector<64x256xf32> -> vector<64x256xf32>
    %429 = arith.addf %426, %428 : vector<64x256xf32>
    %c0_135 = arith.constant 0 : index
    %c0_136 = arith.constant 0 : index
    %430 = vector.load %arg6[%c0_135, %c0_136] : memref<1x256xf32, #tpu.memory_space<vmem>>, vector<1x256xf32>
    %431 = vector.broadcast %430 : vector<1x256xf32> to vector<64x256xf32>
    %432 = arith.addf %429, %431 : vector<64x256xf32>
    %433 = vector.shape_cast %432 : vector<64x256xf32> to vector<8x8x256xf32>
    %c0_137 = arith.constant 0 : index
    %c0_138 = arith.constant 0 : index
    %c0_139 = arith.constant 0 : index
    %434 = vector.load %arg13[%c0_137, %c0_138, %c0_139] : memref<8x8x256xf32, #tpu.memory_space<vmem>>, vector<8x8x256xf32>
    tpu.vector_store %arg13[%c0_137, %c0_138, %c0_139], %433 {strides = array<i32>} : memref<8x8x256xf32, #tpu.memory_space<vmem>>, vector<8x8x256xf32>,
    %c0_140 = arith.constant 0 : index
    %c0_141 = arith.constant 0 : index
    %435 = vector.load %arg5[%c0_140, %c0_141] : memref<32x256xf32, #tpu.memory_space<vmem>>, vector<32x256xf32>
    %cst_142 = arith.constant 0.000000e+00 : f32
    %436 = vector.broadcast %cst_142 : f32 to vector<16x32xf32>
    %cst_143 = arith.constant 0.000000e+00 : f32
    %437 = vector.broadcast %cst_143 : f32 to vector<16x32xf32>
    %c0_i32_144 = arith.constant 0 : i32
    %cst_145 = arith.constant dense<0.000000e+00> : vector<16x256xf32>
    %438 = tpu.matmul %436, %435, %cst_145 {dimension_numbers = #tpu.dot_dimension_numbers<[1], [0], [0], [1], [0, 0, 1, 1], [], []>} : vector<16x32xf32>, vector<32x256xf32>, vector<16x256xf32> -> vector<16x256xf32>
    %439 = arith.index_cast %c0_i32_144 : i32 to index
    %c0_146 = arith.constant 0 : index
    %c0_147 = arith.constant 0 : index
    %440 = vector.load %arg13[%439, %c0_146, %c0_147] : memref<8x8x256xf32, #tpu.memory_space<vmem>>, vector<1x8x256xf32>
    %441 = vector.shape_cast %440 : vector<1x8x256xf32> to vector<8x256xf32>
    %442 = vector.extract_strided_slice %441 {offsets = [0, 0], sizes = [8, 128], strides = [1, 1]} : vector<8x256xf32> to vector<8x128xf32>
    %c7_i32_148 = arith.constant 7 : i32
    %443 = arith.subi %c7_i32_148, %c0_i32_144 : i32
    %444 = arith.index_cast %443 : i32 to index
    %c0_149 = arith.constant 0 : index
    %c0_150 = arith.constant 0 : index
    %445 = vector.load %arg13[%444, %c0_149, %c0_150] : memref<8x8x256xf32, #tpu.memory_space<vmem>>, vector<1x8x256xf32>
    %446 = vector.shape_cast %445 : vector<1x8x256xf32> to vector<8x256xf32>
    %447 = vector.extract_strided_slice %446 {offsets = [0, 128], sizes = [8, 128], strides = [1, 1]} : vector<8x256xf32> to vector<8x128xf32>
    %448 = vector.extract_strided_slice %438 {offsets = [0, 0], sizes = [8, 128], strides = [1, 1]} : vector<16x256xf32> to vector<8x128xf32>
    %449 = arith.addf %442, %448 : vector<8x128xf32>
    %450 = vector.extract_strided_slice %438 {offsets = [8, 128], sizes = [8, 128], strides = [1, 1]} : vector<16x256xf32> to vector<8x128xf32>
    %451 = arith.addf %447, %450 : vector<8x128xf32>
    %452 = tpu.concatenate %449, %451 in 0 : vector<8x128xf32>, vector<8x128xf32> -> vector<16x128xf32>
    %453 = vector.extract_strided_slice %452 {offsets = [0, 0], sizes = [16, 32], strides = [1, 1]} : vector<16x128xf32> to vector<16x32xf32>
    %454 = arith.negf %453 : vector<16x32xf32>
    %455 = math.exp %454 : vector<16x32xf32>
    %cst_151 = arith.constant 1.000000e+00 : f32
    %456 = vector.broadcast %cst_151 : f32 to vector<16x32xf32>
    %457 = arith.addf %456, %455 : vector<16x32xf32>
    %458 = arith.divf %456, %457 : vector<16x32xf32>
    %459 = vector.extract_strided_slice %452 {offsets = [0, 32], sizes = [16, 32], strides = [1, 1]} : vector<16x128xf32> to vector<16x32xf32>
    %460 = arith.negf %459 : vector<16x32xf32>
    %461 = math.exp %460 : vector<16x32xf32>
    %cst_152 = arith.constant 1.000000e+00 : f32
    %462 = vector.broadcast %cst_152 : f32 to vector<16x32xf32>
    %463 = arith.addf %462, %461 : vector<16x32xf32>
    %464 = arith.divf %462, %463 : vector<16x32xf32>
    %465 = vector.extract_strided_slice %452 {offsets = [0, 64], sizes = [16, 32], strides = [1, 1]} : vector<16x128xf32> to vector<16x32xf32>
    %466 = math.tanh %465 : vector<16x32xf32>
    %467 = vector.extract_strided_slice %452 {offsets = [0, 96], sizes = [16, 32], strides = [1, 1]} : vector<16x128xf32> to vector<16x32xf32>
    %468 = arith.negf %467 : vector<16x32xf32>
    %469 = math.exp %468 : vector<16x32xf32>
    %cst_153 = arith.constant 1.000000e+00 : f32
    %470 = vector.broadcast %cst_153 : f32 to vector<16x32xf32>
    %471 = arith.addf %470, %469 : vector<16x32xf32>
    %472 = arith.divf %470, %471 : vector<16x32xf32>
    %473 = arith.mulf %464, %437 : vector<16x32xf32>
    %474 = arith.mulf %458, %466 : vector<16x32xf32>
    %475 = arith.addf %473, %474 : vector<16x32xf32>
    %476 = math.tanh %475 : vector<16x32xf32>
    %477 = arith.mulf %472, %476 : vector<16x32xf32>
    %478 = vector.extract_strided_slice %477 {offsets = [0, 0], sizes = [8, 32], strides = [1, 1]} : vector<16x32xf32> to vector<8x32xf32>
    %479 = arith.index_cast %c0_i32_144 : i32 to index
    %c0_154 = arith.constant 0 : index
    %c0_155 = arith.constant 0 : index
    %480 = vector.load %arg14[%479, %c0_154, %c0_155] : memref<8x8x32xf32, #tpu.memory_space<vmem>>, vector<1x8x32xf32>
    %481 = vector.shape_cast %480 : vector<1x8x32xf32> to vector<8x32xf32>
    %482 = vector.shape_cast %478 : vector<8x32xf32> to vector<1x8x32xf32>
    tpu.vector_store %arg14[%479, %c0_154, %c0_155], %482 {strides = array<i32>} : memref<8x8x32xf32, #tpu.memory_space<vmem>>, vector<1x8x32xf32>,
    %483 = vector.extract_strided_slice %477 {offsets = [8, 0], sizes = [8, 32], strides = [1, 1]} : vector<16x32xf32> to vector<8x32xf32>
    %c7_i32_156 = arith.constant 7 : i32
    %484 = arith.subi %c7_i32_156, %c0_i32_144 : i32
    %485 = arith.index_cast %484 : i32 to index
    %c0_157 = arith.constant 0 : index
    %c0_158 = arith.constant 0 : index
    %486 = vector.load %arg15[%485, %c0_157, %c0_158] : memref<8x8x32xf32, #tpu.memory_space<vmem>>, vector<1x8x32xf32>
    %487 = vector.shape_cast %486 : vector<1x8x32xf32> to vector<8x32xf32>
    %488 = vector.shape_cast %483 : vector<8x32xf32> to vector<1x8x32xf32>
    tpu.vector_store %arg15[%485, %c0_157, %c0_158], %488 {strides = array<i32>} : memref<8x8x32xf32, #tpu.memory_space<vmem>>, vector<1x8x32xf32>,
    %c1_i32_159 = arith.constant 1 : i32
    %cst_160 = arith.constant dense<0.000000e+00> : vector<16x256xf32>
    %489 = tpu.matmul %477, %435, %cst_160 {dimension_numbers = #tpu.dot_dimension_numbers<[1], [0], [0], [1], [0, 0, 1, 1], [], []>} : vector<16x32xf32>, vector<32x256xf32>, vector<16x256xf32> -> vector<16x256xf32>
    %490 = arith.index_cast %c1_i32_159 : i32 to index
    %c0_161 = arith.constant 0 : index
    %c0_162 = arith.constant 0 : index
    %491 = vector.load %arg13[%490, %c0_161, %c0_162] : memref<8x8x256xf32, #tpu.memory_space<vmem>>, vector<1x8x256xf32>
    %492 = vector.shape_cast %491 : vector<1x8x256xf32> to vector<8x256xf32>
    %493 = vector.extract_strided_slice %492 {offsets = [0, 0], sizes = [8, 128], strides = [1, 1]} : vector<8x256xf32> to vector<8x128xf32>
    %c7_i32_163 = arith.constant 7 : i32
    %494 = arith.subi %c7_i32_163, %c1_i32_159 : i32
    %495 = arith.index_cast %494 : i32 to index
    %c0_164 = arith.constant 0 : index
    %c0_165 = arith.constant 0 : index
    %496 = vector.load %arg13[%495, %c0_164, %c0_165] : memref<8x8x256xf32, #tpu.memory_space<vmem>>, vector<1x8x256xf32>
    %497 = vector.shape_cast %496 : vector<1x8x256xf32> to vector<8x256xf32>
    %498 = vector.extract_strided_slice %497 {offsets = [0, 128], sizes = [8, 128], strides = [1, 1]} : vector<8x256xf32> to vector<8x128xf32>
    %499 = vector.extract_strided_slice %489 {offsets = [0, 0], sizes = [8, 128], strides = [1, 1]} : vector<16x256xf32> to vector<8x128xf32>
    %500 = arith.addf %493, %499 : vector<8x128xf32>
    %501 = vector.extract_strided_slice %489 {offsets = [8, 128], sizes = [8, 128], strides = [1, 1]} : vector<16x256xf32> to vector<8x128xf32>
    %502 = arith.addf %498, %501 : vector<8x128xf32>
    %503 = tpu.concatenate %500, %502 in 0 : vector<8x128xf32>, vector<8x128xf32> -> vector<16x128xf32>
    %504 = vector.extract_strided_slice %503 {offsets = [0, 0], sizes = [16, 32], strides = [1, 1]} : vector<16x128xf32> to vector<16x32xf32>
    %505 = arith.negf %504 : vector<16x32xf32>
    %506 = math.exp %505 : vector<16x32xf32>
    %cst_166 = arith.constant 1.000000e+00 : f32
    %507 = vector.broadcast %cst_166 : f32 to vector<16x32xf32>
    %508 = arith.addf %507, %506 : vector<16x32xf32>
    %509 = arith.divf %507, %508 : vector<16x32xf32>
    %510 = vector.extract_strided_slice %503 {offsets = [0, 32], sizes = [16, 32], strides = [1, 1]} : vector<16x128xf32> to vector<16x32xf32>
    %511 = arith.negf %510 : vector<16x32xf32>
    %512 = math.exp %511 : vector<16x32xf32>
    %cst_167 = arith.constant 1.000000e+00 : f32
    %513 = vector.broadcast %cst_167 : f32 to vector<16x32xf32>
    %514 = arith.addf %513, %512 : vector<16x32xf32>
    %515 = arith.divf %513, %514 : vector<16x32xf32>
    %516 = vector.extract_strided_slice %503 {offsets = [0, 64], sizes = [16, 32], strides = [1, 1]} : vector<16x128xf32> to vector<16x32xf32>
    %517 = math.tanh %516 : vector<16x32xf32>
    %518 = vector.extract_strided_slice %503 {offsets = [0, 96], sizes = [16, 32], strides = [1, 1]} : vector<16x128xf32> to vector<16x32xf32>
    %519 = arith.negf %518 : vector<16x32xf32>
    %520 = math.exp %519 : vector<16x32xf32>
    %cst_168 = arith.constant 1.000000e+00 : f32
    %521 = vector.broadcast %cst_168 : f32 to vector<16x32xf32>
    %522 = arith.addf %521, %520 : vector<16x32xf32>
    %523 = arith.divf %521, %522 : vector<16x32xf32>
    %524 = arith.mulf %515, %475 : vector<16x32xf32>
    %525 = arith.mulf %509, %517 : vector<16x32xf32>
    %526 = arith.addf %524, %525 : vector<16x32xf32>
    %527 = math.tanh %526 : vector<16x32xf32>
    %528 = arith.mulf %523, %527 : vector<16x32xf32>
    %529 = vector.extract_strided_slice %528 {offsets = [0, 0], sizes = [8, 32], strides = [1, 1]} : vector<16x32xf32> to vector<8x32xf32>
    %530 = arith.index_cast %c1_i32_159 : i32 to index
    %c0_169 = arith.constant 0 : index
    %c0_170 = arith.constant 0 : index
    %531 = vector.load %arg14[%530, %c0_169, %c0_170] : memref<8x8x32xf32, #tpu.memory_space<vmem>>, vector<1x8x32xf32>
    %532 = vector.shape_cast %531 : vector<1x8x32xf32> to vector<8x32xf32>
    %533 = vector.shape_cast %529 : vector<8x32xf32> to vector<1x8x32xf32>
    tpu.vector_store %arg14[%530, %c0_169, %c0_170], %533 {strides = array<i32>} : memref<8x8x32xf32, #tpu.memory_space<vmem>>, vector<1x8x32xf32>,
    %534 = vector.extract_strided_slice %528 {offsets = [8, 0], sizes = [8, 32], strides = [1, 1]} : vector<16x32xf32> to vector<8x32xf32>
    %c7_i32_171 = arith.constant 7 : i32
    %535 = arith.subi %c7_i32_171, %c1_i32_159 : i32
    %536 = arith.index_cast %535 : i32 to index
    %c0_172 = arith.constant 0 : index
    %c0_173 = arith.constant 0 : index
    %537 = vector.load %arg15[%536, %c0_172, %c0_173] : memref<8x8x32xf32, #tpu.memory_space<vmem>>, vector<1x8x32xf32>
    %538 = vector.shape_cast %537 : vector<1x8x32xf32> to vector<8x32xf32>
    %539 = vector.shape_cast %534 : vector<8x32xf32> to vector<1x8x32xf32>
    tpu.vector_store %arg15[%536, %c0_172, %c0_173], %539 {strides = array<i32>} : memref<8x8x32xf32, #tpu.memory_space<vmem>>, vector<1x8x32xf32>,
    %c2_i32_174 = arith.constant 2 : i32
    %cst_175 = arith.constant dense<0.000000e+00> : vector<16x256xf32>
    %540 = tpu.matmul %528, %435, %cst_175 {dimension_numbers = #tpu.dot_dimension_numbers<[1], [0], [0], [1], [0, 0, 1, 1], [], []>} : vector<16x32xf32>, vector<32x256xf32>, vector<16x256xf32> -> vector<16x256xf32>
    %541 = arith.index_cast %c2_i32_174 : i32 to index
    %c0_176 = arith.constant 0 : index
    %c0_177 = arith.constant 0 : index
    %542 = vector.load %arg13[%541, %c0_176, %c0_177] : memref<8x8x256xf32, #tpu.memory_space<vmem>>, vector<1x8x256xf32>
    %543 = vector.shape_cast %542 : vector<1x8x256xf32> to vector<8x256xf32>
    %544 = vector.extract_strided_slice %543 {offsets = [0, 0], sizes = [8, 128], strides = [1, 1]} : vector<8x256xf32> to vector<8x128xf32>
    %c7_i32_178 = arith.constant 7 : i32
    %545 = arith.subi %c7_i32_178, %c2_i32_174 : i32
    %546 = arith.index_cast %545 : i32 to index
    %c0_179 = arith.constant 0 : index
    %c0_180 = arith.constant 0 : index
    %547 = vector.load %arg13[%546, %c0_179, %c0_180] : memref<8x8x256xf32, #tpu.memory_space<vmem>>, vector<1x8x256xf32>
    %548 = vector.shape_cast %547 : vector<1x8x256xf32> to vector<8x256xf32>
    %549 = vector.extract_strided_slice %548 {offsets = [0, 128], sizes = [8, 128], strides = [1, 1]} : vector<8x256xf32> to vector<8x128xf32>
    %550 = vector.extract_strided_slice %540 {offsets = [0, 0], sizes = [8, 128], strides = [1, 1]} : vector<16x256xf32> to vector<8x128xf32>
    %551 = arith.addf %544, %550 : vector<8x128xf32>
    %552 = vector.extract_strided_slice %540 {offsets = [8, 128], sizes = [8, 128], strides = [1, 1]} : vector<16x256xf32> to vector<8x128xf32>
    %553 = arith.addf %549, %552 : vector<8x128xf32>
    %554 = tpu.concatenate %551, %553 in 0 : vector<8x128xf32>, vector<8x128xf32> -> vector<16x128xf32>
    %555 = vector.extract_strided_slice %554 {offsets = [0, 0], sizes = [16, 32], strides = [1, 1]} : vector<16x128xf32> to vector<16x32xf32>
    %556 = arith.negf %555 : vector<16x32xf32>
    %557 = math.exp %556 : vector<16x32xf32>
    %cst_181 = arith.constant 1.000000e+00 : f32
    %558 = vector.broadcast %cst_181 : f32 to vector<16x32xf32>
    %559 = arith.addf %558, %557 : vector<16x32xf32>
    %560 = arith.divf %558, %559 : vector<16x32xf32>
    %561 = vector.extract_strided_slice %554 {offsets = [0, 32], sizes = [16, 32], strides = [1, 1]} : vector<16x128xf32> to vector<16x32xf32>
    %562 = arith.negf %561 : vector<16x32xf32>
    %563 = math.exp %562 : vector<16x32xf32>
    %cst_182 = arith.constant 1.000000e+00 : f32
    %564 = vector.broadcast %cst_182 : f32 to vector<16x32xf32>
    %565 = arith.addf %564, %563 : vector<16x32xf32>
    %566 = arith.divf %564, %565 : vector<16x32xf32>
    %567 = vector.extract_strided_slice %554 {offsets = [0, 64], sizes = [16, 32], strides = [1, 1]} : vector<16x128xf32> to vector<16x32xf32>
    %568 = math.tanh %567 : vector<16x32xf32>
    %569 = vector.extract_strided_slice %554 {offsets = [0, 96], sizes = [16, 32], strides = [1, 1]} : vector<16x128xf32> to vector<16x32xf32>
    %570 = arith.negf %569 : vector<16x32xf32>
    %571 = math.exp %570 : vector<16x32xf32>
    %cst_183 = arith.constant 1.000000e+00 : f32
    %572 = vector.broadcast %cst_183 : f32 to vector<16x32xf32>
    %573 = arith.addf %572, %571 : vector<16x32xf32>
    %574 = arith.divf %572, %573 : vector<16x32xf32>
    %575 = arith.mulf %566, %526 : vector<16x32xf32>
    %576 = arith.mulf %560, %568 : vector<16x32xf32>
    %577 = arith.addf %575, %576 : vector<16x32xf32>
    %578 = math.tanh %577 : vector<16x32xf32>
    %579 = arith.mulf %574, %578 : vector<16x32xf32>
    %580 = vector.extract_strided_slice %579 {offsets = [0, 0], sizes = [8, 32], strides = [1, 1]} : vector<16x32xf32> to vector<8x32xf32>
    %581 = arith.index_cast %c2_i32_174 : i32 to index
    %c0_184 = arith.constant 0 : index
    %c0_185 = arith.constant 0 : index
    %582 = vector.load %arg14[%581, %c0_184, %c0_185] : memref<8x8x32xf32, #tpu.memory_space<vmem>>, vector<1x8x32xf32>
    %583 = vector.shape_cast %582 : vector<1x8x32xf32> to vector<8x32xf32>
    %584 = vector.shape_cast %580 : vector<8x32xf32> to vector<1x8x32xf32>
    tpu.vector_store %arg14[%581, %c0_184, %c0_185], %584 {strides = array<i32>} : memref<8x8x32xf32, #tpu.memory_space<vmem>>, vector<1x8x32xf32>,
    %585 = vector.extract_strided_slice %579 {offsets = [8, 0], sizes = [8, 32], strides = [1, 1]} : vector<16x32xf32> to vector<8x32xf32>
    %c7_i32_186 = arith.constant 7 : i32
    %586 = arith.subi %c7_i32_186, %c2_i32_174 : i32
    %587 = arith.index_cast %586 : i32 to index
    %c0_187 = arith.constant 0 : index
    %c0_188 = arith.constant 0 : index
    %588 = vector.load %arg15[%587, %c0_187, %c0_188] : memref<8x8x32xf32, #tpu.memory_space<vmem>>, vector<1x8x32xf32>
    %589 = vector.shape_cast %588 : vector<1x8x32xf32> to vector<8x32xf32>
    %590 = vector.shape_cast %585 : vector<8x32xf32> to vector<1x8x32xf32>
    tpu.vector_store %arg15[%587, %c0_187, %c0_188], %590 {strides = array<i32>} : memref<8x8x32xf32, #tpu.memory_space<vmem>>, vector<1x8x32xf32>,
    %c3_i32_189 = arith.constant 3 : i32
    %cst_190 = arith.constant dense<0.000000e+00> : vector<16x256xf32>
    %591 = tpu.matmul %579, %435, %cst_190 {dimension_numbers = #tpu.dot_dimension_numbers<[1], [0], [0], [1], [0, 0, 1, 1], [], []>} : vector<16x32xf32>, vector<32x256xf32>, vector<16x256xf32> -> vector<16x256xf32>
    %592 = arith.index_cast %c3_i32_189 : i32 to index
    %c0_191 = arith.constant 0 : index
    %c0_192 = arith.constant 0 : index
    %593 = vector.load %arg13[%592, %c0_191, %c0_192] : memref<8x8x256xf32, #tpu.memory_space<vmem>>, vector<1x8x256xf32>
    %594 = vector.shape_cast %593 : vector<1x8x256xf32> to vector<8x256xf32>
    %595 = vector.extract_strided_slice %594 {offsets = [0, 0], sizes = [8, 128], strides = [1, 1]} : vector<8x256xf32> to vector<8x128xf32>
    %c7_i32_193 = arith.constant 7 : i32
    %596 = arith.subi %c7_i32_193, %c3_i32_189 : i32
    %597 = arith.index_cast %596 : i32 to index
    %c0_194 = arith.constant 0 : index
    %c0_195 = arith.constant 0 : index
    %598 = vector.load %arg13[%597, %c0_194, %c0_195] : memref<8x8x256xf32, #tpu.memory_space<vmem>>, vector<1x8x256xf32>
    %599 = vector.shape_cast %598 : vector<1x8x256xf32> to vector<8x256xf32>
    %600 = vector.extract_strided_slice %599 {offsets = [0, 128], sizes = [8, 128], strides = [1, 1]} : vector<8x256xf32> to vector<8x128xf32>
    %601 = vector.extract_strided_slice %591 {offsets = [0, 0], sizes = [8, 128], strides = [1, 1]} : vector<16x256xf32> to vector<8x128xf32>
    %602 = arith.addf %595, %601 : vector<8x128xf32>
    %603 = vector.extract_strided_slice %591 {offsets = [8, 128], sizes = [8, 128], strides = [1, 1]} : vector<16x256xf32> to vector<8x128xf32>
    %604 = arith.addf %600, %603 : vector<8x128xf32>
    %605 = tpu.concatenate %602, %604 in 0 : vector<8x128xf32>, vector<8x128xf32> -> vector<16x128xf32>
    %606 = vector.extract_strided_slice %605 {offsets = [0, 0], sizes = [16, 32], strides = [1, 1]} : vector<16x128xf32> to vector<16x32xf32>
    %607 = arith.negf %606 : vector<16x32xf32>
    %608 = math.exp %607 : vector<16x32xf32>
    %cst_196 = arith.constant 1.000000e+00 : f32
    %609 = vector.broadcast %cst_196 : f32 to vector<16x32xf32>
    %610 = arith.addf %609, %608 : vector<16x32xf32>
    %611 = arith.divf %609, %610 : vector<16x32xf32>
    %612 = vector.extract_strided_slice %605 {offsets = [0, 32], sizes = [16, 32], strides = [1, 1]} : vector<16x128xf32> to vector<16x32xf32>
    %613 = arith.negf %612 : vector<16x32xf32>
    %614 = math.exp %613 : vector<16x32xf32>
    %cst_197 = arith.constant 1.000000e+00 : f32
    %615 = vector.broadcast %cst_197 : f32 to vector<16x32xf32>
    %616 = arith.addf %615, %614 : vector<16x32xf32>
    %617 = arith.divf %615, %616 : vector<16x32xf32>
    %618 = vector.extract_strided_slice %605 {offsets = [0, 64], sizes = [16, 32], strides = [1, 1]} : vector<16x128xf32> to vector<16x32xf32>
    %619 = math.tanh %618 : vector<16x32xf32>
    %620 = vector.extract_strided_slice %605 {offsets = [0, 96], sizes = [16, 32], strides = [1, 1]} : vector<16x128xf32> to vector<16x32xf32>
    %621 = arith.negf %620 : vector<16x32xf32>
    %622 = math.exp %621 : vector<16x32xf32>
    %cst_198 = arith.constant 1.000000e+00 : f32
    %623 = vector.broadcast %cst_198 : f32 to vector<16x32xf32>
    %624 = arith.addf %623, %622 : vector<16x32xf32>
    %625 = arith.divf %623, %624 : vector<16x32xf32>
    %626 = arith.mulf %617, %577 : vector<16x32xf32>
    %627 = arith.mulf %611, %619 : vector<16x32xf32>
    %628 = arith.addf %626, %627 : vector<16x32xf32>
    %629 = math.tanh %628 : vector<16x32xf32>
    %630 = arith.mulf %625, %629 : vector<16x32xf32>
    %631 = vector.extract_strided_slice %630 {offsets = [0, 0], sizes = [8, 32], strides = [1, 1]} : vector<16x32xf32> to vector<8x32xf32>
    %632 = arith.index_cast %c3_i32_189 : i32 to index
    %c0_199 = arith.constant 0 : index
    %c0_200 = arith.constant 0 : index
    %633 = vector.load %arg14[%632, %c0_199, %c0_200] : memref<8x8x32xf32, #tpu.memory_space<vmem>>, vector<1x8x32xf32>
    %634 = vector.shape_cast %633 : vector<1x8x32xf32> to vector<8x32xf32>
    %635 = vector.shape_cast %631 : vector<8x32xf32> to vector<1x8x32xf32>
    tpu.vector_store %arg14[%632, %c0_199, %c0_200], %635 {strides = array<i32>} : memref<8x8x32xf32, #tpu.memory_space<vmem>>, vector<1x8x32xf32>,
    %636 = vector.extract_strided_slice %630 {offsets = [8, 0], sizes = [8, 32], strides = [1, 1]} : vector<16x32xf32> to vector<8x32xf32>
    %c7_i32_201 = arith.constant 7 : i32
    %637 = arith.subi %c7_i32_201, %c3_i32_189 : i32
    %638 = arith.index_cast %637 : i32 to index
    %c0_202 = arith.constant 0 : index
    %c0_203 = arith.constant 0 : index
    %639 = vector.load %arg15[%638, %c0_202, %c0_203] : memref<8x8x32xf32, #tpu.memory_space<vmem>>, vector<1x8x32xf32>
    %640 = vector.shape_cast %639 : vector<1x8x32xf32> to vector<8x32xf32>
    %641 = vector.shape_cast %636 : vector<8x32xf32> to vector<1x8x32xf32>
    tpu.vector_store %arg15[%638, %c0_202, %c0_203], %641 {strides = array<i32>} : memref<8x8x32xf32, #tpu.memory_space<vmem>>, vector<1x8x32xf32>,
    %c4_i32_204 = arith.constant 4 : i32
    %cst_205 = arith.constant dense<0.000000e+00> : vector<16x256xf32>
    %642 = tpu.matmul %630, %435, %cst_205 {dimension_numbers = #tpu.dot_dimension_numbers<[1], [0], [0], [1], [0, 0, 1, 1], [], []>} : vector<16x32xf32>, vector<32x256xf32>, vector<16x256xf32> -> vector<16x256xf32>
    %643 = arith.index_cast %c4_i32_204 : i32 to index
    %c0_206 = arith.constant 0 : index
    %c0_207 = arith.constant 0 : index
    %644 = vector.load %arg13[%643, %c0_206, %c0_207] : memref<8x8x256xf32, #tpu.memory_space<vmem>>, vector<1x8x256xf32>
    %645 = vector.shape_cast %644 : vector<1x8x256xf32> to vector<8x256xf32>
    %646 = vector.extract_strided_slice %645 {offsets = [0, 0], sizes = [8, 128], strides = [1, 1]} : vector<8x256xf32> to vector<8x128xf32>
    %c7_i32_208 = arith.constant 7 : i32
    %647 = arith.subi %c7_i32_208, %c4_i32_204 : i32
    %648 = arith.index_cast %647 : i32 to index
    %c0_209 = arith.constant 0 : index
    %c0_210 = arith.constant 0 : index
    %649 = vector.load %arg13[%648, %c0_209, %c0_210] : memref<8x8x256xf32, #tpu.memory_space<vmem>>, vector<1x8x256xf32>
    %650 = vector.shape_cast %649 : vector<1x8x256xf32> to vector<8x256xf32>
    %651 = vector.extract_strided_slice %650 {offsets = [0, 128], sizes = [8, 128], strides = [1, 1]} : vector<8x256xf32> to vector<8x128xf32>
    %652 = vector.extract_strided_slice %642 {offsets = [0, 0], sizes = [8, 128], strides = [1, 1]} : vector<16x256xf32> to vector<8x128xf32>
    %653 = arith.addf %646, %652 : vector<8x128xf32>
    %654 = vector.extract_strided_slice %642 {offsets = [8, 128], sizes = [8, 128], strides = [1, 1]} : vector<16x256xf32> to vector<8x128xf32>
    %655 = arith.addf %651, %654 : vector<8x128xf32>
    %656 = tpu.concatenate %653, %655 in 0 : vector<8x128xf32>, vector<8x128xf32> -> vector<16x128xf32>
    %657 = vector.extract_strided_slice %656 {offsets = [0, 0], sizes = [16, 32], strides = [1, 1]} : vector<16x128xf32> to vector<16x32xf32>
    %658 = arith.negf %657 : vector<16x32xf32>
    %659 = math.exp %658 : vector<16x32xf32>
    %cst_211 = arith.constant 1.000000e+00 : f32
    %660 = vector.broadcast %cst_211 : f32 to vector<16x32xf32>
    %661 = arith.addf %660, %659 : vector<16x32xf32>
    %662 = arith.divf %660, %661 : vector<16x32xf32>
    %663 = vector.extract_strided_slice %656 {offsets = [0, 32], sizes = [16, 32], strides = [1, 1]} : vector<16x128xf32> to vector<16x32xf32>
    %664 = arith.negf %663 : vector<16x32xf32>
    %665 = math.exp %664 : vector<16x32xf32>
    %cst_212 = arith.constant 1.000000e+00 : f32
    %666 = vector.broadcast %cst_212 : f32 to vector<16x32xf32>
    %667 = arith.addf %666, %665 : vector<16x32xf32>
    %668 = arith.divf %666, %667 : vector<16x32xf32>
    %669 = vector.extract_strided_slice %656 {offsets = [0, 64], sizes = [16, 32], strides = [1, 1]} : vector<16x128xf32> to vector<16x32xf32>
    %670 = math.tanh %669 : vector<16x32xf32>
    %671 = vector.extract_strided_slice %656 {offsets = [0, 96], sizes = [16, 32], strides = [1, 1]} : vector<16x128xf32> to vector<16x32xf32>
    %672 = arith.negf %671 : vector<16x32xf32>
    %673 = math.exp %672 : vector<16x32xf32>
    %cst_213 = arith.constant 1.000000e+00 : f32
    %674 = vector.broadcast %cst_213 : f32 to vector<16x32xf32>
    %675 = arith.addf %674, %673 : vector<16x32xf32>
    %676 = arith.divf %674, %675 : vector<16x32xf32>
    %677 = arith.mulf %668, %628 : vector<16x32xf32>
    %678 = arith.mulf %662, %670 : vector<16x32xf32>
    %679 = arith.addf %677, %678 : vector<16x32xf32>
    %680 = math.tanh %679 : vector<16x32xf32>
    %681 = arith.mulf %676, %680 : vector<16x32xf32>
    %682 = vector.extract_strided_slice %681 {offsets = [0, 0], sizes = [8, 32], strides = [1, 1]} : vector<16x32xf32> to vector<8x32xf32>
    %683 = arith.index_cast %c4_i32_204 : i32 to index
    %c0_214 = arith.constant 0 : index
    %c0_215 = arith.constant 0 : index
    %684 = vector.load %arg14[%683, %c0_214, %c0_215] : memref<8x8x32xf32, #tpu.memory_space<vmem>>, vector<1x8x32xf32>
    %685 = vector.shape_cast %684 : vector<1x8x32xf32> to vector<8x32xf32>
    %686 = vector.shape_cast %682 : vector<8x32xf32> to vector<1x8x32xf32>
    tpu.vector_store %arg14[%683, %c0_214, %c0_215], %686 {strides = array<i32>} : memref<8x8x32xf32, #tpu.memory_space<vmem>>, vector<1x8x32xf32>,
    %687 = vector.extract_strided_slice %681 {offsets = [8, 0], sizes = [8, 32], strides = [1, 1]} : vector<16x32xf32> to vector<8x32xf32>
    %c7_i32_216 = arith.constant 7 : i32
    %688 = arith.subi %c7_i32_216, %c4_i32_204 : i32
    %689 = arith.index_cast %688 : i32 to index
    %c0_217 = arith.constant 0 : index
    %c0_218 = arith.constant 0 : index
    %690 = vector.load %arg15[%689, %c0_217, %c0_218] : memref<8x8x32xf32, #tpu.memory_space<vmem>>, vector<1x8x32xf32>
    %691 = vector.shape_cast %690 : vector<1x8x32xf32> to vector<8x32xf32>
    %692 = vector.shape_cast %687 : vector<8x32xf32> to vector<1x8x32xf32>
    tpu.vector_store %arg15[%689, %c0_217, %c0_218], %692 {strides = array<i32>} : memref<8x8x32xf32, #tpu.memory_space<vmem>>, vector<1x8x32xf32>,
    %c5_i32_219 = arith.constant 5 : i32
    %cst_220 = arith.constant dense<0.000000e+00> : vector<16x256xf32>
    %693 = tpu.matmul %681, %435, %cst_220 {dimension_numbers = #tpu.dot_dimension_numbers<[1], [0], [0], [1], [0, 0, 1, 1], [], []>} : vector<16x32xf32>, vector<32x256xf32>, vector<16x256xf32> -> vector<16x256xf32>
    %694 = arith.index_cast %c5_i32_219 : i32 to index
    %c0_221 = arith.constant 0 : index
    %c0_222 = arith.constant 0 : index
    %695 = vector.load %arg13[%694, %c0_221, %c0_222] : memref<8x8x256xf32, #tpu.memory_space<vmem>>, vector<1x8x256xf32>
    %696 = vector.shape_cast %695 : vector<1x8x256xf32> to vector<8x256xf32>
    %697 = vector.extract_strided_slice %696 {offsets = [0, 0], sizes = [8, 128], strides = [1, 1]} : vector<8x256xf32> to vector<8x128xf32>
    %c7_i32_223 = arith.constant 7 : i32
    %698 = arith.subi %c7_i32_223, %c5_i32_219 : i32
    %699 = arith.index_cast %698 : i32 to index
    %c0_224 = arith.constant 0 : index
    %c0_225 = arith.constant 0 : index
    %700 = vector.load %arg13[%699, %c0_224, %c0_225] : memref<8x8x256xf32, #tpu.memory_space<vmem>>, vector<1x8x256xf32>
    %701 = vector.shape_cast %700 : vector<1x8x256xf32> to vector<8x256xf32>
    %702 = vector.extract_strided_slice %701 {offsets = [0, 128], sizes = [8, 128], strides = [1, 1]} : vector<8x256xf32> to vector<8x128xf32>
    %703 = vector.extract_strided_slice %693 {offsets = [0, 0], sizes = [8, 128], strides = [1, 1]} : vector<16x256xf32> to vector<8x128xf32>
    %704 = arith.addf %697, %703 : vector<8x128xf32>
    %705 = vector.extract_strided_slice %693 {offsets = [8, 128], sizes = [8, 128], strides = [1, 1]} : vector<16x256xf32> to vector<8x128xf32>
    %706 = arith.addf %702, %705 : vector<8x128xf32>
    %707 = tpu.concatenate %704, %706 in 0 : vector<8x128xf32>, vector<8x128xf32> -> vector<16x128xf32>
    %708 = vector.extract_strided_slice %707 {offsets = [0, 0], sizes = [16, 32], strides = [1, 1]} : vector<16x128xf32> to vector<16x32xf32>
    %709 = arith.negf %708 : vector<16x32xf32>
    %710 = math.exp %709 : vector<16x32xf32>
    %cst_226 = arith.constant 1.000000e+00 : f32
    %711 = vector.broadcast %cst_226 : f32 to vector<16x32xf32>
    %712 = arith.addf %711, %710 : vector<16x32xf32>
    %713 = arith.divf %711, %712 : vector<16x32xf32>
    %714 = vector.extract_strided_slice %707 {offsets = [0, 32], sizes = [16, 32], strides = [1, 1]} : vector<16x128xf32> to vector<16x32xf32>
    %715 = arith.negf %714 : vector<16x32xf32>
    %716 = math.exp %715 : vector<16x32xf32>
    %cst_227 = arith.constant 1.000000e+00 : f32
    %717 = vector.broadcast %cst_227 : f32 to vector<16x32xf32>
    %718 = arith.addf %717, %716 : vector<16x32xf32>
    %719 = arith.divf %717, %718 : vector<16x32xf32>
    %720 = vector.extract_strided_slice %707 {offsets = [0, 64], sizes = [16, 32], strides = [1, 1]} : vector<16x128xf32> to vector<16x32xf32>
    %721 = math.tanh %720 : vector<16x32xf32>
    %722 = vector.extract_strided_slice %707 {offsets = [0, 96], sizes = [16, 32], strides = [1, 1]} : vector<16x128xf32> to vector<16x32xf32>
    %723 = arith.negf %722 : vector<16x32xf32>
    %724 = math.exp %723 : vector<16x32xf32>
    %cst_228 = arith.constant 1.000000e+00 : f32
    %725 = vector.broadcast %cst_228 : f32 to vector<16x32xf32>
    %726 = arith.addf %725, %724 : vector<16x32xf32>
    %727 = arith.divf %725, %726 : vector<16x32xf32>
    %728 = arith.mulf %719, %679 : vector<16x32xf32>
    %729 = arith.mulf %713, %721 : vector<16x32xf32>
    %730 = arith.addf %728, %729 : vector<16x32xf32>
    %731 = math.tanh %730 : vector<16x32xf32>
    %732 = arith.mulf %727, %731 : vector<16x32xf32>
    %733 = vector.extract_strided_slice %732 {offsets = [0, 0], sizes = [8, 32], strides = [1, 1]} : vector<16x32xf32> to vector<8x32xf32>
    %734 = arith.index_cast %c5_i32_219 : i32 to index
    %c0_229 = arith.constant 0 : index
    %c0_230 = arith.constant 0 : index
    %735 = vector.load %arg14[%734, %c0_229, %c0_230] : memref<8x8x32xf32, #tpu.memory_space<vmem>>, vector<1x8x32xf32>
    %736 = vector.shape_cast %735 : vector<1x8x32xf32> to vector<8x32xf32>
    %737 = vector.shape_cast %733 : vector<8x32xf32> to vector<1x8x32xf32>
    tpu.vector_store %arg14[%734, %c0_229, %c0_230], %737 {strides = array<i32>} : memref<8x8x32xf32, #tpu.memory_space<vmem>>, vector<1x8x32xf32>,
    %738 = vector.extract_strided_slice %732 {offsets = [8, 0], sizes = [8, 32], strides = [1, 1]} : vector<16x32xf32> to vector<8x32xf32>
    %c7_i32_231 = arith.constant 7 : i32
    %739 = arith.subi %c7_i32_231, %c5_i32_219 : i32
    %740 = arith.index_cast %739 : i32 to index
    %c0_232 = arith.constant 0 : index
    %c0_233 = arith.constant 0 : index
    %741 = vector.load %arg15[%740, %c0_232, %c0_233] : memref<8x8x32xf32, #tpu.memory_space<vmem>>, vector<1x8x32xf32>
    %742 = vector.shape_cast %741 : vector<1x8x32xf32> to vector<8x32xf32>
    %743 = vector.shape_cast %738 : vector<8x32xf32> to vector<1x8x32xf32>
    tpu.vector_store %arg15[%740, %c0_232, %c0_233], %743 {strides = array<i32>} : memref<8x8x32xf32, #tpu.memory_space<vmem>>, vector<1x8x32xf32>,
    %c6_i32_234 = arith.constant 6 : i32
    %cst_235 = arith.constant dense<0.000000e+00> : vector<16x256xf32>
    %744 = tpu.matmul %732, %435, %cst_235 {dimension_numbers = #tpu.dot_dimension_numbers<[1], [0], [0], [1], [0, 0, 1, 1], [], []>} : vector<16x32xf32>, vector<32x256xf32>, vector<16x256xf32> -> vector<16x256xf32>
    %745 = arith.index_cast %c6_i32_234 : i32 to index
    %c0_236 = arith.constant 0 : index
    %c0_237 = arith.constant 0 : index
    %746 = vector.load %arg13[%745, %c0_236, %c0_237] : memref<8x8x256xf32, #tpu.memory_space<vmem>>, vector<1x8x256xf32>
    %747 = vector.shape_cast %746 : vector<1x8x256xf32> to vector<8x256xf32>
    %748 = vector.extract_strided_slice %747 {offsets = [0, 0], sizes = [8, 128], strides = [1, 1]} : vector<8x256xf32> to vector<8x128xf32>
    %c7_i32_238 = arith.constant 7 : i32
    %749 = arith.subi %c7_i32_238, %c6_i32_234 : i32
    %750 = arith.index_cast %749 : i32 to index
    %c0_239 = arith.constant 0 : index
    %c0_240 = arith.constant 0 : index
    %751 = vector.load %arg13[%750, %c0_239, %c0_240] : memref<8x8x256xf32, #tpu.memory_space<vmem>>, vector<1x8x256xf32>
    %752 = vector.shape_cast %751 : vector<1x8x256xf32> to vector<8x256xf32>
    %753 = vector.extract_strided_slice %752 {offsets = [0, 128], sizes = [8, 128], strides = [1, 1]} : vector<8x256xf32> to vector<8x128xf32>
    %754 = vector.extract_strided_slice %744 {offsets = [0, 0], sizes = [8, 128], strides = [1, 1]} : vector<16x256xf32> to vector<8x128xf32>
    %755 = arith.addf %748, %754 : vector<8x128xf32>
    %756 = vector.extract_strided_slice %744 {offsets = [8, 128], sizes = [8, 128], strides = [1, 1]} : vector<16x256xf32> to vector<8x128xf32>
    %757 = arith.addf %753, %756 : vector<8x128xf32>
    %758 = tpu.concatenate %755, %757 in 0 : vector<8x128xf32>, vector<8x128xf32> -> vector<16x128xf32>
    %759 = vector.extract_strided_slice %758 {offsets = [0, 0], sizes = [16, 32], strides = [1, 1]} : vector<16x128xf32> to vector<16x32xf32>
    %760 = arith.negf %759 : vector<16x32xf32>
    %761 = math.exp %760 : vector<16x32xf32>
    %cst_241 = arith.constant 1.000000e+00 : f32
    %762 = vector.broadcast %cst_241 : f32 to vector<16x32xf32>
    %763 = arith.addf %762, %761 : vector<16x32xf32>
    %764 = arith.divf %762, %763 : vector<16x32xf32>
    %765 = vector.extract_strided_slice %758 {offsets = [0, 32], sizes = [16, 32], strides = [1, 1]} : vector<16x128xf32> to vector<16x32xf32>
    %766 = arith.negf %765 : vector<16x32xf32>
    %767 = math.exp %766 : vector<16x32xf32>
    %cst_242 = arith.constant 1.000000e+00 : f32
    %768 = vector.broadcast %cst_242 : f32 to vector<16x32xf32>
    %769 = arith.addf %768, %767 : vector<16x32xf32>
    %770 = arith.divf %768, %769 : vector<16x32xf32>
    %771 = vector.extract_strided_slice %758 {offsets = [0, 64], sizes = [16, 32], strides = [1, 1]} : vector<16x128xf32> to vector<16x32xf32>
    %772 = math.tanh %771 : vector<16x32xf32>
    %773 = vector.extract_strided_slice %758 {offsets = [0, 96], sizes = [16, 32], strides = [1, 1]} : vector<16x128xf32> to vector<16x32xf32>
    %774 = arith.negf %773 : vector<16x32xf32>
    %775 = math.exp %774 : vector<16x32xf32>
    %cst_243 = arith.constant 1.000000e+00 : f32
    %776 = vector.broadcast %cst_243 : f32 to vector<16x32xf32>
    %777 = arith.addf %776, %775 : vector<16x32xf32>
    %778 = arith.divf %776, %777 : vector<16x32xf32>
    %779 = arith.mulf %770, %730 : vector<16x32xf32>
    %780 = arith.mulf %764, %772 : vector<16x32xf32>
    %781 = arith.addf %779, %780 : vector<16x32xf32>
    %782 = math.tanh %781 : vector<16x32xf32>
    %783 = arith.mulf %778, %782 : vector<16x32xf32>
    %784 = vector.extract_strided_slice %783 {offsets = [0, 0], sizes = [8, 32], strides = [1, 1]} : vector<16x32xf32> to vector<8x32xf32>
    %785 = arith.index_cast %c6_i32_234 : i32 to index
    %c0_244 = arith.constant 0 : index
    %c0_245 = arith.constant 0 : index
    %786 = vector.load %arg14[%785, %c0_244, %c0_245] : memref<8x8x32xf32, #tpu.memory_space<vmem>>, vector<1x8x32xf32>
    %787 = vector.shape_cast %786 : vector<1x8x32xf32> to vector<8x32xf32>
    %788 = vector.shape_cast %784 : vector<8x32xf32> to vector<1x8x32xf32>
    tpu.vector_store %arg14[%785, %c0_244, %c0_245], %788 {strides = array<i32>} : memref<8x8x32xf32, #tpu.memory_space<vmem>>, vector<1x8x32xf32>,
    %789 = vector.extract_strided_slice %783 {offsets = [8, 0], sizes = [8, 32], strides = [1, 1]} : vector<16x32xf32> to vector<8x32xf32>
    %c7_i32_246 = arith.constant 7 : i32
    %790 = arith.subi %c7_i32_246, %c6_i32_234 : i32
    %791 = arith.index_cast %790 : i32 to index
    %c0_247 = arith.constant 0 : index
    %c0_248 = arith.constant 0 : index
    %792 = vector.load %arg15[%791, %c0_247, %c0_248] : memref<8x8x32xf32, #tpu.memory_space<vmem>>, vector<1x8x32xf32>
    %793 = vector.shape_cast %792 : vector<1x8x32xf32> to vector<8x32xf32>
    %794 = vector.shape_cast %789 : vector<8x32xf32> to vector<1x8x32xf32>
    tpu.vector_store %arg15[%791, %c0_247, %c0_248], %794 {strides = array<i32>} : memref<8x8x32xf32, #tpu.memory_space<vmem>>, vector<1x8x32xf32>,
    %c7_i32_249 = arith.constant 7 : i32
    %cst_250 = arith.constant dense<0.000000e+00> : vector<16x256xf32>
    %795 = tpu.matmul %783, %435, %cst_250 {dimension_numbers = #tpu.dot_dimension_numbers<[1], [0], [0], [1], [0, 0, 1, 1], [], []>} : vector<16x32xf32>, vector<32x256xf32>, vector<16x256xf32> -> vector<16x256xf32>
    %796 = arith.index_cast %c7_i32_249 : i32 to index
    %c0_251 = arith.constant 0 : index
    %c0_252 = arith.constant 0 : index
    %797 = vector.load %arg13[%796, %c0_251, %c0_252] : memref<8x8x256xf32, #tpu.memory_space<vmem>>, vector<1x8x256xf32>
    %798 = vector.shape_cast %797 : vector<1x8x256xf32> to vector<8x256xf32>
    %799 = vector.extract_strided_slice %798 {offsets = [0, 0], sizes = [8, 128], strides = [1, 1]} : vector<8x256xf32> to vector<8x128xf32>
    %c7_i32_253 = arith.constant 7 : i32
    %800 = arith.subi %c7_i32_253, %c7_i32_249 : i32
    %801 = arith.index_cast %800 : i32 to index
    %c0_254 = arith.constant 0 : index
    %c0_255 = arith.constant 0 : index
    %802 = vector.load %arg13[%801, %c0_254, %c0_255] : memref<8x8x256xf32, #tpu.memory_space<vmem>>, vector<1x8x256xf32>
    %803 = vector.shape_cast %802 : vector<1x8x256xf32> to vector<8x256xf32>
    %804 = vector.extract_strided_slice %803 {offsets = [0, 128], sizes = [8, 128], strides = [1, 1]} : vector<8x256xf32> to vector<8x128xf32>
    %805 = vector.extract_strided_slice %795 {offsets = [0, 0], sizes = [8, 128], strides = [1, 1]} : vector<16x256xf32> to vector<8x128xf32>
    %806 = arith.addf %799, %805 : vector<8x128xf32>
    %807 = vector.extract_strided_slice %795 {offsets = [8, 128], sizes = [8, 128], strides = [1, 1]} : vector<16x256xf32> to vector<8x128xf32>
    %808 = arith.addf %804, %807 : vector<8x128xf32>
    %809 = tpu.concatenate %806, %808 in 0 : vector<8x128xf32>, vector<8x128xf32> -> vector<16x128xf32>
    %810 = vector.extract_strided_slice %809 {offsets = [0, 0], sizes = [16, 32], strides = [1, 1]} : vector<16x128xf32> to vector<16x32xf32>
    %811 = arith.negf %810 : vector<16x32xf32>
    %812 = math.exp %811 : vector<16x32xf32>
    %cst_256 = arith.constant 1.000000e+00 : f32
    %813 = vector.broadcast %cst_256 : f32 to vector<16x32xf32>
    %814 = arith.addf %813, %812 : vector<16x32xf32>
    %815 = arith.divf %813, %814 : vector<16x32xf32>
    %816 = vector.extract_strided_slice %809 {offsets = [0, 32], sizes = [16, 32], strides = [1, 1]} : vector<16x128xf32> to vector<16x32xf32>
    %817 = arith.negf %816 : vector<16x32xf32>
    %818 = math.exp %817 : vector<16x32xf32>
    %cst_257 = arith.constant 1.000000e+00 : f32
    %819 = vector.broadcast %cst_257 : f32 to vector<16x32xf32>
    %820 = arith.addf %819, %818 : vector<16x32xf32>
    %821 = arith.divf %819, %820 : vector<16x32xf32>
    %822 = vector.extract_strided_slice %809 {offsets = [0, 64], sizes = [16, 32], strides = [1, 1]} : vector<16x128xf32> to vector<16x32xf32>
    %823 = math.tanh %822 : vector<16x32xf32>
    %824 = vector.extract_strided_slice %809 {offsets = [0, 96], sizes = [16, 32], strides = [1, 1]} : vector<16x128xf32> to vector<16x32xf32>
    %825 = arith.negf %824 : vector<16x32xf32>
    %826 = math.exp %825 : vector<16x32xf32>
    %cst_258 = arith.constant 1.000000e+00 : f32
    %827 = vector.broadcast %cst_258 : f32 to vector<16x32xf32>
    %828 = arith.addf %827, %826 : vector<16x32xf32>
    %829 = arith.divf %827, %828 : vector<16x32xf32>
    %830 = arith.mulf %821, %781 : vector<16x32xf32>
    %831 = arith.mulf %815, %823 : vector<16x32xf32>
    %832 = arith.addf %830, %831 : vector<16x32xf32>
    %833 = math.tanh %832 : vector<16x32xf32>
    %834 = arith.mulf %829, %833 : vector<16x32xf32>
    %835 = vector.extract_strided_slice %834 {offsets = [0, 0], sizes = [8, 32], strides = [1, 1]} : vector<16x32xf32> to vector<8x32xf32>
    %836 = arith.index_cast %c7_i32_249 : i32 to index
    %c0_259 = arith.constant 0 : index
    %c0_260 = arith.constant 0 : index
    %837 = vector.load %arg14[%836, %c0_259, %c0_260] : memref<8x8x32xf32, #tpu.memory_space<vmem>>, vector<1x8x32xf32>
    %838 = vector.shape_cast %837 : vector<1x8x32xf32> to vector<8x32xf32>
    %839 = vector.shape_cast %835 : vector<8x32xf32> to vector<1x8x32xf32>
    tpu.vector_store %arg14[%836, %c0_259, %c0_260], %839 {strides = array<i32>} : memref<8x8x32xf32, #tpu.memory_space<vmem>>, vector<1x8x32xf32>,
    %840 = vector.extract_strided_slice %834 {offsets = [8, 0], sizes = [8, 32], strides = [1, 1]} : vector<16x32xf32> to vector<8x32xf32>
    %c7_i32_261 = arith.constant 7 : i32
    %841 = arith.subi %c7_i32_261, %c7_i32_249 : i32
    %842 = arith.index_cast %841 : i32 to index
    %c0_262 = arith.constant 0 : index
    %c0_263 = arith.constant 0 : index
    %843 = vector.load %arg15[%842, %c0_262, %c0_263] : memref<8x8x32xf32, #tpu.memory_space<vmem>>, vector<1x8x32xf32>
    %844 = vector.shape_cast %843 : vector<1x8x32xf32> to vector<8x32xf32>
    %845 = vector.shape_cast %840 : vector<8x32xf32> to vector<1x8x32xf32>
    tpu.vector_store %arg15[%842, %c0_262, %c0_263], %845 {strides = array<i32>} : memref<8x8x32xf32, #tpu.memory_space<vmem>>, vector<1x8x32xf32>,
    %c8_i32_264 = arith.constant 8 : i32
    %c0_265 = arith.constant 0 : index
    %c0_266 = arith.constant 0 : index
    %846 = vector.load %arg7[%c0_265, %c0_266] : memref<64x256xf32, #tpu.memory_space<vmem>>, vector<64x256xf32>
    %c0_267 = arith.constant 0 : index
    %c0_268 = arith.constant 0 : index
    %c0_269 = arith.constant 0 : index
    %847 = vector.load %arg14[%c0_267, %c0_268, %c0_269] : memref<8x8x32xf32, #tpu.memory_space<vmem>>, vector<8x8x32xf32>
    %848 = vector.shape_cast %847 : vector<8x8x32xf32> to vector<64x32xf32>
    %c0_270 = arith.constant 0 : index
    %c0_271 = arith.constant 0 : index
    %c0_272 = arith.constant 0 : index
    %849 = vector.load %arg15[%c0_270, %c0_271, %c0_272] : memref<8x8x32xf32, #tpu.memory_space<vmem>>, vector<8x8x32xf32>
    %850 = vector.shape_cast %849 : vector<8x8x32xf32> to vector<64x32xf32>
    %851 = vector.extract_strided_slice %846 {offsets = [0, 0], sizes = [32, 256], strides = [1, 1]} : vector<64x256xf32> to vector<32x256xf32>
    %cst_273 = arith.constant dense<0.000000e+00> : vector<64x256xf32>
    %852 = tpu.matmul %848, %851, %cst_273 {dimension_numbers = #tpu.dot_dimension_numbers<[1], [0], [0], [1], [0, 0, 1, 1], [], []>} : vector<64x32xf32>, vector<32x256xf32>, vector<64x256xf32> -> vector<64x256xf32>
    %853 = vector.extract_strided_slice %846 {offsets = [32, 0], sizes = [32, 256], strides = [1, 1]} : vector<64x256xf32> to vector<32x256xf32>
    %cst_274 = arith.constant dense<0.000000e+00> : vector<64x256xf32>
    %854 = tpu.matmul %850, %853, %cst_274 {dimension_numbers = #tpu.dot_dimension_numbers<[1], [0], [0], [1], [0, 0, 1, 1], [], []>} : vector<64x32xf32>, vector<32x256xf32>, vector<64x256xf32> -> vector<64x256xf32>
    %855 = arith.addf %852, %854 : vector<64x256xf32>
    %c0_275 = arith.constant 0 : index
    %c0_276 = arith.constant 0 : index
    %856 = vector.load %arg9[%c0_275, %c0_276] : memref<1x256xf32, #tpu.memory_space<vmem>>, vector<1x256xf32>
    %857 = vector.broadcast %856 : vector<1x256xf32> to vector<64x256xf32>
    %858 = arith.addf %855, %857 : vector<64x256xf32>
    %859 = vector.shape_cast %858 : vector<64x256xf32> to vector<8x8x256xf32>
    %c0_277 = arith.constant 0 : index
    %c0_278 = arith.constant 0 : index
    %c0_279 = arith.constant 0 : index
    %860 = vector.load %arg13[%c0_277, %c0_278, %c0_279] : memref<8x8x256xf32, #tpu.memory_space<vmem>>, vector<8x8x256xf32>
    tpu.vector_store %arg13[%c0_277, %c0_278, %c0_279], %859 {strides = array<i32>} : memref<8x8x256xf32, #tpu.memory_space<vmem>>, vector<8x8x256xf32>,
    %c0_280 = arith.constant 0 : index
    %c0_281 = arith.constant 0 : index
    %861 = vector.load %arg8[%c0_280, %c0_281] : memref<32x256xf32, #tpu.memory_space<vmem>>, vector<32x256xf32>
    %cst_282 = arith.constant 0.000000e+00 : f32
    %862 = vector.broadcast %cst_282 : f32 to vector<16x32xf32>
    %cst_283 = arith.constant 0.000000e+00 : f32
    %863 = vector.broadcast %cst_283 : f32 to vector<16x32xf32>
    %c0_i32_284 = arith.constant 0 : i32
    %cst_285 = arith.constant dense<0.000000e+00> : vector<16x256xf32>
    %864 = tpu.matmul %862, %861, %cst_285 {dimension_numbers = #tpu.dot_dimension_numbers<[1], [0], [0], [1], [0, 0, 1, 1], [], []>} : vector<16x32xf32>, vector<32x256xf32>, vector<16x256xf32> -> vector<16x256xf32>
    %865 = arith.index_cast %c0_i32_284 : i32 to index
    %c0_286 = arith.constant 0 : index
    %c0_287 = arith.constant 0 : index
    %866 = vector.load %arg13[%865, %c0_286, %c0_287] : memref<8x8x256xf32, #tpu.memory_space<vmem>>, vector<1x8x256xf32>
    %867 = vector.shape_cast %866 : vector<1x8x256xf32> to vector<8x256xf32>
    %868 = vector.extract_strided_slice %867 {offsets = [0, 0], sizes = [8, 128], strides = [1, 1]} : vector<8x256xf32> to vector<8x128xf32>
    %c7_i32_288 = arith.constant 7 : i32
    %869 = arith.subi %c7_i32_288, %c0_i32_284 : i32
    %870 = arith.index_cast %869 : i32 to index
    %c0_289 = arith.constant 0 : index
    %c0_290 = arith.constant 0 : index
    %871 = vector.load %arg13[%870, %c0_289, %c0_290] : memref<8x8x256xf32, #tpu.memory_space<vmem>>, vector<1x8x256xf32>
    %872 = vector.shape_cast %871 : vector<1x8x256xf32> to vector<8x256xf32>
    %873 = vector.extract_strided_slice %872 {offsets = [0, 128], sizes = [8, 128], strides = [1, 1]} : vector<8x256xf32> to vector<8x128xf32>
    %874 = vector.extract_strided_slice %864 {offsets = [0, 0], sizes = [8, 128], strides = [1, 1]} : vector<16x256xf32> to vector<8x128xf32>
    %875 = arith.addf %868, %874 : vector<8x128xf32>
    %876 = vector.extract_strided_slice %864 {offsets = [8, 128], sizes = [8, 128], strides = [1, 1]} : vector<16x256xf32> to vector<8x128xf32>
    %877 = arith.addf %873, %876 : vector<8x128xf32>
    %878 = tpu.concatenate %875, %877 in 0 : vector<8x128xf32>, vector<8x128xf32> -> vector<16x128xf32>
    %879 = vector.extract_strided_slice %878 {offsets = [0, 0], sizes = [16, 32], strides = [1, 1]} : vector<16x128xf32> to vector<16x32xf32>
    %880 = arith.negf %879 : vector<16x32xf32>
    %881 = math.exp %880 : vector<16x32xf32>
    %cst_291 = arith.constant 1.000000e+00 : f32
    %882 = vector.broadcast %cst_291 : f32 to vector<16x32xf32>
    %883 = arith.addf %882, %881 : vector<16x32xf32>
    %884 = arith.divf %882, %883 : vector<16x32xf32>
    %885 = vector.extract_strided_slice %878 {offsets = [0, 32], sizes = [16, 32], strides = [1, 1]} : vector<16x128xf32> to vector<16x32xf32>
    %886 = arith.negf %885 : vector<16x32xf32>
    %887 = math.exp %886 : vector<16x32xf32>
    %cst_292 = arith.constant 1.000000e+00 : f32
    %888 = vector.broadcast %cst_292 : f32 to vector<16x32xf32>
    %889 = arith.addf %888, %887 : vector<16x32xf32>
    %890 = arith.divf %888, %889 : vector<16x32xf32>
    %891 = vector.extract_strided_slice %878 {offsets = [0, 64], sizes = [16, 32], strides = [1, 1]} : vector<16x128xf32> to vector<16x32xf32>
    %892 = math.tanh %891 : vector<16x32xf32>
    %893 = vector.extract_strided_slice %878 {offsets = [0, 96], sizes = [16, 32], strides = [1, 1]} : vector<16x128xf32> to vector<16x32xf32>
    %894 = arith.negf %893 : vector<16x32xf32>
    %895 = math.exp %894 : vector<16x32xf32>
    %cst_293 = arith.constant 1.000000e+00 : f32
    %896 = vector.broadcast %cst_293 : f32 to vector<16x32xf32>
    %897 = arith.addf %896, %895 : vector<16x32xf32>
    %898 = arith.divf %896, %897 : vector<16x32xf32>
    %899 = arith.mulf %890, %863 : vector<16x32xf32>
    %900 = arith.mulf %884, %892 : vector<16x32xf32>
    %901 = arith.addf %899, %900 : vector<16x32xf32>
    %902 = math.tanh %901 : vector<16x32xf32>
    %903 = arith.mulf %898, %902 : vector<16x32xf32>
    %904 = vector.extract_strided_slice %903 {offsets = [0, 0], sizes = [8, 32], strides = [1, 1]} : vector<16x32xf32> to vector<8x32xf32>
    %905 = arith.index_cast %c0_i32_284 : i32 to index
    %c0_294 = arith.constant 0 : index
    %c0_295 = arith.constant 0 : index
    %906 = vector.load %arg14[%905, %c0_294, %c0_295] : memref<8x8x32xf32, #tpu.memory_space<vmem>>, vector<1x8x32xf32>
    %907 = vector.shape_cast %906 : vector<1x8x32xf32> to vector<8x32xf32>
    %908 = vector.shape_cast %904 : vector<8x32xf32> to vector<1x8x32xf32>
    tpu.vector_store %arg14[%905, %c0_294, %c0_295], %908 {strides = array<i32>} : memref<8x8x32xf32, #tpu.memory_space<vmem>>, vector<1x8x32xf32>,
    %909 = vector.extract_strided_slice %903 {offsets = [8, 0], sizes = [8, 32], strides = [1, 1]} : vector<16x32xf32> to vector<8x32xf32>
    %c7_i32_296 = arith.constant 7 : i32
    %910 = arith.subi %c7_i32_296, %c0_i32_284 : i32
    %911 = arith.index_cast %910 : i32 to index
    %c0_297 = arith.constant 0 : index
    %c0_298 = arith.constant 0 : index
    %912 = vector.load %arg15[%911, %c0_297, %c0_298] : memref<8x8x32xf32, #tpu.memory_space<vmem>>, vector<1x8x32xf32>
    %913 = vector.shape_cast %912 : vector<1x8x32xf32> to vector<8x32xf32>
    %914 = vector.shape_cast %909 : vector<8x32xf32> to vector<1x8x32xf32>
    tpu.vector_store %arg15[%911, %c0_297, %c0_298], %914 {strides = array<i32>} : memref<8x8x32xf32, #tpu.memory_space<vmem>>, vector<1x8x32xf32>,
    %c1_i32_299 = arith.constant 1 : i32
    %cst_300 = arith.constant dense<0.000000e+00> : vector<16x256xf32>
    %915 = tpu.matmul %903, %861, %cst_300 {dimension_numbers = #tpu.dot_dimension_numbers<[1], [0], [0], [1], [0, 0, 1, 1], [], []>} : vector<16x32xf32>, vector<32x256xf32>, vector<16x256xf32> -> vector<16x256xf32>
    %916 = arith.index_cast %c1_i32_299 : i32 to index
    %c0_301 = arith.constant 0 : index
    %c0_302 = arith.constant 0 : index
    %917 = vector.load %arg13[%916, %c0_301, %c0_302] : memref<8x8x256xf32, #tpu.memory_space<vmem>>, vector<1x8x256xf32>
    %918 = vector.shape_cast %917 : vector<1x8x256xf32> to vector<8x256xf32>
    %919 = vector.extract_strided_slice %918 {offsets = [0, 0], sizes = [8, 128], strides = [1, 1]} : vector<8x256xf32> to vector<8x128xf32>
    %c7_i32_303 = arith.constant 7 : i32
    %920 = arith.subi %c7_i32_303, %c1_i32_299 : i32
    %921 = arith.index_cast %920 : i32 to index
    %c0_304 = arith.constant 0 : index
    %c0_305 = arith.constant 0 : index
    %922 = vector.load %arg13[%921, %c0_304, %c0_305] : memref<8x8x256xf32, #tpu.memory_space<vmem>>, vector<1x8x256xf32>
    %923 = vector.shape_cast %922 : vector<1x8x256xf32> to vector<8x256xf32>
    %924 = vector.extract_strided_slice %923 {offsets = [0, 128], sizes = [8, 128], strides = [1, 1]} : vector<8x256xf32> to vector<8x128xf32>
    %925 = vector.extract_strided_slice %915 {offsets = [0, 0], sizes = [8, 128], strides = [1, 1]} : vector<16x256xf32> to vector<8x128xf32>
    %926 = arith.addf %919, %925 : vector<8x128xf32>
    %927 = vector.extract_strided_slice %915 {offsets = [8, 128], sizes = [8, 128], strides = [1, 1]} : vector<16x256xf32> to vector<8x128xf32>
    %928 = arith.addf %924, %927 : vector<8x128xf32>
    %929 = tpu.concatenate %926, %928 in 0 : vector<8x128xf32>, vector<8x128xf32> -> vector<16x128xf32>
    %930 = vector.extract_strided_slice %929 {offsets = [0, 0], sizes = [16, 32], strides = [1, 1]} : vector<16x128xf32> to vector<16x32xf32>
    %931 = arith.negf %930 : vector<16x32xf32>
    %932 = math.exp %931 : vector<16x32xf32>
    %cst_306 = arith.constant 1.000000e+00 : f32
    %933 = vector.broadcast %cst_306 : f32 to vector<16x32xf32>
    %934 = arith.addf %933, %932 : vector<16x32xf32>
    %935 = arith.divf %933, %934 : vector<16x32xf32>
    %936 = vector.extract_strided_slice %929 {offsets = [0, 32], sizes = [16, 32], strides = [1, 1]} : vector<16x128xf32> to vector<16x32xf32>
    %937 = arith.negf %936 : vector<16x32xf32>
    %938 = math.exp %937 : vector<16x32xf32>
    %cst_307 = arith.constant 1.000000e+00 : f32
    %939 = vector.broadcast %cst_307 : f32 to vector<16x32xf32>
    %940 = arith.addf %939, %938 : vector<16x32xf32>
    %941 = arith.divf %939, %940 : vector<16x32xf32>
    %942 = vector.extract_strided_slice %929 {offsets = [0, 64], sizes = [16, 32], strides = [1, 1]} : vector<16x128xf32> to vector<16x32xf32>
    %943 = math.tanh %942 : vector<16x32xf32>
    %944 = vector.extract_strided_slice %929 {offsets = [0, 96], sizes = [16, 32], strides = [1, 1]} : vector<16x128xf32> to vector<16x32xf32>
    %945 = arith.negf %944 : vector<16x32xf32>
    %946 = math.exp %945 : vector<16x32xf32>
    %cst_308 = arith.constant 1.000000e+00 : f32
    %947 = vector.broadcast %cst_308 : f32 to vector<16x32xf32>
    %948 = arith.addf %947, %946 : vector<16x32xf32>
    %949 = arith.divf %947, %948 : vector<16x32xf32>
    %950 = arith.mulf %941, %901 : vector<16x32xf32>
    %951 = arith.mulf %935, %943 : vector<16x32xf32>
    %952 = arith.addf %950, %951 : vector<16x32xf32>
    %953 = math.tanh %952 : vector<16x32xf32>
    %954 = arith.mulf %949, %953 : vector<16x32xf32>
    %955 = vector.extract_strided_slice %954 {offsets = [0, 0], sizes = [8, 32], strides = [1, 1]} : vector<16x32xf32> to vector<8x32xf32>
    %956 = arith.index_cast %c1_i32_299 : i32 to index
    %c0_309 = arith.constant 0 : index
    %c0_310 = arith.constant 0 : index
    %957 = vector.load %arg14[%956, %c0_309, %c0_310] : memref<8x8x32xf32, #tpu.memory_space<vmem>>, vector<1x8x32xf32>
    %958 = vector.shape_cast %957 : vector<1x8x32xf32> to vector<8x32xf32>
    %959 = vector.shape_cast %955 : vector<8x32xf32> to vector<1x8x32xf32>
    tpu.vector_store %arg14[%956, %c0_309, %c0_310], %959 {strides = array<i32>} : memref<8x8x32xf32, #tpu.memory_space<vmem>>, vector<1x8x32xf32>,
    %960 = vector.extract_strided_slice %954 {offsets = [8, 0], sizes = [8, 32], strides = [1, 1]} : vector<16x32xf32> to vector<8x32xf32>
    %c7_i32_311 = arith.constant 7 : i32
    %961 = arith.subi %c7_i32_311, %c1_i32_299 : i32
    %962 = arith.index_cast %961 : i32 to index
    %c0_312 = arith.constant 0 : index
    %c0_313 = arith.constant 0 : index
    %963 = vector.load %arg15[%962, %c0_312, %c0_313] : memref<8x8x32xf32, #tpu.memory_space<vmem>>, vector<1x8x32xf32>
    %964 = vector.shape_cast %963 : vector<1x8x32xf32> to vector<8x32xf32>
    %965 = vector.shape_cast %960 : vector<8x32xf32> to vector<1x8x32xf32>
    tpu.vector_store %arg15[%962, %c0_312, %c0_313], %965 {strides = array<i32>} : memref<8x8x32xf32, #tpu.memory_space<vmem>>, vector<1x8x32xf32>,
    %c2_i32_314 = arith.constant 2 : i32
    %cst_315 = arith.constant dense<0.000000e+00> : vector<16x256xf32>
    %966 = tpu.matmul %954, %861, %cst_315 {dimension_numbers = #tpu.dot_dimension_numbers<[1], [0], [0], [1], [0, 0, 1, 1], [], []>} : vector<16x32xf32>, vector<32x256xf32>, vector<16x256xf32> -> vector<16x256xf32>
    %967 = arith.index_cast %c2_i32_314 : i32 to index
    %c0_316 = arith.constant 0 : index
    %c0_317 = arith.constant 0 : index
    %968 = vector.load %arg13[%967, %c0_316, %c0_317] : memref<8x8x256xf32, #tpu.memory_space<vmem>>, vector<1x8x256xf32>
    %969 = vector.shape_cast %968 : vector<1x8x256xf32> to vector<8x256xf32>
    %970 = vector.extract_strided_slice %969 {offsets = [0, 0], sizes = [8, 128], strides = [1, 1]} : vector<8x256xf32> to vector<8x128xf32>
    %c7_i32_318 = arith.constant 7 : i32
    %971 = arith.subi %c7_i32_318, %c2_i32_314 : i32
    %972 = arith.index_cast %971 : i32 to index
    %c0_319 = arith.constant 0 : index
    %c0_320 = arith.constant 0 : index
    %973 = vector.load %arg13[%972, %c0_319, %c0_320] : memref<8x8x256xf32, #tpu.memory_space<vmem>>, vector<1x8x256xf32>
    %974 = vector.shape_cast %973 : vector<1x8x256xf32> to vector<8x256xf32>
    %975 = vector.extract_strided_slice %974 {offsets = [0, 128], sizes = [8, 128], strides = [1, 1]} : vector<8x256xf32> to vector<8x128xf32>
    %976 = vector.extract_strided_slice %966 {offsets = [0, 0], sizes = [8, 128], strides = [1, 1]} : vector<16x256xf32> to vector<8x128xf32>
    %977 = arith.addf %970, %976 : vector<8x128xf32>
    %978 = vector.extract_strided_slice %966 {offsets = [8, 128], sizes = [8, 128], strides = [1, 1]} : vector<16x256xf32> to vector<8x128xf32>
    %979 = arith.addf %975, %978 : vector<8x128xf32>
    %980 = tpu.concatenate %977, %979 in 0 : vector<8x128xf32>, vector<8x128xf32> -> vector<16x128xf32>
    %981 = vector.extract_strided_slice %980 {offsets = [0, 0], sizes = [16, 32], strides = [1, 1]} : vector<16x128xf32> to vector<16x32xf32>
    %982 = arith.negf %981 : vector<16x32xf32>
    %983 = math.exp %982 : vector<16x32xf32>
    %cst_321 = arith.constant 1.000000e+00 : f32
    %984 = vector.broadcast %cst_321 : f32 to vector<16x32xf32>
    %985 = arith.addf %984, %983 : vector<16x32xf32>
    %986 = arith.divf %984, %985 : vector<16x32xf32>
    %987 = vector.extract_strided_slice %980 {offsets = [0, 32], sizes = [16, 32], strides = [1, 1]} : vector<16x128xf32> to vector<16x32xf32>
    %988 = arith.negf %987 : vector<16x32xf32>
    %989 = math.exp %988 : vector<16x32xf32>
    %cst_322 = arith.constant 1.000000e+00 : f32
    %990 = vector.broadcast %cst_322 : f32 to vector<16x32xf32>
    %991 = arith.addf %990, %989 : vector<16x32xf32>
    %992 = arith.divf %990, %991 : vector<16x32xf32>
    %993 = vector.extract_strided_slice %980 {offsets = [0, 64], sizes = [16, 32], strides = [1, 1]} : vector<16x128xf32> to vector<16x32xf32>
    %994 = math.tanh %993 : vector<16x32xf32>
    %995 = vector.extract_strided_slice %980 {offsets = [0, 96], sizes = [16, 32], strides = [1, 1]} : vector<16x128xf32> to vector<16x32xf32>
    %996 = arith.negf %995 : vector<16x32xf32>
    %997 = math.exp %996 : vector<16x32xf32>
    %cst_323 = arith.constant 1.000000e+00 : f32
    %998 = vector.broadcast %cst_323 : f32 to vector<16x32xf32>
    %999 = arith.addf %998, %997 : vector<16x32xf32>
    %1000 = arith.divf %998, %999 : vector<16x32xf32>
    %1001 = arith.mulf %992, %952 : vector<16x32xf32>
    %1002 = arith.mulf %986, %994 : vector<16x32xf32>
    %1003 = arith.addf %1001, %1002 : vector<16x32xf32>
    %1004 = math.tanh %1003 : vector<16x32xf32>
    %1005 = arith.mulf %1000, %1004 : vector<16x32xf32>
    %1006 = vector.extract_strided_slice %1005 {offsets = [0, 0], sizes = [8, 32], strides = [1, 1]} : vector<16x32xf32> to vector<8x32xf32>
    %1007 = arith.index_cast %c2_i32_314 : i32 to index
    %c0_324 = arith.constant 0 : index
    %c0_325 = arith.constant 0 : index
    %1008 = vector.load %arg14[%1007, %c0_324, %c0_325] : memref<8x8x32xf32, #tpu.memory_space<vmem>>, vector<1x8x32xf32>
    %1009 = vector.shape_cast %1008 : vector<1x8x32xf32> to vector<8x32xf32>
    %1010 = vector.shape_cast %1006 : vector<8x32xf32> to vector<1x8x32xf32>
    tpu.vector_store %arg14[%1007, %c0_324, %c0_325], %1010 {strides = array<i32>} : memref<8x8x32xf32, #tpu.memory_space<vmem>>, vector<1x8x32xf32>,
    %1011 = vector.extract_strided_slice %1005 {offsets = [8, 0], sizes = [8, 32], strides = [1, 1]} : vector<16x32xf32> to vector<8x32xf32>
    %c7_i32_326 = arith.constant 7 : i32
    %1012 = arith.subi %c7_i32_326, %c2_i32_314 : i32
    %1013 = arith.index_cast %1012 : i32 to index
    %c0_327 = arith.constant 0 : index
    %c0_328 = arith.constant 0 : index
    %1014 = vector.load %arg15[%1013, %c0_327, %c0_328] : memref<8x8x32xf32, #tpu.memory_space<vmem>>, vector<1x8x32xf32>
    %1015 = vector.shape_cast %1014 : vector<1x8x32xf32> to vector<8x32xf32>
    %1016 = vector.shape_cast %1011 : vector<8x32xf32> to vector<1x8x32xf32>
    tpu.vector_store %arg15[%1013, %c0_327, %c0_328], %1016 {strides = array<i32>} : memref<8x8x32xf32, #tpu.memory_space<vmem>>, vector<1x8x32xf32>,
    %c3_i32_329 = arith.constant 3 : i32
    %cst_330 = arith.constant dense<0.000000e+00> : vector<16x256xf32>
    %1017 = tpu.matmul %1005, %861, %cst_330 {dimension_numbers = #tpu.dot_dimension_numbers<[1], [0], [0], [1], [0, 0, 1, 1], [], []>} : vector<16x32xf32>, vector<32x256xf32>, vector<16x256xf32> -> vector<16x256xf32>
    %1018 = arith.index_cast %c3_i32_329 : i32 to index
    %c0_331 = arith.constant 0 : index
    %c0_332 = arith.constant 0 : index
    %1019 = vector.load %arg13[%1018, %c0_331, %c0_332] : memref<8x8x256xf32, #tpu.memory_space<vmem>>, vector<1x8x256xf32>
    %1020 = vector.shape_cast %1019 : vector<1x8x256xf32> to vector<8x256xf32>
    %1021 = vector.extract_strided_slice %1020 {offsets = [0, 0], sizes = [8, 128], strides = [1, 1]} : vector<8x256xf32> to vector<8x128xf32>
    %c7_i32_333 = arith.constant 7 : i32
    %1022 = arith.subi %c7_i32_333, %c3_i32_329 : i32
    %1023 = arith.index_cast %1022 : i32 to index
    %c0_334 = arith.constant 0 : index
    %c0_335 = arith.constant 0 : index
    %1024 = vector.load %arg13[%1023, %c0_334, %c0_335] : memref<8x8x256xf32, #tpu.memory_space<vmem>>, vector<1x8x256xf32>
    %1025 = vector.shape_cast %1024 : vector<1x8x256xf32> to vector<8x256xf32>
    %1026 = vector.extract_strided_slice %1025 {offsets = [0, 128], sizes = [8, 128], strides = [1, 1]} : vector<8x256xf32> to vector<8x128xf32>
    %1027 = vector.extract_strided_slice %1017 {offsets = [0, 0], sizes = [8, 128], strides = [1, 1]} : vector<16x256xf32> to vector<8x128xf32>
    %1028 = arith.addf %1021, %1027 : vector<8x128xf32>
    %1029 = vector.extract_strided_slice %1017 {offsets = [8, 128], sizes = [8, 128], strides = [1, 1]} : vector<16x256xf32> to vector<8x128xf32>
    %1030 = arith.addf %1026, %1029 : vector<8x128xf32>
    %1031 = tpu.concatenate %1028, %1030 in 0 : vector<8x128xf32>, vector<8x128xf32> -> vector<16x128xf32>
    %1032 = vector.extract_strided_slice %1031 {offsets = [0, 0], sizes = [16, 32], strides = [1, 1]} : vector<16x128xf32> to vector<16x32xf32>
    %1033 = arith.negf %1032 : vector<16x32xf32>
    %1034 = math.exp %1033 : vector<16x32xf32>
    %cst_336 = arith.constant 1.000000e+00 : f32
    %1035 = vector.broadcast %cst_336 : f32 to vector<16x32xf32>
    %1036 = arith.addf %1035, %1034 : vector<16x32xf32>
    %1037 = arith.divf %1035, %1036 : vector<16x32xf32>
    %1038 = vector.extract_strided_slice %1031 {offsets = [0, 32], sizes = [16, 32], strides = [1, 1]} : vector<16x128xf32> to vector<16x32xf32>
    %1039 = arith.negf %1038 : vector<16x32xf32>
    %1040 = math.exp %1039 : vector<16x32xf32>
    %cst_337 = arith.constant 1.000000e+00 : f32
    %1041 = vector.broadcast %cst_337 : f32 to vector<16x32xf32>
    %1042 = arith.addf %1041, %1040 : vector<16x32xf32>
    %1043 = arith.divf %1041, %1042 : vector<16x32xf32>
    %1044 = vector.extract_strided_slice %1031 {offsets = [0, 64], sizes = [16, 32], strides = [1, 1]} : vector<16x128xf32> to vector<16x32xf32>
    %1045 = math.tanh %1044 : vector<16x32xf32>
    %1046 = vector.extract_strided_slice %1031 {offsets = [0, 96], sizes = [16, 32], strides = [1, 1]} : vector<16x128xf32> to vector<16x32xf32>
    %1047 = arith.negf %1046 : vector<16x32xf32>
    %1048 = math.exp %1047 : vector<16x32xf32>
    %cst_338 = arith.constant 1.000000e+00 : f32
    %1049 = vector.broadcast %cst_338 : f32 to vector<16x32xf32>
    %1050 = arith.addf %1049, %1048 : vector<16x32xf32>
    %1051 = arith.divf %1049, %1050 : vector<16x32xf32>
    %1052 = arith.mulf %1043, %1003 : vector<16x32xf32>
    %1053 = arith.mulf %1037, %1045 : vector<16x32xf32>
    %1054 = arith.addf %1052, %1053 : vector<16x32xf32>
    %1055 = math.tanh %1054 : vector<16x32xf32>
    %1056 = arith.mulf %1051, %1055 : vector<16x32xf32>
    %1057 = vector.extract_strided_slice %1056 {offsets = [0, 0], sizes = [8, 32], strides = [1, 1]} : vector<16x32xf32> to vector<8x32xf32>
    %1058 = arith.index_cast %c3_i32_329 : i32 to index
    %c0_339 = arith.constant 0 : index
    %c0_340 = arith.constant 0 : index
    %1059 = vector.load %arg14[%1058, %c0_339, %c0_340] : memref<8x8x32xf32, #tpu.memory_space<vmem>>, vector<1x8x32xf32>
    %1060 = vector.shape_cast %1059 : vector<1x8x32xf32> to vector<8x32xf32>
    %1061 = vector.shape_cast %1057 : vector<8x32xf32> to vector<1x8x32xf32>
    tpu.vector_store %arg14[%1058, %c0_339, %c0_340], %1061 {strides = array<i32>} : memref<8x8x32xf32, #tpu.memory_space<vmem>>, vector<1x8x32xf32>,
    %1062 = vector.extract_strided_slice %1056 {offsets = [8, 0], sizes = [8, 32], strides = [1, 1]} : vector<16x32xf32> to vector<8x32xf32>
    %c7_i32_341 = arith.constant 7 : i32
    %1063 = arith.subi %c7_i32_341, %c3_i32_329 : i32
    %1064 = arith.index_cast %1063 : i32 to index
    %c0_342 = arith.constant 0 : index
    %c0_343 = arith.constant 0 : index
    %1065 = vector.load %arg15[%1064, %c0_342, %c0_343] : memref<8x8x32xf32, #tpu.memory_space<vmem>>, vector<1x8x32xf32>
    %1066 = vector.shape_cast %1065 : vector<1x8x32xf32> to vector<8x32xf32>
    %1067 = vector.shape_cast %1062 : vector<8x32xf32> to vector<1x8x32xf32>
    tpu.vector_store %arg15[%1064, %c0_342, %c0_343], %1067 {strides = array<i32>} : memref<8x8x32xf32, #tpu.memory_space<vmem>>, vector<1x8x32xf32>,
    %c4_i32_344 = arith.constant 4 : i32
    %cst_345 = arith.constant dense<0.000000e+00> : vector<16x256xf32>
    %1068 = tpu.matmul %1056, %861, %cst_345 {dimension_numbers = #tpu.dot_dimension_numbers<[1], [0], [0], [1], [0, 0, 1, 1], [], []>} : vector<16x32xf32>, vector<32x256xf32>, vector<16x256xf32> -> vector<16x256xf32>
    %1069 = arith.index_cast %c4_i32_344 : i32 to index
    %c0_346 = arith.constant 0 : index
    %c0_347 = arith.constant 0 : index
    %1070 = vector.load %arg13[%1069, %c0_346, %c0_347] : memref<8x8x256xf32, #tpu.memory_space<vmem>>, vector<1x8x256xf32>
    %1071 = vector.shape_cast %1070 : vector<1x8x256xf32> to vector<8x256xf32>
    %1072 = vector.extract_strided_slice %1071 {offsets = [0, 0], sizes = [8, 128], strides = [1, 1]} : vector<8x256xf32> to vector<8x128xf32>
    %c7_i32_348 = arith.constant 7 : i32
    %1073 = arith.subi %c7_i32_348, %c4_i32_344 : i32
    %1074 = arith.index_cast %1073 : i32 to index
    %c0_349 = arith.constant 0 : index
    %c0_350 = arith.constant 0 : index
    %1075 = vector.load %arg13[%1074, %c0_349, %c0_350] : memref<8x8x256xf32, #tpu.memory_space<vmem>>, vector<1x8x256xf32>
    %1076 = vector.shape_cast %1075 : vector<1x8x256xf32> to vector<8x256xf32>
    %1077 = vector.extract_strided_slice %1076 {offsets = [0, 128], sizes = [8, 128], strides = [1, 1]} : vector<8x256xf32> to vector<8x128xf32>
    %1078 = vector.extract_strided_slice %1068 {offsets = [0, 0], sizes = [8, 128], strides = [1, 1]} : vector<16x256xf32> to vector<8x128xf32>
    %1079 = arith.addf %1072, %1078 : vector<8x128xf32>
    %1080 = vector.extract_strided_slice %1068 {offsets = [8, 128], sizes = [8, 128], strides = [1, 1]} : vector<16x256xf32> to vector<8x128xf32>
    %1081 = arith.addf %1077, %1080 : vector<8x128xf32>
    %1082 = tpu.concatenate %1079, %1081 in 0 : vector<8x128xf32>, vector<8x128xf32> -> vector<16x128xf32>
    %1083 = vector.extract_strided_slice %1082 {offsets = [0, 0], sizes = [16, 32], strides = [1, 1]} : vector<16x128xf32> to vector<16x32xf32>
    %1084 = arith.negf %1083 : vector<16x32xf32>
    %1085 = math.exp %1084 : vector<16x32xf32>
    %cst_351 = arith.constant 1.000000e+00 : f32
    %1086 = vector.broadcast %cst_351 : f32 to vector<16x32xf32>
    %1087 = arith.addf %1086, %1085 : vector<16x32xf32>
    %1088 = arith.divf %1086, %1087 : vector<16x32xf32>
    %1089 = vector.extract_strided_slice %1082 {offsets = [0, 32], sizes = [16, 32], strides = [1, 1]} : vector<16x128xf32> to vector<16x32xf32>
    %1090 = arith.negf %1089 : vector<16x32xf32>
    %1091 = math.exp %1090 : vector<16x32xf32>
    %cst_352 = arith.constant 1.000000e+00 : f32
    %1092 = vector.broadcast %cst_352 : f32 to vector<16x32xf32>
    %1093 = arith.addf %1092, %1091 : vector<16x32xf32>
    %1094 = arith.divf %1092, %1093 : vector<16x32xf32>
    %1095 = vector.extract_strided_slice %1082 {offsets = [0, 64], sizes = [16, 32], strides = [1, 1]} : vector<16x128xf32> to vector<16x32xf32>
    %1096 = math.tanh %1095 : vector<16x32xf32>
    %1097 = vector.extract_strided_slice %1082 {offsets = [0, 96], sizes = [16, 32], strides = [1, 1]} : vector<16x128xf32> to vector<16x32xf32>
    %1098 = arith.negf %1097 : vector<16x32xf32>
    %1099 = math.exp %1098 : vector<16x32xf32>
    %cst_353 = arith.constant 1.000000e+00 : f32
    %1100 = vector.broadcast %cst_353 : f32 to vector<16x32xf32>
    %1101 = arith.addf %1100, %1099 : vector<16x32xf32>
    %1102 = arith.divf %1100, %1101 : vector<16x32xf32>
    %1103 = arith.mulf %1094, %1054 : vector<16x32xf32>
    %1104 = arith.mulf %1088, %1096 : vector<16x32xf32>
    %1105 = arith.addf %1103, %1104 : vector<16x32xf32>
    %1106 = math.tanh %1105 : vector<16x32xf32>
    %1107 = arith.mulf %1102, %1106 : vector<16x32xf32>
    %1108 = vector.extract_strided_slice %1107 {offsets = [0, 0], sizes = [8, 32], strides = [1, 1]} : vector<16x32xf32> to vector<8x32xf32>
    %1109 = arith.index_cast %c4_i32_344 : i32 to index
    %c0_354 = arith.constant 0 : index
    %c0_355 = arith.constant 0 : index
    %1110 = vector.load %arg14[%1109, %c0_354, %c0_355] : memref<8x8x32xf32, #tpu.memory_space<vmem>>, vector<1x8x32xf32>
    %1111 = vector.shape_cast %1110 : vector<1x8x32xf32> to vector<8x32xf32>
    %1112 = vector.shape_cast %1108 : vector<8x32xf32> to vector<1x8x32xf32>
    tpu.vector_store %arg14[%1109, %c0_354, %c0_355], %1112 {strides = array<i32>} : memref<8x8x32xf32, #tpu.memory_space<vmem>>, vector<1x8x32xf32>,
    %1113 = vector.extract_strided_slice %1107 {offsets = [8, 0], sizes = [8, 32], strides = [1, 1]} : vector<16x32xf32> to vector<8x32xf32>
    %c7_i32_356 = arith.constant 7 : i32
    %1114 = arith.subi %c7_i32_356, %c4_i32_344 : i32
    %1115 = arith.index_cast %1114 : i32 to index
    %c0_357 = arith.constant 0 : index
    %c0_358 = arith.constant 0 : index
    %1116 = vector.load %arg15[%1115, %c0_357, %c0_358] : memref<8x8x32xf32, #tpu.memory_space<vmem>>, vector<1x8x32xf32>
    %1117 = vector.shape_cast %1116 : vector<1x8x32xf32> to vector<8x32xf32>
    %1118 = vector.shape_cast %1113 : vector<8x32xf32> to vector<1x8x32xf32>
    tpu.vector_store %arg15[%1115, %c0_357, %c0_358], %1118 {strides = array<i32>} : memref<8x8x32xf32, #tpu.memory_space<vmem>>, vector<1x8x32xf32>,
    %c5_i32_359 = arith.constant 5 : i32
    %cst_360 = arith.constant dense<0.000000e+00> : vector<16x256xf32>
    %1119 = tpu.matmul %1107, %861, %cst_360 {dimension_numbers = #tpu.dot_dimension_numbers<[1], [0], [0], [1], [0, 0, 1, 1], [], []>} : vector<16x32xf32>, vector<32x256xf32>, vector<16x256xf32> -> vector<16x256xf32>
    %1120 = arith.index_cast %c5_i32_359 : i32 to index
    %c0_361 = arith.constant 0 : index
    %c0_362 = arith.constant 0 : index
    %1121 = vector.load %arg13[%1120, %c0_361, %c0_362] : memref<8x8x256xf32, #tpu.memory_space<vmem>>, vector<1x8x256xf32>
    %1122 = vector.shape_cast %1121 : vector<1x8x256xf32> to vector<8x256xf32>
    %1123 = vector.extract_strided_slice %1122 {offsets = [0, 0], sizes = [8, 128], strides = [1, 1]} : vector<8x256xf32> to vector<8x128xf32>
    %c7_i32_363 = arith.constant 7 : i32
    %1124 = arith.subi %c7_i32_363, %c5_i32_359 : i32
    %1125 = arith.index_cast %1124 : i32 to index
    %c0_364 = arith.constant 0 : index
    %c0_365 = arith.constant 0 : index
    %1126 = vector.load %arg13[%1125, %c0_364, %c0_365] : memref<8x8x256xf32, #tpu.memory_space<vmem>>, vector<1x8x256xf32>
    %1127 = vector.shape_cast %1126 : vector<1x8x256xf32> to vector<8x256xf32>
    %1128 = vector.extract_strided_slice %1127 {offsets = [0, 128], sizes = [8, 128], strides = [1, 1]} : vector<8x256xf32> to vector<8x128xf32>
    %1129 = vector.extract_strided_slice %1119 {offsets = [0, 0], sizes = [8, 128], strides = [1, 1]} : vector<16x256xf32> to vector<8x128xf32>
    %1130 = arith.addf %1123, %1129 : vector<8x128xf32>
    %1131 = vector.extract_strided_slice %1119 {offsets = [8, 128], sizes = [8, 128], strides = [1, 1]} : vector<16x256xf32> to vector<8x128xf32>
    %1132 = arith.addf %1128, %1131 : vector<8x128xf32>
    %1133 = tpu.concatenate %1130, %1132 in 0 : vector<8x128xf32>, vector<8x128xf32> -> vector<16x128xf32>
    %1134 = vector.extract_strided_slice %1133 {offsets = [0, 0], sizes = [16, 32], strides = [1, 1]} : vector<16x128xf32> to vector<16x32xf32>
    %1135 = arith.negf %1134 : vector<16x32xf32>
    %1136 = math.exp %1135 : vector<16x32xf32>
    %cst_366 = arith.constant 1.000000e+00 : f32
    %1137 = vector.broadcast %cst_366 : f32 to vector<16x32xf32>
    %1138 = arith.addf %1137, %1136 : vector<16x32xf32>
    %1139 = arith.divf %1137, %1138 : vector<16x32xf32>
    %1140 = vector.extract_strided_slice %1133 {offsets = [0, 32], sizes = [16, 32], strides = [1, 1]} : vector<16x128xf32> to vector<16x32xf32>
    %1141 = arith.negf %1140 : vector<16x32xf32>
    %1142 = math.exp %1141 : vector<16x32xf32>
    %cst_367 = arith.constant 1.000000e+00 : f32
    %1143 = vector.broadcast %cst_367 : f32 to vector<16x32xf32>
    %1144 = arith.addf %1143, %1142 : vector<16x32xf32>
    %1145 = arith.divf %1143, %1144 : vector<16x32xf32>
    %1146 = vector.extract_strided_slice %1133 {offsets = [0, 64], sizes = [16, 32], strides = [1, 1]} : vector<16x128xf32> to vector<16x32xf32>
    %1147 = math.tanh %1146 : vector<16x32xf32>
    %1148 = vector.extract_strided_slice %1133 {offsets = [0, 96], sizes = [16, 32], strides = [1, 1]} : vector<16x128xf32> to vector<16x32xf32>
    %1149 = arith.negf %1148 : vector<16x32xf32>
    %1150 = math.exp %1149 : vector<16x32xf32>
    %cst_368 = arith.constant 1.000000e+00 : f32
    %1151 = vector.broadcast %cst_368 : f32 to vector<16x32xf32>
    %1152 = arith.addf %1151, %1150 : vector<16x32xf32>
    %1153 = arith.divf %1151, %1152 : vector<16x32xf32>
    %1154 = arith.mulf %1145, %1105 : vector<16x32xf32>
    %1155 = arith.mulf %1139, %1147 : vector<16x32xf32>
    %1156 = arith.addf %1154, %1155 : vector<16x32xf32>
    %1157 = math.tanh %1156 : vector<16x32xf32>
    %1158 = arith.mulf %1153, %1157 : vector<16x32xf32>
    %1159 = vector.extract_strided_slice %1158 {offsets = [0, 0], sizes = [8, 32], strides = [1, 1]} : vector<16x32xf32> to vector<8x32xf32>
    %1160 = arith.index_cast %c5_i32_359 : i32 to index
    %c0_369 = arith.constant 0 : index
    %c0_370 = arith.constant 0 : index
    %1161 = vector.load %arg14[%1160, %c0_369, %c0_370] : memref<8x8x32xf32, #tpu.memory_space<vmem>>, vector<1x8x32xf32>
    %1162 = vector.shape_cast %1161 : vector<1x8x32xf32> to vector<8x32xf32>
    %1163 = vector.shape_cast %1159 : vector<8x32xf32> to vector<1x8x32xf32>
    tpu.vector_store %arg14[%1160, %c0_369, %c0_370], %1163 {strides = array<i32>} : memref<8x8x32xf32, #tpu.memory_space<vmem>>, vector<1x8x32xf32>,
    %1164 = vector.extract_strided_slice %1158 {offsets = [8, 0], sizes = [8, 32], strides = [1, 1]} : vector<16x32xf32> to vector<8x32xf32>
    %c7_i32_371 = arith.constant 7 : i32
    %1165 = arith.subi %c7_i32_371, %c5_i32_359 : i32
    %1166 = arith.index_cast %1165 : i32 to index
    %c0_372 = arith.constant 0 : index
    %c0_373 = arith.constant 0 : index
    %1167 = vector.load %arg15[%1166, %c0_372, %c0_373] : memref<8x8x32xf32, #tpu.memory_space<vmem>>, vector<1x8x32xf32>
    %1168 = vector.shape_cast %1167 : vector<1x8x32xf32> to vector<8x32xf32>
    %1169 = vector.shape_cast %1164 : vector<8x32xf32> to vector<1x8x32xf32>
    tpu.vector_store %arg15[%1166, %c0_372, %c0_373], %1169 {strides = array<i32>} : memref<8x8x32xf32, #tpu.memory_space<vmem>>, vector<1x8x32xf32>,
    %c6_i32_374 = arith.constant 6 : i32
    %cst_375 = arith.constant dense<0.000000e+00> : vector<16x256xf32>
    %1170 = tpu.matmul %1158, %861, %cst_375 {dimension_numbers = #tpu.dot_dimension_numbers<[1], [0], [0], [1], [0, 0, 1, 1], [], []>} : vector<16x32xf32>, vector<32x256xf32>, vector<16x256xf32> -> vector<16x256xf32>
    %1171 = arith.index_cast %c6_i32_374 : i32 to index
    %c0_376 = arith.constant 0 : index
    %c0_377 = arith.constant 0 : index
    %1172 = vector.load %arg13[%1171, %c0_376, %c0_377] : memref<8x8x256xf32, #tpu.memory_space<vmem>>, vector<1x8x256xf32>
    %1173 = vector.shape_cast %1172 : vector<1x8x256xf32> to vector<8x256xf32>
    %1174 = vector.extract_strided_slice %1173 {offsets = [0, 0], sizes = [8, 128], strides = [1, 1]} : vector<8x256xf32> to vector<8x128xf32>
    %c7_i32_378 = arith.constant 7 : i32
    %1175 = arith.subi %c7_i32_378, %c6_i32_374 : i32
    %1176 = arith.index_cast %1175 : i32 to index
    %c0_379 = arith.constant 0 : index
    %c0_380 = arith.constant 0 : index
    %1177 = vector.load %arg13[%1176, %c0_379, %c0_380] : memref<8x8x256xf32, #tpu.memory_space<vmem>>, vector<1x8x256xf32>
    %1178 = vector.shape_cast %1177 : vector<1x8x256xf32> to vector<8x256xf32>
    %1179 = vector.extract_strided_slice %1178 {offsets = [0, 128], sizes = [8, 128], strides = [1, 1]} : vector<8x256xf32> to vector<8x128xf32>
    %1180 = vector.extract_strided_slice %1170 {offsets = [0, 0], sizes = [8, 128], strides = [1, 1]} : vector<16x256xf32> to vector<8x128xf32>
    %1181 = arith.addf %1174, %1180 : vector<8x128xf32>
    %1182 = vector.extract_strided_slice %1170 {offsets = [8, 128], sizes = [8, 128], strides = [1, 1]} : vector<16x256xf32> to vector<8x128xf32>
    %1183 = arith.addf %1179, %1182 : vector<8x128xf32>
    %1184 = tpu.concatenate %1181, %1183 in 0 : vector<8x128xf32>, vector<8x128xf32> -> vector<16x128xf32>
    %1185 = vector.extract_strided_slice %1184 {offsets = [0, 0], sizes = [16, 32], strides = [1, 1]} : vector<16x128xf32> to vector<16x32xf32>
    %1186 = arith.negf %1185 : vector<16x32xf32>
    %1187 = math.exp %1186 : vector<16x32xf32>
    %cst_381 = arith.constant 1.000000e+00 : f32
    %1188 = vector.broadcast %cst_381 : f32 to vector<16x32xf32>
    %1189 = arith.addf %1188, %1187 : vector<16x32xf32>
    %1190 = arith.divf %1188, %1189 : vector<16x32xf32>
    %1191 = vector.extract_strided_slice %1184 {offsets = [0, 32], sizes = [16, 32], strides = [1, 1]} : vector<16x128xf32> to vector<16x32xf32>
    %1192 = arith.negf %1191 : vector<16x32xf32>
    %1193 = math.exp %1192 : vector<16x32xf32>
    %cst_382 = arith.constant 1.000000e+00 : f32
    %1194 = vector.broadcast %cst_382 : f32 to vector<16x32xf32>
    %1195 = arith.addf %1194, %1193 : vector<16x32xf32>
    %1196 = arith.divf %1194, %1195 : vector<16x32xf32>
    %1197 = vector.extract_strided_slice %1184 {offsets = [0, 64], sizes = [16, 32], strides = [1, 1]} : vector<16x128xf32> to vector<16x32xf32>
    %1198 = math.tanh %1197 : vector<16x32xf32>
    %1199 = vector.extract_strided_slice %1184 {offsets = [0, 96], sizes = [16, 32], strides = [1, 1]} : vector<16x128xf32> to vector<16x32xf32>
    %1200 = arith.negf %1199 : vector<16x32xf32>
    %1201 = math.exp %1200 : vector<16x32xf32>
    %cst_383 = arith.constant 1.000000e+00 : f32
    %1202 = vector.broadcast %cst_383 : f32 to vector<16x32xf32>
    %1203 = arith.addf %1202, %1201 : vector<16x32xf32>
    %1204 = arith.divf %1202, %1203 : vector<16x32xf32>
    %1205 = arith.mulf %1196, %1156 : vector<16x32xf32>
    %1206 = arith.mulf %1190, %1198 : vector<16x32xf32>
    %1207 = arith.addf %1205, %1206 : vector<16x32xf32>
    %1208 = math.tanh %1207 : vector<16x32xf32>
    %1209 = arith.mulf %1204, %1208 : vector<16x32xf32>
    %1210 = vector.extract_strided_slice %1209 {offsets = [0, 0], sizes = [8, 32], strides = [1, 1]} : vector<16x32xf32> to vector<8x32xf32>
    %1211 = arith.index_cast %c6_i32_374 : i32 to index
    %c0_384 = arith.constant 0 : index
    %c0_385 = arith.constant 0 : index
    %1212 = vector.load %arg14[%1211, %c0_384, %c0_385] : memref<8x8x32xf32, #tpu.memory_space<vmem>>, vector<1x8x32xf32>
    %1213 = vector.shape_cast %1212 : vector<1x8x32xf32> to vector<8x32xf32>
    %1214 = vector.shape_cast %1210 : vector<8x32xf32> to vector<1x8x32xf32>
    tpu.vector_store %arg14[%1211, %c0_384, %c0_385], %1214 {strides = array<i32>} : memref<8x8x32xf32, #tpu.memory_space<vmem>>, vector<1x8x32xf32>,
    %1215 = vector.extract_strided_slice %1209 {offsets = [8, 0], sizes = [8, 32], strides = [1, 1]} : vector<16x32xf32> to vector<8x32xf32>
    %c7_i32_386 = arith.constant 7 : i32
    %1216 = arith.subi %c7_i32_386, %c6_i32_374 : i32
    %1217 = arith.index_cast %1216 : i32 to index
    %c0_387 = arith.constant 0 : index
    %c0_388 = arith.constant 0 : index
    %1218 = vector.load %arg15[%1217, %c0_387, %c0_388] : memref<8x8x32xf32, #tpu.memory_space<vmem>>, vector<1x8x32xf32>
    %1219 = vector.shape_cast %1218 : vector<1x8x32xf32> to vector<8x32xf32>
    %1220 = vector.shape_cast %1215 : vector<8x32xf32> to vector<1x8x32xf32>
    tpu.vector_store %arg15[%1217, %c0_387, %c0_388], %1220 {strides = array<i32>} : memref<8x8x32xf32, #tpu.memory_space<vmem>>, vector<1x8x32xf32>,
    %c7_i32_389 = arith.constant 7 : i32
    %cst_390 = arith.constant dense<0.000000e+00> : vector<16x256xf32>
    %1221 = tpu.matmul %1209, %861, %cst_390 {dimension_numbers = #tpu.dot_dimension_numbers<[1], [0], [0], [1], [0, 0, 1, 1], [], []>} : vector<16x32xf32>, vector<32x256xf32>, vector<16x256xf32> -> vector<16x256xf32>
    %1222 = arith.index_cast %c7_i32_389 : i32 to index
    %c0_391 = arith.constant 0 : index
    %c0_392 = arith.constant 0 : index
    %1223 = vector.load %arg13[%1222, %c0_391, %c0_392] : memref<8x8x256xf32, #tpu.memory_space<vmem>>, vector<1x8x256xf32>
    %1224 = vector.shape_cast %1223 : vector<1x8x256xf32> to vector<8x256xf32>
    %1225 = vector.extract_strided_slice %1224 {offsets = [0, 0], sizes = [8, 128], strides = [1, 1]} : vector<8x256xf32> to vector<8x128xf32>
    %c7_i32_393 = arith.constant 7 : i32
    %1226 = arith.subi %c7_i32_393, %c7_i32_389 : i32
    %1227 = arith.index_cast %1226 : i32 to index
    %c0_394 = arith.constant 0 : index
    %c0_395 = arith.constant 0 : index
    %1228 = vector.load %arg13[%1227, %c0_394, %c0_395] : memref<8x8x256xf32, #tpu.memory_space<vmem>>, vector<1x8x256xf32>
    %1229 = vector.shape_cast %1228 : vector<1x8x256xf32> to vector<8x256xf32>
    %1230 = vector.extract_strided_slice %1229 {offsets = [0, 128], sizes = [8, 128], strides = [1, 1]} : vector<8x256xf32> to vector<8x128xf32>
    %1231 = vector.extract_strided_slice %1221 {offsets = [0, 0], sizes = [8, 128], strides = [1, 1]} : vector<16x256xf32> to vector<8x128xf32>
    %1232 = arith.addf %1225, %1231 : vector<8x128xf32>
    %1233 = vector.extract_strided_slice %1221 {offsets = [8, 128], sizes = [8, 128], strides = [1, 1]} : vector<16x256xf32> to vector<8x128xf32>
    %1234 = arith.addf %1230, %1233 : vector<8x128xf32>
    %1235 = tpu.concatenate %1232, %1234 in 0 : vector<8x128xf32>, vector<8x128xf32> -> vector<16x128xf32>
    %1236 = vector.extract_strided_slice %1235 {offsets = [0, 0], sizes = [16, 32], strides = [1, 1]} : vector<16x128xf32> to vector<16x32xf32>
    %1237 = arith.negf %1236 : vector<16x32xf32>
    %1238 = math.exp %1237 : vector<16x32xf32>
    %cst_396 = arith.constant 1.000000e+00 : f32
    %1239 = vector.broadcast %cst_396 : f32 to vector<16x32xf32>
    %1240 = arith.addf %1239, %1238 : vector<16x32xf32>
    %1241 = arith.divf %1239, %1240 : vector<16x32xf32>
    %1242 = vector.extract_strided_slice %1235 {offsets = [0, 32], sizes = [16, 32], strides = [1, 1]} : vector<16x128xf32> to vector<16x32xf32>
    %1243 = arith.negf %1242 : vector<16x32xf32>
    %1244 = math.exp %1243 : vector<16x32xf32>
    %cst_397 = arith.constant 1.000000e+00 : f32
    %1245 = vector.broadcast %cst_397 : f32 to vector<16x32xf32>
    %1246 = arith.addf %1245, %1244 : vector<16x32xf32>
    %1247 = arith.divf %1245, %1246 : vector<16x32xf32>
    %1248 = vector.extract_strided_slice %1235 {offsets = [0, 64], sizes = [16, 32], strides = [1, 1]} : vector<16x128xf32> to vector<16x32xf32>
    %1249 = math.tanh %1248 : vector<16x32xf32>
    %1250 = vector.extract_strided_slice %1235 {offsets = [0, 96], sizes = [16, 32], strides = [1, 1]} : vector<16x128xf32> to vector<16x32xf32>
    %1251 = arith.negf %1250 : vector<16x32xf32>
    %1252 = math.exp %1251 : vector<16x32xf32>
    %cst_398 = arith.constant 1.000000e+00 : f32
    %1253 = vector.broadcast %cst_398 : f32 to vector<16x32xf32>
    %1254 = arith.addf %1253, %1252 : vector<16x32xf32>
    %1255 = arith.divf %1253, %1254 : vector<16x32xf32>
    %1256 = arith.mulf %1247, %1207 : vector<16x32xf32>
    %1257 = arith.mulf %1241, %1249 : vector<16x32xf32>
    %1258 = arith.addf %1256, %1257 : vector<16x32xf32>
    %1259 = math.tanh %1258 : vector<16x32xf32>
    %1260 = arith.mulf %1255, %1259 : vector<16x32xf32>
    %1261 = vector.extract_strided_slice %1260 {offsets = [0, 0], sizes = [8, 32], strides = [1, 1]} : vector<16x32xf32> to vector<8x32xf32>
    %1262 = arith.index_cast %c7_i32_389 : i32 to index
    %c0_399 = arith.constant 0 : index
    %c0_400 = arith.constant 0 : index
    %1263 = vector.load %arg14[%1262, %c0_399, %c0_400] : memref<8x8x32xf32, #tpu.memory_space<vmem>>, vector<1x8x32xf32>
    %1264 = vector.shape_cast %1263 : vector<1x8x32xf32> to vector<8x32xf32>
    %1265 = vector.shape_cast %1261 : vector<8x32xf32> to vector<1x8x32xf32>
    tpu.vector_store %arg14[%1262, %c0_399, %c0_400], %1265 {strides = array<i32>} : memref<8x8x32xf32, #tpu.memory_space<vmem>>, vector<1x8x32xf32>,
    %1266 = vector.extract_strided_slice %1260 {offsets = [8, 0], sizes = [8, 32], strides = [1, 1]} : vector<16x32xf32> to vector<8x32xf32>
    %c7_i32_401 = arith.constant 7 : i32
    %1267 = arith.subi %c7_i32_401, %c7_i32_389 : i32
    %1268 = arith.index_cast %1267 : i32 to index
    %c0_402 = arith.constant 0 : index
    %c0_403 = arith.constant 0 : index
    %1269 = vector.load %arg15[%1268, %c0_402, %c0_403] : memref<8x8x32xf32, #tpu.memory_space<vmem>>, vector<1x8x32xf32>
    %1270 = vector.shape_cast %1269 : vector<1x8x32xf32> to vector<8x32xf32>
    %1271 = vector.shape_cast %1266 : vector<8x32xf32> to vector<1x8x32xf32>
    tpu.vector_store %arg15[%1268, %c0_402, %c0_403], %1271 {strides = array<i32>} : memref<8x8x32xf32, #tpu.memory_space<vmem>>, vector<1x8x32xf32>,
    %c8_i32_404 = arith.constant 8 : i32
    %1272 = vector.extract_strided_slice %1260 {offsets = [8, 0], sizes = [8, 32], strides = [1, 1]} : vector<16x32xf32> to vector<8x32xf32>
    %c0_405 = arith.constant 0 : index
    %c0_406 = arith.constant 0 : index
    %1273 = vector.load %arg10[%c0_405, %c0_406] : memref<32x10xf32, #tpu.memory_space<vmem>>, vector<32x10xf32>
    %cst_407 = arith.constant dense<0.000000e+00> : vector<8x10xf32>
    %1274 = tpu.matmul %1272, %1273, %cst_407 {dimension_numbers = #tpu.dot_dimension_numbers<[1], [0], [0], [1], [0, 0, 1, 1], [], []>} : vector<8x32xf32>, vector<32x10xf32>, vector<8x10xf32> -> vector<8x10xf32>
    %c0_408 = arith.constant 0 : index
    %c0_409 = arith.constant 0 : index
    %1275 = vector.load %arg11[%c0_408, %c0_409] : memref<1x10xf32, #tpu.memory_space<vmem>>, vector<1x10xf32>
    %1276 = vector.broadcast %1275 : vector<1x10xf32> to vector<8x10xf32>
    %1277 = arith.addf %1274, %1276 : vector<8x10xf32>
    %c0_410 = arith.constant 0 : index
    %c0_411 = arith.constant 0 : index
    %1278 = vector.load %arg12[%c0_410, %c0_411] : memref<8x10xf32, #tpu.memory_space<vmem>>, vector<8x10xf32>
    tpu.vector_store %arg12[%c0_410, %c0_411], %1277 {strides = array<i32>} : memref<8x10xf32, #tpu.memory_space<vmem>>, vector<8x10xf32>,
    return
  }
}

</mosaic_0001>

<llo_original>
// kernel: rnn_forward.1
$region0: #{rnn_forward.1}
  #allocation0 [shape = 'u32[]', space=smem, size = 0x4, offset = 0x4, fixed_abs, tag = 'smem constant byte address 0x4 - core index']
  #allocation1 [shape = 'u32[144,128]{1,0:T(1,128)}', space=vmem, size = 0x12000, scoped, tag = 'internal scratch']
  #allocation2 [shape = 'f32[8,8,256]{2,1,0:T(8,128)}', space=vmem, size = 0x10000, scoped, tag = 'scratch operand']
  #allocation3 [shape = 'f32[8,8,32]{2,1,0:T(8,128)}', space=vmem, size = 0x8000, scoped, tag = 'scratch operand']
  #allocation4 [shape = 'f32[8,8,32]{2,1,0:T(8,128)}', space=vmem, size = 0x8000, scoped, tag = 'scratch operand']
  %s0 = inlined_call_operand.vmem [shape: f32[8,8,16], index: 0, kind: input, shape index: {}]
  %s1 = inlined_call_operand.vmem [shape: f32[16,256], index: 1, kind: input, shape index: {}]
  %s2 = inlined_call_operand.vmem [shape: f32[32,256], index: 2, kind: input, shape index: {}]
  %s3 = inlined_call_operand.vmem [shape: f32[1,256], index: 3, kind: input, shape index: {}]
  %s4 = inlined_call_operand.vmem [shape: f32[64,256], index: 4, kind: input, shape index: {}]
  %s5 = inlined_call_operand.vmem [shape: f32[32,256], index: 5, kind: input, shape index: {}]
  %s6 = inlined_call_operand.vmem [shape: f32[1,256], index: 6, kind: input, shape index: {}]
  %s7 = inlined_call_operand.vmem [shape: f32[64,256], index: 7, kind: input, shape index: {}]
  %s8 = inlined_call_operand.vmem [shape: f32[32,256], index: 8, kind: input, shape index: {}]
  %s9 = inlined_call_operand.vmem [shape: f32[1,256], index: 9, kind: input, shape index: {}]
  %s10 = inlined_call_operand.vmem [shape: f32[32,10], index: 10, kind: input, shape index: {}]
  %s11 = inlined_call_operand.vmem [shape: f32[1,10], index: 11, kind: input, shape index: {}]
  %s12 = inlined_call_operand.vmem [shape: f32[8,10], index: 12, kind: output, shape index: {}]
  %s13 = sld [smem:[#allocation0]]
  $region58: #{rnn_forward.1} parent=0
    _
  %s15 = ssub.s32 1, %s13
  %s16 = scalar_select 0, %s15, %s13
  // Predicated region
  $region2: #{rnn_forward.1} parent=0 // pred_check
    _
  $region3: #{rnn_forward.1} parent=0 // pred_check_branch
    %18 = sbr.rel (0) target = $region5
  $region4: #{rnn_forward.1} parent=0 // pred_region
    _
  $region5: #{rnn_forward.1} parent=0 // pred_fallthru
    _
  // Predicated region
  $region6: #{rnn_forward.1} parent=0 // pred_check
    _
  $region7: #{rnn_forward.1} parent=0 // pred_check_branch
    %20 = sbr.rel (0) target = $region9
  $region8: #{rnn_forward.1} parent=0 // pred_region
    _
  $region9: #{rnn_forward.1} parent=0 // pred_fallthru
    _
  // Predicated region
  $region10: #{rnn_forward.1} parent=0 // pred_check
    _
  $region11: #{rnn_forward.1} parent=0 // pred_check_branch
    %22 = sbr.rel (0) target = $region13
  $region12: #{rnn_forward.1} parent=0 // pred_region
    _
  $region13: #{rnn_forward.1} parent=0 // pred_fallthru
    _
  // Predicated region
  $region14: #{rnn_forward.1} parent=0 // pred_check
    _
  $region15: #{rnn_forward.1} parent=0 // pred_check_branch
    %24 = sbr.rel (0) target = $region17
  $region16: #{rnn_forward.1} parent=0 // pred_region
    _
  $region17: #{rnn_forward.1} parent=0 // pred_fallthru
    _
  // Predicated region
  $region18: #{rnn_forward.1} parent=0 // pred_check
    _
  $region19: #{rnn_forward.1} parent=0 // pred_check_branch
    %26 = sbr.rel (0) target = $region21
  $region20: #{rnn_forward.1} parent=0 // pred_region
    _
  $region21: #{rnn_forward.1} parent=0 // pred_fallthru
    _
  // Predicated region
  $region22: #{rnn_forward.1} parent=0 // pred_check
    _
  $region23: #{rnn_forward.1} parent=0 // pred_check_branch
    %28 = sbr.rel (0) target = $region25
  $region24: #{rnn_forward.1} parent=0 // pred_region
    _
  $region25: #{rnn_forward.1} parent=0 // pred_fallthru
    _
  // Predicated region
  $region26: #{rnn_forward.1} parent=0 // pred_check
    _
  $region27: #{rnn_forward.1} parent=0 // pred_check_branch
    %30 = sbr.rel (0) target = $region29
  $region28: #{rnn_forward.1} parent=0 // pred_region
    _
  $region29: #{rnn_forward.1} parent=0 // pred_fallthru
    _
  // Predicated region
  $region30: #{rnn_forward.1} parent=0 // pred_check
    _
  $region31: #{rnn_forward.1} parent=0 // pred_check_branch
    %32 = sbr.rel (0) target = $region33
  $region32: #{rnn_forward.1} parent=0 // pred_region
    _
  $region33: #{rnn_forward.1} parent=0 // pred_fallthru
    _
  // Predicated region
  $region34: #{rnn_forward.1} parent=0 // pred_check
    _
  $region35: #{rnn_forward.1} parent=0 // pred_check_branch
    %34 = sbr.rel (0) target = $region37
  $region36: #{rnn_forward.1} parent=0 // pred_region
    _
  $region37: #{rnn_forward.1} parent=0 // pred_fallthru
    _
  // Predicated region
  $region38: #{rnn_forward.1} parent=0 // pred_check
    _
  $region39: #{rnn_forward.1} parent=0 // pred_check_branch
    %36 = sbr.rel (0) target = $region41
  $region40: #{rnn_forward.1} parent=0 // pred_region
    _
  $region41: #{rnn_forward.1} parent=0 // pred_fallthru
    _
  // Predicated region
  $region42: #{rnn_forward.1} parent=0 // pred_check
    _
  $region43: #{rnn_forward.1} parent=0 // pred_check_branch
    %38 = sbr.rel (0) target = $region45
  $region44: #{rnn_forward.1} parent=0 // pred_region
    _
  $region45: #{rnn_forward.1} parent=0 // pred_fallthru
    _
  // Predicated region
  $region46: #{rnn_forward.1} parent=0 // pred_check
    _
  $region47: #{rnn_forward.1} parent=0 // pred_check_branch
    %40 = sbr.rel (0) target = $region49
  $region48: #{rnn_forward.1} parent=0 // pred_region
    _
  $region49: #{rnn_forward.1} parent=0 // pred_fallthru
    _
  %v41 = vld [vmem:[%s0] sm:$0xff]
  %v42 = vld [vmem:[%s0 + $0x8] sm:$0xff]
  %v43 = vld [vmem:[%s0 + $0x10] sm:$0xff]
  %v44 = vld [vmem:[%s0 + $0x18] sm:$0xff]
  %v45 = vld [vmem:[%s0 + $0x20] sm:$0xff]
  %v46 = vld [vmem:[%s0 + $0x28] sm:$0xff]
  %v47 = vld [vmem:[%s0 + $0x30] sm:$0xff]
  %v48 = vld [vmem:[%s0 + $0x38] sm:$0xff]
  %v49 = vld [vmem:[%s1] sm:$0xff]
  %v50 = vld [vmem:[%s1 + $0x8] sm:$0xff]
  %v51 = vld [vmem:[%s1 + $0x10] sm:$0xff]
  %v52 = vld [vmem:[%s1 + $0x18] sm:$0xff]
  %v53 = vld [vmem:[%s3] sm:$0x3]
  %v55 = vlaneseq
  %v56 = vshrl.u32 %v55, 7
  %v57 = vsub.s32 0, %v56
  %v58 = vrot.slane %v53, %v57
  %v59 = vlaneseq
  %v60 = vshrl.u32 %v59, 7
  %v61 = vsub.s32 1, %v60
  %v62 = vrot.slane %v53, %v61
  %vm65 = vcmask 130048
  %v67 = vsel %vm65, %v41, 0
  %v70 = vsel %vm65, %v42, 0
  %v73 = vsel %vm65, %v43, 0
  %v76 = vsel %vm65, %v44, 0
  %v79 = vsel %vm65, %v45, 0
  %v82 = vsel %vm65, %v46, 0
  %v85 = vsel %vm65, %v47, 0
  %v88 = vsel %vm65, %v48, 0
  %90 = vmatprep.subr.mxu0 0.0
  %91 = vmatpush1.msra.mxu0 0.0
  %92 = vmatprep.subr.mxu0 0.0
  %93 = vmatpush1.msra.mxu0 0.0
  %94 = vmatprep.subr.mxu0 0.0
  %95 = vmatpush1.msra.mxu0 0.0
  %96 = vmatprep.subr.mxu0 0.0
  %97 = vmatpush1.msra.mxu0 0.0
  %98 = vmatprep.subr.mxu0 0.0
  %99 = vmatpush1.msra.mxu0 0.0
  %100 = vmatprep.subr.mxu0 0.0
  %101 = vmatpush1.msra.mxu0 0.0
  %102 = vmatprep.subr.mxu0 0.0
  %103 = vmatpush1.msra.mxu0 0.0
  %104 = vmatprep.subr.mxu0 0.0
  %105 = vmatpush1.msra.mxu0 0.0
  %106 = vmatprep.subr.mxu0 0.0
  %107 = vmatpush1.msra.mxu0 0.0
  %108 = vmatprep.subr.mxu0 0.0
  %109 = vmatpush1.msra.mxu0 0.0
  %110 = vmatprep.subr.mxu0 0.0
  %111 = vmatpush1.msra.mxu0 0.0
  %112 = vmatprep.subr.mxu0 0.0
  %113 = vmatpush1.msra.mxu0 0.0
  %114 = vmatprep.subr.mxu0 0.0
  %115 = vmatpush1.msra.mxu0 0.0
  %116 = vmatprep.subr.mxu0 0.0
  %117 = vmatpush1.msra.mxu0 0.0
  %118 = vmatprep.subr.mxu0 %v52
  %119 = vmatpush1.msra.mxu0 %v51
  %120 = vmatprep.subr.mxu0 %v50
  %121 = vmatpush1.msra.mxu0 %v49
  %122 = vmatprep.subr.mxu0 0.0
  %123 = vmatpush2.msra.mxu0 0.0
  %124 = vmatprep.subr.mxu0 0.0
  %125 = vmatpush2.msra.mxu0 0.0
  %126 = vmatprep.subr.mxu0 0.0
  %127 = vmatpush2.msra.mxu0 0.0
  %128 = vmatprep.subr.mxu0 0.0
  %129 = vmatpush2.msra.mxu0 0.0
  %130 = vmatprep.subr.mxu0 0.0
  %131 = vmatpush2.msra.mxu0 0.0
  %132 = vmatprep.subr.mxu0 0.0
  %133 = vmatpush2.msra.mxu0 0.0
  %134 = vmatprep.subr.mxu0 0.0
  %135 = vmatpush2.msra.mxu0 0.0
  %136 = vmatprep.subr.mxu0 0.0
  %137 = vmatpush2.msra.mxu0 0.0
  %138 = vmatprep.subr.mxu0 0.0
  %139 = vmatpush2.msra.mxu0 0.0
  %140 = vmatprep.subr.mxu0 0.0
  %141 = vmatpush2.msra.mxu0 0.0
  %142 = vmatprep.subr.mxu0 0.0
  %143 = vmatpush2.msra.mxu0 0.0
  %144 = vmatprep.subr.mxu0 0.0
  %145 = vmatpush2.msra.mxu0 0.0
  %146 = vmatprep.subr.mxu0 0.0
  %147 = vmatpush2.msra.mxu0 0.0
  %148 = vmatprep.subr.mxu0 0.0
  %149 = vmatpush2.msra.mxu0 0.0
  %150 = vmatprep.subr.mxu0 0.0
  %151 = vmatpush2.msra.mxu0 0.0
  %152 = vmatprep.subr.mxu0 0.0
  %153 = vmatpush2.msra.mxu0 0.0
  %154 = vmatprep.mubr.f32.mxu0 0.0
  %155 = vmatmul.mubr.f32.gmra.mxu0 %v67
  %v156 = vpop.f32.mrf.mxu0
  %v157 = vadd.f32 %v58, %v156
  %v158 = vpop.f32.mrf.mxu0
  %v159 = vadd.f32 %v62, %v158
  %160 = vmatprep.mubr.f32.mxu0 0.0
  %161 = vmatmul.mubr.f32.gmra.mxu0 %v70
  %v162 = vpop.f32.mrf.mxu0
  %v163 = vadd.f32 %v58, %v162
  %v164 = vpop.f32.mrf.mxu0
  %v165 = vadd.f32 %v62, %v164
  %166 = vmatprep.mubr.f32.mxu0 0.0
  %167 = vmatmul.mubr.f32.gmra.mxu0 %v73
  %v168 = vpop.f32.mrf.mxu0
  %v169 = vadd.f32 %v58, %v168
  %v170 = vpop.f32.mrf.mxu0
  %v171 = vadd.f32 %v62, %v170
  %172 = vmatprep.mubr.f32.mxu0 0.0
  %173 = vmatmul.mubr.f32.gmra.mxu0 %v76
  %v174 = vpop.f32.mrf.mxu0
  %v175 = vadd.f32 %v58, %v174
  %v176 = vpop.f32.mrf.mxu0
  %v177 = vadd.f32 %v62, %v176
  %178 = vmatprep.mubr.f32.mxu0 0.0
  %179 = vmatmul.mubr.f32.gmra.mxu0 %v79
  %v180 = vpop.f32.mrf.mxu0
  %v181 = vadd.f32 %v58, %v180
  %v182 = vpop.f32.mrf.mxu0
  %v183 = vadd.f32 %v62, %v182
  %184 = vmatprep.mubr.f32.mxu0 0.0
  %185 = vmatmul.mubr.f32.gmra.mxu0 %v82
  %v186 = vpop.f32.mrf.mxu0
  %v187 = vadd.f32 %v58, %v186
  %v188 = vpop.f32.mrf.mxu0
  %v189 = vadd.f32 %v62, %v188
  %190 = vmatprep.mubr.f32.mxu0 0.0
  %191 = vmatmul.mubr.f32.gmra.mxu0 %v85
  %v192 = vpop.f32.mrf.mxu0
  %v193 = vadd.f32 %v58, %v192
  %v194 = vpop.f32.mrf.mxu0
  %v195 = vadd.f32 %v62, %v194
  %196 = vmatprep.mubr.f32.mxu0 0.0
  %197 = vmatmul.mubr.f32.gmra.mxu0 %v88
  %v198 = vpop.f32.mrf.mxu0
  %v199 = vadd.f32 %v58, %v198
  %v200 = vpop.f32.mrf.mxu0
  %v201 = vadd.f32 %v62, %v200
  %202 = vdwg.mxu0
  %203 = vst [vmem:[#allocation2] sm:$0xff] %v157
  %204 = vst [vmem:[#allocation2 + $0x8] sm:$0xff] %v159
  %205 = vst [vmem:[#allocation2 + $0x10] sm:$0xff] %v163
  %206 = vst [vmem:[#allocation2 + $0x18] sm:$0xff] %v165
  %207 = vst [vmem:[#allocation2 + $0x20] sm:$0xff] %v169
  %208 = vst [vmem:[#allocation2 + $0x28] sm:$0xff] %v171
  %209 = vst [vmem:[#allocation2 + $0x30] sm:$0xff] %v175
  %210 = vst [vmem:[#allocation2 + $0x38] sm:$0xff] %v177
  %211 = vst [vmem:[#allocation2 + $0x40] sm:$0xff] %v181
  %212 = vst [vmem:[#allocation2 + $0x48] sm:$0xff] %v183
  %213 = vst [vmem:[#allocation2 + $0x50] sm:$0xff] %v187
  %214 = vst [vmem:[#allocation2 + $0x58] sm:$0xff] %v189
  %215 = vst [vmem:[#allocation2 + $0x60] sm:$0xff] %v193
  %216 = vst [vmem:[#allocation2 + $0x68] sm:$0xff] %v195
  %217 = vst [vmem:[#allocation2 + $0x70] sm:$0xff] %v199
  %218 = vst [vmem:[#allocation2 + $0x78] sm:$0xff] %v201
  %v219 = vld [vmem:[%s2] sm:$0xff]
  %v220 = vld [vmem:[%s2 + $0x8] sm:$0xff]
  %v221 = vld [vmem:[%s2 + $0x10] sm:$0xff]
  %v222 = vld [vmem:[%s2 + $0x18] sm:$0xff]
  %v223 = vld [vmem:[%s2 + $0x20] sm:$0xff]
  %v224 = vld [vmem:[%s2 + $0x28] sm:$0xff]
  %v225 = vld [vmem:[%s2 + $0x30] sm:$0xff]
  %v226 = vld [vmem:[%s2 + $0x38] sm:$0xff]
  %vm227 = vcmask 261120
  %v229 = vsel %vm227, 0.0, 0
  %231 = vmatprep.subr.mxu0 0.0
  %232 = vmatpush1.msra.mxu0 0.0
  %233 = vmatprep.subr.mxu0 0.0
  %234 = vmatpush1.msra.mxu0 0.0
  %235 = vmatprep.subr.mxu0 0.0
  %236 = vmatpush1.msra.mxu0 0.0
  %237 = vmatprep.subr.mxu0 0.0
  %238 = vmatpush1.msra.mxu0 0.0
  %239 = vmatprep.subr.mxu0 0.0
  %240 = vmatpush1.msra.mxu0 0.0
  %241 = vmatprep.subr.mxu0 0.0
  %242 = vmatpush1.msra.mxu0 0.0
  %243 = vmatprep.subr.mxu0 0.0
  %244 = vmatpush1.msra.mxu0 0.0
  %245 = vmatprep.subr.mxu0 0.0
  %246 = vmatpush1.msra.mxu0 0.0
  %247 = vmatprep.subr.mxu0 0.0
  %248 = vmatpush1.msra.mxu0 0.0
  %249 = vmatprep.subr.mxu0 0.0
  %250 = vmatpush1.msra.mxu0 0.0
  %251 = vmatprep.subr.mxu0 0.0
  %252 = vmatpush1.msra.mxu0 0.0
  %253 = vmatprep.subr.mxu0 0.0
  %254 = vmatpush1.msra.mxu0 0.0
  %255 = vmatprep.subr.mxu0 %v226
  %256 = vmatpush1.msra.mxu0 %v225
  %257 = vmatprep.subr.mxu0 %v224
  %258 = vmatpush1.msra.mxu0 %v223
  %259 = vmatprep.subr.mxu0 %v222
  %260 = vmatpush1.msra.mxu0 %v221
  %261 = vmatprep.subr.mxu0 %v220
  %262 = vmatpush1.msra.mxu0 %v219
  %263 = vmatprep.subr.mxu0 0.0
  %264 = vmatpush2.msra.mxu0 0.0
  %265 = vmatprep.subr.mxu0 0.0
  %266 = vmatpush2.msra.mxu0 0.0
  %267 = vmatprep.subr.mxu0 0.0
  %268 = vmatpush2.msra.mxu0 0.0
  %269 = vmatprep.subr.mxu0 0.0
  %270 = vmatpush2.msra.mxu0 0.0
  %271 = vmatprep.subr.mxu0 0.0
  %272 = vmatpush2.msra.mxu0 0.0
  %273 = vmatprep.subr.mxu0 0.0
  %274 = vmatpush2.msra.mxu0 0.0
  %275 = vmatprep.subr.mxu0 0.0
  %276 = vmatpush2.msra.mxu0 0.0
  %277 = vmatprep.subr.mxu0 0.0
  %278 = vmatpush2.msra.mxu0 0.0
  %279 = vmatprep.subr.mxu0 0.0
  %280 = vmatpush2.msra.mxu0 0.0
  %281 = vmatprep.subr.mxu0 0.0
  %282 = vmatpush2.msra.mxu0 0.0
  %283 = vmatprep.subr.mxu0 0.0
  %284 = vmatpush2.msra.mxu0 0.0
  %285 = vmatprep.subr.mxu0 0.0
  %286 = vmatpush2.msra.mxu0 0.0
  %287 = vmatprep.subr.mxu0 0.0
  %288 = vmatpush2.msra.mxu0 0.0
  %289 = vmatprep.subr.mxu0 0.0
  %290 = vmatpush2.msra.mxu0 0.0
  %291 = vmatprep.subr.mxu0 0.0
  %292 = vmatpush2.msra.mxu0 0.0
  %293 = vmatprep.subr.mxu0 0.0
  %294 = vmatpush2.msra.mxu0 0.0
  %295 = vmatprep.mubr.f32.mxu0 0.0
  %296 = vmatmul.mubr.f32.gmra.mxu0 %v229
  %v297 = vpop.f32.mrf.mxu0
  %v298 = vadd.f32 0.0, %v297
  %v299 = vpop.f32.mrf.mxu0
  %300 = vmatprep.mubr.f32.mxu0 0.0
  %301 = vmatmul.mubr.f32.gmra.mxu0 %v229
  %v302 = vpop.f32.mrf.mxu0
  %v303 = vpop.f32.mrf.mxu0
  %v304 = vadd.f32 0.0, %v303
  %305 = vdwg.mxu0
  %v306 = vld [vmem:[#allocation2] sm:$0xff]
  %s307 = scalar_lea.vmem [#allocation2], 112
  %v308 = vld [vmem:[%s307 + $0x8] sm:$0xff]
  %v309 = vadd.f32 %v306, %v298
  %v310 = vadd.f32 %v308, %v304
  %v311 = vxor.u32 %v309, 2147483648
  %v312 = vxor.u32 %v310, 2147483648
  %v313 = vmul.f32 %v311, 1.442695
  %v314 = vpow.pop %v313
  %v315 = vmul.f32 %v312, 1.442695
  %v316 = vpow.pop %v315
  %v317 = vadd.f32 %v314, 1.0
  %v318 = vadd.f32 %v316, 1.0
  %v319 = vrcp.pop %v317
  %v320 = vmul.f32 1.0, %v319
  %v321 = vrcp.pop %v318
  %v322 = vmul.f32 1.0, %v321
  %v323 = vtanh.pop %v309
  %v324 = vtanh.pop %v310
  %v325 = vmul.f32 %v320, 0.0
  %v326 = vmul.f32 %v322, 0.0
  %329 = vrot.lane.b32.xlu0 %v323, 64
  %v330 = vpop.permute.xlu0 %329
  %331 = vrot.lane.b32.xlu0 %v324, 64
  %v332 = vpop.permute.xlu0 %331
  %v335 = vmul.f32 %v320, %v330
  %v336 = vmul.f32 %v322, %v332
  %339 = vrot.lane.b32.xlu0 %v335, 32
  %v340 = vpop.permute.xlu0 %339
  %341 = vrot.lane.b32.xlu0 %v336, 32
  %v342 = vpop.permute.xlu0 %341
  %v345 = vadd.f32 %v325, %v340
  %v346 = vadd.f32 %v326, %v342
  %v347 = vtanh.pop %v345
  %v348 = vtanh.pop %v346
  %351 = vrot.lane.b32.xlu0 %v347, 64
  %v352 = vpop.permute.xlu0 %351
  %353 = vrot.lane.b32.xlu0 %v348, 64
  %v354 = vpop.permute.xlu0 %353
  %v357 = vmul.f32 %v320, %v352
  %v358 = vmul.f32 %v322, %v354
  %360 = vrot.lane.b32.xlu0 %v357, 32
  %v361 = vpop.permute.xlu0 %360
  %363 = vst.msk [vmem:[#allocation3] sm:$0xff] %vm227, %v361
  %365 = vrot.lane.b32.xlu0 %v358, 32
  %v366 = vpop.permute.xlu0 %365
  %s368 = scalar_lea.vmem [#allocation4], 56
  %369 = vst.msk [vmem:[%s368] sm:$0xff] %vm227, %v366
  %v370 = vsel %vm227, %v361, 0
  %v372 = vsel %vm227, %v366, 0
  %374 = vmatprep.subr.mxu0 0.0
  %375 = vmatpush1.msra.mxu0 0.0
  %376 = vmatprep.subr.mxu0 0.0
  %377 = vmatpush1.msra.mxu0 0.0
  %378 = vmatprep.subr.mxu0 0.0
  %379 = vmatpush1.msra.mxu0 0.0
  %380 = vmatprep.subr.mxu0 0.0
  %381 = vmatpush1.msra.mxu0 0.0
  %382 = vmatprep.subr.mxu0 0.0
  %383 = vmatpush1.msra.mxu0 0.0
  %384 = vmatprep.subr.mxu0 0.0
  %385 = vmatpush1.msra.mxu0 0.0
  %386 = vmatprep.subr.mxu0 0.0
  %387 = vmatpush1.msra.mxu0 0.0
  %388 = vmatprep.subr.mxu0 0.0
  %389 = vmatpush1.msra.mxu0 0.0
  %390 = vmatprep.subr.mxu0 0.0
  %391 = vmatpush1.msra.mxu0 0.0
  %392 = vmatprep.subr.mxu0 0.0
  %393 = vmatpush1.msra.mxu0 0.0
  %394 = vmatprep.subr.mxu0 0.0
  %395 = vmatpush1.msra.mxu0 0.0
  %396 = vmatprep.subr.mxu0 0.0
  %397 = vmatpush1.msra.mxu0 0.0
  %398 = vmatprep.subr.mxu0 %v226
  %399 = vmatpush1.msra.mxu0 %v225
  %400 = vmatprep.subr.mxu0 %v224
  %401 = vmatpush1.msra.mxu0 %v223
  %402 = vmatprep.subr.mxu0 %v222
  %403 = vmatpush1.msra.mxu0 %v221
  %404 = vmatprep.subr.mxu0 %v220
  %405 = vmatpush1.msra.mxu0 %v219
  %406 = vmatprep.subr.mxu0 0.0
  %407 = vmatpush2.msra.mxu0 0.0
  %408 = vmatprep.subr.mxu0 0.0
  %409 = vmatpush2.msra.mxu0 0.0
  %410 = vmatprep.subr.mxu0 0.0
  %411 = vmatpush2.msra.mxu0 0.0
  %412 = vmatprep.subr.mxu0 0.0
  %413 = vmatpush2.msra.mxu0 0.0
  %414 = vmatprep.subr.mxu0 0.0
  %415 = vmatpush2.msra.mxu0 0.0
  %416 = vmatprep.subr.mxu0 0.0
  %417 = vmatpush2.msra.mxu0 0.0
  %418 = vmatprep.subr.mxu0 0.0
  %419 = vmatpush2.msra.mxu0 0.0
  %420 = vmatprep.subr.mxu0 0.0
  %421 = vmatpush2.msra.mxu0 0.0
  %422 = vmatprep.subr.mxu0 0.0
  %423 = vmatpush2.msra.mxu0 0.0
  %424 = vmatprep.subr.mxu0 0.0
  %425 = vmatpush2.msra.mxu0 0.0
  %426 = vmatprep.subr.mxu0 0.0
  %427 = vmatpush2.msra.mxu0 0.0
  %428 = vmatprep.subr.mxu0 0.0
  %429 = vmatpush2.msra.mxu0 0.0
  %430 = vmatprep.subr.mxu0 0.0
  %431 = vmatpush2.msra.mxu0 0.0
  %432 = vmatprep.subr.mxu0 0.0
  %433 = vmatpush2.msra.mxu0 0.0
  %434 = vmatprep.subr.mxu0 0.0
  %435 = vmatpush2.msra.mxu0 0.0
  %436 = vmatprep.subr.mxu0 0.0
  %437 = vmatpush2.msra.mxu0 0.0
  %438 = vmatprep.mubr.f32.mxu0 0.0
  %439 = vmatmul.mubr.f32.gmra.mxu0 %v370
  %v440 = vpop.f32.mrf.mxu0
  %v441 = vadd.f32 0.0, %v440
  %v442 = vpop.f32.mrf.mxu0
  %443 = vmatprep.mubr.f32.mxu0 0.0
  %444 = vmatmul.mubr.f32.gmra.mxu0 %v372
  %v445 = vpop.f32.mrf.mxu0
  %v446 = vpop.f32.mrf.mxu0
  %v447 = vadd.f32 0.0, %v446
  %448 = vdwg.mxu0
  %s449 = scalar_lea.vmem [#allocation2], 16
  %v450 = vld [vmem:[%s449] sm:$0xff]
  %s451 = scalar_lea.vmem [#allocation2], 96
  %v452 = vld [vmem:[%s451 + $0x8] sm:$0xff]
  %v453 = vadd.f32 %v450, %v441
  %v454 = vadd.f32 %v452, %v447
  %v455 = vxor.u32 %v453, 2147483648
  %v456 = vxor.u32 %v454, 2147483648
  %v457 = vmul.f32 %v455, 1.442695
  %v458 = vpow.pop %v457
  %v459 = vmul.f32 %v456, 1.442695
  %v460 = vpow.pop %v459
  %v461 = vadd.f32 %v458, 1.0
  %v462 = vadd.f32 %v460, 1.0
  %v463 = vrcp.pop %v461
  %v464 = vmul.f32 1.0, %v463
  %v465 = vrcp.pop %v462
  %v466 = vmul.f32 1.0, %v465
  %v467 = vtanh.pop %v453
  %v468 = vtanh.pop %v454
  %v469 = vmul.f32 %v464, %v345
  %v470 = vmul.f32 %v466, %v346
  %473 = vrot.lane.b32.xlu0 %v467, 64
  %v474 = vpop.permute.xlu0 %473
  %475 = vrot.lane.b32.xlu0 %v468, 64
  %v476 = vpop.permute.xlu0 %475
  %v479 = vmul.f32 %v464, %v474
  %v480 = vmul.f32 %v466, %v476
  %483 = vrot.lane.b32.xlu0 %v479, 32
  %v484 = vpop.permute.xlu0 %483
  %485 = vrot.lane.b32.xlu0 %v480, 32
  %v486 = vpop.permute.xlu0 %485
  %v489 = vadd.f32 %v469, %v484
  %v490 = vadd.f32 %v470, %v486
  %v491 = vtanh.pop %v489
  %v492 = vtanh.pop %v490
  %495 = vrot.lane.b32.xlu0 %v491, 64
  %v496 = vpop.permute.xlu0 %495
  %497 = vrot.lane.b32.xlu0 %v492, 64
  %v498 = vpop.permute.xlu0 %497
  %v501 = vmul.f32 %v464, %v496
  %v502 = vmul.f32 %v466, %v498
  %504 = vrot.lane.b32.xlu0 %v501, 32
  %v505 = vpop.permute.xlu0 %504
  %s507 = scalar_lea.vmem [#allocation3], 8
  %508 = vst.msk [vmem:[%s507] sm:$0xff] %vm227, %v505
  %510 = vrot.lane.b32.xlu0 %v502, 32
  %v511 = vpop.permute.xlu0 %510
  %s513 = scalar_lea.vmem [#allocation4], 48
  %514 = vst.msk [vmem:[%s513] sm:$0xff] %vm227, %v511
  %v515 = vsel %vm227, %v505, 0
  %v517 = vsel %vm227, %v511, 0
  %519 = vmatprep.subr.mxu0 0.0
  %520 = vmatpush1.msra.mxu0 0.0
  %521 = vmatprep.subr.mxu0 0.0
  %522 = vmatpush1.msra.mxu0 0.0
  %523 = vmatprep.subr.mxu0 0.0
  %524 = vmatpush1.msra.mxu0 0.0
  %525 = vmatprep.subr.mxu0 0.0
  %526 = vmatpush1.msra.mxu0 0.0
  %527 = vmatprep.subr.mxu0 0.0
  %528 = vmatpush1.msra.mxu0 0.0
  %529 = vmatprep.subr.mxu0 0.0
  %530 = vmatpush1.msra.mxu0 0.0
  %531 = vmatprep.subr.mxu0 0.0
  %532 = vmatpush1.msra.mxu0 0.0
  %533 = vmatprep.subr.mxu0 0.0
  %534 = vmatpush1.msra.mxu0 0.0
  %535 = vmatprep.subr.mxu0 0.0
  %536 = vmatpush1.msra.mxu0 0.0
  %537 = vmatprep.subr.mxu0 0.0
  %538 = vmatpush1.msra.mxu0 0.0
  %539 = vmatprep.subr.mxu0 0.0
  %540 = vmatpush1.msra.mxu0 0.0
  %541 = vmatprep.subr.mxu0 0.0
  %542 = vmatpush1.msra.mxu0 0.0
  %543 = vmatprep.subr.mxu0 %v226
  %544 = vmatpush1.msra.mxu0 %v225
  %545 = vmatprep.subr.mxu0 %v224
  %546 = vmatpush1.msra.mxu0 %v223
  %547 = vmatprep.subr.mxu0 %v222
  %548 = vmatpush1.msra.mxu0 %v221
  %549 = vmatprep.subr.mxu0 %v220
  %550 = vmatpush1.msra.mxu0 %v219
  %551 = vmatprep.subr.mxu0 0.0
  %552 = vmatpush2.msra.mxu0 0.0
  %553 = vmatprep.subr.mxu0 0.0
  %554 = vmatpush2.msra.mxu0 0.0
  %555 = vmatprep.subr.mxu0 0.0
  %556 = vmatpush2.msra.mxu0 0.0
  %557 = vmatprep.subr.mxu0 0.0
  %558 = vmatpush2.msra.mxu0 0.0
  %559 = vmatprep.subr.mxu0 0.0
  %560 = vmatpush2.msra.mxu0 0.0
  %561 = vmatprep.subr.mxu0 0.0
  %562 = vmatpush2.msra.mxu0 0.0
  %563 = vmatprep.subr.mxu0 0.0
  %564 = vmatpush2.msra.mxu0 0.0
  %565 = vmatprep.subr.mxu0 0.0
  %566 = vmatpush2.msra.mxu0 0.0
  %567 = vmatprep.subr.mxu0 0.0
  %568 = vmatpush2.msra.mxu0 0.0
  %569 = vmatprep.subr.mxu0 0.0
  %570 = vmatpush2.msra.mxu0 0.0
  %571 = vmatprep.subr.mxu0 0.0
  %572 = vmatpush2.msra.mxu0 0.0
  %573 = vmatprep.subr.mxu0 0.0
  %574 = vmatpush2.msra.mxu0 0.0
  %575 = vmatprep.subr.mxu0 0.0
  %576 = vmatpush2.msra.mxu0 0.0
  %577 = vmatprep.subr.mxu0 0.0
  %578 = vmatpush2.msra.mxu0 0.0
  %579 = vmatprep.subr.mxu0 0.0
  %580 = vmatpush2.msra.mxu0 0.0
  %581 = vmatprep.subr.mxu0 0.0
  %582 = vmatpush2.msra.mxu0 0.0
  %583 = vmatprep.mubr.f32.mxu0 0.0
  %584 = vmatmul.mubr.f32.gmra.mxu0 %v515
  %v585 = vpop.f32.mrf.mxu0
  %v586 = vadd.f32 0.0, %v585
  %v587 = vpop.f32.mrf.mxu0
  %588 = vmatprep.mubr.f32.mxu0 0.0
  %589 = vmatmul.mubr.f32.gmra.mxu0 %v517
  %v590 = vpop.f32.mrf.mxu0
  %v591 = vpop.f32.mrf.mxu0
  %v592 = vadd.f32 0.0, %v591
  %593 = vdwg.mxu0
  %s594 = scalar_lea.vmem [#allocation2], 32
  %v595 = vld [vmem:[%s594] sm:$0xff]
  %s596 = scalar_lea.vmem [#allocation2], 80
  %v597 = vld [vmem:[%s596 + $0x8] sm:$0xff]
  %v598 = vadd.f32 %v595, %v586
  %v599 = vadd.f32 %v597, %v592
  %v600 = vxor.u32 %v598, 2147483648
  %v601 = vxor.u32 %v599, 2147483648
  %v602 = vmul.f32 %v600, 1.442695
  %v603 = vpow.pop %v602
  %v604 = vmul.f32 %v601, 1.442695
  %v605 = vpow.pop %v604
  %v606 = vadd.f32 %v603, 1.0
  %v607 = vadd.f32 %v605, 1.0
  %v608 = vrcp.pop %v606
  %v609 = vmul.f32 1.0, %v608
  %v610 = vrcp.pop %v607
  %v611 = vmul.f32 1.0, %v610
  %v612 = vtanh.pop %v598
  %v613 = vtanh.pop %v599
  %v614 = vmul.f32 %v609, %v489
  %v615 = vmul.f32 %v611, %v490
  %618 = vrot.lane.b32.xlu0 %v612, 64
  %v619 = vpop.permute.xlu0 %618
  %620 = vrot.lane.b32.xlu0 %v613, 64
  %v621 = vpop.permute.xlu0 %620
  %v624 = vmul.f32 %v609, %v619
  %v625 = vmul.f32 %v611, %v621
  %628 = vrot.lane.b32.xlu0 %v624, 32
  %v629 = vpop.permute.xlu0 %628
  %630 = vrot.lane.b32.xlu0 %v625, 32
  %v631 = vpop.permute.xlu0 %630
  %v634 = vadd.f32 %v614, %v629
  %v635 = vadd.f32 %v615, %v631
  %v636 = vtanh.pop %v634
  %v637 = vtanh.pop %v635
  %640 = vrot.lane.b32.xlu0 %v636, 64
  %v641 = vpop.permute.xlu0 %640
  %642 = vrot.lane.b32.xlu0 %v637, 64
  %v643 = vpop.permute.xlu0 %642
  %v646 = vmul.f32 %v609, %v641
  %v647 = vmul.f32 %v611, %v643
  %649 = vrot.lane.b32.xlu0 %v646, 32
  %v650 = vpop.permute.xlu0 %649
  %s652 = scalar_lea.vmem [#allocation3], 16
  %653 = vst.msk [vmem:[%s652] sm:$0xff] %vm227, %v650
  %655 = vrot.lane.b32.xlu0 %v647, 32
  %v656 = vpop.permute.xlu0 %655
  %s658 = scalar_lea.vmem [#allocation4], 40
  %659 = vst.msk [vmem:[%s658] sm:$0xff] %vm227, %v656
  %v660 = vsel %vm227, %v650, 0
  %v662 = vsel %vm227, %v656, 0
  %664 = vmatprep.subr.mxu0 0.0
  %665 = vmatpush1.msra.mxu0 0.0
  %666 = vmatprep.subr.mxu0 0.0
  %667 = vmatpush1.msra.mxu0 0.0
  %668 = vmatprep.subr.mxu0 0.0
  %669 = vmatpush1.msra.mxu0 0.0
  %670 = vmatprep.subr.mxu0 0.0
  %671 = vmatpush1.msra.mxu0 0.0
  %672 = vmatprep.subr.mxu0 0.0
  %673 = vmatpush1.msra.mxu0 0.0
  %674 = vmatprep.subr.mxu0 0.0
  %675 = vmatpush1.msra.mxu0 0.0
  %676 = vmatprep.subr.mxu0 0.0
  %677 = vmatpush1.msra.mxu0 0.0
  %678 = vmatprep.subr.mxu0 0.0
  %679 = vmatpush1.msra.mxu0 0.0
  %680 = vmatprep.subr.mxu0 0.0
  %681 = vmatpush1.msra.mxu0 0.0
  %682 = vmatprep.subr.mxu0 0.0
  %683 = vmatpush1.msra.mxu0 0.0
  %684 = vmatprep.subr.mxu0 0.0
  %685 = vmatpush1.msra.mxu0 0.0
  %686 = vmatprep.subr.mxu0 0.0
  %687 = vmatpush1.msra.mxu0 0.0
  %688 = vmatprep.subr.mxu0 %v226
  %689 = vmatpush1.msra.mxu0 %v225
  %690 = vmatprep.subr.mxu0 %v224
  %691 = vmatpush1.msra.mxu0 %v223
  %692 = vmatprep.subr.mxu0 %v222
  %693 = vmatpush1.msra.mxu0 %v221
  %694 = vmatprep.subr.mxu0 %v220
  %695 = vmatpush1.msra.mxu0 %v219
  %696 = vmatprep.subr.mxu0 0.0
  %697 = vmatpush2.msra.mxu0 0.0
  %698 = vmatprep.subr.mxu0 0.0
  %699 = vmatpush2.msra.mxu0 0.0
  %700 = vmatprep.subr.mxu0 0.0
  %701 = vmatpush2.msra.mxu0 0.0
  %702 = vmatprep.subr.mxu0 0.0
  %703 = vmatpush2.msra.mxu0 0.0
  %704 = vmatprep.subr.mxu0 0.0
  %705 = vmatpush2.msra.mxu0 0.0
  %706 = vmatprep.subr.mxu0 0.0
  %707 = vmatpush2.msra.mxu0 0.0
  %708 = vmatprep.subr.mxu0 0.0
  %709 = vmatpush2.msra.mxu0 0.0
  %710 = vmatprep.subr.mxu0 0.0
  %711 = vmatpush2.msra.mxu0 0.0
  %712 = vmatprep.subr.mxu0 0.0
  %713 = vmatpush2.msra.mxu0 0.0
  %714 = vmatprep.subr.mxu0 0.0
  %715 = vmatpush2.msra.mxu0 0.0
  %716 = vmatprep.subr.mxu0 0.0
  %717 = vmatpush2.msra.mxu0 0.0
  %718 = vmatprep.subr.mxu0 0.0
  %719 = vmatpush2.msra.mxu0 0.0
  %720 = vmatprep.subr.mxu0 0.0
  %721 = vmatpush2.msra.mxu0 0.0
  %722 = vmatprep.subr.mxu0 0.0
  %723 = vmatpush2.msra.mxu0 0.0
  %724 = vmatprep.subr.mxu0 0.0
  %725 = vmatpush2.msra.mxu0 0.0
  %726 = vmatprep.subr.mxu0 0.0
  %727 = vmatpush2.msra.mxu0 0.0
  %728 = vmatprep.mubr.f32.mxu0 0.0
  %729 = vmatmul.mubr.f32.gmra.mxu0 %v660
  %v730 = vpop.f32.mrf.mxu0
  %v731 = vadd.f32 0.0, %v730
  %v732 = vpop.f32.mrf.mxu0
  %733 = vmatprep.mubr.f32.mxu0 0.0
  %734 = vmatmul.mubr.f32.gmra.mxu0 %v662
  %v735 = vpop.f32.mrf.mxu0
  %v736 = vpop.f32.mrf.mxu0
  %v737 = vadd.f32 0.0, %v736
  %738 = vdwg.mxu0
  %s739 = scalar_lea.vmem [#allocation2], 48
  %v740 = vld [vmem:[%s739] sm:$0xff]
  %s741 = scalar_lea.vmem [#allocation2], 64
  %v742 = vld [vmem:[%s741 + $0x8] sm:$0xff]
  %v743 = vadd.f32 %v740, %v731
  %v744 = vadd.f32 %v742, %v737
  %v745 = vxor.u32 %v743, 2147483648
  %v746 = vxor.u32 %v744, 2147483648
  %v747 = vmul.f32 %v745, 1.442695
  %v748 = vpow.pop %v747
  %v749 = vmul.f32 %v746, 1.442695
  %v750 = vpow.pop %v749
  %v751 = vadd.f32 %v748, 1.0
  %v752 = vadd.f32 %v750, 1.0
  %v753 = vrcp.pop %v751
  %v754 = vmul.f32 1.0, %v753
  %v755 = vrcp.pop %v752
  %v756 = vmul.f32 1.0, %v755
  %v757 = vtanh.pop %v743
  %v758 = vtanh.pop %v744
  %v759 = vmul.f32 %v754, %v634
  %v760 = vmul.f32 %v756, %v635
  %763 = vrot.lane.b32.xlu0 %v757, 64
  %v764 = vpop.permute.xlu0 %763
  %765 = vrot.lane.b32.xlu0 %v758, 64
  %v766 = vpop.permute.xlu0 %765
  %v769 = vmul.f32 %v754, %v764
  %v770 = vmul.f32 %v756, %v766
  %773 = vrot.lane.b32.xlu0 %v769, 32
  %v774 = vpop.permute.xlu0 %773
  %775 = vrot.lane.b32.xlu0 %v770, 32
  %v776 = vpop.permute.xlu0 %775
  %v779 = vadd.f32 %v759, %v774
  %v780 = vadd.f32 %v760, %v776
  %v781 = vtanh.pop %v779
  %v782 = vtanh.pop %v780
  %785 = vrot.lane.b32.xlu0 %v781, 64
  %v786 = vpop.permute.xlu0 %785
  %787 = vrot.lane.b32.xlu0 %v782, 64
  %v788 = vpop.permute.xlu0 %787
  %v791 = vmul.f32 %v754, %v786
  %v792 = vmul.f32 %v756, %v788
  %794 = vrot.lane.b32.xlu0 %v791, 32
  %v795 = vpop.permute.xlu0 %794
  %s797 = scalar_lea.vmem [#allocation3], 24
  %798 = vst.msk [vmem:[%s797] sm:$0xff] %vm227, %v795
  %800 = vrot.lane.b32.xlu0 %v792, 32
  %v801 = vpop.permute.xlu0 %800
  %s803 = scalar_lea.vmem [#allocation4], 32
  %804 = vst.msk [vmem:[%s803] sm:$0xff] %vm227, %v801
  %v805 = vsel %vm227, %v795, 0
  %v807 = vsel %vm227, %v801, 0
  %809 = vmatprep.subr.mxu0 0.0
  %810 = vmatpush1.msra.mxu0 0.0
  %811 = vmatprep.subr.mxu0 0.0
  %812 = vmatpush1.msra.mxu0 0.0
  %813 = vmatprep.subr.mxu0 0.0
  %814 = vmatpush1.msra.mxu0 0.0
  %815 = vmatprep.subr.mxu0 0.0
  %816 = vmatpush1.msra.mxu0 0.0
  %817 = vmatprep.subr.mxu0 0.0
  %818 = vmatpush1.msra.mxu0 0.0
  %819 = vmatprep.subr.mxu0 0.0
  %820 = vmatpush1.msra.mxu0 0.0
  %821 = vmatprep.subr.mxu0 0.0
  %822 = vmatpush1.msra.mxu0 0.0
  %823 = vmatprep.subr.mxu0 0.0
  %824 = vmatpush1.msra.mxu0 0.0
  %825 = vmatprep.subr.mxu0 0.0
  %826 = vmatpush1.msra.mxu0 0.0
  %827 = vmatprep.subr.mxu0 0.0
  %828 = vmatpush1.msra.mxu0 0.0
  %829 = vmatprep.subr.mxu0 0.0
  %830 = vmatpush1.msra.mxu0 0.0
  %831 = vmatprep.subr.mxu0 0.0
  %832 = vmatpush1.msra.mxu0 0.0
  %833 = vmatprep.subr.mxu0 %v226
  %834 = vmatpush1.msra.mxu0 %v225
  %835 = vmatprep.subr.mxu0 %v224
  %836 = vmatpush1.msra.mxu0 %v223
  %837 = vmatprep.subr.mxu0 %v222
  %838 = vmatpush1.msra.mxu0 %v221
  %839 = vmatprep.subr.mxu0 %v220
  %840 = vmatpush1.msra.mxu0 %v219
  %841 = vmatprep.subr.mxu0 0.0
  %842 = vmatpush2.msra.mxu0 0.0
  %843 = vmatprep.subr.mxu0 0.0
  %844 = vmatpush2.msra.mxu0 0.0
  %845 = vmatprep.subr.mxu0 0.0
  %846 = vmatpush2.msra.mxu0 0.0
  %847 = vmatprep.subr.mxu0 0.0
  %848 = vmatpush2.msra.mxu0 0.0
  %849 = vmatprep.subr.mxu0 0.0
  %850 = vmatpush2.msra.mxu0 0.0
  %851 = vmatprep.subr.mxu0 0.0
  %852 = vmatpush2.msra.mxu0 0.0
  %853 = vmatprep.subr.mxu0 0.0
  %854 = vmatpush2.msra.mxu0 0.0
  %855 = vmatprep.subr.mxu0 0.0
  %856 = vmatpush2.msra.mxu0 0.0
  %857 = vmatprep.subr.mxu0 0.0
  %858 = vmatpush2.msra.mxu0 0.0
  %859 = vmatprep.subr.mxu0 0.0
  %860 = vmatpush2.msra.mxu0 0.0
  %861 = vmatprep.subr.mxu0 0.0
  %862 = vmatpush2.msra.mxu0 0.0
  %863 = vmatprep.subr.mxu0 0.0
  %864 = vmatpush2.msra.mxu0 0.0
  %865 = vmatprep.subr.mxu0 0.0
  %866 = vmatpush2.msra.mxu0 0.0
  %867 = vmatprep.subr.mxu0 0.0
  %868 = vmatpush2.msra.mxu0 0.0
  %869 = vmatprep.subr.mxu0 0.0
  %870 = vmatpush2.msra.mxu0 0.0
  %871 = vmatprep.subr.mxu0 0.0
  %872 = vmatpush2.msra.mxu0 0.0
  %873 = vmatprep.mubr.f32.mxu0 0.0
  %874 = vmatmul.mubr.f32.gmra.mxu0 %v805
  %v875 = vpop.f32.mrf.mxu0
  %v876 = vadd.f32 0.0, %v875
  %v877 = vpop.f32.mrf.mxu0
  %878 = vmatprep.mubr.f32.mxu0 0.0
  %879 = vmatmul.mubr.f32.gmra.mxu0 %v807
  %v880 = vpop.f32.mrf.mxu0
  %v881 = vpop.f32.mrf.mxu0
  %v882 = vadd.f32 0.0, %v881
  %883 = vdwg.mxu0
  %v884 = vld [vmem:[%s741] sm:$0xff]
  %v885 = vld [vmem:[%s739 + $0x8] sm:$0xff]
  %v886 = vadd.f32 %v884, %v876
  %v887 = vadd.f32 %v885, %v882
  %v888 = vxor.u32 %v886, 2147483648
  %v889 = vxor.u32 %v887, 2147483648
  %v890 = vmul.f32 %v888, 1.442695
  %v891 = vpow.pop %v890
  %v892 = vmul.f32 %v889, 1.442695
  %v893 = vpow.pop %v892
  %v894 = vadd.f32 %v891, 1.0
  %v895 = vadd.f32 %v893, 1.0
  %v896 = vrcp.pop %v894
  %v897 = vmul.f32 1.0, %v896
  %v898 = vrcp.pop %v895
  %v899 = vmul.f32 1.0, %v898
  %v900 = vtanh.pop %v886
  %v901 = vtanh.pop %v887
  %v902 = vmul.f32 %v897, %v779
  %v903 = vmul.f32 %v899, %v780
  %906 = vrot.lane.b32.xlu0 %v900, 64
  %v907 = vpop.permute.xlu0 %906
  %908 = vrot.lane.b32.xlu0 %v901, 64
  %v909 = vpop.permute.xlu0 %908
  %v912 = vmul.f32 %v897, %v907
  %v913 = vmul.f32 %v899, %v909
  %916 = vrot.lane.b32.xlu0 %v912, 32
  %v917 = vpop.permute.xlu0 %916
  %918 = vrot.lane.b32.xlu0 %v913, 32
  %v919 = vpop.permute.xlu0 %918
  %v922 = vadd.f32 %v902, %v917
  %v923 = vadd.f32 %v903, %v919
  %v924 = vtanh.pop %v922
  %v925 = vtanh.pop %v923
  %928 = vrot.lane.b32.xlu0 %v924, 64
  %v929 = vpop.permute.xlu0 %928
  %930 = vrot.lane.b32.xlu0 %v925, 64
  %v931 = vpop.permute.xlu0 %930
  %v934 = vmul.f32 %v897, %v929
  %v935 = vmul.f32 %v899, %v931
  %937 = vrot.lane.b32.xlu0 %v934, 32
  %v938 = vpop.permute.xlu0 %937
  %s940 = scalar_lea.vmem [#allocation3], 32
  %941 = vst.msk [vmem:[%s940] sm:$0xff] %vm227, %v938
  %943 = vrot.lane.b32.xlu0 %v935, 32
  %v944 = vpop.permute.xlu0 %943
  %s946 = scalar_lea.vmem [#allocation4], 24
  %947 = vst.msk [vmem:[%s946] sm:$0xff] %vm227, %v944
  %v948 = vsel %vm227, %v938, 0
  %v950 = vsel %vm227, %v944, 0
  %952 = vmatprep.subr.mxu0 0.0
  %953 = vmatpush1.msra.mxu0 0.0
  %954 = vmatprep.subr.mxu0 0.0
  %955 = vmatpush1.msra.mxu0 0.0
  %956 = vmatprep.subr.mxu0 0.0
  %957 = vmatpush1.msra.mxu0 0.0
  %958 = vmatprep.subr.mxu0 0.0
  %959 = vmatpush1.msra.mxu0 0.0
  %960 = vmatprep.subr.mxu0 0.0
  %961 = vmatpush1.msra.mxu0 0.0
  %962 = vmatprep.subr.mxu0 0.0
  %963 = vmatpush1.msra.mxu0 0.0
  %964 = vmatprep.subr.mxu0 0.0
  %965 = vmatpush1.msra.mxu0 0.0
  %966 = vmatprep.subr.mxu0 0.0
  %967 = vmatpush1.msra.mxu0 0.0
  %968 = vmatprep.subr.mxu0 0.0
  %969 = vmatpush1.msra.mxu0 0.0
  %970 = vmatprep.subr.mxu0 0.0
  %971 = vmatpush1.msra.mxu0 0.0
  %972 = vmatprep.subr.mxu0 0.0
  %973 = vmatpush1.msra.mxu0 0.0
  %974 = vmatprep.subr.mxu0 0.0
  %975 = vmatpush1.msra.mxu0 0.0
  %976 = vmatprep.subr.mxu0 %v226
  %977 = vmatpush1.msra.mxu0 %v225
  %978 = vmatprep.subr.mxu0 %v224
  %979 = vmatpush1.msra.mxu0 %v223
  %980 = vmatprep.subr.mxu0 %v222
  %981 = vmatpush1.msra.mxu0 %v221
  %982 = vmatprep.subr.mxu0 %v220
  %983 = vmatpush1.msra.mxu0 %v219
  %984 = vmatprep.subr.mxu0 0.0
  %985 = vmatpush2.msra.mxu0 0.0
  %986 = vmatprep.subr.mxu0 0.0
  %987 = vmatpush2.msra.mxu0 0.0
  %988 = vmatprep.subr.mxu0 0.0
  %989 = vmatpush2.msra.mxu0 0.0
  %990 = vmatprep.subr.mxu0 0.0
  %991 = vmatpush2.msra.mxu0 0.0
  %992 = vmatprep.subr.mxu0 0.0
  %993 = vmatpush2.msra.mxu0 0.0
  %994 = vmatprep.subr.mxu0 0.0
  %995 = vmatpush2.msra.mxu0 0.0
  %996 = vmatprep.subr.mxu0 0.0
  %997 = vmatpush2.msra.mxu0 0.0
  %998 = vmatprep.subr.mxu0 0.0
  %999 = vmatpush2.msra.mxu0 0.0
  %1000 = vmatprep.subr.mxu0 0.0
  %1001 = vmatpush2.msra.mxu0 0.0
  %1002 = vmatprep.subr.mxu0 0.0
  %1003 = vmatpush2.msra.mxu0 0.0
  %1004 = vmatprep.subr.mxu0 0.0
  %1005 = vmatpush2.msra.mxu0 0.0
  %1006 = vmatprep.subr.mxu0 0.0
  %1007 = vmatpush2.msra.mxu0 0.0
  %1008 = vmatprep.subr.mxu0 0.0
  %1009 = vmatpush2.msra.mxu0 0.0
  %1010 = vmatprep.subr.mxu0 0.0
  %1011 = vmatpush2.msra.mxu0 0.0
  %1012 = vmatprep.subr.mxu0 0.0
  %1013 = vmatpush2.msra.mxu0 0.0
  %1014 = vmatprep.subr.mxu0 0.0
  %1015 = vmatpush2.msra.mxu0 0.0
  %1016 = vmatprep.mubr.f32.mxu0 0.0
  %1017 = vmatmul.mubr.f32.gmra.mxu0 %v948
  %v1018 = vpop.f32.mrf.mxu0
  %v1019 = vadd.f32 0.0, %v1018
  %v1020 = vpop.f32.mrf.mxu0
  %1021 = vmatprep.mubr.f32.mxu0 0.0
  %1022 = vmatmul.mubr.f32.gmra.mxu0 %v950
  %v1023 = vpop.f32.mrf.mxu0
  %v1024 = vpop.f32.mrf.mxu0
  %v1025 = vadd.f32 0.0, %v1024
  %1026 = vdwg.mxu0
  %v1027 = vld [vmem:[%s596] sm:$0xff]
  %v1028 = vld [vmem:[%s594 + $0x8] sm:$0xff]
  %v1029 = vadd.f32 %v1027, %v1019
  %v1030 = vadd.f32 %v1028, %v1025
  %v1031 = vxor.u32 %v1029, 2147483648
  %v1032 = vxor.u32 %v1030, 2147483648
  %v1033 = vmul.f32 %v1031, 1.442695
  %v1034 = vpow.pop %v1033
  %v1035 = vmul.f32 %v1032, 1.442695
  %v1036 = vpow.pop %v1035
  %v1037 = vadd.f32 %v1034, 1.0
  %v1038 = vadd.f32 %v1036, 1.0
  %v1039 = vrcp.pop %v1037
  %v1040 = vmul.f32 1.0, %v1039
  %v1041 = vrcp.pop %v1038
  %v1042 = vmul.f32 1.0, %v1041
  %v1043 = vtanh.pop %v1029
  %v1044 = vtanh.pop %v1030
  %v1045 = vmul.f32 %v1040, %v922
  %v1046 = vmul.f32 %v1042, %v923
  %1049 = vrot.lane.b32.xlu0 %v1043, 64
  %v1050 = vpop.permute.xlu0 %1049
  %1051 = vrot.lane.b32.xlu0 %v1044, 64
  %v1052 = vpop.permute.xlu0 %1051
  %v1055 = vmul.f32 %v1040, %v1050
  %v1056 = vmul.f32 %v1042, %v1052
  %1059 = vrot.lane.b32.xlu0 %v1055, 32
  %v1060 = vpop.permute.xlu0 %1059
  %1061 = vrot.lane.b32.xlu0 %v1056, 32
  %v1062 = vpop.permute.xlu0 %1061
  %v1065 = vadd.f32 %v1045, %v1060
  %v1066 = vadd.f32 %v1046, %v1062
  %v1067 = vtanh.pop %v1065
  %v1068 = vtanh.pop %v1066
  %1071 = vrot.lane.b32.xlu0 %v1067, 64
  %v1072 = vpop.permute.xlu0 %1071
  %1073 = vrot.lane.b32.xlu0 %v1068, 64
  %v1074 = vpop.permute.xlu0 %1073
  %v1077 = vmul.f32 %v1040, %v1072
  %v1078 = vmul.f32 %v1042, %v1074
  %1080 = vrot.lane.b32.xlu0 %v1077, 32
  %v1081 = vpop.permute.xlu0 %1080
  %s1083 = scalar_lea.vmem [#allocation3], 40
  %1084 = vst.msk [vmem:[%s1083] sm:$0xff] %vm227, %v1081
  %1086 = vrot.lane.b32.xlu0 %v1078, 32
  %v1087 = vpop.permute.xlu0 %1086
  %s1089 = scalar_lea.vmem [#allocation4], 16
  %1090 = vst.msk [vmem:[%s1089] sm:$0xff] %vm227, %v1087
  %v1091 = vsel %vm227, %v1081, 0
  %v1093 = vsel %vm227, %v1087, 0
  %1095 = vmatprep.subr.mxu0 0.0
  %1096 = vmatpush1.msra.mxu0 0.0
  %1097 = vmatprep.subr.mxu0 0.0
  %1098 = vmatpush1.msra.mxu0 0.0
  %1099 = vmatprep.subr.mxu0 0.0
  %1100 = vmatpush1.msra.mxu0 0.0
  %1101 = vmatprep.subr.mxu0 0.0
  %1102 = vmatpush1.msra.mxu0 0.0
  %1103 = vmatprep.subr.mxu0 0.0
  %1104 = vmatpush1.msra.mxu0 0.0
  %1105 = vmatprep.subr.mxu0 0.0
  %1106 = vmatpush1.msra.mxu0 0.0
  %1107 = vmatprep.subr.mxu0 0.0
  %1108 = vmatpush1.msra.mxu0 0.0
  %1109 = vmatprep.subr.mxu0 0.0
  %1110 = vmatpush1.msra.mxu0 0.0
  %1111 = vmatprep.subr.mxu0 0.0
  %1112 = vmatpush1.msra.mxu0 0.0
  %1113 = vmatprep.subr.mxu0 0.0
  %1114 = vmatpush1.msra.mxu0 0.0
  %1115 = vmatprep.subr.mxu0 0.0
  %1116 = vmatpush1.msra.mxu0 0.0
  %1117 = vmatprep.subr.mxu0 0.0
  %1118 = vmatpush1.msra.mxu0 0.0
  %1119 = vmatprep.subr.mxu0 %v226
  %1120 = vmatpush1.msra.mxu0 %v225
  %1121 = vmatprep.subr.mxu0 %v224
  %1122 = vmatpush1.msra.mxu0 %v223
  %1123 = vmatprep.subr.mxu0 %v222
  %1124 = vmatpush1.msra.mxu0 %v221
  %1125 = vmatprep.subr.mxu0 %v220
  %1126 = vmatpush1.msra.mxu0 %v219
  %1127 = vmatprep.subr.mxu0 0.0
  %1128 = vmatpush2.msra.mxu0 0.0
  %1129 = vmatprep.subr.mxu0 0.0
  %1130 = vmatpush2.msra.mxu0 0.0
  %1131 = vmatprep.subr.mxu0 0.0
  %1132 = vmatpush2.msra.mxu0 0.0
  %1133 = vmatprep.subr.mxu0 0.0
  %1134 = vmatpush2.msra.mxu0 0.0
  %1135 = vmatprep.subr.mxu0 0.0
  %1136 = vmatpush2.msra.mxu0 0.0
  %1137 = vmatprep.subr.mxu0 0.0
  %1138 = vmatpush2.msra.mxu0 0.0
  %1139 = vmatprep.subr.mxu0 0.0
  %1140 = vmatpush2.msra.mxu0 0.0
  %1141 = vmatprep.subr.mxu0 0.0
  %1142 = vmatpush2.msra.mxu0 0.0
  %1143 = vmatprep.subr.mxu0 0.0
  %1144 = vmatpush2.msra.mxu0 0.0
  %1145 = vmatprep.subr.mxu0 0.0
  %1146 = vmatpush2.msra.mxu0 0.0
  %1147 = vmatprep.subr.mxu0 0.0
  %1148 = vmatpush2.msra.mxu0 0.0
  %1149 = vmatprep.subr.mxu0 0.0
  %1150 = vmatpush2.msra.mxu0 0.0
  %1151 = vmatprep.subr.mxu0 0.0
  %1152 = vmatpush2.msra.mxu0 0.0
  %1153 = vmatprep.subr.mxu0 0.0
  %1154 = vmatpush2.msra.mxu0 0.0
  %1155 = vmatprep.subr.mxu0 0.0
  %1156 = vmatpush2.msra.mxu0 0.0
  %1157 = vmatprep.subr.mxu0 0.0
  %1158 = vmatpush2.msra.mxu0 0.0
  %1159 = vmatprep.mubr.f32.mxu0 0.0
  %1160 = vmatmul.mubr.f32.gmra.mxu0 %v1091
  %v1161 = vpop.f32.mrf.mxu0
  %v1162 = vadd.f32 0.0, %v1161
  %v1163 = vpop.f32.mrf.mxu0
  %1164 = vmatprep.mubr.f32.mxu0 0.0
  %1165 = vmatmul.mubr.f32.gmra.mxu0 %v1093
  %v1166 = vpop.f32.mrf.mxu0
  %v1167 = vpop.f32.mrf.mxu0
  %v1168 = vadd.f32 0.0, %v1167
  %1169 = vdwg.mxu0
  %v1170 = vld [vmem:[%s451] sm:$0xff]
  %v1171 = vld [vmem:[%s449 + $0x8] sm:$0xff]
  %v1172 = vadd.f32 %v1170, %v1162
  %v1173 = vadd.f32 %v1171, %v1168
  %v1174 = vxor.u32 %v1172, 2147483648
  %v1175 = vxor.u32 %v1173, 2147483648
  %v1176 = vmul.f32 %v1174, 1.442695
  %v1177 = vpow.pop %v1176
  %v1178 = vmul.f32 %v1175, 1.442695
  %v1179 = vpow.pop %v1178
  %v1180 = vadd.f32 %v1177, 1.0
  %v1181 = vadd.f32 %v1179, 1.0
  %v1182 = vrcp.pop %v1180
  %v1183 = vmul.f32 1.0, %v1182
  %v1184 = vrcp.pop %v1181
  %v1185 = vmul.f32 1.0, %v1184
  %v1186 = vtanh.pop %v1172
  %v1187 = vtanh.pop %v1173
  %v1188 = vmul.f32 %v1183, %v1065
  %v1189 = vmul.f32 %v1185, %v1066
  %1192 = vrot.lane.b32.xlu0 %v1186, 64
  %v1193 = vpop.permute.xlu0 %1192
  %1194 = vrot.lane.b32.xlu0 %v1187, 64
  %v1195 = vpop.permute.xlu0 %1194
  %v1198 = vmul.f32 %v1183, %v1193
  %v1199 = vmul.f32 %v1185, %v1195
  %1202 = vrot.lane.b32.xlu0 %v1198, 32
  %v1203 = vpop.permute.xlu0 %1202
  %1204 = vrot.lane.b32.xlu0 %v1199, 32
  %v1205 = vpop.permute.xlu0 %1204
  %v1208 = vadd.f32 %v1188, %v1203
  %v1209 = vadd.f32 %v1189, %v1205
  %v1210 = vtanh.pop %v1208
  %v1211 = vtanh.pop %v1209
  %1214 = vrot.lane.b32.xlu0 %v1210, 64
  %v1215 = vpop.permute.xlu0 %1214
  %1216 = vrot.lane.b32.xlu0 %v1211, 64
  %v1217 = vpop.permute.xlu0 %1216
  %v1220 = vmul.f32 %v1183, %v1215
  %v1221 = vmul.f32 %v1185, %v1217
  %1223 = vrot.lane.b32.xlu0 %v1220, 32
  %v1224 = vpop.permute.xlu0 %1223
  %s1226 = scalar_lea.vmem [#allocation3], 48
  %1227 = vst.msk [vmem:[%s1226] sm:$0xff] %vm227, %v1224
  %1229 = vrot.lane.b32.xlu0 %v1221, 32
  %v1230 = vpop.permute.xlu0 %1229
  %s1232 = scalar_lea.vmem [#allocation4], 8
  %1233 = vst.msk [vmem:[%s1232] sm:$0xff] %vm227, %v1230
  %v1234 = vsel %vm227, %v1224, 0
  %v1236 = vsel %vm227, %v1230, 0
  %1238 = vmatprep.subr.mxu0 0.0
  %1239 = vmatpush1.msra.mxu0 0.0
  %1240 = vmatprep.subr.mxu0 0.0
  %1241 = vmatpush1.msra.mxu0 0.0
  %1242 = vmatprep.subr.mxu0 0.0
  %1243 = vmatpush1.msra.mxu0 0.0
  %1244 = vmatprep.subr.mxu0 0.0
  %1245 = vmatpush1.msra.mxu0 0.0
  %1246 = vmatprep.subr.mxu0 0.0
  %1247 = vmatpush1.msra.mxu0 0.0
  %1248 = vmatprep.subr.mxu0 0.0
  %1249 = vmatpush1.msra.mxu0 0.0
  %1250 = vmatprep.subr.mxu0 0.0
  %1251 = vmatpush1.msra.mxu0 0.0
  %1252 = vmatprep.subr.mxu0 0.0
  %1253 = vmatpush1.msra.mxu0 0.0
  %1254 = vmatprep.subr.mxu0 0.0
  %1255 = vmatpush1.msra.mxu0 0.0
  %1256 = vmatprep.subr.mxu0 0.0
  %1257 = vmatpush1.msra.mxu0 0.0
  %1258 = vmatprep.subr.mxu0 0.0
  %1259 = vmatpush1.msra.mxu0 0.0
  %1260 = vmatprep.subr.mxu0 0.0
  %1261 = vmatpush1.msra.mxu0 0.0
  %1262 = vmatprep.subr.mxu0 %v226
  %1263 = vmatpush1.msra.mxu0 %v225
  %1264 = vmatprep.subr.mxu0 %v224
  %1265 = vmatpush1.msra.mxu0 %v223
  %1266 = vmatprep.subr.mxu0 %v222
  %1267 = vmatpush1.msra.mxu0 %v221
  %1268 = vmatprep.subr.mxu0 %v220
  %1269 = vmatpush1.msra.mxu0 %v219
  %1270 = vmatprep.subr.mxu0 0.0
  %1271 = vmatpush2.msra.mxu0 0.0
  %1272 = vmatprep.subr.mxu0 0.0
  %1273 = vmatpush2.msra.mxu0 0.0
  %1274 = vmatprep.subr.mxu0 0.0
  %1275 = vmatpush2.msra.mxu0 0.0
  %1276 = vmatprep.subr.mxu0 0.0
  %1277 = vmatpush2.msra.mxu0 0.0
  %1278 = vmatprep.subr.mxu0 0.0
  %1279 = vmatpush2.msra.mxu0 0.0
  %1280 = vmatprep.subr.mxu0 0.0
  %1281 = vmatpush2.msra.mxu0 0.0
  %1282 = vmatprep.subr.mxu0 0.0
  %1283 = vmatpush2.msra.mxu0 0.0
  %1284 = vmatprep.subr.mxu0 0.0
  %1285 = vmatpush2.msra.mxu0 0.0
  %1286 = vmatprep.subr.mxu0 0.0
  %1287 = vmatpush2.msra.mxu0 0.0
  %1288 = vmatprep.subr.mxu0 0.0
  %1289 = vmatpush2.msra.mxu0 0.0
  %1290 = vmatprep.subr.mxu0 0.0
  %1291 = vmatpush2.msra.mxu0 0.0
  %1292 = vmatprep.subr.mxu0 0.0
  %1293 = vmatpush2.msra.mxu0 0.0
  %1294 = vmatprep.subr.mxu0 0.0
  %1295 = vmatpush2.msra.mxu0 0.0
  %1296 = vmatprep.subr.mxu0 0.0
  %1297 = vmatpush2.msra.mxu0 0.0
  %1298 = vmatprep.subr.mxu0 0.0
  %1299 = vmatpush2.msra.mxu0 0.0
  %1300 = vmatprep.subr.mxu0 0.0
  %1301 = vmatpush2.msra.mxu0 0.0
  %1302 = vmatprep.mubr.f32.mxu0 0.0
  %1303 = vmatmul.mubr.f32.gmra.mxu0 %v1234
  %v1304 = vpop.f32.mrf.mxu0
  %v1305 = vadd.f32 0.0, %v1304
  %v1306 = vpop.f32.mrf.mxu0
  %1307 = vmatprep.mubr.f32.mxu0 0.0
  %1308 = vmatmul.mubr.f32.gmra.mxu0 %v1236
  %v1309 = vpop.f32.mrf.mxu0
  %v1310 = vpop.f32.mrf.mxu0
  %v1311 = vadd.f32 0.0, %v1310
  %1312 = vdwg.mxu0
  %v1313 = vld [vmem:[%s307] sm:$0xff]
  %v1314 = vld [vmem:[#allocation2 + $0x8] sm:$0xff]
  %v1315 = vadd.f32 %v1313, %v1305
  %v1316 = vadd.f32 %v1314, %v1311
  %v1317 = vxor.u32 %v1315, 2147483648
  %v1318 = vxor.u32 %v1316, 2147483648
  %v1319 = vmul.f32 %v1317, 1.442695
  %v1320 = vpow.pop %v1319
  %v1321 = vmul.f32 %v1318, 1.442695
  %v1322 = vpow.pop %v1321
  %v1323 = vadd.f32 %v1320, 1.0
  %v1324 = vadd.f32 %v1322, 1.0
  %v1325 = vrcp.pop %v1323
  %v1326 = vmul.f32 1.0, %v1325
  %v1327 = vrcp.pop %v1324
  %v1328 = vmul.f32 1.0, %v1327
  %v1329 = vtanh.pop %v1315
  %v1330 = vtanh.pop %v1316
  %v1331 = vmul.f32 %v1326, %v1208
  %v1332 = vmul.f32 %v1328, %v1209
  %1335 = vrot.lane.b32.xlu0 %v1329, 64
  %v1336 = vpop.permute.xlu0 %1335
  %1337 = vrot.lane.b32.xlu0 %v1330, 64
  %v1338 = vpop.permute.xlu0 %1337
  %v1341 = vmul.f32 %v1326, %v1336
  %v1342 = vmul.f32 %v1328, %v1338
  %1345 = vrot.lane.b32.xlu0 %v1341, 32
  %v1346 = vpop.permute.xlu0 %1345
  %1347 = vrot.lane.b32.xlu0 %v1342, 32
  %v1348 = vpop.permute.xlu0 %1347
  %v1351 = vadd.f32 %v1331, %v1346
  %v1352 = vadd.f32 %v1332, %v1348
  %v1353 = vtanh.pop %v1351
  %v1354 = vtanh.pop %v1352
  %1357 = vrot.lane.b32.xlu0 %v1353, 64
  %v1358 = vpop.permute.xlu0 %1357
  %1359 = vrot.lane.b32.xlu0 %v1354, 64
  %v1360 = vpop.permute.xlu0 %1359
  %v1363 = vmul.f32 %v1326, %v1358
  %v1364 = vmul.f32 %v1328, %v1360
  %1366 = vrot.lane.b32.xlu0 %v1363, 32
  %v1367 = vpop.permute.xlu0 %1366
  %s1369 = scalar_lea.vmem [#allocation3], 56
  %1370 = vst.msk [vmem:[%s1369] sm:$0xff] %vm227, %v1367
  %1372 = vrot.lane.b32.xlu0 %v1364, 32
  %v1373 = vpop.permute.xlu0 %1372
  %1375 = vst.msk [vmem:[#allocation4] sm:$0xff] %vm227, %v1373
  %v1376 = vld [vmem:[%s4] sm:$0xff]
  %v1377 = vld [vmem:[%s4 + $0x8] sm:$0xff]
  %v1378 = vld [vmem:[%s4 + $0x10] sm:$0xff]
  %v1379 = vld [vmem:[%s4 + $0x18] sm:$0xff]
  %v1380 = vld [vmem:[%s4 + $0x20] sm:$0xff]
  %v1381 = vld [vmem:[%s4 + $0x28] sm:$0xff]
  %v1382 = vld [vmem:[%s4 + $0x30] sm:$0xff]
  %v1383 = vld [vmem:[%s4 + $0x38] sm:$0xff]
  %v1384 = vld [vmem:[%s4 + $0x40] sm:$0xff]
  %v1385 = vld [vmem:[%s4 + $0x48] sm:$0xff]
  %v1386 = vld [vmem:[%s4 + $0x50] sm:$0xff]
  %v1387 = vld [vmem:[%s4 + $0x58] sm:$0xff]
  %v1388 = vld [vmem:[%s4 + $0x60] sm:$0xff]
  %v1389 = vld [vmem:[%s4 + $0x68] sm:$0xff]
  %v1390 = vld [vmem:[%s4 + $0x70] sm:$0xff]
  %v1391 = vld [vmem:[%s4 + $0x78] sm:$0xff]
  %v1392 = vld [vmem:[#allocation3] sm:$0xff]
  %v1393 = vld [vmem:[#allocation3 + $0x8] sm:$0xff]
  %v1394 = vld [vmem:[#allocation3 + $0x10] sm:$0xff]
  %v1395 = vld [vmem:[#allocation3 + $0x18] sm:$0xff]
  %v1396 = vld [vmem:[#allocation3 + $0x20] sm:$0xff]
  %v1397 = vld [vmem:[#allocation3 + $0x28] sm:$0xff]
  %v1398 = vld [vmem:[#allocation3 + $0x30] sm:$0xff]
  %v1399 = vld [vmem:[#allocation3 + $0x38] sm:$0xff]
  %v1400 = vld [vmem:[#allocation4] sm:$0xff]
  %v1401 = vld [vmem:[#allocation4 + $0x8] sm:$0xff]
  %v1402 = vld [vmem:[#allocation4 + $0x10] sm:$0xff]
  %v1403 = vld [vmem:[#allocation4 + $0x18] sm:$0xff]
  %v1404 = vld [vmem:[#allocation4 + $0x20] sm:$0xff]
  %v1405 = vld [vmem:[#allocation4 + $0x28] sm:$0xff]
  %v1406 = vld [vmem:[#allocation4 + $0x30] sm:$0xff]
  %v1407 = vld [vmem:[#allocation4 + $0x38] sm:$0xff]
  %v1409 = vsel %vm227, %v1400, 0
  %v1412 = vsel %vm227, %v1401, 0
  %v1415 = vsel %vm227, %v1402, 0
  %v1418 = vsel %vm227, %v1403, 0
  %v1421 = vsel %vm227, %v1404, 0
  %v1424 = vsel %vm227, %v1405, 0
  %v1427 = vsel %vm227, %v1406, 0
  %v1430 = vsel %vm227, %v1407, 0
  %1432 = vmatprep.subr.mxu0 0.0
  %1433 = vmatpush1.msra.mxu0 0.0
  %1434 = vmatprep.subr.mxu0 0.0
  %1435 = vmatpush1.msra.mxu0 0.0
  %1436 = vmatprep.subr.mxu0 0.0
  %1437 = vmatpush1.msra.mxu0 0.0
  %1438 = vmatprep.subr.mxu0 0.0
  %1439 = vmatpush1.msra.mxu0 0.0
  %1440 = vmatprep.subr.mxu0 0.0
  %1441 = vmatpush1.msra.mxu0 0.0
  %1442 = vmatprep.subr.mxu0 0.0
  %1443 = vmatpush1.msra.mxu0 0.0
  %1444 = vmatprep.subr.mxu0 0.0
  %1445 = vmatpush1.msra.mxu0 0.0
  %1446 = vmatprep.subr.mxu0 0.0
  %1447 = vmatpush1.msra.mxu0 0.0
  %1448 = vmatprep.subr.mxu0 0.0
  %1449 = vmatpush1.msra.mxu0 0.0
  %1450 = vmatprep.subr.mxu0 0.0
  %1451 = vmatpush1.msra.mxu0 0.0
  %1452 = vmatprep.subr.mxu0 0.0
  %1453 = vmatpush1.msra.mxu0 0.0
  %1454 = vmatprep.subr.mxu0 0.0
  %1455 = vmatpush1.msra.mxu0 0.0
  %1456 = vmatprep.subr.mxu0 %v1391
  %1457 = vmatpush1.msra.mxu0 %v1390
  %1458 = vmatprep.subr.mxu0 %v1389
  %1459 = vmatpush1.msra.mxu0 %v1388
  %1460 = vmatprep.subr.mxu0 %v1387
  %1461 = vmatpush1.msra.mxu0 %v1386
  %1462 = vmatprep.subr.mxu0 %v1385
  %1463 = vmatpush1.msra.mxu0 %v1384
  %1464 = vmatprep.subr.mxu0 0.0
  %1465 = vmatpush2.msra.mxu0 0.0
  %1466 = vmatprep.subr.mxu0 0.0
  %1467 = vmatpush2.msra.mxu0 0.0
  %1468 = vmatprep.subr.mxu0 0.0
  %1469 = vmatpush2.msra.mxu0 0.0
  %1470 = vmatprep.subr.mxu0 0.0
  %1471 = vmatpush2.msra.mxu0 0.0
  %1472 = vmatprep.subr.mxu0 0.0
  %1473 = vmatpush2.msra.mxu0 0.0
  %1474 = vmatprep.subr.mxu0 0.0
  %1475 = vmatpush2.msra.mxu0 0.0
  %1476 = vmatprep.subr.mxu0 0.0
  %1477 = vmatpush2.msra.mxu0 0.0
  %1478 = vmatprep.subr.mxu0 0.0
  %1479 = vmatpush2.msra.mxu0 0.0
  %1480 = vmatprep.subr.mxu0 0.0
  %1481 = vmatpush2.msra.mxu0 0.0
  %1482 = vmatprep.subr.mxu0 0.0
  %1483 = vmatpush2.msra.mxu0 0.0
  %1484 = vmatprep.subr.mxu0 0.0
  %1485 = vmatpush2.msra.mxu0 0.0
  %1486 = vmatprep.subr.mxu0 0.0
  %1487 = vmatpush2.msra.mxu0 0.0
  %1488 = vmatprep.subr.mxu0 0.0
  %1489 = vmatpush2.msra.mxu0 0.0
  %1490 = vmatprep.subr.mxu0 0.0
  %1491 = vmatpush2.msra.mxu0 0.0
  %1492 = vmatprep.subr.mxu0 0.0
  %1493 = vmatpush2.msra.mxu0 0.0
  %1494 = vmatprep.subr.mxu0 0.0
  %1495 = vmatpush2.msra.mxu0 0.0
  %1496 = vmatprep.mubr.f32.mxu0 0.0
  %1497 = vmatmul.mubr.f32.gmra.mxu0 %v1409
  %v1498 = vpop.f32.mrf.mxu0
  %v1499 = vadd.f32 0.0, %v1498
  %v1500 = vpop.f32.mrf.mxu0
  %v1501 = vadd.f32 0.0, %v1500
  %1502 = vmatprep.mubr.f32.mxu0 0.0
  %1503 = vmatmul.mubr.f32.gmra.mxu0 %v1412
  %v1504 = vpop.f32.mrf.mxu0
  %v1505 = vadd.f32 0.0, %v1504
  %v1506 = vpop.f32.mrf.mxu0
  %v1507 = vadd.f32 0.0, %v1506
  %1508 = vmatprep.mubr.f32.mxu0 0.0
  %1509 = vmatmul.mubr.f32.gmra.mxu0 %v1415
  %v1510 = vpop.f32.mrf.mxu0
  %v1511 = vadd.f32 0.0, %v1510
  %v1512 = vpop.f32.mrf.mxu0
  %v1513 = vadd.f32 0.0, %v1512
  %1514 = vmatprep.mubr.f32.mxu0 0.0
  %1515 = vmatmul.mubr.f32.gmra.mxu0 %v1418
  %v1516 = vpop.f32.mrf.mxu0
  %v1517 = vadd.f32 0.0, %v1516
  %v1518 = vpop.f32.mrf.mxu0
  %v1519 = vadd.f32 0.0, %v1518
  %1520 = vmatprep.mubr.f32.mxu0 0.0
  %1521 = vmatmul.mubr.f32.gmra.mxu0 %v1421
  %v1522 = vpop.f32.mrf.mxu0
  %v1523 = vadd.f32 0.0, %v1522
  %v1524 = vpop.f32.mrf.mxu0
  %v1525 = vadd.f32 0.0, %v1524
  %1526 = vmatprep.mubr.f32.mxu0 0.0
  %1527 = vmatmul.mubr.f32.gmra.mxu0 %v1424
  %v1528 = vpop.f32.mrf.mxu0
  %v1529 = vadd.f32 0.0, %v1528
  %v1530 = vpop.f32.mrf.mxu0
  %v1531 = vadd.f32 0.0, %v1530
  %1532 = vmatprep.mubr.f32.mxu0 0.0
  %1533 = vmatmul.mubr.f32.gmra.mxu0 %v1427
  %v1534 = vpop.f32.mrf.mxu0
  %v1535 = vadd.f32 0.0, %v1534
  %v1536 = vpop.f32.mrf.mxu0
  %v1537 = vadd.f32 0.0, %v1536
  %1538 = vmatprep.mubr.f32.mxu0 0.0
  %1539 = vmatmul.mubr.f32.gmra.mxu0 %v1430
  %v1540 = vpop.f32.mrf.mxu0
  %v1541 = vadd.f32 0.0, %v1540
  %v1542 = vpop.f32.mrf.mxu0
  %v1543 = vadd.f32 0.0, %v1542
  %1544 = vdwg.mxu0
  %v1546 = vsel %vm227, %v1392, 0
  %v1549 = vsel %vm227, %v1393, 0
  %v1552 = vsel %vm227, %v1394, 0
  %v1555 = vsel %vm227, %v1395, 0
  %v1558 = vsel %vm227, %v1396, 0
  %v1561 = vsel %vm227, %v1397, 0
  %v1564 = vsel %vm227, %v1398, 0
  %v1567 = vsel %vm227, %v1399, 0
  %1569 = vmatprep.subr.mxu0 0.0
  %1570 = vmatpush1.msra.mxu0 0.0
  %1571 = vmatprep.subr.mxu0 0.0
  %1572 = vmatpush1.msra.mxu0 0.0
  %1573 = vmatprep.subr.mxu0 0.0
  %1574 = vmatpush1.msra.mxu0 0.0
  %1575 = vmatprep.subr.mxu0 0.0
  %1576 = vmatpush1.msra.mxu0 0.0
  %1577 = vmatprep.subr.mxu0 0.0
  %1578 = vmatpush1.msra.mxu0 0.0
  %1579 = vmatprep.subr.mxu0 0.0
  %1580 = vmatpush1.msra.mxu0 0.0
  %1581 = vmatprep.subr.mxu0 0.0
  %1582 = vmatpush1.msra.mxu0 0.0
  %1583 = vmatprep.subr.mxu0 0.0
  %1584 = vmatpush1.msra.mxu0 0.0
  %1585 = vmatprep.subr.mxu0 0.0
  %1586 = vmatpush1.msra.mxu0 0.0
  %1587 = vmatprep.subr.mxu0 0.0
  %1588 = vmatpush1.msra.mxu0 0.0
  %1589 = vmatprep.subr.mxu0 0.0
  %1590 = vmatpush1.msra.mxu0 0.0
  %1591 = vmatprep.subr.mxu0 0.0
  %1592 = vmatpush1.msra.mxu0 0.0
  %1593 = vmatprep.subr.mxu0 %v1383
  %1594 = vmatpush1.msra.mxu0 %v1382
  %1595 = vmatprep.subr.mxu0 %v1381
  %1596 = vmatpush1.msra.mxu0 %v1380
  %1597 = vmatprep.subr.mxu0 %v1379
  %1598 = vmatpush1.msra.mxu0 %v1378
  %1599 = vmatprep.subr.mxu0 %v1377
  %1600 = vmatpush1.msra.mxu0 %v1376
  %1601 = vmatprep.subr.mxu0 0.0
  %1602 = vmatpush2.msra.mxu0 0.0
  %1603 = vmatprep.subr.mxu0 0.0
  %1604 = vmatpush2.msra.mxu0 0.0
  %1605 = vmatprep.subr.mxu0 0.0
  %1606 = vmatpush2.msra.mxu0 0.0
  %1607 = vmatprep.subr.mxu0 0.0
  %1608 = vmatpush2.msra.mxu0 0.0
  %1609 = vmatprep.subr.mxu0 0.0
  %1610 = vmatpush2.msra.mxu0 0.0
  %1611 = vmatprep.subr.mxu0 0.0
  %1612 = vmatpush2.msra.mxu0 0.0
  %1613 = vmatprep.subr.mxu0 0.0
  %1614 = vmatpush2.msra.mxu0 0.0
  %1615 = vmatprep.subr.mxu0 0.0
  %1616 = vmatpush2.msra.mxu0 0.0
  %1617 = vmatprep.subr.mxu0 0.0
  %1618 = vmatpush2.msra.mxu0 0.0
  %1619 = vmatprep.subr.mxu0 0.0
  %1620 = vmatpush2.msra.mxu0 0.0
  %1621 = vmatprep.subr.mxu0 0.0
  %1622 = vmatpush2.msra.mxu0 0.0
  %1623 = vmatprep.subr.mxu0 0.0
  %1624 = vmatpush2.msra.mxu0 0.0
  %1625 = vmatprep.subr.mxu0 0.0
  %1626 = vmatpush2.msra.mxu0 0.0
  %1627 = vmatprep.subr.mxu0 0.0
  %1628 = vmatpush2.msra.mxu0 0.0
  %1629 = vmatprep.subr.mxu0 0.0
  %1630 = vmatpush2.msra.mxu0 0.0
  %1631 = vmatprep.subr.mxu0 0.0
  %1632 = vmatpush2.msra.mxu0 0.0
  %1633 = vmatprep.mubr.f32.mxu0 0.0
  %1634 = vmatmul.mubr.f32.gmra.mxu0 %v1546
  %v1635 = vpop.f32.mrf.mxu0
  %v1636 = vadd.f32 %v1499, %v1635
  %v1637 = vpop.f32.mrf.mxu0
  %v1638 = vadd.f32 %v1501, %v1637
  %1639 = vmatprep.mubr.f32.mxu0 0.0
  %1640 = vmatmul.mubr.f32.gmra.mxu0 %v1549
  %v1641 = vpop.f32.mrf.mxu0
  %v1642 = vadd.f32 %v1505, %v1641
  %v1643 = vpop.f32.mrf.mxu0
  %v1644 = vadd.f32 %v1507, %v1643
  %1645 = vmatprep.mubr.f32.mxu0 0.0
  %1646 = vmatmul.mubr.f32.gmra.mxu0 %v1552
  %v1647 = vpop.f32.mrf.mxu0
  %v1648 = vadd.f32 %v1511, %v1647
  %v1649 = vpop.f32.mrf.mxu0
  %v1650 = vadd.f32 %v1513, %v1649
  %1651 = vmatprep.mubr.f32.mxu0 0.0
  %1652 = vmatmul.mubr.f32.gmra.mxu0 %v1555
  %v1653 = vpop.f32.mrf.mxu0
  %v1654 = vadd.f32 %v1517, %v1653
  %v1655 = vpop.f32.mrf.mxu0
  %v1656 = vadd.f32 %v1519, %v1655
  %1657 = vmatprep.mubr.f32.mxu0 0.0
  %1658 = vmatmul.mubr.f32.gmra.mxu0 %v1558
  %v1659 = vpop.f32.mrf.mxu0
  %v1660 = vadd.f32 %v1523, %v1659
  %v1661 = vpop.f32.mrf.mxu0
  %v1662 = vadd.f32 %v1525, %v1661
  %1663 = vmatprep.mubr.f32.mxu0 0.0
  %1664 = vmatmul.mubr.f32.gmra.mxu0 %v1561
  %v1665 = vpop.f32.mrf.mxu0
  %v1666 = vadd.f32 %v1529, %v1665
  %v1667 = vpop.f32.mrf.mxu0
  %v1668 = vadd.f32 %v1531, %v1667
  %1669 = vmatprep.mubr.f32.mxu0 0.0
  %1670 = vmatmul.mubr.f32.gmra.mxu0 %v1564
  %v1671 = vpop.f32.mrf.mxu0
  %v1672 = vadd.f32 %v1535, %v1671
  %v1673 = vpop.f32.mrf.mxu0
  %v1674 = vadd.f32 %v1537, %v1673
  %1675 = vmatprep.mubr.f32.mxu0 0.0
  %1676 = vmatmul.mubr.f32.gmra.mxu0 %v1567
  %v1677 = vpop.f32.mrf.mxu0
  %v1678 = vadd.f32 %v1541, %v1677
  %v1679 = vpop.f32.mrf.mxu0
  %v1680 = vadd.f32 %v1543, %v1679
  %1681 = vdwg.mxu0
  %v1682 = vld [vmem:[%s6] sm:$0x3]
  %v1684 = vlaneseq
  %v1685 = vshrl.u32 %v1684, 7
  %v1686 = vsub.s32 0, %v1685
  %v1687 = vrot.slane %v1682, %v1686
  %v1688 = vlaneseq
  %v1689 = vshrl.u32 %v1688, 7
  %v1690 = vsub.s32 1, %v1689
  %v1691 = vrot.slane %v1682, %v1690
  %v1694 = vadd.f32 %v1636, %v1687
  %v1695 = vadd.f32 %v1638, %v1691
  %v1696 = vadd.f32 %v1642, %v1687
  %v1697 = vadd.f32 %v1644, %v1691
  %v1698 = vadd.f32 %v1648, %v1687
  %v1699 = vadd.f32 %v1650, %v1691
  %v1700 = vadd.f32 %v1654, %v1687
  %v1701 = vadd.f32 %v1656, %v1691
  %v1702 = vadd.f32 %v1660, %v1687
  %v1703 = vadd.f32 %v1662, %v1691
  %v1704 = vadd.f32 %v1666, %v1687
  %v1705 = vadd.f32 %v1668, %v1691
  %v1706 = vadd.f32 %v1672, %v1687
  %v1707 = vadd.f32 %v1674, %v1691
  %v1708 = vadd.f32 %v1678, %v1687
  %v1709 = vadd.f32 %v1680, %v1691
  %1710 = vst [vmem:[#allocation2] sm:$0xff] %v1694
  %1711 = vst [vmem:[#allocation2 + $0x8] sm:$0xff] %v1695
  %1712 = vst [vmem:[#allocation2 + $0x10] sm:$0xff] %v1696
  %1713 = vst [vmem:[#allocation2 + $0x18] sm:$0xff] %v1697
  %1714 = vst [vmem:[#allocation2 + $0x20] sm:$0xff] %v1698
  %1715 = vst [vmem:[#allocation2 + $0x28] sm:$0xff] %v1699
  %1716 = vst [vmem:[#allocation2 + $0x30] sm:$0xff] %v1700
  %1717 = vst [vmem:[#allocation2 + $0x38] sm:$0xff] %v1701
  %1718 = vst [vmem:[#allocation2 + $0x40] sm:$0xff] %v1702
  %1719 = vst [vmem:[#allocation2 + $0x48] sm:$0xff] %v1703
  %1720 = vst [vmem:[#allocation2 + $0x50] sm:$0xff] %v1704
  %1721 = vst [vmem:[#allocation2 + $0x58] sm:$0xff] %v1705
  %1722 = vst [vmem:[#allocation2 + $0x60] sm:$0xff] %v1706
  %1723 = vst [vmem:[#allocation2 + $0x68] sm:$0xff] %v1707
  %1724 = vst [vmem:[#allocation2 + $0x70] sm:$0xff] %v1708
  %1725 = vst [vmem:[#allocation2 + $0x78] sm:$0xff] %v1709
  %v1726 = vld [vmem:[%s5] sm:$0xff]
  %v1727 = vld [vmem:[%s5 + $0x8] sm:$0xff]
  %v1728 = vld [vmem:[%s5 + $0x10] sm:$0xff]
  %v1729 = vld [vmem:[%s5 + $0x18] sm:$0xff]
  %v1730 = vld [vmem:[%s5 + $0x20] sm:$0xff]
  %v1731 = vld [vmem:[%s5 + $0x28] sm:$0xff]
  %v1732 = vld [vmem:[%s5 + $0x30] sm:$0xff]
  %v1733 = vld [vmem:[%s5 + $0x38] sm:$0xff]
  %1734 = vmatprep.subr.mxu0 0.0
  %1735 = vmatpush1.msra.mxu0 0.0
  %1736 = vmatprep.subr.mxu0 0.0
  %1737 = vmatpush1.msra.mxu0 0.0
  %1738 = vmatprep.subr.mxu0 0.0
  %1739 = vmatpush1.msra.mxu0 0.0
  %1740 = vmatprep.subr.mxu0 0.0
  %1741 = vmatpush1.msra.mxu0 0.0
  %1742 = vmatprep.subr.mxu0 0.0
  %1743 = vmatpush1.msra.mxu0 0.0
  %1744 = vmatprep.subr.mxu0 0.0
  %1745 = vmatpush1.msra.mxu0 0.0
  %1746 = vmatprep.subr.mxu0 0.0
  %1747 = vmatpush1.msra.mxu0 0.0
  %1748 = vmatprep.subr.mxu0 0.0
  %1749 = vmatpush1.msra.mxu0 0.0
  %1750 = vmatprep.subr.mxu0 0.0
  %1751 = vmatpush1.msra.mxu0 0.0
  %1752 = vmatprep.subr.mxu0 0.0
  %1753 = vmatpush1.msra.mxu0 0.0
  %1754 = vmatprep.subr.mxu0 0.0
  %1755 = vmatpush1.msra.mxu0 0.0
  %1756 = vmatprep.subr.mxu0 0.0
  %1757 = vmatpush1.msra.mxu0 0.0
  %1758 = vmatprep.subr.mxu0 %v1733
  %1759 = vmatpush1.msra.mxu0 %v1732
  %1760 = vmatprep.subr.mxu0 %v1731
  %1761 = vmatpush1.msra.mxu0 %v1730
  %1762 = vmatprep.subr.mxu0 %v1729
  %1763 = vmatpush1.msra.mxu0 %v1728
  %1764 = vmatprep.subr.mxu0 %v1727
  %1765 = vmatpush1.msra.mxu0 %v1726
  %1766 = vmatprep.subr.mxu0 0.0
  %1767 = vmatpush2.msra.mxu0 0.0
  %1768 = vmatprep.subr.mxu0 0.0
  %1769 = vmatpush2.msra.mxu0 0.0
  %1770 = vmatprep.subr.mxu0 0.0
  %1771 = vmatpush2.msra.mxu0 0.0
  %1772 = vmatprep.subr.mxu0 0.0
  %1773 = vmatpush2.msra.mxu0 0.0
  %1774 = vmatprep.subr.mxu0 0.0
  %1775 = vmatpush2.msra.mxu0 0.0
  %1776 = vmatprep.subr.mxu0 0.0
  %1777 = vmatpush2.msra.mxu0 0.0
  %1778 = vmatprep.subr.mxu0 0.0
  %1779 = vmatpush2.msra.mxu0 0.0
  %1780 = vmatprep.subr.mxu0 0.0
  %1781 = vmatpush2.msra.mxu0 0.0
  %1782 = vmatprep.subr.mxu0 0.0
  %1783 = vmatpush2.msra.mxu0 0.0
  %1784 = vmatprep.subr.mxu0 0.0
  %1785 = vmatpush2.msra.mxu0 0.0
  %1786 = vmatprep.subr.mxu0 0.0
  %1787 = vmatpush2.msra.mxu0 0.0
  %1788 = vmatprep.subr.mxu0 0.0
  %1789 = vmatpush2.msra.mxu0 0.0
  %1790 = vmatprep.subr.mxu0 0.0
  %1791 = vmatpush2.msra.mxu0 0.0
  %1792 = vmatprep.subr.mxu0 0.0
  %1793 = vmatpush2.msra.mxu0 0.0
  %1794 = vmatprep.subr.mxu0 0.0
  %1795 = vmatpush2.msra.mxu0 0.0
  %1796 = vmatprep.subr.mxu0 0.0
  %1797 = vmatpush2.msra.mxu0 0.0
  %1798 = vmatprep.mubr.f32.mxu0 0.0
  %1799 = vmatmul.mubr.f32.gmra.mxu0 %v229
  %v1800 = vpop.f32.mrf.mxu0
  %v1801 = vadd.f32 0.0, %v1800
  %v1802 = vpop.f32.mrf.mxu0
  %1803 = vmatprep.mubr.f32.mxu0 0.0
  %1804 = vmatmul.mubr.f32.gmra.mxu0 %v229
  %v1805 = vpop.f32.mrf.mxu0
  %v1806 = vpop.f32.mrf.mxu0
  %v1807 = vadd.f32 0.0, %v1806
  %1808 = vdwg.mxu0
  %v1809 = vld [vmem:[#allocation2] sm:$0xff]
  %v1810 = vld [vmem:[%s307 + $0x8] sm:$0xff]
  %v1811 = vadd.f32 %v1809, %v1801
  %v1812 = vadd.f32 %v1810, %v1807
  %v1813 = vxor.u32 %v1811, 2147483648
  %v1814 = vxor.u32 %v1812, 2147483648
  %v1815 = vmul.f32 %v1813, 1.442695
  %v1816 = vpow.pop %v1815
  %v1817 = vmul.f32 %v1814, 1.442695
  %v1818 = vpow.pop %v1817
  %v1819 = vadd.f32 %v1816, 1.0
  %v1820 = vadd.f32 %v1818, 1.0
  %v1821 = vrcp.pop %v1819
  %v1822 = vmul.f32 1.0, %v1821
  %v1823 = vrcp.pop %v1820
  %v1824 = vmul.f32 1.0, %v1823
  %v1825 = vtanh.pop %v1811
  %v1826 = vtanh.pop %v1812
  %v1827 = vmul.f32 %v1822, 0.0
  %v1828 = vmul.f32 %v1824, 0.0
  %1831 = vrot.lane.b32.xlu0 %v1825, 64
  %v1832 = vpop.permute.xlu0 %1831
  %1833 = vrot.lane.b32.xlu0 %v1826, 64
  %v1834 = vpop.permute.xlu0 %1833
  %v1837 = vmul.f32 %v1822, %v1832
  %v1838 = vmul.f32 %v1824, %v1834
  %1841 = vrot.lane.b32.xlu0 %v1837, 32
  %v1842 = vpop.permute.xlu0 %1841
  %1843 = vrot.lane.b32.xlu0 %v1838, 32
  %v1844 = vpop.permute.xlu0 %1843
  %v1847 = vadd.f32 %v1827, %v1842
  %v1848 = vadd.f32 %v1828, %v1844
  %v1849 = vtanh.pop %v1847
  %v1850 = vtanh.pop %v1848
  %1853 = vrot.lane.b32.xlu0 %v1849, 64
  %v1854 = vpop.permute.xlu0 %1853
  %1855 = vrot.lane.b32.xlu0 %v1850, 64
  %v1856 = vpop.permute.xlu0 %1855
  %v1859 = vmul.f32 %v1822, %v1854
  %v1860 = vmul.f32 %v1824, %v1856
  %1862 = vrot.lane.b32.xlu0 %v1859, 32
  %v1863 = vpop.permute.xlu0 %1862
  %1865 = vst.msk [vmem:[#allocation3] sm:$0xff] %vm227, %v1863
  %1867 = vrot.lane.b32.xlu0 %v1860, 32
  %v1868 = vpop.permute.xlu0 %1867
  %1870 = vst.msk [vmem:[%s368] sm:$0xff] %vm227, %v1868
  %v1871 = vsel %vm227, %v1863, 0
  %v1873 = vsel %vm227, %v1868, 0
  %1875 = vmatprep.subr.mxu0 0.0
  %1876 = vmatpush1.msra.mxu0 0.0
  %1877 = vmatprep.subr.mxu0 0.0
  %1878 = vmatpush1.msra.mxu0 0.0
  %1879 = vmatprep.subr.mxu0 0.0
  %1880 = vmatpush1.msra.mxu0 0.0
  %1881 = vmatprep.subr.mxu0 0.0
  %1882 = vmatpush1.msra.mxu0 0.0
  %1883 = vmatprep.subr.mxu0 0.0
  %1884 = vmatpush1.msra.mxu0 0.0
  %1885 = vmatprep.subr.mxu0 0.0
  %1886 = vmatpush1.msra.mxu0 0.0
  %1887 = vmatprep.subr.mxu0 0.0
  %1888 = vmatpush1.msra.mxu0 0.0
  %1889 = vmatprep.subr.mxu0 0.0
  %1890 = vmatpush1.msra.mxu0 0.0
  %1891 = vmatprep.subr.mxu0 0.0
  %1892 = vmatpush1.msra.mxu0 0.0
  %1893 = vmatprep.subr.mxu0 0.0
  %1894 = vmatpush1.msra.mxu0 0.0
  %1895 = vmatprep.subr.mxu0 0.0
  %1896 = vmatpush1.msra.mxu0 0.0
  %1897 = vmatprep.subr.mxu0 0.0
  %1898 = vmatpush1.msra.mxu0 0.0
  %1899 = vmatprep.subr.mxu0 %v1733
  %1900 = vmatpush1.msra.mxu0 %v1732
  %1901 = vmatprep.subr.mxu0 %v1731
  %1902 = vmatpush1.msra.mxu0 %v1730
  %1903 = vmatprep.subr.mxu0 %v1729
  %1904 = vmatpush1.msra.mxu0 %v1728
  %1905 = vmatprep.subr.mxu0 %v1727
  %1906 = vmatpush1.msra.mxu0 %v1726
  %1907 = vmatprep.subr.mxu0 0.0
  %1908 = vmatpush2.msra.mxu0 0.0
  %1909 = vmatprep.subr.mxu0 0.0
  %1910 = vmatpush2.msra.mxu0 0.0
  %1911 = vmatprep.subr.mxu0 0.0
  %1912 = vmatpush2.msra.mxu0 0.0
  %1913 = vmatprep.subr.mxu0 0.0
  %1914 = vmatpush2.msra.mxu0 0.0
  %1915 = vmatprep.subr.mxu0 0.0
  %1916 = vmatpush2.msra.mxu0 0.0
  %1917 = vmatprep.subr.mxu0 0.0
  %1918 = vmatpush2.msra.mxu0 0.0
  %1919 = vmatprep.subr.mxu0 0.0
  %1920 = vmatpush2.msra.mxu0 0.0
  %1921 = vmatprep.subr.mxu0 0.0
  %1922 = vmatpush2.msra.mxu0 0.0
  %1923 = vmatprep.subr.mxu0 0.0
  %1924 = vmatpush2.msra.mxu0 0.0
  %1925 = vmatprep.subr.mxu0 0.0
  %1926 = vmatpush2.msra.mxu0 0.0
  %1927 = vmatprep.subr.mxu0 0.0
  %1928 = vmatpush2.msra.mxu0 0.0
  %1929 = vmatprep.subr.mxu0 0.0
  %1930 = vmatpush2.msra.mxu0 0.0
  %1931 = vmatprep.subr.mxu0 0.0
  %1932 = vmatpush2.msra.mxu0 0.0
  %1933 = vmatprep.subr.mxu0 0.0
  %1934 = vmatpush2.msra.mxu0 0.0
  %1935 = vmatprep.subr.mxu0 0.0
  %1936 = vmatpush2.msra.mxu0 0.0
  %1937 = vmatprep.subr.mxu0 0.0
  %1938 = vmatpush2.msra.mxu0 0.0
  %1939 = vmatprep.mubr.f32.mxu0 0.0
  %1940 = vmatmul.mubr.f32.gmra.mxu0 %v1871
  %v1941 = vpop.f32.mrf.mxu0
  %v1942 = vadd.f32 0.0, %v1941
  %v1943 = vpop.f32.mrf.mxu0
  %1944 = vmatprep.mubr.f32.mxu0 0.0
  %1945 = vmatmul.mubr.f32.gmra.mxu0 %v1873
  %v1946 = vpop.f32.mrf.mxu0
  %v1947 = vpop.f32.mrf.mxu0
  %v1948 = vadd.f32 0.0, %v1947
  %1949 = vdwg.mxu0
  %v1950 = vld [vmem:[%s449] sm:$0xff]
  %v1951 = vld [vmem:[%s451 + $0x8] sm:$0xff]
  %v1952 = vadd.f32 %v1950, %v1942
  %v1953 = vadd.f32 %v1951, %v1948
  %v1954 = vxor.u32 %v1952, 2147483648
  %v1955 = vxor.u32 %v1953, 2147483648
  %v1956 = vmul.f32 %v1954, 1.442695
  %v1957 = vpow.pop %v1956
  %v1958 = vmul.f32 %v1955, 1.442695
  %v1959 = vpow.pop %v1958
  %v1960 = vadd.f32 %v1957, 1.0
  %v1961 = vadd.f32 %v1959, 1.0
  %v1962 = vrcp.pop %v1960
  %v1963 = vmul.f32 1.0, %v1962
  %v1964 = vrcp.pop %v1961
  %v1965 = vmul.f32 1.0, %v1964
  %v1966 = vtanh.pop %v1952
  %v1967 = vtanh.pop %v1953
  %v1968 = vmul.f32 %v1963, %v1847
  %v1969 = vmul.f32 %v1965, %v1848
  %1972 = vrot.lane.b32.xlu0 %v1966, 64
  %v1973 = vpop.permute.xlu0 %1972
  %1974 = vrot.lane.b32.xlu0 %v1967, 64
  %v1975 = vpop.permute.xlu0 %1974
  %v1978 = vmul.f32 %v1963, %v1973
  %v1979 = vmul.f32 %v1965, %v1975
  %1982 = vrot.lane.b32.xlu0 %v1978, 32
  %v1983 = vpop.permute.xlu0 %1982
  %1984 = vrot.lane.b32.xlu0 %v1979, 32
  %v1985 = vpop.permute.xlu0 %1984
  %v1988 = vadd.f32 %v1968, %v1983
  %v1989 = vadd.f32 %v1969, %v1985
  %v1990 = vtanh.pop %v1988
  %v1991 = vtanh.pop %v1989
  %1994 = vrot.lane.b32.xlu0 %v1990, 64
  %v1995 = vpop.permute.xlu0 %1994
  %1996 = vrot.lane.b32.xlu0 %v1991, 64
  %v1997 = vpop.permute.xlu0 %1996
  %v2000 = vmul.f32 %v1963, %v1995
  %v2001 = vmul.f32 %v1965, %v1997
  %2003 = vrot.lane.b32.xlu0 %v2000, 32
  %v2004 = vpop.permute.xlu0 %2003
  %2006 = vst.msk [vmem:[%s507] sm:$0xff] %vm227, %v2004
  %2008 = vrot.lane.b32.xlu0 %v2001, 32
  %v2009 = vpop.permute.xlu0 %2008
  %2011 = vst.msk [vmem:[%s513] sm:$0xff] %vm227, %v2009
  %v2012 = vsel %vm227, %v2004, 0
  %v2014 = vsel %vm227, %v2009, 0
  %2016 = vmatprep.subr.mxu0 0.0
  %2017 = vmatpush1.msra.mxu0 0.0
  %2018 = vmatprep.subr.mxu0 0.0
  %2019 = vmatpush1.msra.mxu0 0.0
  %2020 = vmatprep.subr.mxu0 0.0
  %2021 = vmatpush1.msra.mxu0 0.0
  %2022 = vmatprep.subr.mxu0 0.0
  %2023 = vmatpush1.msra.mxu0 0.0
  %2024 = vmatprep.subr.mxu0 0.0
  %2025 = vmatpush1.msra.mxu0 0.0
  %2026 = vmatprep.subr.mxu0 0.0
  %2027 = vmatpush1.msra.mxu0 0.0
  %2028 = vmatprep.subr.mxu0 0.0
  %2029 = vmatpush1.msra.mxu0 0.0
  %2030 = vmatprep.subr.mxu0 0.0
  %2031 = vmatpush1.msra.mxu0 0.0
  %2032 = vmatprep.subr.mxu0 0.0
  %2033 = vmatpush1.msra.mxu0 0.0
  %2034 = vmatprep.subr.mxu0 0.0
  %2035 = vmatpush1.msra.mxu0 0.0
  %2036 = vmatprep.subr.mxu0 0.0
  %2037 = vmatpush1.msra.mxu0 0.0
  %2038 = vmatprep.subr.mxu0 0.0
  %2039 = vmatpush1.msra.mxu0 0.0
  %2040 = vmatprep.subr.mxu0 %v1733
  %2041 = vmatpush1.msra.mxu0 %v1732
  %2042 = vmatprep.subr.mxu0 %v1731
  %2043 = vmatpush1.msra.mxu0 %v1730
  %2044 = vmatprep.subr.mxu0 %v1729
  %2045 = vmatpush1.msra.mxu0 %v1728
  %2046 = vmatprep.subr.mxu0 %v1727
  %2047 = vmatpush1.msra.mxu0 %v1726
  %2048 = vmatprep.subr.mxu0 0.0
  %2049 = vmatpush2.msra.mxu0 0.0
  %2050 = vmatprep.subr.mxu0 0.0
  %2051 = vmatpush2.msra.mxu0 0.0
  %2052 = vmatprep.subr.mxu0 0.0
  %2053 = vmatpush2.msra.mxu0 0.0
  %2054 = vmatprep.subr.mxu0 0.0
  %2055 = vmatpush2.msra.mxu0 0.0
  %2056 = vmatprep.subr.mxu0 0.0
  %2057 = vmatpush2.msra.mxu0 0.0
  %2058 = vmatprep.subr.mxu0 0.0
  %2059 = vmatpush2.msra.mxu0 0.0
  %2060 = vmatprep.subr.mxu0 0.0
  %2061 = vmatpush2.msra.mxu0 0.0
  %2062 = vmatprep.subr.mxu0 0.0
  %2063 = vmatpush2.msra.mxu0 0.0
  %2064 = vmatprep.subr.mxu0 0.0
  %2065 = vmatpush2.msra.mxu0 0.0
  %2066 = vmatprep.subr.mxu0 0.0
  %2067 = vmatpush2.msra.mxu0 0.0
  %2068 = vmatprep.subr.mxu0 0.0
  %2069 = vmatpush2.msra.mxu0 0.0
  %2070 = vmatprep.subr.mxu0 0.0
  %2071 = vmatpush2.msra.mxu0 0.0
  %2072 = vmatprep.subr.mxu0 0.0
  %2073 = vmatpush2.msra.mxu0 0.0
  %2074 = vmatprep.subr.mxu0 0.0
  %2075 = vmatpush2.msra.mxu0 0.0
  %2076 = vmatprep.subr.mxu0 0.0
  %2077 = vmatpush2.msra.mxu0 0.0
  %2078 = vmatprep.subr.mxu0 0.0
  %2079 = vmatpush2.msra.mxu0 0.0
  %2080 = vmatprep.mubr.f32.mxu0 0.0
  %2081 = vmatmul.mubr.f32.gmra.mxu0 %v2012
  %v2082 = vpop.f32.mrf.mxu0
  %v2083 = vadd.f32 0.0, %v2082
  %v2084 = vpop.f32.mrf.mxu0
  %2085 = vmatprep.mubr.f32.mxu0 0.0
  %2086 = vmatmul.mubr.f32.gmra.mxu0 %v2014
  %v2087 = vpop.f32.mrf.mxu0
  %v2088 = vpop.f32.mrf.mxu0
  %v2089 = vadd.f32 0.0, %v2088
  %2090 = vdwg.mxu0
  %v2091 = vld [vmem:[%s594] sm:$0xff]
  %v2092 = vld [vmem:[%s596 + $0x8] sm:$0xff]
  %v2093 = vadd.f32 %v2091, %v2083
  %v2094 = vadd.f32 %v2092, %v2089
  %v2095 = vxor.u32 %v2093, 2147483648
  %v2096 = vxor.u32 %v2094, 2147483648
  %v2097 = vmul.f32 %v2095, 1.442695
  %v2098 = vpow.pop %v2097
  %v2099 = vmul.f32 %v2096, 1.442695
  %v2100 = vpow.pop %v2099
  %v2101 = vadd.f32 %v2098, 1.0
  %v2102 = vadd.f32 %v2100, 1.0
  %v2103 = vrcp.pop %v2101
  %v2104 = vmul.f32 1.0, %v2103
  %v2105 = vrcp.pop %v2102
  %v2106 = vmul.f32 1.0, %v2105
  %v2107 = vtanh.pop %v2093
  %v2108 = vtanh.pop %v2094
  %v2109 = vmul.f32 %v2104, %v1988
  %v2110 = vmul.f32 %v2106, %v1989
  %2113 = vrot.lane.b32.xlu0 %v2107, 64
  %v2114 = vpop.permute.xlu0 %2113
  %2115 = vrot.lane.b32.xlu0 %v2108, 64
  %v2116 = vpop.permute.xlu0 %2115
  %v2119 = vmul.f32 %v2104, %v2114
  %v2120 = vmul.f32 %v2106, %v2116
  %2123 = vrot.lane.b32.xlu0 %v2119, 32
  %v2124 = vpop.permute.xlu0 %2123
  %2125 = vrot.lane.b32.xlu0 %v2120, 32
  %v2126 = vpop.permute.xlu0 %2125
  %v2129 = vadd.f32 %v2109, %v2124
  %v2130 = vadd.f32 %v2110, %v2126
  %v2131 = vtanh.pop %v2129
  %v2132 = vtanh.pop %v2130
  %2135 = vrot.lane.b32.xlu0 %v2131, 64
  %v2136 = vpop.permute.xlu0 %2135
  %2137 = vrot.lane.b32.xlu0 %v2132, 64
  %v2138 = vpop.permute.xlu0 %2137
  %v2141 = vmul.f32 %v2104, %v2136
  %v2142 = vmul.f32 %v2106, %v2138
  %2144 = vrot.lane.b32.xlu0 %v2141, 32
  %v2145 = vpop.permute.xlu0 %2144
  %2147 = vst.msk [vmem:[%s652] sm:$0xff] %vm227, %v2145
  %2149 = vrot.lane.b32.xlu0 %v2142, 32
  %v2150 = vpop.permute.xlu0 %2149
  %2152 = vst.msk [vmem:[%s658] sm:$0xff] %vm227, %v2150
  %v2153 = vsel %vm227, %v2145, 0
  %v2155 = vsel %vm227, %v2150, 0
  %2157 = vmatprep.subr.mxu0 0.0
  %2158 = vmatpush1.msra.mxu0 0.0
  %2159 = vmatprep.subr.mxu0 0.0
  %2160 = vmatpush1.msra.mxu0 0.0
  %2161 = vmatprep.subr.mxu0 0.0
  %2162 = vmatpush1.msra.mxu0 0.0
  %2163 = vmatprep.subr.mxu0 0.0
  %2164 = vmatpush1.msra.mxu0 0.0
  %2165 = vmatprep.subr.mxu0 0.0
  %2166 = vmatpush1.msra.mxu0 0.0
  %2167 = vmatprep.subr.mxu0 0.0
  %2168 = vmatpush1.msra.mxu0 0.0
  %2169 = vmatprep.subr.mxu0 0.0
  %2170 = vmatpush1.msra.mxu0 0.0
  %2171 = vmatprep.subr.mxu0 0.0
  %2172 = vmatpush1.msra.mxu0 0.0
  %2173 = vmatprep.subr.mxu0 0.0
  %2174 = vmatpush1.msra.mxu0 0.0
  %2175 = vmatprep.subr.mxu0 0.0
  %2176 = vmatpush1.msra.mxu0 0.0
  %2177 = vmatprep.subr.mxu0 0.0
  %2178 = vmatpush1.msra.mxu0 0.0
  %2179 = vmatprep.subr.mxu0 0.0
  %2180 = vmatpush1.msra.mxu0 0.0
  %2181 = vmatprep.subr.mxu0 %v1733
  %2182 = vmatpush1.msra.mxu0 %v1732
  %2183 = vmatprep.subr.mxu0 %v1731
  %2184 = vmatpush1.msra.mxu0 %v1730
  %2185 = vmatprep.subr.mxu0 %v1729
  %2186 = vmatpush1.msra.mxu0 %v1728
  %2187 = vmatprep.subr.mxu0 %v1727
  %2188 = vmatpush1.msra.mxu0 %v1726
  %2189 = vmatprep.subr.mxu0 0.0
  %2190 = vmatpush2.msra.mxu0 0.0
  %2191 = vmatprep.subr.mxu0 0.0
  %2192 = vmatpush2.msra.mxu0 0.0
  %2193 = vmatprep.subr.mxu0 0.0
  %2194 = vmatpush2.msra.mxu0 0.0
  %2195 = vmatprep.subr.mxu0 0.0
  %2196 = vmatpush2.msra.mxu0 0.0
  %2197 = vmatprep.subr.mxu0 0.0
  %2198 = vmatpush2.msra.mxu0 0.0
  %2199 = vmatprep.subr.mxu0 0.0
  %2200 = vmatpush2.msra.mxu0 0.0
  %2201 = vmatprep.subr.mxu0 0.0
  %2202 = vmatpush2.msra.mxu0 0.0
  %2203 = vmatprep.subr.mxu0 0.0
  %2204 = vmatpush2.msra.mxu0 0.0
  %2205 = vmatprep.subr.mxu0 0.0
  %2206 = vmatpush2.msra.mxu0 0.0
  %2207 = vmatprep.subr.mxu0 0.0
  %2208 = vmatpush2.msra.mxu0 0.0
  %2209 = vmatprep.subr.mxu0 0.0
  %2210 = vmatpush2.msra.mxu0 0.0
  %2211 = vmatprep.subr.mxu0 0.0
  %2212 = vmatpush2.msra.mxu0 0.0
  %2213 = vmatprep.subr.mxu0 0.0
  %2214 = vmatpush2.msra.mxu0 0.0
  %2215 = vmatprep.subr.mxu0 0.0
  %2216 = vmatpush2.msra.mxu0 0.0
  %2217 = vmatprep.subr.mxu0 0.0
  %2218 = vmatpush2.msra.mxu0 0.0
  %2219 = vmatprep.subr.mxu0 0.0
  %2220 = vmatpush2.msra.mxu0 0.0
  %2221 = vmatprep.mubr.f32.mxu0 0.0
  %2222 = vmatmul.mubr.f32.gmra.mxu0 %v2153
  %v2223 = vpop.f32.mrf.mxu0
  %v2224 = vadd.f32 0.0, %v2223
  %v2225 = vpop.f32.mrf.mxu0
  %2226 = vmatprep.mubr.f32.mxu0 0.0
  %2227 = vmatmul.mubr.f32.gmra.mxu0 %v2155
  %v2228 = vpop.f32.mrf.mxu0
  %v2229 = vpop.f32.mrf.mxu0
  %v2230 = vadd.f32 0.0, %v2229
  %2231 = vdwg.mxu0
  %v2232 = vld [vmem:[%s739] sm:$0xff]
  %v2233 = vld [vmem:[%s741 + $0x8] sm:$0xff]
  %v2234 = vadd.f32 %v2232, %v2224
  %v2235 = vadd.f32 %v2233, %v2230
  %v2236 = vxor.u32 %v2234, 2147483648
  %v2237 = vxor.u32 %v2235, 2147483648
  %v2238 = vmul.f32 %v2236, 1.442695
  %v2239 = vpow.pop %v2238
  %v2240 = vmul.f32 %v2237, 1.442695
  %v2241 = vpow.pop %v2240
  %v2242 = vadd.f32 %v2239, 1.0
  %v2243 = vadd.f32 %v2241, 1.0
  %v2244 = vrcp.pop %v2242
  %v2245 = vmul.f32 1.0, %v2244
  %v2246 = vrcp.pop %v2243
  %v2247 = vmul.f32 1.0, %v2246
  %v2248 = vtanh.pop %v2234
  %v2249 = vtanh.pop %v2235
  %v2250 = vmul.f32 %v2245, %v2129
  %v2251 = vmul.f32 %v2247, %v2130
  %2254 = vrot.lane.b32.xlu0 %v2248, 64
  %v2255 = vpop.permute.xlu0 %2254
  %2256 = vrot.lane.b32.xlu0 %v2249, 64
  %v2257 = vpop.permute.xlu0 %2256
  %v2260 = vmul.f32 %v2245, %v2255
  %v2261 = vmul.f32 %v2247, %v2257
  %2264 = vrot.lane.b32.xlu0 %v2260, 32
  %v2265 = vpop.permute.xlu0 %2264
  %2266 = vrot.lane.b32.xlu0 %v2261, 32
  %v2267 = vpop.permute.xlu0 %2266
  %v2270 = vadd.f32 %v2250, %v2265
  %v2271 = vadd.f32 %v2251, %v2267
  %v2272 = vtanh.pop %v2270
  %v2273 = vtanh.pop %v2271
  %2276 = vrot.lane.b32.xlu0 %v2272, 64
  %v2277 = vpop.permute.xlu0 %2276
  %2278 = vrot.lane.b32.xlu0 %v2273, 64
  %v2279 = vpop.permute.xlu0 %2278
  %v2282 = vmul.f32 %v2245, %v2277
  %v2283 = vmul.f32 %v2247, %v2279
  %2285 = vrot.lane.b32.xlu0 %v2282, 32
  %v2286 = vpop.permute.xlu0 %2285
  %2288 = vst.msk [vmem:[%s797] sm:$0xff] %vm227, %v2286
  %2290 = vrot.lane.b32.xlu0 %v2283, 32
  %v2291 = vpop.permute.xlu0 %2290
  %2293 = vst.msk [vmem:[%s803] sm:$0xff] %vm227, %v2291
  %v2294 = vsel %vm227, %v2286, 0
  %v2296 = vsel %vm227, %v2291, 0
  %2298 = vmatprep.subr.mxu0 0.0
  %2299 = vmatpush1.msra.mxu0 0.0
  %2300 = vmatprep.subr.mxu0 0.0
  %2301 = vmatpush1.msra.mxu0 0.0
  %2302 = vmatprep.subr.mxu0 0.0
  %2303 = vmatpush1.msra.mxu0 0.0
  %2304 = vmatprep.subr.mxu0 0.0
  %2305 = vmatpush1.msra.mxu0 0.0
  %2306 = vmatprep.subr.mxu0 0.0
  %2307 = vmatpush1.msra.mxu0 0.0
  %2308 = vmatprep.subr.mxu0 0.0
  %2309 = vmatpush1.msra.mxu0 0.0
  %2310 = vmatprep.subr.mxu0 0.0
  %2311 = vmatpush1.msra.mxu0 0.0
  %2312 = vmatprep.subr.mxu0 0.0
  %2313 = vmatpush1.msra.mxu0 0.0
  %2314 = vmatprep.subr.mxu0 0.0
  %2315 = vmatpush1.msra.mxu0 0.0
  %2316 = vmatprep.subr.mxu0 0.0
  %2317 = vmatpush1.msra.mxu0 0.0
  %2318 = vmatprep.subr.mxu0 0.0
  %2319 = vmatpush1.msra.mxu0 0.0
  %2320 = vmatprep.subr.mxu0 0.0
  %2321 = vmatpush1.msra.mxu0 0.0
  %2322 = vmatprep.subr.mxu0 %v1733
  %2323 = vmatpush1.msra.mxu0 %v1732
  %2324 = vmatprep.subr.mxu0 %v1731
  %2325 = vmatpush1.msra.mxu0 %v1730
  %2326 = vmatprep.subr.mxu0 %v1729
  %2327 = vmatpush1.msra.mxu0 %v1728
  %2328 = vmatprep.subr.mxu0 %v1727
  %2329 = vmatpush1.msra.mxu0 %v1726
  %2330 = vmatprep.subr.mxu0 0.0
  %2331 = vmatpush2.msra.mxu0 0.0
  %2332 = vmatprep.subr.mxu0 0.0
  %2333 = vmatpush2.msra.mxu0 0.0
  %2334 = vmatprep.subr.mxu0 0.0
  %2335 = vmatpush2.msra.mxu0 0.0
  %2336 = vmatprep.subr.mxu0 0.0
  %2337 = vmatpush2.msra.mxu0 0.0
  %2338 = vmatprep.subr.mxu0 0.0
  %2339 = vmatpush2.msra.mxu0 0.0
  %2340 = vmatprep.subr.mxu0 0.0
  %2341 = vmatpush2.msra.mxu0 0.0
  %2342 = vmatprep.subr.mxu0 0.0
  %2343 = vmatpush2.msra.mxu0 0.0
  %2344 = vmatprep.subr.mxu0 0.0
  %2345 = vmatpush2.msra.mxu0 0.0
  %2346 = vmatprep.subr.mxu0 0.0
  %2347 = vmatpush2.msra.mxu0 0.0
  %2348 = vmatprep.subr.mxu0 0.0
  %2349 = vmatpush2.msra.mxu0 0.0
  %2350 = vmatprep.subr.mxu0 0.0
  %2351 = vmatpush2.msra.mxu0 0.0
  %2352 = vmatprep.subr.mxu0 0.0
  %2353 = vmatpush2.msra.mxu0 0.0
  %2354 = vmatprep.subr.mxu0 0.0
  %2355 = vmatpush2.msra.mxu0 0.0
  %2356 = vmatprep.subr.mxu0 0.0
  %2357 = vmatpush2.msra.mxu0 0.0
  %2358 = vmatprep.subr.mxu0 0.0
  %2359 = vmatpush2.msra.mxu0 0.0
  %2360 = vmatprep.subr.mxu0 0.0
  %2361 = vmatpush2.msra.mxu0 0.0
  %2362 = vmatprep.mubr.f32.mxu0 0.0
  %2363 = vmatmul.mubr.f32.gmra.mxu0 %v2294
  %v2364 = vpop.f32.mrf.mxu0
  %v2365 = vadd.f32 0.0, %v2364
  %v2366 = vpop.f32.mrf.mxu0
  %2367 = vmatprep.mubr.f32.mxu0 0.0
  %2368 = vmatmul.mubr.f32.gmra.mxu0 %v2296
  %v2369 = vpop.f32.mrf.mxu0
  %v2370 = vpop.f32.mrf.mxu0
  %v2371 = vadd.f32 0.0, %v2370
  %2372 = vdwg.mxu0
  %v2373 = vld [vmem:[%s741] sm:$0xff]
  %v2374 = vld [vmem:[%s739 + $0x8] sm:$0xff]
  %v2375 = vadd.f32 %v2373, %v2365
  %v2376 = vadd.f32 %v2374, %v2371
  %v2377 = vxor.u32 %v2375, 2147483648
  %v2378 = vxor.u32 %v2376, 2147483648
  %v2379 = vmul.f32 %v2377, 1.442695
  %v2380 = vpow.pop %v2379
  %v2381 = vmul.f32 %v2378, 1.442695
  %v2382 = vpow.pop %v2381
  %v2383 = vadd.f32 %v2380, 1.0
  %v2384 = vadd.f32 %v2382, 1.0
  %v2385 = vrcp.pop %v2383
  %v2386 = vmul.f32 1.0, %v2385
  %v2387 = vrcp.pop %v2384
  %v2388 = vmul.f32 1.0, %v2387
  %v2389 = vtanh.pop %v2375
  %v2390 = vtanh.pop %v2376
  %v2391 = vmul.f32 %v2386, %v2270
  %v2392 = vmul.f32 %v2388, %v2271
  %2395 = vrot.lane.b32.xlu0 %v2389, 64
  %v2396 = vpop.permute.xlu0 %2395
  %2397 = vrot.lane.b32.xlu0 %v2390, 64
  %v2398 = vpop.permute.xlu0 %2397
  %v2401 = vmul.f32 %v2386, %v2396
  %v2402 = vmul.f32 %v2388, %v2398
  %2405 = vrot.lane.b32.xlu0 %v2401, 32
  %v2406 = vpop.permute.xlu0 %2405
  %2407 = vrot.lane.b32.xlu0 %v2402, 32
  %v2408 = vpop.permute.xlu0 %2407
  %v2411 = vadd.f32 %v2391, %v2406
  %v2412 = vadd.f32 %v2392, %v2408
  %v2413 = vtanh.pop %v2411
  %v2414 = vtanh.pop %v2412
  %2417 = vrot.lane.b32.xlu0 %v2413, 64
  %v2418 = vpop.permute.xlu0 %2417
  %2419 = vrot.lane.b32.xlu0 %v2414, 64
  %v2420 = vpop.permute.xlu0 %2419
  %v2423 = vmul.f32 %v2386, %v2418
  %v2424 = vmul.f32 %v2388, %v2420
  %2426 = vrot.lane.b32.xlu0 %v2423, 32
  %v2427 = vpop.permute.xlu0 %2426
  %2429 = vst.msk [vmem:[%s940] sm:$0xff] %vm227, %v2427
  %2431 = vrot.lane.b32.xlu0 %v2424, 32
  %v2432 = vpop.permute.xlu0 %2431
  %2434 = vst.msk [vmem:[%s946] sm:$0xff] %vm227, %v2432
  %v2435 = vsel %vm227, %v2427, 0
  %v2437 = vsel %vm227, %v2432, 0
  %2439 = vmatprep.subr.mxu0 0.0
  %2440 = vmatpush1.msra.mxu0 0.0
  %2441 = vmatprep.subr.mxu0 0.0
  %2442 = vmatpush1.msra.mxu0 0.0
  %2443 = vmatprep.subr.mxu0 0.0
  %2444 = vmatpush1.msra.mxu0 0.0
  %2445 = vmatprep.subr.mxu0 0.0
  %2446 = vmatpush1.msra.mxu0 0.0
  %2447 = vmatprep.subr.mxu0 0.0
  %2448 = vmatpush1.msra.mxu0 0.0
  %2449 = vmatprep.subr.mxu0 0.0
  %2450 = vmatpush1.msra.mxu0 0.0
  %2451 = vmatprep.subr.mxu0 0.0
  %2452 = vmatpush1.msra.mxu0 0.0
  %2453 = vmatprep.subr.mxu0 0.0
  %2454 = vmatpush1.msra.mxu0 0.0
  %2455 = vmatprep.subr.mxu0 0.0
  %2456 = vmatpush1.msra.mxu0 0.0
  %2457 = vmatprep.subr.mxu0 0.0
  %2458 = vmatpush1.msra.mxu0 0.0
  %2459 = vmatprep.subr.mxu0 0.0
  %2460 = vmatpush1.msra.mxu0 0.0
  %2461 = vmatprep.subr.mxu0 0.0
  %2462 = vmatpush1.msra.mxu0 0.0
  %2463 = vmatprep.subr.mxu0 %v1733
  %2464 = vmatpush1.msra.mxu0 %v1732
  %2465 = vmatprep.subr.mxu0 %v1731
  %2466 = vmatpush1.msra.mxu0 %v1730
  %2467 = vmatprep.subr.mxu0 %v1729
  %2468 = vmatpush1.msra.mxu0 %v1728
  %2469 = vmatprep.subr.mxu0 %v1727
  %2470 = vmatpush1.msra.mxu0 %v1726
  %2471 = vmatprep.subr.mxu0 0.0
  %2472 = vmatpush2.msra.mxu0 0.0
  %2473 = vmatprep.subr.mxu0 0.0
  %2474 = vmatpush2.msra.mxu0 0.0
  %2475 = vmatprep.subr.mxu0 0.0
  %2476 = vmatpush2.msra.mxu0 0.0
  %2477 = vmatprep.subr.mxu0 0.0
  %2478 = vmatpush2.msra.mxu0 0.0
  %2479 = vmatprep.subr.mxu0 0.0
  %2480 = vmatpush2.msra.mxu0 0.0
  %2481 = vmatprep.subr.mxu0 0.0
  %2482 = vmatpush2.msra.mxu0 0.0
  %2483 = vmatprep.subr.mxu0 0.0
  %2484 = vmatpush2.msra.mxu0 0.0
  %2485 = vmatprep.subr.mxu0 0.0
  %2486 = vmatpush2.msra.mxu0 0.0
  %2487 = vmatprep.subr.mxu0 0.0
  %2488 = vmatpush2.msra.mxu0 0.0
  %2489 = vmatprep.subr.mxu0 0.0
  %2490 = vmatpush2.msra.mxu0 0.0
  %2491 = vmatprep.subr.mxu0 0.0
  %2492 = vmatpush2.msra.mxu0 0.0
  %2493 = vmatprep.subr.mxu0 0.0
  %2494 = vmatpush2.msra.mxu0 0.0
  %2495 = vmatprep.subr.mxu0 0.0
  %2496 = vmatpush2.msra.mxu0 0.0
  %2497 = vmatprep.subr.mxu0 0.0
  %2498 = vmatpush2.msra.mxu0 0.0
  %2499 = vmatprep.subr.mxu0 0.0
  %2500 = vmatpush2.msra.mxu0 0.0
  %2501 = vmatprep.subr.mxu0 0.0
  %2502 = vmatpush2.msra.mxu0 0.0
  %2503 = vmatprep.mubr.f32.mxu0 0.0
  %2504 = vmatmul.mubr.f32.gmra.mxu0 %v2435
  %v2505 = vpop.f32.mrf.mxu0
  %v2506 = vadd.f32 0.0, %v2505
  %v2507 = vpop.f32.mrf.mxu0
  %2508 = vmatprep.mubr.f32.mxu0 0.0
  %2509 = vmatmul.mubr.f32.gmra.mxu0 %v2437
  %v2510 = vpop.f32.mrf.mxu0
  %v2511 = vpop.f32.mrf.mxu0
  %v2512 = vadd.f32 0.0, %v2511
  %2513 = vdwg.mxu0
  %v2514 = vld [vmem:[%s596] sm:$0xff]
  %v2515 = vld [vmem:[%s594 + $0x8] sm:$0xff]
  %v2516 = vadd.f32 %v2514, %v2506
  %v2517 = vadd.f32 %v2515, %v2512
  %v2518 = vxor.u32 %v2516, 2147483648
  %v2519 = vxor.u32 %v2517, 2147483648
  %v2520 = vmul.f32 %v2518, 1.442695
  %v2521 = vpow.pop %v2520
  %v2522 = vmul.f32 %v2519, 1.442695
  %v2523 = vpow.pop %v2522
  %v2524 = vadd.f32 %v2521, 1.0
  %v2525 = vadd.f32 %v2523, 1.0
  %v2526 = vrcp.pop %v2524
  %v2527 = vmul.f32 1.0, %v2526
  %v2528 = vrcp.pop %v2525
  %v2529 = vmul.f32 1.0, %v2528
  %v2530 = vtanh.pop %v2516
  %v2531 = vtanh.pop %v2517
  %v2532 = vmul.f32 %v2527, %v2411
  %v2533 = vmul.f32 %v2529, %v2412
  %2536 = vrot.lane.b32.xlu0 %v2530, 64
  %v2537 = vpop.permute.xlu0 %2536
  %2538 = vrot.lane.b32.xlu0 %v2531, 64
  %v2539 = vpop.permute.xlu0 %2538
  %v2542 = vmul.f32 %v2527, %v2537
  %v2543 = vmul.f32 %v2529, %v2539
  %2546 = vrot.lane.b32.xlu0 %v2542, 32
  %v2547 = vpop.permute.xlu0 %2546
  %2548 = vrot.lane.b32.xlu0 %v2543, 32
  %v2549 = vpop.permute.xlu0 %2548
  %v2552 = vadd.f32 %v2532, %v2547
  %v2553 = vadd.f32 %v2533, %v2549
  %v2554 = vtanh.pop %v2552
  %v2555 = vtanh.pop %v2553
  %2558 = vrot.lane.b32.xlu0 %v2554, 64
  %v2559 = vpop.permute.xlu0 %2558
  %2560 = vrot.lane.b32.xlu0 %v2555, 64
  %v2561 = vpop.permute.xlu0 %2560
  %v2564 = vmul.f32 %v2527, %v2559
  %v2565 = vmul.f32 %v2529, %v2561
  %2567 = vrot.lane.b32.xlu0 %v2564, 32
  %v2568 = vpop.permute.xlu0 %2567
  %2570 = vst.msk [vmem:[%s1083] sm:$0xff] %vm227, %v2568
  %2572 = vrot.lane.b32.xlu0 %v2565, 32
  %v2573 = vpop.permute.xlu0 %2572
  %2575 = vst.msk [vmem:[%s1089] sm:$0xff] %vm227, %v2573
  %v2576 = vsel %vm227, %v2568, 0
  %v2578 = vsel %vm227, %v2573, 0
  %2580 = vmatprep.subr.mxu0 0.0
  %2581 = vmatpush1.msra.mxu0 0.0
  %2582 = vmatprep.subr.mxu0 0.0
  %2583 = vmatpush1.msra.mxu0 0.0
  %2584 = vmatprep.subr.mxu0 0.0
  %2585 = vmatpush1.msra.mxu0 0.0
  %2586 = vmatprep.subr.mxu0 0.0
  %2587 = vmatpush1.msra.mxu0 0.0
  %2588 = vmatprep.subr.mxu0 0.0
  %2589 = vmatpush1.msra.mxu0 0.0
  %2590 = vmatprep.subr.mxu0 0.0
  %2591 = vmatpush1.msra.mxu0 0.0
  %2592 = vmatprep.subr.mxu0 0.0
  %2593 = vmatpush1.msra.mxu0 0.0
  %2594 = vmatprep.subr.mxu0 0.0
  %2595 = vmatpush1.msra.mxu0 0.0
  %2596 = vmatprep.subr.mxu0 0.0
  %2597 = vmatpush1.msra.mxu0 0.0
  %2598 = vmatprep.subr.mxu0 0.0
  %2599 = vmatpush1.msra.mxu0 0.0
  %2600 = vmatprep.subr.mxu0 0.0
  %2601 = vmatpush1.msra.mxu0 0.0
  %2602 = vmatprep.subr.mxu0 0.0
  %2603 = vmatpush1.msra.mxu0 0.0
  %2604 = vmatprep.subr.mxu0 %v1733
  %2605 = vmatpush1.msra.mxu0 %v1732
  %2606 = vmatprep.subr.mxu0 %v1731
  %2607 = vmatpush1.msra.mxu0 %v1730
  %2608 = vmatprep.subr.mxu0 %v1729
  %2609 = vmatpush1.msra.mxu0 %v1728
  %2610 = vmatprep.subr.mxu0 %v1727
  %2611 = vmatpush1.msra.mxu0 %v1726
  %2612 = vmatprep.subr.mxu0 0.0
  %2613 = vmatpush2.msra.mxu0 0.0
  %2614 = vmatprep.subr.mxu0 0.0
  %2615 = vmatpush2.msra.mxu0 0.0
  %2616 = vmatprep.subr.mxu0 0.0
  %2617 = vmatpush2.msra.mxu0 0.0
  %2618 = vmatprep.subr.mxu0 0.0
  %2619 = vmatpush2.msra.mxu0 0.0
  %2620 = vmatprep.subr.mxu0 0.0
  %2621 = vmatpush2.msra.mxu0 0.0
  %2622 = vmatprep.subr.mxu0 0.0
  %2623 = vmatpush2.msra.mxu0 0.0
  %2624 = vmatprep.subr.mxu0 0.0
  %2625 = vmatpush2.msra.mxu0 0.0
  %2626 = vmatprep.subr.mxu0 0.0
  %2627 = vmatpush2.msra.mxu0 0.0
  %2628 = vmatprep.subr.mxu0 0.0
  %2629 = vmatpush2.msra.mxu0 0.0
  %2630 = vmatprep.subr.mxu0 0.0
  %2631 = vmatpush2.msra.mxu0 0.0
  %2632 = vmatprep.subr.mxu0 0.0
  %2633 = vmatpush2.msra.mxu0 0.0
  %2634 = vmatprep.subr.mxu0 0.0
  %2635 = vmatpush2.msra.mxu0 0.0
  %2636 = vmatprep.subr.mxu0 0.0
  %2637 = vmatpush2.msra.mxu0 0.0
  %2638 = vmatprep.subr.mxu0 0.0
  %2639 = vmatpush2.msra.mxu0 0.0
  %2640 = vmatprep.subr.mxu0 0.0
  %2641 = vmatpush2.msra.mxu0 0.0
  %2642 = vmatprep.subr.mxu0 0.0
  %2643 = vmatpush2.msra.mxu0 0.0
  %2644 = vmatprep.mubr.f32.mxu0 0.0
  %2645 = vmatmul.mubr.f32.gmra.mxu0 %v2576
  %v2646 = vpop.f32.mrf.mxu0
  %v2647 = vadd.f32 0.0, %v2646
  %v2648 = vpop.f32.mrf.mxu0
  %2649 = vmatprep.mubr.f32.mxu0 0.0
  %2650 = vmatmul.mubr.f32.gmra.mxu0 %v2578
  %v2651 = vpop.f32.mrf.mxu0
  %v2652 = vpop.f32.mrf.mxu0
  %v2653 = vadd.f32 0.0, %v2652
  %2654 = vdwg.mxu0
  %v2655 = vld [vmem:[%s451] sm:$0xff]
  %v2656 = vld [vmem:[%s449 + $0x8] sm:$0xff]
  %v2657 = vadd.f32 %v2655, %v2647
  %v2658 = vadd.f32 %v2656, %v2653
  %v2659 = vxor.u32 %v2657, 2147483648
  %v2660 = vxor.u32 %v2658, 2147483648
  %v2661 = vmul.f32 %v2659, 1.442695
  %v2662 = vpow.pop %v2661
  %v2663 = vmul.f32 %v2660, 1.442695
  %v2664 = vpow.pop %v2663
  %v2665 = vadd.f32 %v2662, 1.0
  %v2666 = vadd.f32 %v2664, 1.0
  %v2667 = vrcp.pop %v2665
  %v2668 = vmul.f32 1.0, %v2667
  %v2669 = vrcp.pop %v2666
  %v2670 = vmul.f32 1.0, %v2669
  %v2671 = vtanh.pop %v2657
  %v2672 = vtanh.pop %v2658
  %v2673 = vmul.f32 %v2668, %v2552
  %v2674 = vmul.f32 %v2670, %v2553
  %2677 = vrot.lane.b32.xlu0 %v2671, 64
  %v2678 = vpop.permute.xlu0 %2677
  %2679 = vrot.lane.b32.xlu0 %v2672, 64
  %v2680 = vpop.permute.xlu0 %2679
  %v2683 = vmul.f32 %v2668, %v2678
  %v2684 = vmul.f32 %v2670, %v2680
  %2687 = vrot.lane.b32.xlu0 %v2683, 32
  %v2688 = vpop.permute.xlu0 %2687
  %2689 = vrot.lane.b32.xlu0 %v2684, 32
  %v2690 = vpop.permute.xlu0 %2689
  %v2693 = vadd.f32 %v2673, %v2688
  %v2694 = vadd.f32 %v2674, %v2690
  %v2695 = vtanh.pop %v2693
  %v2696 = vtanh.pop %v2694
  %2699 = vrot.lane.b32.xlu0 %v2695, 64
  %v2700 = vpop.permute.xlu0 %2699
  %2701 = vrot.lane.b32.xlu0 %v2696, 64
  %v2702 = vpop.permute.xlu0 %2701
  %v2705 = vmul.f32 %v2668, %v2700
  %v2706 = vmul.f32 %v2670, %v2702
  %2708 = vrot.lane.b32.xlu0 %v2705, 32
  %v2709 = vpop.permute.xlu0 %2708
  %2711 = vst.msk [vmem:[%s1226] sm:$0xff] %vm227, %v2709
  %2713 = vrot.lane.b32.xlu0 %v2706, 32
  %v2714 = vpop.permute.xlu0 %2713
  %2716 = vst.msk [vmem:[%s1232] sm:$0xff] %vm227, %v2714
  %v2717 = vsel %vm227, %v2709, 0
  %v2719 = vsel %vm227, %v2714, 0
  %2721 = vmatprep.subr.mxu0 0.0
  %2722 = vmatpush1.msra.mxu0 0.0
  %2723 = vmatprep.subr.mxu0 0.0
  %2724 = vmatpush1.msra.mxu0 0.0
  %2725 = vmatprep.subr.mxu0 0.0
  %2726 = vmatpush1.msra.mxu0 0.0
  %2727 = vmatprep.subr.mxu0 0.0
  %2728 = vmatpush1.msra.mxu0 0.0
  %2729 = vmatprep.subr.mxu0 0.0
  %2730 = vmatpush1.msra.mxu0 0.0
  %2731 = vmatprep.subr.mxu0 0.0
  %2732 = vmatpush1.msra.mxu0 0.0
  %2733 = vmatprep.subr.mxu0 0.0
  %2734 = vmatpush1.msra.mxu0 0.0
  %2735 = vmatprep.subr.mxu0 0.0
  %2736 = vmatpush1.msra.mxu0 0.0
  %2737 = vmatprep.subr.mxu0 0.0
  %2738 = vmatpush1.msra.mxu0 0.0
  %2739 = vmatprep.subr.mxu0 0.0
  %2740 = vmatpush1.msra.mxu0 0.0
  %2741 = vmatprep.subr.mxu0 0.0
  %2742 = vmatpush1.msra.mxu0 0.0
  %2743 = vmatprep.subr.mxu0 0.0
  %2744 = vmatpush1.msra.mxu0 0.0
  %2745 = vmatprep.subr.mxu0 %v1733
  %2746 = vmatpush1.msra.mxu0 %v1732
  %2747 = vmatprep.subr.mxu0 %v1731
  %2748 = vmatpush1.msra.mxu0 %v1730
  %2749 = vmatprep.subr.mxu0 %v1729
  %2750 = vmatpush1.msra.mxu0 %v1728
  %2751 = vmatprep.subr.mxu0 %v1727
  %2752 = vmatpush1.msra.mxu0 %v1726
  %2753 = vmatprep.subr.mxu0 0.0
  %2754 = vmatpush2.msra.mxu0 0.0
  %2755 = vmatprep.subr.mxu0 0.0
  %2756 = vmatpush2.msra.mxu0 0.0
  %2757 = vmatprep.subr.mxu0 0.0
  %2758 = vmatpush2.msra.mxu0 0.0
  %2759 = vmatprep.subr.mxu0 0.0
  %2760 = vmatpush2.msra.mxu0 0.0
  %2761 = vmatprep.subr.mxu0 0.0
  %2762 = vmatpush2.msra.mxu0 0.0
  %2763 = vmatprep.subr.mxu0 0.0
  %2764 = vmatpush2.msra.mxu0 0.0
  %2765 = vmatprep.subr.mxu0 0.0
  %2766 = vmatpush2.msra.mxu0 0.0
  %2767 = vmatprep.subr.mxu0 0.0
  %2768 = vmatpush2.msra.mxu0 0.0
  %2769 = vmatprep.subr.mxu0 0.0
  %2770 = vmatpush2.msra.mxu0 0.0
  %2771 = vmatprep.subr.mxu0 0.0
  %2772 = vmatpush2.msra.mxu0 0.0
  %2773 = vmatprep.subr.mxu0 0.0
  %2774 = vmatpush2.msra.mxu0 0.0
  %2775 = vmatprep.subr.mxu0 0.0
  %2776 = vmatpush2.msra.mxu0 0.0
  %2777 = vmatprep.subr.mxu0 0.0
  %2778 = vmatpush2.msra.mxu0 0.0
  %2779 = vmatprep.subr.mxu0 0.0
  %2780 = vmatpush2.msra.mxu0 0.0
  %2781 = vmatprep.subr.mxu0 0.0
  %2782 = vmatpush2.msra.mxu0 0.0
  %2783 = vmatprep.subr.mxu0 0.0
  %2784 = vmatpush2.msra.mxu0 0.0
  %2785 = vmatprep.mubr.f32.mxu0 0.0
  %2786 = vmatmul.mubr.f32.gmra.mxu0 %v2717
  %v2787 = vpop.f32.mrf.mxu0
  %v2788 = vadd.f32 0.0, %v2787
  %v2789 = vpop.f32.mrf.mxu0
  %2790 = vmatprep.mubr.f32.mxu0 0.0
  %2791 = vmatmul.mubr.f32.gmra.mxu0 %v2719
  %v2792 = vpop.f32.mrf.mxu0
  %v2793 = vpop.f32.mrf.mxu0
  %v2794 = vadd.f32 0.0, %v2793
  %2795 = vdwg.mxu0
  %v2796 = vld [vmem:[%s307] sm:$0xff]
  %v2797 = vld [vmem:[#allocation2 + $0x8] sm:$0xff]
  %v2798 = vadd.f32 %v2796, %v2788
  %v2799 = vadd.f32 %v2797, %v2794
  %v2800 = vxor.u32 %v2798, 2147483648
  %v2801 = vxor.u32 %v2799, 2147483648
  %v2802 = vmul.f32 %v2800, 1.442695
  %v2803 = vpow.pop %v2802
  %v2804 = vmul.f32 %v2801, 1.442695
  %v2805 = vpow.pop %v2804
  %v2806 = vadd.f32 %v2803, 1.0
  %v2807 = vadd.f32 %v2805, 1.0
  %v2808 = vrcp.pop %v2806
  %v2809 = vmul.f32 1.0, %v2808
  %v2810 = vrcp.pop %v2807
  %v2811 = vmul.f32 1.0, %v2810
  %v2812 = vtanh.pop %v2798
  %v2813 = vtanh.pop %v2799
  %v2814 = vmul.f32 %v2809, %v2693
  %v2815 = vmul.f32 %v2811, %v2694
  %2818 = vrot.lane.b32.xlu0 %v2812, 64
  %v2819 = vpop.permute.xlu0 %2818
  %2820 = vrot.lane.b32.xlu0 %v2813, 64
  %v2821 = vpop.permute.xlu0 %2820
  %v2824 = vmul.f32 %v2809, %v2819
  %v2825 = vmul.f32 %v2811, %v2821
  %2828 = vrot.lane.b32.xlu0 %v2824, 32
  %v2829 = vpop.permute.xlu0 %2828
  %2830 = vrot.lane.b32.xlu0 %v2825, 32
  %v2831 = vpop.permute.xlu0 %2830
  %v2834 = vadd.f32 %v2814, %v2829
  %v2835 = vadd.f32 %v2815, %v2831
  %v2836 = vtanh.pop %v2834
  %v2837 = vtanh.pop %v2835
  %2840 = vrot.lane.b32.xlu0 %v2836, 64
  %v2841 = vpop.permute.xlu0 %2840
  %2842 = vrot.lane.b32.xlu0 %v2837, 64
  %v2843 = vpop.permute.xlu0 %2842
  %v2846 = vmul.f32 %v2809, %v2841
  %v2847 = vmul.f32 %v2811, %v2843
  %2849 = vrot.lane.b32.xlu0 %v2846, 32
  %v2850 = vpop.permute.xlu0 %2849
  %2852 = vst.msk [vmem:[%s1369] sm:$0xff] %vm227, %v2850
  %2854 = vrot.lane.b32.xlu0 %v2847, 32
  %v2855 = vpop.permute.xlu0 %2854
  %2857 = vst.msk [vmem:[#allocation4] sm:$0xff] %vm227, %v2855
  %v2858 = vld [vmem:[%s7] sm:$0xff]
  %v2859 = vld [vmem:[%s7 + $0x8] sm:$0xff]
  %v2860 = vld [vmem:[%s7 + $0x10] sm:$0xff]
  %v2861 = vld [vmem:[%s7 + $0x18] sm:$0xff]
  %v2862 = vld [vmem:[%s7 + $0x20] sm:$0xff]
  %v2863 = vld [vmem:[%s7 + $0x28] sm:$0xff]
  %v2864 = vld [vmem:[%s7 + $0x30] sm:$0xff]
  %v2865 = vld [vmem:[%s7 + $0x38] sm:$0xff]
  %v2866 = vld [vmem:[%s7 + $0x40] sm:$0xff]
  %v2867 = vld [vmem:[%s7 + $0x48] sm:$0xff]
  %v2868 = vld [vmem:[%s7 + $0x50] sm:$0xff]
  %v2869 = vld [vmem:[%s7 + $0x58] sm:$0xff]
  %v2870 = vld [vmem:[%s7 + $0x60] sm:$0xff]
  %v2871 = vld [vmem:[%s7 + $0x68] sm:$0xff]
  %v2872 = vld [vmem:[%s7 + $0x70] sm:$0xff]
  %v2873 = vld [vmem:[%s7 + $0x78] sm:$0xff]
  %v2874 = vld [vmem:[#allocation3] sm:$0xff]
  %v2875 = vld [vmem:[#allocation3 + $0x8] sm:$0xff]
  %v2876 = vld [vmem:[#allocation3 + $0x10] sm:$0xff]
  %v2877 = vld [vmem:[#allocation3 + $0x18] sm:$0xff]
  %v2878 = vld [vmem:[#allocation3 + $0x20] sm:$0xff]
  %v2879 = vld [vmem:[#allocation3 + $0x28] sm:$0xff]
  %v2880 = vld [vmem:[#allocation3 + $0x30] sm:$0xff]
  %v2881 = vld [vmem:[#allocation3 + $0x38] sm:$0xff]
  %v2882 = vld [vmem:[#allocation4] sm:$0xff]
  %v2883 = vld [vmem:[#allocation4 + $0x8] sm:$0xff]
  %v2884 = vld [vmem:[#allocation4 + $0x10] sm:$0xff]
  %v2885 = vld [vmem:[#allocation4 + $0x18] sm:$0xff]
  %v2886 = vld [vmem:[#allocation4 + $0x20] sm:$0xff]
  %v2887 = vld [vmem:[#allocation4 + $0x28] sm:$0xff]
  %v2888 = vld [vmem:[#allocation4 + $0x30] sm:$0xff]
  %v2889 = vld [vmem:[#allocation4 + $0x38] sm:$0xff]
  %v2891 = vsel %vm227, %v2882, 0
  %v2894 = vsel %vm227, %v2883, 0
  %v2897 = vsel %vm227, %v2884, 0
  %v2900 = vsel %vm227, %v2885, 0
  %v2903 = vsel %vm227, %v2886, 0
  %v2906 = vsel %vm227, %v2887, 0
  %v2909 = vsel %vm227, %v2888, 0
  %v2912 = vsel %vm227, %v2889, 0
  %2914 = vmatprep.subr.mxu0 0.0
  %2915 = vmatpush1.msra.mxu0 0.0
  %2916 = vmatprep.subr.mxu0 0.0
  %2917 = vmatpush1.msra.mxu0 0.0
  %2918 = vmatprep.subr.mxu0 0.0
  %2919 = vmatpush1.msra.mxu0 0.0
  %2920 = vmatprep.subr.mxu0 0.0
  %2921 = vmatpush1.msra.mxu0 0.0
  %2922 = vmatprep.subr.mxu0 0.0
  %2923 = vmatpush1.msra.mxu0 0.0
  %2924 = vmatprep.subr.mxu0 0.0
  %2925 = vmatpush1.msra.mxu0 0.0
  %2926 = vmatprep.subr.mxu0 0.0
  %2927 = vmatpush1.msra.mxu0 0.0
  %2928 = vmatprep.subr.mxu0 0.0
  %2929 = vmatpush1.msra.mxu0 0.0
  %2930 = vmatprep.subr.mxu0 0.0
  %2931 = vmatpush1.msra.mxu0 0.0
  %2932 = vmatprep.subr.mxu0 0.0
  %2933 = vmatpush1.msra.mxu0 0.0
  %2934 = vmatprep.subr.mxu0 0.0
  %2935 = vmatpush1.msra.mxu0 0.0
  %2936 = vmatprep.subr.mxu0 0.0
  %2937 = vmatpush1.msra.mxu0 0.0
  %2938 = vmatprep.subr.mxu0 %v2873
  %2939 = vmatpush1.msra.mxu0 %v2872
  %2940 = vmatprep.subr.mxu0 %v2871
  %2941 = vmatpush1.msra.mxu0 %v2870
  %2942 = vmatprep.subr.mxu0 %v2869
  %2943 = vmatpush1.msra.mxu0 %v2868
  %2944 = vmatprep.subr.mxu0 %v2867
  %2945 = vmatpush1.msra.mxu0 %v2866
  %2946 = vmatprep.subr.mxu0 0.0
  %2947 = vmatpush2.msra.mxu0 0.0
  %2948 = vmatprep.subr.mxu0 0.0
  %2949 = vmatpush2.msra.mxu0 0.0
  %2950 = vmatprep.subr.mxu0 0.0
  %2951 = vmatpush2.msra.mxu0 0.0
  %2952 = vmatprep.subr.mxu0 0.0
  %2953 = vmatpush2.msra.mxu0 0.0
  %2954 = vmatprep.subr.mxu0 0.0
  %2955 = vmatpush2.msra.mxu0 0.0
  %2956 = vmatprep.subr.mxu0 0.0
  %2957 = vmatpush2.msra.mxu0 0.0
  %2958 = vmatprep.subr.mxu0 0.0
  %2959 = vmatpush2.msra.mxu0 0.0
  %2960 = vmatprep.subr.mxu0 0.0
  %2961 = vmatpush2.msra.mxu0 0.0
  %2962 = vmatprep.subr.mxu0 0.0
  %2963 = vmatpush2.msra.mxu0 0.0
  %2964 = vmatprep.subr.mxu0 0.0
  %2965 = vmatpush2.msra.mxu0 0.0
  %2966 = vmatprep.subr.mxu0 0.0
  %2967 = vmatpush2.msra.mxu0 0.0
  %2968 = vmatprep.subr.mxu0 0.0
  %2969 = vmatpush2.msra.mxu0 0.0
  %2970 = vmatprep.subr.mxu0 0.0
  %2971 = vmatpush2.msra.mxu0 0.0
  %2972 = vmatprep.subr.mxu0 0.0
  %2973 = vmatpush2.msra.mxu0 0.0
  %2974 = vmatprep.subr.mxu0 0.0
  %2975 = vmatpush2.msra.mxu0 0.0
  %2976 = vmatprep.subr.mxu0 0.0
  %2977 = vmatpush2.msra.mxu0 0.0
  %2978 = vmatprep.mubr.f32.mxu0 0.0
  %2979 = vmatmul.mubr.f32.gmra.mxu0 %v2891
  %v2980 = vpop.f32.mrf.mxu0
  %v2981 = vadd.f32 0.0, %v2980
  %v2982 = vpop.f32.mrf.mxu0
  %v2983 = vadd.f32 0.0, %v2982
  %2984 = vmatprep.mubr.f32.mxu0 0.0
  %2985 = vmatmul.mubr.f32.gmra.mxu0 %v2894
  %v2986 = vpop.f32.mrf.mxu0
  %v2987 = vadd.f32 0.0, %v2986
  %v2988 = vpop.f32.mrf.mxu0
  %v2989 = vadd.f32 0.0, %v2988
  %2990 = vmatprep.mubr.f32.mxu0 0.0
  %2991 = vmatmul.mubr.f32.gmra.mxu0 %v2897
  %v2992 = vpop.f32.mrf.mxu0
  %v2993 = vadd.f32 0.0, %v2992
  %v2994 = vpop.f32.mrf.mxu0
  %v2995 = vadd.f32 0.0, %v2994
  %2996 = vmatprep.mubr.f32.mxu0 0.0
  %2997 = vmatmul.mubr.f32.gmra.mxu0 %v2900
  %v2998 = vpop.f32.mrf.mxu0
  %v2999 = vadd.f32 0.0, %v2998
  %v3000 = vpop.f32.mrf.mxu0
  %v3001 = vadd.f32 0.0, %v3000
  %3002 = vmatprep.mubr.f32.mxu0 0.0
  %3003 = vmatmul.mubr.f32.gmra.mxu0 %v2903
  %v3004 = vpop.f32.mrf.mxu0
  %v3005 = vadd.f32 0.0, %v3004
  %v3006 = vpop.f32.mrf.mxu0
  %v3007 = vadd.f32 0.0, %v3006
  %3008 = vmatprep.mubr.f32.mxu0 0.0
  %3009 = vmatmul.mubr.f32.gmra.mxu0 %v2906
  %v3010 = vpop.f32.mrf.mxu0
  %v3011 = vadd.f32 0.0, %v3010
  %v3012 = vpop.f32.mrf.mxu0
  %v3013 = vadd.f32 0.0, %v3012
  %3014 = vmatprep.mubr.f32.mxu0 0.0
  %3015 = vmatmul.mubr.f32.gmra.mxu0 %v2909
  %v3016 = vpop.f32.mrf.mxu0
  %v3017 = vadd.f32 0.0, %v3016
  %v3018 = vpop.f32.mrf.mxu0
  %v3019 = vadd.f32 0.0, %v3018
  %3020 = vmatprep.mubr.f32.mxu0 0.0
  %3021 = vmatmul.mubr.f32.gmra.mxu0 %v2912
  %v3022 = vpop.f32.mrf.mxu0
  %v3023 = vadd.f32 0.0, %v3022
  %v3024 = vpop.f32.mrf.mxu0
  %v3025 = vadd.f32 0.0, %v3024
  %3026 = vdwg.mxu0
  %v3028 = vsel %vm227, %v2874, 0
  %v3031 = vsel %vm227, %v2875, 0
  %v3034 = vsel %vm227, %v2876, 0
  %v3037 = vsel %vm227, %v2877, 0
  %v3040 = vsel %vm227, %v2878, 0
  %v3043 = vsel %vm227, %v2879, 0
  %v3046 = vsel %vm227, %v2880, 0
  %v3049 = vsel %vm227, %v2881, 0
  %3051 = vmatprep.subr.mxu0 0.0
  %3052 = vmatpush1.msra.mxu0 0.0
  %3053 = vmatprep.subr.mxu0 0.0
  %3054 = vmatpush1.msra.mxu0 0.0
  %3055 = vmatprep.subr.mxu0 0.0
  %3056 = vmatpush1.msra.mxu0 0.0
  %3057 = vmatprep.subr.mxu0 0.0
  %3058 = vmatpush1.msra.mxu0 0.0
  %3059 = vmatprep.subr.mxu0 0.0
  %3060 = vmatpush1.msra.mxu0 0.0
  %3061 = vmatprep.subr.mxu0 0.0
  %3062 = vmatpush1.msra.mxu0 0.0
  %3063 = vmatprep.subr.mxu0 0.0
  %3064 = vmatpush1.msra.mxu0 0.0
  %3065 = vmatprep.subr.mxu0 0.0
  %3066 = vmatpush1.msra.mxu0 0.0
  %3067 = vmatprep.subr.mxu0 0.0
  %3068 = vmatpush1.msra.mxu0 0.0
  %3069 = vmatprep.subr.mxu0 0.0
  %3070 = vmatpush1.msra.mxu0 0.0
  %3071 = vmatprep.subr.mxu0 0.0
  %3072 = vmatpush1.msra.mxu0 0.0
  %3073 = vmatprep.subr.mxu0 0.0
  %3074 = vmatpush1.msra.mxu0 0.0
  %3075 = vmatprep.subr.mxu0 %v2865
  %3076 = vmatpush1.msra.mxu0 %v2864
  %3077 = vmatprep.subr.mxu0 %v2863
  %3078 = vmatpush1.msra.mxu0 %v2862
  %3079 = vmatprep.subr.mxu0 %v2861
  %3080 = vmatpush1.msra.mxu0 %v2860
  %3081 = vmatprep.subr.mxu0 %v2859
  %3082 = vmatpush1.msra.mxu0 %v2858
  %3083 = vmatprep.subr.mxu0 0.0
  %3084 = vmatpush2.msra.mxu0 0.0
  %3085 = vmatprep.subr.mxu0 0.0
  %3086 = vmatpush2.msra.mxu0 0.0
  %3087 = vmatprep.subr.mxu0 0.0
  %3088 = vmatpush2.msra.mxu0 0.0
  %3089 = vmatprep.subr.mxu0 0.0
  %3090 = vmatpush2.msra.mxu0 0.0
  %3091 = vmatprep.subr.mxu0 0.0
  %3092 = vmatpush2.msra.mxu0 0.0
  %3093 = vmatprep.subr.mxu0 0.0
  %3094 = vmatpush2.msra.mxu0 0.0
  %3095 = vmatprep.subr.mxu0 0.0
  %3096 = vmatpush2.msra.mxu0 0.0
  %3097 = vmatprep.subr.mxu0 0.0
  %3098 = vmatpush2.msra.mxu0 0.0
  %3099 = vmatprep.subr.mxu0 0.0
  %3100 = vmatpush2.msra.mxu0 0.0
  %3101 = vmatprep.subr.mxu0 0.0
  %3102 = vmatpush2.msra.mxu0 0.0
  %3103 = vmatprep.subr.mxu0 0.0
  %3104 = vmatpush2.msra.mxu0 0.0
  %3105 = vmatprep.subr.mxu0 0.0
  %3106 = vmatpush2.msra.mxu0 0.0
  %3107 = vmatprep.subr.mxu0 0.0
  %3108 = vmatpush2.msra.mxu0 0.0
  %3109 = vmatprep.subr.mxu0 0.0
  %3110 = vmatpush2.msra.mxu0 0.0
  %3111 = vmatprep.subr.mxu0 0.0
  %3112 = vmatpush2.msra.mxu0 0.0
  %3113 = vmatprep.subr.mxu0 0.0
  %3114 = vmatpush2.msra.mxu0 0.0
  %3115 = vmatprep.mubr.f32.mxu0 0.0
  %3116 = vmatmul.mubr.f32.gmra.mxu0 %v3028
  %v3117 = vpop.f32.mrf.mxu0
  %v3118 = vadd.f32 %v2981, %v3117
  %v3119 = vpop.f32.mrf.mxu0
  %v3120 = vadd.f32 %v2983, %v3119
  %3121 = vmatprep.mubr.f32.mxu0 0.0
  %3122 = vmatmul.mubr.f32.gmra.mxu0 %v3031
  %v3123 = vpop.f32.mrf.mxu0
  %v3124 = vadd.f32 %v2987, %v3123
  %v3125 = vpop.f32.mrf.mxu0
  %v3126 = vadd.f32 %v2989, %v3125
  %3127 = vmatprep.mubr.f32.mxu0 0.0
  %3128 = vmatmul.mubr.f32.gmra.mxu0 %v3034
  %v3129 = vpop.f32.mrf.mxu0
  %v3130 = vadd.f32 %v2993, %v3129
  %v3131 = vpop.f32.mrf.mxu0
  %v3132 = vadd.f32 %v2995, %v3131
  %3133 = vmatprep.mubr.f32.mxu0 0.0
  %3134 = vmatmul.mubr.f32.gmra.mxu0 %v3037
  %v3135 = vpop.f32.mrf.mxu0
  %v3136 = vadd.f32 %v2999, %v3135
  %v3137 = vpop.f32.mrf.mxu0
  %v3138 = vadd.f32 %v3001, %v3137
  %3139 = vmatprep.mubr.f32.mxu0 0.0
  %3140 = vmatmul.mubr.f32.gmra.mxu0 %v3040
  %v3141 = vpop.f32.mrf.mxu0
  %v3142 = vadd.f32 %v3005, %v3141
  %v3143 = vpop.f32.mrf.mxu0
  %v3144 = vadd.f32 %v3007, %v3143
  %3145 = vmatprep.mubr.f32.mxu0 0.0
  %3146 = vmatmul.mubr.f32.gmra.mxu0 %v3043
  %v3147 = vpop.f32.mrf.mxu0
  %v3148 = vadd.f32 %v3011, %v3147
  %v3149 = vpop.f32.mrf.mxu0
  %v3150 = vadd.f32 %v3013, %v3149
  %3151 = vmatprep.mubr.f32.mxu0 0.0
  %3152 = vmatmul.mubr.f32.gmra.mxu0 %v3046
  %v3153 = vpop.f32.mrf.mxu0
  %v3154 = vadd.f32 %v3017, %v3153
  %v3155 = vpop.f32.mrf.mxu0
  %v3156 = vadd.f32 %v3019, %v3155
  %3157 = vmatprep.mubr.f32.mxu0 0.0
  %3158 = vmatmul.mubr.f32.gmra.mxu0 %v3049
  %v3159 = vpop.f32.mrf.mxu0
  %v3160 = vadd.f32 %v3023, %v3159
  %v3161 = vpop.f32.mrf.mxu0
  %v3162 = vadd.f32 %v3025, %v3161
  %3163 = vdwg.mxu0
  %v3164 = vld [vmem:[%s9] sm:$0x3]
  %v3166 = vlaneseq
  %v3167 = vshrl.u32 %v3166, 7
  %v3168 = vsub.s32 0, %v3167
  %v3169 = vrot.slane %v3164, %v3168
  %v3170 = vlaneseq
  %v3171 = vshrl.u32 %v3170, 7
  %v3172 = vsub.s32 1, %v3171
  %v3173 = vrot.slane %v3164, %v3172
  %v3176 = vadd.f32 %v3118, %v3169
  %v3177 = vadd.f32 %v3120, %v3173
  %v3178 = vadd.f32 %v3124, %v3169
  %v3179 = vadd.f32 %v3126, %v3173
  %v3180 = vadd.f32 %v3130, %v3169
  %v3181 = vadd.f32 %v3132, %v3173
  %v3182 = vadd.f32 %v3136, %v3169
  %v3183 = vadd.f32 %v3138, %v3173
  %v3184 = vadd.f32 %v3142, %v3169
  %v3185 = vadd.f32 %v3144, %v3173
  %v3186 = vadd.f32 %v3148, %v3169
  %v3187 = vadd.f32 %v3150, %v3173
  %v3188 = vadd.f32 %v3154, %v3169
  %v3189 = vadd.f32 %v3156, %v3173
  %v3190 = vadd.f32 %v3160, %v3169
  %v3191 = vadd.f32 %v3162, %v3173
  %3192 = vst [vmem:[#allocation2] sm:$0xff] %v3176
  %3193 = vst [vmem:[#allocation2 + $0x8] sm:$0xff] %v3177
  %3194 = vst [vmem:[#allocation2 + $0x10] sm:$0xff] %v3178
  %3195 = vst [vmem:[#allocation2 + $0x18] sm:$0xff] %v3179
  %3196 = vst [vmem:[#allocation2 + $0x20] sm:$0xff] %v3180
  %3197 = vst [vmem:[#allocation2 + $0x28] sm:$0xff] %v3181
  %3198 = vst [vmem:[#allocation2 + $0x30] sm:$0xff] %v3182
  %3199 = vst [vmem:[#allocation2 + $0x38] sm:$0xff] %v3183
  %3200 = vst [vmem:[#allocation2 + $0x40] sm:$0xff] %v3184
  %3201 = vst [vmem:[#allocation2 + $0x48] sm:$0xff] %v3185
  %3202 = vst [vmem:[#allocation2 + $0x50] sm:$0xff] %v3186
  %3203 = vst [vmem:[#allocation2 + $0x58] sm:$0xff] %v3187
  %3204 = vst [vmem:[#allocation2 + $0x60] sm:$0xff] %v3188
  %3205 = vst [vmem:[#allocation2 + $0x68] sm:$0xff] %v3189
  %3206 = vst [vmem:[#allocation2 + $0x70] sm:$0xff] %v3190
  %3207 = vst [vmem:[#allocation2 + $0x78] sm:$0xff] %v3191
  %v3208 = vld [vmem:[%s8] sm:$0xff]
  %v3209 = vld [vmem:[%s8 + $0x8] sm:$0xff]
  %v3210 = vld [vmem:[%s8 + $0x10] sm:$0xff]
  %v3211 = vld [vmem:[%s8 + $0x18] sm:$0xff]
  %v3212 = vld [vmem:[%s8 + $0x20] sm:$0xff]
  %v3213 = vld [vmem:[%s8 + $0x28] sm:$0xff]
  %v3214 = vld [vmem:[%s8 + $0x30] sm:$0xff]
  %v3215 = vld [vmem:[%s8 + $0x38] sm:$0xff]
  %3216 = vmatprep.subr.mxu0 0.0
  %3217 = vmatpush1.msra.mxu0 0.0
  %3218 = vmatprep.subr.mxu0 0.0
  %3219 = vmatpush1.msra.mxu0 0.0
  %3220 = vmatprep.subr.mxu0 0.0
  %3221 = vmatpush1.msra.mxu0 0.0
  %3222 = vmatprep.subr.mxu0 0.0
  %3223 = vmatpush1.msra.mxu0 0.0
  %3224 = vmatprep.subr.mxu0 0.0
  %3225 = vmatpush1.msra.mxu0 0.0
  %3226 = vmatprep.subr.mxu0 0.0
  %3227 = vmatpush1.msra.mxu0 0.0
  %3228 = vmatprep.subr.mxu0 0.0
  %3229 = vmatpush1.msra.mxu0 0.0
  %3230 = vmatprep.subr.mxu0 0.0
  %3231 = vmatpush1.msra.mxu0 0.0
  %3232 = vmatprep.subr.mxu0 0.0
  %3233 = vmatpush1.msra.mxu0 0.0
  %3234 = vmatprep.subr.mxu0 0.0
  %3235 = vmatpush1.msra.mxu0 0.0
  %3236 = vmatprep.subr.mxu0 0.0
  %3237 = vmatpush1.msra.mxu0 0.0
  %3238 = vmatprep.subr.mxu0 0.0
  %3239 = vmatpush1.msra.mxu0 0.0
  %3240 = vmatprep.subr.mxu0 %v3215
  %3241 = vmatpush1.msra.mxu0 %v3214
  %3242 = vmatprep.subr.mxu0 %v3213
  %3243 = vmatpush1.msra.mxu0 %v3212
  %3244 = vmatprep.subr.mxu0 %v3211
  %3245 = vmatpush1.msra.mxu0 %v3210
  %3246 = vmatprep.subr.mxu0 %v3209
  %3247 = vmatpush1.msra.mxu0 %v3208
  %3248 = vmatprep.subr.mxu0 0.0
  %3249 = vmatpush2.msra.mxu0 0.0
  %3250 = vmatprep.subr.mxu0 0.0
  %3251 = vmatpush2.msra.mxu0 0.0
  %3252 = vmatprep.subr.mxu0 0.0
  %3253 = vmatpush2.msra.mxu0 0.0
  %3254 = vmatprep.subr.mxu0 0.0
  %3255 = vmatpush2.msra.mxu0 0.0
  %3256 = vmatprep.subr.mxu0 0.0
  %3257 = vmatpush2.msra.mxu0 0.0
  %3258 = vmatprep.subr.mxu0 0.0
  %3259 = vmatpush2.msra.mxu0 0.0
  %3260 = vmatprep.subr.mxu0 0.0
  %3261 = vmatpush2.msra.mxu0 0.0
  %3262 = vmatprep.subr.mxu0 0.0
  %3263 = vmatpush2.msra.mxu0 0.0
  %3264 = vmatprep.subr.mxu0 0.0
  %3265 = vmatpush2.msra.mxu0 0.0
  %3266 = vmatprep.subr.mxu0 0.0
  %3267 = vmatpush2.msra.mxu0 0.0
  %3268 = vmatprep.subr.mxu0 0.0
  %3269 = vmatpush2.msra.mxu0 0.0
  %3270 = vmatprep.subr.mxu0 0.0
  %3271 = vmatpush2.msra.mxu0 0.0
  %3272 = vmatprep.subr.mxu0 0.0
  %3273 = vmatpush2.msra.mxu0 0.0
  %3274 = vmatprep.subr.mxu0 0.0
  %3275 = vmatpush2.msra.mxu0 0.0
  %3276 = vmatprep.subr.mxu0 0.0
  %3277 = vmatpush2.msra.mxu0 0.0
  %3278 = vmatprep.subr.mxu0 0.0
  %3279 = vmatpush2.msra.mxu0 0.0
  %3280 = vmatprep.mubr.f32.mxu0 0.0
  %3281 = vmatmul.mubr.f32.gmra.mxu0 %v229
  %v3282 = vpop.f32.mrf.mxu0
  %v3283 = vadd.f32 0.0, %v3282
  %v3284 = vpop.f32.mrf.mxu0
  %3285 = vmatprep.mubr.f32.mxu0 0.0
  %3286 = vmatmul.mubr.f32.gmra.mxu0 %v229
  %v3287 = vpop.f32.mrf.mxu0
  %v3288 = vpop.f32.mrf.mxu0
  %v3289 = vadd.f32 0.0, %v3288
  %3290 = vdwg.mxu0
  %v3291 = vld [vmem:[#allocation2] sm:$0xff]
  %v3292 = vld [vmem:[%s307 + $0x8] sm:$0xff]
  %v3293 = vadd.f32 %v3291, %v3283
  %v3294 = vadd.f32 %v3292, %v3289
  %v3295 = vxor.u32 %v3293, 2147483648
  %v3296 = vxor.u32 %v3294, 2147483648
  %v3297 = vmul.f32 %v3295, 1.442695
  %v3298 = vpow.pop %v3297
  %v3299 = vmul.f32 %v3296, 1.442695
  %v3300 = vpow.pop %v3299
  %v3301 = vadd.f32 %v3298, 1.0
  %v3302 = vadd.f32 %v3300, 1.0
  %v3303 = vrcp.pop %v3301
  %v3304 = vmul.f32 1.0, %v3303
  %v3305 = vrcp.pop %v3302
  %v3306 = vmul.f32 1.0, %v3305
  %v3307 = vtanh.pop %v3293
  %v3308 = vtanh.pop %v3294
  %v3309 = vmul.f32 %v3304, 0.0
  %v3310 = vmul.f32 %v3306, 0.0
  %3313 = vrot.lane.b32.xlu0 %v3307, 64
  %v3314 = vpop.permute.xlu0 %3313
  %3315 = vrot.lane.b32.xlu0 %v3308, 64
  %v3316 = vpop.permute.xlu0 %3315
  %v3319 = vmul.f32 %v3304, %v3314
  %v3320 = vmul.f32 %v3306, %v3316
  %3323 = vrot.lane.b32.xlu0 %v3319, 32
  %v3324 = vpop.permute.xlu0 %3323
  %3325 = vrot.lane.b32.xlu0 %v3320, 32
  %v3326 = vpop.permute.xlu0 %3325
  %v3329 = vadd.f32 %v3309, %v3324
  %v3330 = vadd.f32 %v3310, %v3326
  %v3331 = vtanh.pop %v3329
  %v3332 = vtanh.pop %v3330
  %3335 = vrot.lane.b32.xlu0 %v3331, 64
  %v3336 = vpop.permute.xlu0 %3335
  %3337 = vrot.lane.b32.xlu0 %v3332, 64
  %v3338 = vpop.permute.xlu0 %3337
  %v3341 = vmul.f32 %v3304, %v3336
  %v3342 = vmul.f32 %v3306, %v3338
  %3344 = vrot.lane.b32.xlu0 %v3341, 32
  %v3345 = vpop.permute.xlu0 %3344
  %3347 = vst.msk [vmem:[#allocation3] sm:$0xff] %vm227, %v3345
  %3349 = vrot.lane.b32.xlu0 %v3342, 32
  %v3350 = vpop.permute.xlu0 %3349
  %3352 = vst.msk [vmem:[%s368] sm:$0xff] %vm227, %v3350
  %v3353 = vsel %vm227, %v3345, 0
  %v3355 = vsel %vm227, %v3350, 0
  %3357 = vmatprep.subr.mxu0 0.0
  %3358 = vmatpush1.msra.mxu0 0.0
  %3359 = vmatprep.subr.mxu0 0.0
  %3360 = vmatpush1.msra.mxu0 0.0
  %3361 = vmatprep.subr.mxu0 0.0
  %3362 = vmatpush1.msra.mxu0 0.0
  %3363 = vmatprep.subr.mxu0 0.0
  %3364 = vmatpush1.msra.mxu0 0.0
  %3365 = vmatprep.subr.mxu0 0.0
  %3366 = vmatpush1.msra.mxu0 0.0
  %3367 = vmatprep.subr.mxu0 0.0
  %3368 = vmatpush1.msra.mxu0 0.0
  %3369 = vmatprep.subr.mxu0 0.0
  %3370 = vmatpush1.msra.mxu0 0.0
  %3371 = vmatprep.subr.mxu0 0.0
  %3372 = vmatpush1.msra.mxu0 0.0
  %3373 = vmatprep.subr.mxu0 0.0
  %3374 = vmatpush1.msra.mxu0 0.0
  %3375 = vmatprep.subr.mxu0 0.0
  %3376 = vmatpush1.msra.mxu0 0.0
  %3377 = vmatprep.subr.mxu0 0.0
  %3378 = vmatpush1.msra.mxu0 0.0
  %3379 = vmatprep.subr.mxu0 0.0
  %3380 = vmatpush1.msra.mxu0 0.0
  %3381 = vmatprep.subr.mxu0 %v3215
  %3382 = vmatpush1.msra.mxu0 %v3214
  %3383 = vmatprep.subr.mxu0 %v3213
  %3384 = vmatpush1.msra.mxu0 %v3212
  %3385 = vmatprep.subr.mxu0 %v3211
  %3386 = vmatpush1.msra.mxu0 %v3210
  %3387 = vmatprep.subr.mxu0 %v3209
  %3388 = vmatpush1.msra.mxu0 %v3208
  %3389 = vmatprep.subr.mxu0 0.0
  %3390 = vmatpush2.msra.mxu0 0.0
  %3391 = vmatprep.subr.mxu0 0.0
  %3392 = vmatpush2.msra.mxu0 0.0
  %3393 = vmatprep.subr.mxu0 0.0
  %3394 = vmatpush2.msra.mxu0 0.0
  %3395 = vmatprep.subr.mxu0 0.0
  %3396 = vmatpush2.msra.mxu0 0.0
  %3397 = vmatprep.subr.mxu0 0.0
  %3398 = vmatpush2.msra.mxu0 0.0
  %3399 = vmatprep.subr.mxu0 0.0
  %3400 = vmatpush2.msra.mxu0 0.0
  %3401 = vmatprep.subr.mxu0 0.0
  %3402 = vmatpush2.msra.mxu0 0.0
  %3403 = vmatprep.subr.mxu0 0.0
  %3404 = vmatpush2.msra.mxu0 0.0
  %3405 = vmatprep.subr.mxu0 0.0
  %3406 = vmatpush2.msra.mxu0 0.0
  %3407 = vmatprep.subr.mxu0 0.0
  %3408 = vmatpush2.msra.mxu0 0.0
  %3409 = vmatprep.subr.mxu0 0.0
  %3410 = vmatpush2.msra.mxu0 0.0
  %3411 = vmatprep.subr.mxu0 0.0
  %3412 = vmatpush2.msra.mxu0 0.0
  %3413 = vmatprep.subr.mxu0 0.0
  %3414 = vmatpush2.msra.mxu0 0.0
  %3415 = vmatprep.subr.mxu0 0.0
  %3416 = vmatpush2.msra.mxu0 0.0
  %3417 = vmatprep.subr.mxu0 0.0
  %3418 = vmatpush2.msra.mxu0 0.0
  %3419 = vmatprep.subr.mxu0 0.0
  %3420 = vmatpush2.msra.mxu0 0.0
  %3421 = vmatprep.mubr.f32.mxu0 0.0
  %3422 = vmatmul.mubr.f32.gmra.mxu0 %v3353
  %v3423 = vpop.f32.mrf.mxu0
  %v3424 = vadd.f32 0.0, %v3423
  %v3425 = vpop.f32.mrf.mxu0
  %3426 = vmatprep.mubr.f32.mxu0 0.0
  %3427 = vmatmul.mubr.f32.gmra.mxu0 %v3355
  %v3428 = vpop.f32.mrf.mxu0
  %v3429 = vpop.f32.mrf.mxu0
  %v3430 = vadd.f32 0.0, %v3429
  %3431 = vdwg.mxu0
  %v3432 = vld [vmem:[%s449] sm:$0xff]
  %v3433 = vld [vmem:[%s451 + $0x8] sm:$0xff]
  %v3434 = vadd.f32 %v3432, %v3424
  %v3435 = vadd.f32 %v3433, %v3430
  %v3436 = vxor.u32 %v3434, 2147483648
  %v3437 = vxor.u32 %v3435, 2147483648
  %v3438 = vmul.f32 %v3436, 1.442695
  %v3439 = vpow.pop %v3438
  %v3440 = vmul.f32 %v3437, 1.442695
  %v3441 = vpow.pop %v3440
  %v3442 = vadd.f32 %v3439, 1.0
  %v3443 = vadd.f32 %v3441, 1.0
  %v3444 = vrcp.pop %v3442
  %v3445 = vmul.f32 1.0, %v3444
  %v3446 = vrcp.pop %v3443
  %v3447 = vmul.f32 1.0, %v3446
  %v3448 = vtanh.pop %v3434
  %v3449 = vtanh.pop %v3435
  %v3450 = vmul.f32 %v3445, %v3329
  %v3451 = vmul.f32 %v3447, %v3330
  %3454 = vrot.lane.b32.xlu0 %v3448, 64
  %v3455 = vpop.permute.xlu0 %3454
  %3456 = vrot.lane.b32.xlu0 %v3449, 64
  %v3457 = vpop.permute.xlu0 %3456
  %v3460 = vmul.f32 %v3445, %v3455
  %v3461 = vmul.f32 %v3447, %v3457
  %3464 = vrot.lane.b32.xlu0 %v3460, 32
  %v3465 = vpop.permute.xlu0 %3464
  %3466 = vrot.lane.b32.xlu0 %v3461, 32
  %v3467 = vpop.permute.xlu0 %3466
  %v3470 = vadd.f32 %v3450, %v3465
  %v3471 = vadd.f32 %v3451, %v3467
  %v3472 = vtanh.pop %v3470
  %v3473 = vtanh.pop %v3471
  %3476 = vrot.lane.b32.xlu0 %v3472, 64
  %v3477 = vpop.permute.xlu0 %3476
  %3478 = vrot.lane.b32.xlu0 %v3473, 64
  %v3479 = vpop.permute.xlu0 %3478
  %v3482 = vmul.f32 %v3445, %v3477
  %v3483 = vmul.f32 %v3447, %v3479
  %3485 = vrot.lane.b32.xlu0 %v3482, 32
  %v3486 = vpop.permute.xlu0 %3485
  %3488 = vst.msk [vmem:[%s507] sm:$0xff] %vm227, %v3486
  %3490 = vrot.lane.b32.xlu0 %v3483, 32
  %v3491 = vpop.permute.xlu0 %3490
  %3493 = vst.msk [vmem:[%s513] sm:$0xff] %vm227, %v3491
  %v3494 = vsel %vm227, %v3486, 0
  %v3496 = vsel %vm227, %v3491, 0
  %3498 = vmatprep.subr.mxu0 0.0
  %3499 = vmatpush1.msra.mxu0 0.0
  %3500 = vmatprep.subr.mxu0 0.0
  %3501 = vmatpush1.msra.mxu0 0.0
  %3502 = vmatprep.subr.mxu0 0.0
  %3503 = vmatpush1.msra.mxu0 0.0
  %3504 = vmatprep.subr.mxu0 0.0
  %3505 = vmatpush1.msra.mxu0 0.0
  %3506 = vmatprep.subr.mxu0 0.0
  %3507 = vmatpush1.msra.mxu0 0.0
  %3508 = vmatprep.subr.mxu0 0.0
  %3509 = vmatpush1.msra.mxu0 0.0
  %3510 = vmatprep.subr.mxu0 0.0
  %3511 = vmatpush1.msra.mxu0 0.0
  %3512 = vmatprep.subr.mxu0 0.0
  %3513 = vmatpush1.msra.mxu0 0.0
  %3514 = vmatprep.subr.mxu0 0.0
  %3515 = vmatpush1.msra.mxu0 0.0
  %3516 = vmatprep.subr.mxu0 0.0
  %3517 = vmatpush1.msra.mxu0 0.0
  %3518 = vmatprep.subr.mxu0 0.0
  %3519 = vmatpush1.msra.mxu0 0.0
  %3520 = vmatprep.subr.mxu0 0.0
  %3521 = vmatpush1.msra.mxu0 0.0
  %3522 = vmatprep.subr.mxu0 %v3215
  %3523 = vmatpush1.msra.mxu0 %v3214
  %3524 = vmatprep.subr.mxu0 %v3213
  %3525 = vmatpush1.msra.mxu0 %v3212
  %3526 = vmatprep.subr.mxu0 %v3211
  %3527 = vmatpush1.msra.mxu0 %v3210
  %3528 = vmatprep.subr.mxu0 %v3209
  %3529 = vmatpush1.msra.mxu0 %v3208
  %3530 = vmatprep.subr.mxu0 0.0
  %3531 = vmatpush2.msra.mxu0 0.0
  %3532 = vmatprep.subr.mxu0 0.0
  %3533 = vmatpush2.msra.mxu0 0.0
  %3534 = vmatprep.subr.mxu0 0.0
  %3535 = vmatpush2.msra.mxu0 0.0
  %3536 = vmatprep.subr.mxu0 0.0
  %3537 = vmatpush2.msra.mxu0 0.0
  %3538 = vmatprep.subr.mxu0 0.0
  %3539 = vmatpush2.msra.mxu0 0.0
  %3540 = vmatprep.subr.mxu0 0.0
  %3541 = vmatpush2.msra.mxu0 0.0
  %3542 = vmatprep.subr.mxu0 0.0
  %3543 = vmatpush2.msra.mxu0 0.0
  %3544 = vmatprep.subr.mxu0 0.0
  %3545 = vmatpush2.msra.mxu0 0.0
  %3546 = vmatprep.subr.mxu0 0.0
  %3547 = vmatpush2.msra.mxu0 0.0
  %3548 = vmatprep.subr.mxu0 0.0
  %3549 = vmatpush2.msra.mxu0 0.0
  %3550 = vmatprep.subr.mxu0 0.0
  %3551 = vmatpush2.msra.mxu0 0.0
  %3552 = vmatprep.subr.mxu0 0.0
  %3553 = vmatpush2.msra.mxu0 0.0
  %3554 = vmatprep.subr.mxu0 0.0
  %3555 = vmatpush2.msra.mxu0 0.0
  %3556 = vmatprep.subr.mxu0 0.0
  %3557 = vmatpush2.msra.mxu0 0.0
  %3558 = vmatprep.subr.mxu0 0.0
  %3559 = vmatpush2.msra.mxu0 0.0
  %3560 = vmatprep.subr.mxu0 0.0
  %3561 = vmatpush2.msra.mxu0 0.0
  %3562 = vmatprep.mubr.f32.mxu0 0.0
  %3563 = vmatmul.mubr.f32.gmra.mxu0 %v3494
  %v3564 = vpop.f32.mrf.mxu0
  %v3565 = vadd.f32 0.0, %v3564
  %v3566 = vpop.f32.mrf.mxu0
  %3567 = vmatprep.mubr.f32.mxu0 0.0
  %3568 = vmatmul.mubr.f32.gmra.mxu0 %v3496
  %v3569 = vpop.f32.mrf.mxu0
  %v3570 = vpop.f32.mrf.mxu0
  %v3571 = vadd.f32 0.0, %v3570
  %3572 = vdwg.mxu0
  %v3573 = vld [vmem:[%s594] sm:$0xff]
  %v3574 = vld [vmem:[%s596 + $0x8] sm:$0xff]
  %v3575 = vadd.f32 %v3573, %v3565
  %v3576 = vadd.f32 %v3574, %v3571
  %v3577 = vxor.u32 %v3575, 2147483648
  %v3578 = vxor.u32 %v3576, 2147483648
  %v3579 = vmul.f32 %v3577, 1.442695
  %v3580 = vpow.pop %v3579
  %v3581 = vmul.f32 %v3578, 1.442695
  %v3582 = vpow.pop %v3581
  %v3583 = vadd.f32 %v3580, 1.0
  %v3584 = vadd.f32 %v3582, 1.0
  %v3585 = vrcp.pop %v3583
  %v3586 = vmul.f32 1.0, %v3585
  %v3587 = vrcp.pop %v3584
  %v3588 = vmul.f32 1.0, %v3587
  %v3589 = vtanh.pop %v3575
  %v3590 = vtanh.pop %v3576
  %v3591 = vmul.f32 %v3586, %v3470
  %v3592 = vmul.f32 %v3588, %v3471
  %3595 = vrot.lane.b32.xlu0 %v3589, 64
  %v3596 = vpop.permute.xlu0 %3595
  %3597 = vrot.lane.b32.xlu0 %v3590, 64
  %v3598 = vpop.permute.xlu0 %3597
  %v3601 = vmul.f32 %v3586, %v3596
  %v3602 = vmul.f32 %v3588, %v3598
  %3605 = vrot.lane.b32.xlu0 %v3601, 32
  %v3606 = vpop.permute.xlu0 %3605
  %3607 = vrot.lane.b32.xlu0 %v3602, 32
  %v3608 = vpop.permute.xlu0 %3607
  %v3611 = vadd.f32 %v3591, %v3606
  %v3612 = vadd.f32 %v3592, %v3608
  %v3613 = vtanh.pop %v3611
  %v3614 = vtanh.pop %v3612
  %3617 = vrot.lane.b32.xlu0 %v3613, 64
  %v3618 = vpop.permute.xlu0 %3617
  %3619 = vrot.lane.b32.xlu0 %v3614, 64
  %v3620 = vpop.permute.xlu0 %3619
  %v3623 = vmul.f32 %v3586, %v3618
  %v3624 = vmul.f32 %v3588, %v3620
  %3626 = vrot.lane.b32.xlu0 %v3623, 32
  %v3627 = vpop.permute.xlu0 %3626
  %3629 = vst.msk [vmem:[%s652] sm:$0xff] %vm227, %v3627
  %3631 = vrot.lane.b32.xlu0 %v3624, 32
  %v3632 = vpop.permute.xlu0 %3631
  %3634 = vst.msk [vmem:[%s658] sm:$0xff] %vm227, %v3632
  %v3635 = vsel %vm227, %v3627, 0
  %v3637 = vsel %vm227, %v3632, 0
  %3639 = vmatprep.subr.mxu0 0.0
  %3640 = vmatpush1.msra.mxu0 0.0
  %3641 = vmatprep.subr.mxu0 0.0
  %3642 = vmatpush1.msra.mxu0 0.0
  %3643 = vmatprep.subr.mxu0 0.0
  %3644 = vmatpush1.msra.mxu0 0.0
  %3645 = vmatprep.subr.mxu0 0.0
  %3646 = vmatpush1.msra.mxu0 0.0
  %3647 = vmatprep.subr.mxu0 0.0
  %3648 = vmatpush1.msra.mxu0 0.0
  %3649 = vmatprep.subr.mxu0 0.0
  %3650 = vmatpush1.msra.mxu0 0.0
  %3651 = vmatprep.subr.mxu0 0.0
  %3652 = vmatpush1.msra.mxu0 0.0
  %3653 = vmatprep.subr.mxu0 0.0
  %3654 = vmatpush1.msra.mxu0 0.0
  %3655 = vmatprep.subr.mxu0 0.0
  %3656 = vmatpush1.msra.mxu0 0.0
  %3657 = vmatprep.subr.mxu0 0.0
  %3658 = vmatpush1.msra.mxu0 0.0
  %3659 = vmatprep.subr.mxu0 0.0
  %3660 = vmatpush1.msra.mxu0 0.0
  %3661 = vmatprep.subr.mxu0 0.0
  %3662 = vmatpush1.msra.mxu0 0.0
  %3663 = vmatprep.subr.mxu0 %v3215
  %3664 = vmatpush1.msra.mxu0 %v3214
  %3665 = vmatprep.subr.mxu0 %v3213
  %3666 = vmatpush1.msra.mxu0 %v3212
  %3667 = vmatprep.subr.mxu0 %v3211
  %3668 = vmatpush1.msra.mxu0 %v3210
  %3669 = vmatprep.subr.mxu0 %v3209
  %3670 = vmatpush1.msra.mxu0 %v3208
  %3671 = vmatprep.subr.mxu0 0.0
  %3672 = vmatpush2.msra.mxu0 0.0
  %3673 = vmatprep.subr.mxu0 0.0
  %3674 = vmatpush2.msra.mxu0 0.0
  %3675 = vmatprep.subr.mxu0 0.0
  %3676 = vmatpush2.msra.mxu0 0.0
  %3677 = vmatprep.subr.mxu0 0.0
  %3678 = vmatpush2.msra.mxu0 0.0
  %3679 = vmatprep.subr.mxu0 0.0
  %3680 = vmatpush2.msra.mxu0 0.0
  %3681 = vmatprep.subr.mxu0 0.0
  %3682 = vmatpush2.msra.mxu0 0.0
  %3683 = vmatprep.subr.mxu0 0.0
  %3684 = vmatpush2.msra.mxu0 0.0
  %3685 = vmatprep.subr.mxu0 0.0
  %3686 = vmatpush2.msra.mxu0 0.0
  %3687 = vmatprep.subr.mxu0 0.0
  %3688 = vmatpush2.msra.mxu0 0.0
  %3689 = vmatprep.subr.mxu0 0.0
  %3690 = vmatpush2.msra.mxu0 0.0
  %3691 = vmatprep.subr.mxu0 0.0
  %3692 = vmatpush2.msra.mxu0 0.0
  %3693 = vmatprep.subr.mxu0 0.0
  %3694 = vmatpush2.msra.mxu0 0.0
  %3695 = vmatprep.subr.mxu0 0.0
  %3696 = vmatpush2.msra.mxu0 0.0
  %3697 = vmatprep.subr.mxu0 0.0
  %3698 = vmatpush2.msra.mxu0 0.0
  %3699 = vmatprep.subr.mxu0 0.0
  %3700 = vmatpush2.msra.mxu0 0.0
  %3701 = vmatprep.subr.mxu0 0.0
  %3702 = vmatpush2.msra.mxu0 0.0
  %3703 = vmatprep.mubr.f32.mxu0 0.0
  %3704 = vmatmul.mubr.f32.gmra.mxu0 %v3635
  %v3705 = vpop.f32.mrf.mxu0
  %v3706 = vadd.f32 0.0, %v3705
  %v3707 = vpop.f32.mrf.mxu0
  %3708 = vmatprep.mubr.f32.mxu0 0.0
  %3709 = vmatmul.mubr.f32.gmra.mxu0 %v3637
  %v3710 = vpop.f32.mrf.mxu0
  %v3711 = vpop.f32.mrf.mxu0
  %v3712 = vadd.f32 0.0, %v3711
  %3713 = vdwg.mxu0
  %v3714 = vld [vmem:[%s739] sm:$0xff]
  %v3715 = vld [vmem:[%s741 + $0x8] sm:$0xff]
  %v3716 = vadd.f32 %v3714, %v3706
  %v3717 = vadd.f32 %v3715, %v3712
  %v3718 = vxor.u32 %v3716, 2147483648
  %v3719 = vxor.u32 %v3717, 2147483648
  %v3720 = vmul.f32 %v3718, 1.442695
  %v3721 = vpow.pop %v3720
  %v3722 = vmul.f32 %v3719, 1.442695
  %v3723 = vpow.pop %v3722
  %v3724 = vadd.f32 %v3721, 1.0
  %v3725 = vadd.f32 %v3723, 1.0
  %v3726 = vrcp.pop %v3724
  %v3727 = vmul.f32 1.0, %v3726
  %v3728 = vrcp.pop %v3725
  %v3729 = vmul.f32 1.0, %v3728
  %v3730 = vtanh.pop %v3716
  %v3731 = vtanh.pop %v3717
  %v3732 = vmul.f32 %v3727, %v3611
  %v3733 = vmul.f32 %v3729, %v3612
  %3736 = vrot.lane.b32.xlu0 %v3730, 64
  %v3737 = vpop.permute.xlu0 %3736
  %3738 = vrot.lane.b32.xlu0 %v3731, 64
  %v3739 = vpop.permute.xlu0 %3738
  %v3742 = vmul.f32 %v3727, %v3737
  %v3743 = vmul.f32 %v3729, %v3739
  %3746 = vrot.lane.b32.xlu0 %v3742, 32
  %v3747 = vpop.permute.xlu0 %3746
  %3748 = vrot.lane.b32.xlu0 %v3743, 32
  %v3749 = vpop.permute.xlu0 %3748
  %v3752 = vadd.f32 %v3732, %v3747
  %v3753 = vadd.f32 %v3733, %v3749
  %v3754 = vtanh.pop %v3752
  %v3755 = vtanh.pop %v3753
  %3758 = vrot.lane.b32.xlu0 %v3754, 64
  %v3759 = vpop.permute.xlu0 %3758
  %3760 = vrot.lane.b32.xlu0 %v3755, 64
  %v3761 = vpop.permute.xlu0 %3760
  %v3764 = vmul.f32 %v3727, %v3759
  %v3765 = vmul.f32 %v3729, %v3761
  %3767 = vrot.lane.b32.xlu0 %v3764, 32
  %v3768 = vpop.permute.xlu0 %3767
  %3770 = vst.msk [vmem:[%s797] sm:$0xff] %vm227, %v3768
  %3772 = vrot.lane.b32.xlu0 %v3765, 32
  %v3773 = vpop.permute.xlu0 %3772
  %3775 = vst.msk [vmem:[%s803] sm:$0xff] %vm227, %v3773
  %v3776 = vsel %vm227, %v3768, 0
  %v3778 = vsel %vm227, %v3773, 0
  %3780 = vmatprep.subr.mxu0 0.0
  %3781 = vmatpush1.msra.mxu0 0.0
  %3782 = vmatprep.subr.mxu0 0.0
  %3783 = vmatpush1.msra.mxu0 0.0
  %3784 = vmatprep.subr.mxu0 0.0
  %3785 = vmatpush1.msra.mxu0 0.0
  %3786 = vmatprep.subr.mxu0 0.0
  %3787 = vmatpush1.msra.mxu0 0.0
  %3788 = vmatprep.subr.mxu0 0.0
  %3789 = vmatpush1.msra.mxu0 0.0
  %3790 = vmatprep.subr.mxu0 0.0
  %3791 = vmatpush1.msra.mxu0 0.0
  %3792 = vmatprep.subr.mxu0 0.0
  %3793 = vmatpush1.msra.mxu0 0.0
  %3794 = vmatprep.subr.mxu0 0.0
  %3795 = vmatpush1.msra.mxu0 0.0
  %3796 = vmatprep.subr.mxu0 0.0
  %3797 = vmatpush1.msra.mxu0 0.0
  %3798 = vmatprep.subr.mxu0 0.0
  %3799 = vmatpush1.msra.mxu0 0.0
  %3800 = vmatprep.subr.mxu0 0.0
  %3801 = vmatpush1.msra.mxu0 0.0
  %3802 = vmatprep.subr.mxu0 0.0
  %3803 = vmatpush1.msra.mxu0 0.0
  %3804 = vmatprep.subr.mxu0 %v3215
  %3805 = vmatpush1.msra.mxu0 %v3214
  %3806 = vmatprep.subr.mxu0 %v3213
  %3807 = vmatpush1.msra.mxu0 %v3212
  %3808 = vmatprep.subr.mxu0 %v3211
  %3809 = vmatpush1.msra.mxu0 %v3210
  %3810 = vmatprep.subr.mxu0 %v3209
  %3811 = vmatpush1.msra.mxu0 %v3208
  %3812 = vmatprep.subr.mxu0 0.0
  %3813 = vmatpush2.msra.mxu0 0.0
  %3814 = vmatprep.subr.mxu0 0.0
  %3815 = vmatpush2.msra.mxu0 0.0
  %3816 = vmatprep.subr.mxu0 0.0
  %3817 = vmatpush2.msra.mxu0 0.0
  %3818 = vmatprep.subr.mxu0 0.0
  %3819 = vmatpush2.msra.mxu0 0.0
  %3820 = vmatprep.subr.mxu0 0.0
  %3821 = vmatpush2.msra.mxu0 0.0
  %3822 = vmatprep.subr.mxu0 0.0
  %3823 = vmatpush2.msra.mxu0 0.0
  %3824 = vmatprep.subr.mxu0 0.0
  %3825 = vmatpush2.msra.mxu0 0.0
  %3826 = vmatprep.subr.mxu0 0.0
  %3827 = vmatpush2.msra.mxu0 0.0
  %3828 = vmatprep.subr.mxu0 0.0
  %3829 = vmatpush2.msra.mxu0 0.0
  %3830 = vmatprep.subr.mxu0 0.0
  %3831 = vmatpush2.msra.mxu0 0.0
  %3832 = vmatprep.subr.mxu0 0.0
  %3833 = vmatpush2.msra.mxu0 0.0
  %3834 = vmatprep.subr.mxu0 0.0
  %3835 = vmatpush2.msra.mxu0 0.0
  %3836 = vmatprep.subr.mxu0 0.0
  %3837 = vmatpush2.msra.mxu0 0.0
  %3838 = vmatprep.subr.mxu0 0.0
  %3839 = vmatpush2.msra.mxu0 0.0
  %3840 = vmatprep.subr.mxu0 0.0
  %3841 = vmatpush2.msra.mxu0 0.0
  %3842 = vmatprep.subr.mxu0 0.0
  %3843 = vmatpush2.msra.mxu0 0.0
  %3844 = vmatprep.mubr.f32.mxu0 0.0
  %3845 = vmatmul.mubr.f32.gmra.mxu0 %v3776
  %v3846 = vpop.f32.mrf.mxu0
  %v3847 = vadd.f32 0.0, %v3846
  %v3848 = vpop.f32.mrf.mxu0
  %3849 = vmatprep.mubr.f32.mxu0 0.0
  %3850 = vmatmul.mubr.f32.gmra.mxu0 %v3778
  %v3851 = vpop.f32.mrf.mxu0
  %v3852 = vpop.f32.mrf.mxu0
  %v3853 = vadd.f32 0.0, %v3852
  %3854 = vdwg.mxu0
  %v3855 = vld [vmem:[%s741] sm:$0xff]
  %v3856 = vld [vmem:[%s739 + $0x8] sm:$0xff]
  %v3857 = vadd.f32 %v3855, %v3847
  %v3858 = vadd.f32 %v3856, %v3853
  %v3859 = vxor.u32 %v3857, 2147483648
  %v3860 = vxor.u32 %v3858, 2147483648
  %v3861 = vmul.f32 %v3859, 1.442695
  %v3862 = vpow.pop %v3861
  %v3863 = vmul.f32 %v3860, 1.442695
  %v3864 = vpow.pop %v3863
  %v3865 = vadd.f32 %v3862, 1.0
  %v3866 = vadd.f32 %v3864, 1.0
  %v3867 = vrcp.pop %v3865
  %v3868 = vmul.f32 1.0, %v3867
  %v3869 = vrcp.pop %v3866
  %v3870 = vmul.f32 1.0, %v3869
  %v3871 = vtanh.pop %v3857
  %v3872 = vtanh.pop %v3858
  %v3873 = vmul.f32 %v3868, %v3752
  %v3874 = vmul.f32 %v3870, %v3753
  %3877 = vrot.lane.b32.xlu0 %v3871, 64
  %v3878 = vpop.permute.xlu0 %3877
  %3879 = vrot.lane.b32.xlu0 %v3872, 64
  %v3880 = vpop.permute.xlu0 %3879
  %v3883 = vmul.f32 %v3868, %v3878
  %v3884 = vmul.f32 %v3870, %v3880
  %3887 = vrot.lane.b32.xlu0 %v3883, 32
  %v3888 = vpop.permute.xlu0 %3887
  %3889 = vrot.lane.b32.xlu0 %v3884, 32
  %v3890 = vpop.permute.xlu0 %3889
  %v3893 = vadd.f32 %v3873, %v3888
  %v3894 = vadd.f32 %v3874, %v3890
  %v3895 = vtanh.pop %v3893
  %v3896 = vtanh.pop %v3894
  %3899 = vrot.lane.b32.xlu0 %v3895, 64
  %v3900 = vpop.permute.xlu0 %3899
  %3901 = vrot.lane.b32.xlu0 %v3896, 64
  %v3902 = vpop.permute.xlu0 %3901
  %v3905 = vmul.f32 %v3868, %v3900
  %v3906 = vmul.f32 %v3870, %v3902
  %3908 = vrot.lane.b32.xlu0 %v3905, 32
  %v3909 = vpop.permute.xlu0 %3908
  %3911 = vst.msk [vmem:[%s940] sm:$0xff] %vm227, %v3909
  %3913 = vrot.lane.b32.xlu0 %v3906, 32
  %v3914 = vpop.permute.xlu0 %3913
  %3916 = vst.msk [vmem:[%s946] sm:$0xff] %vm227, %v3914
  %v3917 = vsel %vm227, %v3909, 0
  %v3919 = vsel %vm227, %v3914, 0
  %3921 = vmatprep.subr.mxu0 0.0
  %3922 = vmatpush1.msra.mxu0 0.0
  %3923 = vmatprep.subr.mxu0 0.0
  %3924 = vmatpush1.msra.mxu0 0.0
  %3925 = vmatprep.subr.mxu0 0.0
  %3926 = vmatpush1.msra.mxu0 0.0
  %3927 = vmatprep.subr.mxu0 0.0
  %3928 = vmatpush1.msra.mxu0 0.0
  %3929 = vmatprep.subr.mxu0 0.0
  %3930 = vmatpush1.msra.mxu0 0.0
  %3931 = vmatprep.subr.mxu0 0.0
  %3932 = vmatpush1.msra.mxu0 0.0
  %3933 = vmatprep.subr.mxu0 0.0
  %3934 = vmatpush1.msra.mxu0 0.0
  %3935 = vmatprep.subr.mxu0 0.0
  %3936 = vmatpush1.msra.mxu0 0.0
  %3937 = vmatprep.subr.mxu0 0.0
  %3938 = vmatpush1.msra.mxu0 0.0
  %3939 = vmatprep.subr.mxu0 0.0
  %3940 = vmatpush1.msra.mxu0 0.0
  %3941 = vmatprep.subr.mxu0 0.0
  %3942 = vmatpush1.msra.mxu0 0.0
  %3943 = vmatprep.subr.mxu0 0.0
  %3944 = vmatpush1.msra.mxu0 0.0
  %3945 = vmatprep.subr.mxu0 %v3215
  %3946 = vmatpush1.msra.mxu0 %v3214
  %3947 = vmatprep.subr.mxu0 %v3213
  %3948 = vmatpush1.msra.mxu0 %v3212
  %3949 = vmatprep.subr.mxu0 %v3211
  %3950 = vmatpush1.msra.mxu0 %v3210
  %3951 = vmatprep.subr.mxu0 %v3209
  %3952 = vmatpush1.msra.mxu0 %v3208
  %3953 = vmatprep.subr.mxu0 0.0
  %3954 = vmatpush2.msra.mxu0 0.0
  %3955 = vmatprep.subr.mxu0 0.0
  %3956 = vmatpush2.msra.mxu0 0.0
  %3957 = vmatprep.subr.mxu0 0.0
  %3958 = vmatpush2.msra.mxu0 0.0
  %3959 = vmatprep.subr.mxu0 0.0
  %3960 = vmatpush2.msra.mxu0 0.0
  %3961 = vmatprep.subr.mxu0 0.0
  %3962 = vmatpush2.msra.mxu0 0.0
  %3963 = vmatprep.subr.mxu0 0.0
  %3964 = vmatpush2.msra.mxu0 0.0
  %3965 = vmatprep.subr.mxu0 0.0
  %3966 = vmatpush2.msra.mxu0 0.0
  %3967 = vmatprep.subr.mxu0 0.0
  %3968 = vmatpush2.msra.mxu0 0.0
  %3969 = vmatprep.subr.mxu0 0.0
  %3970 = vmatpush2.msra.mxu0 0.0
  %3971 = vmatprep.subr.mxu0 0.0
  %3972 = vmatpush2.msra.mxu0 0.0
  %3973 = vmatprep.subr.mxu0 0.0
  %3974 = vmatpush2.msra.mxu0 0.0
  %3975 = vmatprep.subr.mxu0 0.0
  %3976 = vmatpush2.msra.mxu0 0.0
  %3977 = vmatprep.subr.mxu0 0.0
  %3978 = vmatpush2.msra.mxu0 0.0
  %3979 = vmatprep.subr.mxu0 0.0
  %3980 = vmatpush2.msra.mxu0 0.0
  %3981 = vmatprep.subr.mxu0 0.0
  %3982 = vmatpush2.msra.mxu0 0.0
  %3983 = vmatprep.subr.mxu0 0.0
  %3984 = vmatpush2.msra.mxu0 0.0
  %3985 = vmatprep.mubr.f32.mxu0 0.0
  %3986 = vmatmul.mubr.f32.gmra.mxu0 %v3917
  %v3987 = vpop.f32.mrf.mxu0
  %v3988 = vadd.f32 0.0, %v3987
  %v3989 = vpop.f32.mrf.mxu0
  %3990 = vmatprep.mubr.f32.mxu0 0.0
  %3991 = vmatmul.mubr.f32.gmra.mxu0 %v3919
  %v3992 = vpop.f32.mrf.mxu0
  %v3993 = vpop.f32.mrf.mxu0
  %v3994 = vadd.f32 0.0, %v3993
  %3995 = vdwg.mxu0
  %v3996 = vld [vmem:[%s596] sm:$0xff]
  %v3997 = vld [vmem:[%s594 + $0x8] sm:$0xff]
  %v3998 = vadd.f32 %v3996, %v3988
  %v3999 = vadd.f32 %v3997, %v3994
  %v4000 = vxor.u32 %v3998, 2147483648
  %v4001 = vxor.u32 %v3999, 2147483648
  %v4002 = vmul.f32 %v4000, 1.442695
  %v4003 = vpow.pop %v4002
  %v4004 = vmul.f32 %v4001, 1.442695
  %v4005 = vpow.pop %v4004
  %v4006 = vadd.f32 %v4003, 1.0
  %v4007 = vadd.f32 %v4005, 1.0
  %v4008 = vrcp.pop %v4006
  %v4009 = vmul.f32 1.0, %v4008
  %v4010 = vrcp.pop %v4007
  %v4011 = vmul.f32 1.0, %v4010
  %v4012 = vtanh.pop %v3998
  %v4013 = vtanh.pop %v3999
  %v4014 = vmul.f32 %v4009, %v3893
  %v4015 = vmul.f32 %v4011, %v3894
  %4018 = vrot.lane.b32.xlu0 %v4012, 64
  %v4019 = vpop.permute.xlu0 %4018
  %4020 = vrot.lane.b32.xlu0 %v4013, 64
  %v4021 = vpop.permute.xlu0 %4020
  %v4024 = vmul.f32 %v4009, %v4019
  %v4025 = vmul.f32 %v4011, %v4021
  %4028 = vrot.lane.b32.xlu0 %v4024, 32
  %v4029 = vpop.permute.xlu0 %4028
  %4030 = vrot.lane.b32.xlu0 %v4025, 32
  %v4031 = vpop.permute.xlu0 %4030
  %v4034 = vadd.f32 %v4014, %v4029
  %v4035 = vadd.f32 %v4015, %v4031
  %v4036 = vtanh.pop %v4034
  %v4037 = vtanh.pop %v4035
  %4040 = vrot.lane.b32.xlu0 %v4036, 64
  %v4041 = vpop.permute.xlu0 %4040
  %4042 = vrot.lane.b32.xlu0 %v4037, 64
  %v4043 = vpop.permute.xlu0 %4042
  %v4046 = vmul.f32 %v4009, %v4041
  %v4047 = vmul.f32 %v4011, %v4043
  %4049 = vrot.lane.b32.xlu0 %v4046, 32
  %v4050 = vpop.permute.xlu0 %4049
  %4052 = vst.msk [vmem:[%s1083] sm:$0xff] %vm227, %v4050
  %4054 = vrot.lane.b32.xlu0 %v4047, 32
  %v4055 = vpop.permute.xlu0 %4054
  %4057 = vst.msk [vmem:[%s1089] sm:$0xff] %vm227, %v4055
  %v4058 = vsel %vm227, %v4050, 0
  %v4060 = vsel %vm227, %v4055, 0
  %4062 = vmatprep.subr.mxu0 0.0
  %4063 = vmatpush1.msra.mxu0 0.0
  %4064 = vmatprep.subr.mxu0 0.0
  %4065 = vmatpush1.msra.mxu0 0.0
  %4066 = vmatprep.subr.mxu0 0.0
  %4067 = vmatpush1.msra.mxu0 0.0
  %4068 = vmatprep.subr.mxu0 0.0
  %4069 = vmatpush1.msra.mxu0 0.0
  %4070 = vmatprep.subr.mxu0 0.0
  %4071 = vmatpush1.msra.mxu0 0.0
  %4072 = vmatprep.subr.mxu0 0.0
  %4073 = vmatpush1.msra.mxu0 0.0
  %4074 = vmatprep.subr.mxu0 0.0
  %4075 = vmatpush1.msra.mxu0 0.0
  %4076 = vmatprep.subr.mxu0 0.0
  %4077 = vmatpush1.msra.mxu0 0.0
  %4078 = vmatprep.subr.mxu0 0.0
  %4079 = vmatpush1.msra.mxu0 0.0
  %4080 = vmatprep.subr.mxu0 0.0
  %4081 = vmatpush1.msra.mxu0 0.0
  %4082 = vmatprep.subr.mxu0 0.0
  %4083 = vmatpush1.msra.mxu0 0.0
  %4084 = vmatprep.subr.mxu0 0.0
  %4085 = vmatpush1.msra.mxu0 0.0
  %4086 = vmatprep.subr.mxu0 %v3215
  %4087 = vmatpush1.msra.mxu0 %v3214
  %4088 = vmatprep.subr.mxu0 %v3213
  %4089 = vmatpush1.msra.mxu0 %v3212
  %4090 = vmatprep.subr.mxu0 %v3211
  %4091 = vmatpush1.msra.mxu0 %v3210
  %4092 = vmatprep.subr.mxu0 %v3209
  %4093 = vmatpush1.msra.mxu0 %v3208
  %4094 = vmatprep.subr.mxu0 0.0
  %4095 = vmatpush2.msra.mxu0 0.0
  %4096 = vmatprep.subr.mxu0 0.0
  %4097 = vmatpush2.msra.mxu0 0.0
  %4098 = vmatprep.subr.mxu0 0.0
  %4099 = vmatpush2.msra.mxu0 0.0
  %4100 = vmatprep.subr.mxu0 0.0
  %4101 = vmatpush2.msra.mxu0 0.0
  %4102 = vmatprep.subr.mxu0 0.0
  %4103 = vmatpush2.msra.mxu0 0.0
  %4104 = vmatprep.subr.mxu0 0.0
  %4105 = vmatpush2.msra.mxu0 0.0
  %4106 = vmatprep.subr.mxu0 0.0
  %4107 = vmatpush2.msra.mxu0 0.0
  %4108 = vmatprep.subr.mxu0 0.0
  %4109 = vmatpush2.msra.mxu0 0.0
  %4110 = vmatprep.subr.mxu0 0.0
  %4111 = vmatpush2.msra.mxu0 0.0
  %4112 = vmatprep.subr.mxu0 0.0
  %4113 = vmatpush2.msra.mxu0 0.0
  %4114 = vmatprep.subr.mxu0 0.0
  %4115 = vmatpush2.msra.mxu0 0.0
  %4116 = vmatprep.subr.mxu0 0.0
  %4117 = vmatpush2.msra.mxu0 0.0
  %4118 = vmatprep.subr.mxu0 0.0
  %4119 = vmatpush2.msra.mxu0 0.0
  %4120 = vmatprep.subr.mxu0 0.0
  %4121 = vmatpush2.msra.mxu0 0.0
  %4122 = vmatprep.subr.mxu0 0.0
  %4123 = vmatpush2.msra.mxu0 0.0
  %4124 = vmatprep.subr.mxu0 0.0
  %4125 = vmatpush2.msra.mxu0 0.0
  %4126 = vmatprep.mubr.f32.mxu0 0.0
  %4127 = vmatmul.mubr.f32.gmra.mxu0 %v4058
  %v4128 = vpop.f32.mrf.mxu0
  %v4129 = vadd.f32 0.0, %v4128
  %v4130 = vpop.f32.mrf.mxu0
  %4131 = vmatprep.mubr.f32.mxu0 0.0
  %4132 = vmatmul.mubr.f32.gmra.mxu0 %v4060
  %v4133 = vpop.f32.mrf.mxu0
  %v4134 = vpop.f32.mrf.mxu0
  %v4135 = vadd.f32 0.0, %v4134
  %4136 = vdwg.mxu0
  %v4137 = vld [vmem:[%s451] sm:$0xff]
  %v4138 = vld [vmem:[%s449 + $0x8] sm:$0xff]
  %v4139 = vadd.f32 %v4137, %v4129
  %v4140 = vadd.f32 %v4138, %v4135
  %v4141 = vxor.u32 %v4139, 2147483648
  %v4142 = vxor.u32 %v4140, 2147483648
  %v4143 = vmul.f32 %v4141, 1.442695
  %v4144 = vpow.pop %v4143
  %v4145 = vmul.f32 %v4142, 1.442695
  %v4146 = vpow.pop %v4145
  %v4147 = vadd.f32 %v4144, 1.0
  %v4148 = vadd.f32 %v4146, 1.0
  %v4149 = vrcp.pop %v4147
  %v4150 = vmul.f32 1.0, %v4149
  %v4151 = vrcp.pop %v4148
  %v4152 = vmul.f32 1.0, %v4151
  %v4153 = vtanh.pop %v4139
  %v4154 = vtanh.pop %v4140
  %v4155 = vmul.f32 %v4150, %v4034
  %v4156 = vmul.f32 %v4152, %v4035
  %4159 = vrot.lane.b32.xlu0 %v4153, 64
  %v4160 = vpop.permute.xlu0 %4159
  %4161 = vrot.lane.b32.xlu0 %v4154, 64
  %v4162 = vpop.permute.xlu0 %4161
  %v4165 = vmul.f32 %v4150, %v4160
  %v4166 = vmul.f32 %v4152, %v4162
  %4169 = vrot.lane.b32.xlu0 %v4165, 32
  %v4170 = vpop.permute.xlu0 %4169
  %4171 = vrot.lane.b32.xlu0 %v4166, 32
  %v4172 = vpop.permute.xlu0 %4171
  %v4175 = vadd.f32 %v4155, %v4170
  %v4176 = vadd.f32 %v4156, %v4172
  %v4177 = vtanh.pop %v4175
  %v4178 = vtanh.pop %v4176
  %4181 = vrot.lane.b32.xlu0 %v4177, 64
  %v4182 = vpop.permute.xlu0 %4181
  %4183 = vrot.lane.b32.xlu0 %v4178, 64
  %v4184 = vpop.permute.xlu0 %4183
  %v4187 = vmul.f32 %v4150, %v4182
  %v4188 = vmul.f32 %v4152, %v4184
  %4190 = vrot.lane.b32.xlu0 %v4187, 32
  %v4191 = vpop.permute.xlu0 %4190
  %4193 = vst.msk [vmem:[%s1226] sm:$0xff] %vm227, %v4191
  %4195 = vrot.lane.b32.xlu0 %v4188, 32
  %v4196 = vpop.permute.xlu0 %4195
  %4198 = vst.msk [vmem:[%s1232] sm:$0xff] %vm227, %v4196
  %v4199 = vsel %vm227, %v4191, 0
  %v4201 = vsel %vm227, %v4196, 0
  %4203 = vmatprep.subr.mxu0 0.0
  %4204 = vmatpush1.msra.mxu0 0.0
  %4205 = vmatprep.subr.mxu0 0.0
  %4206 = vmatpush1.msra.mxu0 0.0
  %4207 = vmatprep.subr.mxu0 0.0
  %4208 = vmatpush1.msra.mxu0 0.0
  %4209 = vmatprep.subr.mxu0 0.0
  %4210 = vmatpush1.msra.mxu0 0.0
  %4211 = vmatprep.subr.mxu0 0.0
  %4212 = vmatpush1.msra.mxu0 0.0
  %4213 = vmatprep.subr.mxu0 0.0
  %4214 = vmatpush1.msra.mxu0 0.0
  %4215 = vmatprep.subr.mxu0 0.0
  %4216 = vmatpush1.msra.mxu0 0.0
  %4217 = vmatprep.subr.mxu0 0.0
  %4218 = vmatpush1.msra.mxu0 0.0
  %4219 = vmatprep.subr.mxu0 0.0
  %4220 = vmatpush1.msra.mxu0 0.0
  %4221 = vmatprep.subr.mxu0 0.0
  %4222 = vmatpush1.msra.mxu0 0.0
  %4223 = vmatprep.subr.mxu0 0.0
  %4224 = vmatpush1.msra.mxu0 0.0
  %4225 = vmatprep.subr.mxu0 0.0
  %4226 = vmatpush1.msra.mxu0 0.0
  %4227 = vmatprep.subr.mxu0 %v3215
  %4228 = vmatpush1.msra.mxu0 %v3214
  %4229 = vmatprep.subr.mxu0 %v3213
  %4230 = vmatpush1.msra.mxu0 %v3212
  %4231 = vmatprep.subr.mxu0 %v3211
  %4232 = vmatpush1.msra.mxu0 %v3210
  %4233 = vmatprep.subr.mxu0 %v3209
  %4234 = vmatpush1.msra.mxu0 %v3208
  %4235 = vmatprep.subr.mxu0 0.0
  %4236 = vmatpush2.msra.mxu0 0.0
  %4237 = vmatprep.subr.mxu0 0.0
  %4238 = vmatpush2.msra.mxu0 0.0
  %4239 = vmatprep.subr.mxu0 0.0
  %4240 = vmatpush2.msra.mxu0 0.0
  %4241 = vmatprep.subr.mxu0 0.0
  %4242 = vmatpush2.msra.mxu0 0.0
  %4243 = vmatprep.subr.mxu0 0.0
  %4244 = vmatpush2.msra.mxu0 0.0
  %4245 = vmatprep.subr.mxu0 0.0
  %4246 = vmatpush2.msra.mxu0 0.0
  %4247 = vmatprep.subr.mxu0 0.0
  %4248 = vmatpush2.msra.mxu0 0.0
  %4249 = vmatprep.subr.mxu0 0.0
  %4250 = vmatpush2.msra.mxu0 0.0
  %4251 = vmatprep.subr.mxu0 0.0
  %4252 = vmatpush2.msra.mxu0 0.0
  %4253 = vmatprep.subr.mxu0 0.0
  %4254 = vmatpush2.msra.mxu0 0.0
  %4255 = vmatprep.subr.mxu0 0.0
  %4256 = vmatpush2.msra.mxu0 0.0
  %4257 = vmatprep.subr.mxu0 0.0
  %4258 = vmatpush2.msra.mxu0 0.0
  %4259 = vmatprep.subr.mxu0 0.0
  %4260 = vmatpush2.msra.mxu0 0.0
  %4261 = vmatprep.subr.mxu0 0.0
  %4262 = vmatpush2.msra.mxu0 0.0
  %4263 = vmatprep.subr.mxu0 0.0
  %4264 = vmatpush2.msra.mxu0 0.0
  %4265 = vmatprep.subr.mxu0 0.0
  %4266 = vmatpush2.msra.mxu0 0.0
  %4267 = vmatprep.mubr.f32.mxu0 0.0
  %4268 = vmatmul.mubr.f32.gmra.mxu0 %v4199
  %v4269 = vpop.f32.mrf.mxu0
  %v4270 = vadd.f32 0.0, %v4269
  %v4271 = vpop.f32.mrf.mxu0
  %4272 = vmatprep.mubr.f32.mxu0 0.0
  %4273 = vmatmul.mubr.f32.gmra.mxu0 %v4201
  %v4274 = vpop.f32.mrf.mxu0
  %v4275 = vpop.f32.mrf.mxu0
  %v4276 = vadd.f32 0.0, %v4275
  %4277 = vdwg.mxu0
  %v4278 = vld [vmem:[%s307] sm:$0xff]
  %v4279 = vld [vmem:[#allocation2 + $0x8] sm:$0xff]
  %v4280 = vadd.f32 %v4278, %v4270
  %v4281 = vadd.f32 %v4279, %v4276
  %v4282 = vxor.u32 %v4280, 2147483648
  %v4283 = vxor.u32 %v4281, 2147483648
  %v4284 = vmul.f32 %v4282, 1.442695
  %v4285 = vpow.pop %v4284
  %v4286 = vmul.f32 %v4283, 1.442695
  %v4287 = vpow.pop %v4286
  %v4288 = vadd.f32 %v4285, 1.0
  %v4289 = vadd.f32 %v4287, 1.0
  %v4290 = vrcp.pop %v4288
  %v4291 = vmul.f32 1.0, %v4290
  %v4292 = vrcp.pop %v4289
  %v4293 = vmul.f32 1.0, %v4292
  %v4294 = vtanh.pop %v4280
  %v4295 = vtanh.pop %v4281
  %v4296 = vmul.f32 %v4291, %v4175
  %v4297 = vmul.f32 %v4293, %v4176
  %4300 = vrot.lane.b32.xlu0 %v4294, 64
  %v4301 = vpop.permute.xlu0 %4300
  %4302 = vrot.lane.b32.xlu0 %v4295, 64
  %v4303 = vpop.permute.xlu0 %4302
  %v4306 = vmul.f32 %v4291, %v4301
  %v4307 = vmul.f32 %v4293, %v4303
  %4310 = vrot.lane.b32.xlu0 %v4306, 32
  %v4311 = vpop.permute.xlu0 %4310
  %4312 = vrot.lane.b32.xlu0 %v4307, 32
  %v4313 = vpop.permute.xlu0 %4312
  %v4316 = vadd.f32 %v4296, %v4311
  %v4317 = vadd.f32 %v4297, %v4313
  %v4318 = vtanh.pop %v4316
  %v4319 = vtanh.pop %v4317
  %4322 = vrot.lane.b32.xlu0 %v4318, 64
  %v4323 = vpop.permute.xlu0 %4322
  %4324 = vrot.lane.b32.xlu0 %v4319, 64
  %v4325 = vpop.permute.xlu0 %4324
  %v4328 = vmul.f32 %v4291, %v4323
  %v4329 = vmul.f32 %v4293, %v4325
  %4331 = vrot.lane.b32.xlu0 %v4328, 32
  %v4332 = vpop.permute.xlu0 %4331
  %4334 = vst.msk [vmem:[%s1369] sm:$0xff] %vm227, %v4332
  %4336 = vrot.lane.b32.xlu0 %v4329, 32
  %v4337 = vpop.permute.xlu0 %4336
  %4339 = vst.msk [vmem:[#allocation4] sm:$0xff] %vm227, %v4337
  %v4340 = vld [vmem:[%s10] sm:$0xff]
  %v4341 = vld [vmem:[%s10 + $0x8] sm:$0xff]
  %v4342 = vld [vmem:[%s10 + $0x10] sm:$0xff]
  %v4343 = vld [vmem:[%s10 + $0x18] sm:$0xff]
  %v4344 = vld [vmem:[%s11] sm:$0x1]
  %v4346 = vlaneseq
  %v4347 = vshrl.u32 %v4346, 7
  %v4348 = vsub.s32 0, %v4347
  %v4349 = vrot.slane %v4344, %v4348
  %v4351 = vsel %vm227, %v4337, 0
  %4353 = vmatprep.subr.mxu0 0.0
  %4354 = vmatpush1.msra.mxu0 0.0
  %4355 = vmatprep.subr.mxu0 0.0
  %4356 = vmatpush1.msra.mxu0 0.0
  %4357 = vmatprep.subr.mxu0 0.0
  %4358 = vmatpush1.msra.mxu0 0.0
  %4359 = vmatprep.subr.mxu0 0.0
  %4360 = vmatpush1.msra.mxu0 0.0
  %4361 = vmatprep.subr.mxu0 0.0
  %4362 = vmatpush1.msra.mxu0 0.0
  %4363 = vmatprep.subr.mxu0 0.0
  %4364 = vmatpush1.msra.mxu0 0.0
  %4365 = vmatprep.subr.mxu0 0.0
  %4366 = vmatpush1.msra.mxu0 0.0
  %4367 = vmatprep.subr.mxu0 0.0
  %4368 = vmatpush1.msra.mxu0 0.0
  %4369 = vmatprep.subr.mxu0 0.0
  %4370 = vmatpush1.msra.mxu0 0.0
  %4371 = vmatprep.subr.mxu0 0.0
  %4372 = vmatpush1.msra.mxu0 0.0
  %4373 = vmatprep.subr.mxu0 0.0
  %4374 = vmatpush1.msra.mxu0 0.0
  %4375 = vmatprep.subr.mxu0 0.0
  %4376 = vmatpush1.msra.mxu0 0.0
  %4377 = vmatprep.subr.mxu0 0.0
  %4378 = vmatpush1.msra.mxu0 %v4343
  %4379 = vmatprep.subr.mxu0 0.0
  %4380 = vmatpush1.msra.mxu0 %v4342
  %4381 = vmatprep.subr.mxu0 0.0
  %4382 = vmatpush1.msra.mxu0 %v4341
  %4383 = vmatprep.subr.mxu0 0.0
  %4384 = vmatpush1.msra.mxu0 %v4340
  %4385 = vmatprep.subr.mxu0 0.0
  %4386 = vmatpush2.msra.mxu0 0.0
  %4387 = vmatprep.subr.mxu0 0.0
  %4388 = vmatpush2.msra.mxu0 0.0
  %4389 = vmatprep.subr.mxu0 0.0
  %4390 = vmatpush2.msra.mxu0 0.0
  %4391 = vmatprep.subr.mxu0 0.0
  %4392 = vmatpush2.msra.mxu0 0.0
  %4393 = vmatprep.subr.mxu0 0.0
  %4394 = vmatpush2.msra.mxu0 0.0
  %4395 = vmatprep.subr.mxu0 0.0
  %4396 = vmatpush2.msra.mxu0 0.0
  %4397 = vmatprep.subr.mxu0 0.0
  %4398 = vmatpush2.msra.mxu0 0.0
  %4399 = vmatprep.subr.mxu0 0.0
  %4400 = vmatpush2.msra.mxu0 0.0
  %4401 = vmatprep.subr.mxu0 0.0
  %4402 = vmatpush2.msra.mxu0 0.0
  %4403 = vmatprep.subr.mxu0 0.0
  %4404 = vmatpush2.msra.mxu0 0.0
  %4405 = vmatprep.subr.mxu0 0.0
  %4406 = vmatpush2.msra.mxu0 0.0
  %4407 = vmatprep.subr.mxu0 0.0
  %4408 = vmatpush2.msra.mxu0 0.0
  %4409 = vmatprep.subr.mxu0 0.0
  %4410 = vmatpush2.msra.mxu0 0.0
  %4411 = vmatprep.subr.mxu0 0.0
  %4412 = vmatpush2.msra.mxu0 0.0
  %4413 = vmatprep.subr.mxu0 0.0
  %4414 = vmatpush2.msra.mxu0 0.0
  %4415 = vmatprep.subr.mxu0 0.0
  %4416 = vmatpush2.msra.mxu0 0.0
  %4417 = vmatprep.mubr.f32.mxu0 0.0
  %4418 = vmatmul.mubr.f32.gmra.mxu0 %v4351
  %v4419 = vpop.f32.mrf.mxu0
  %v4420 = vadd.f32 %v4349, %v4419
  %v4421 = vpop.f32.mrf.mxu0
  %4422 = vdwg.mxu0
  %vm4423 = vcmask 80896
  %4424 = vst.msk [vmem:[%s12] sm:$0xff] %vm4423, %v4420
  // Predicated region
  $region50: #{rnn_forward.1} parent=0 // pred_check
    _
  $region51: #{rnn_forward.1} parent=0 // pred_check_branch
    %4426 = sbr.rel (0) target = $region53
  $region52: #{rnn_forward.1} parent=0 // pred_region
    _
  $region53: #{rnn_forward.1} parent=0 // pred_fallthru
    _
  // Predicated region
  $region54: #{rnn_forward.1} parent=0 // pred_check
    _
  $region55: #{rnn_forward.1} parent=0 // pred_check_branch
    %4428 = sbr.rel (0) target = $region57
  $region56: #{rnn_forward.1} parent=0 // pred_region
    _
  $region57: #{rnn_forward.1} parent=0 // pred_fallthru
    _

</llo_original>
